<compile_context>
chip_gen: v7x
topology: tpu7x:2x2x1
jax: 0.10.0
libtpu: 0.0.40
codegen_flags: <defaults>
</compile_context>

<pallas_src>
import functools

import jax
import jax.numpy as jnp
from jax.experimental import pallas as pl
from jax.experimental.pallas import tpu as pltpu

HIDDEN = 1024
IN_FEATS = 2
OUT_FEATS = 2
X_PAD = 8       # pad input feature dim 2 -> 8 (sublane-friendly, tiny)
OUT_PAD = 128   # keep output lane-dense (one full vreg width)
TB_MAX = 256    # batch tile (rows per grid step)


def _round_up(a, m):
    return (a + m - 1) // m * m


def mlp_kernel(x_ref, w1_ref, b1_ref, w2_ref, b2_ref, w3_ref, b3_ref,
               w4_ref, b4_ref, o_ref):
    x = x_ref[...]                      # (TB, X_PAD) f32, only cols 0..1 are real
    w1 = w1_ref[...]                    # (2, HIDDEN)  f32

    # fc1 + relu: K=2, so do it on the VPU as two broadcast FMAs (no padded matmul).
    h = x[:, 0:1] * w1[0:1, :] + x[:, 1:2] * w1[1:2, :] + b1_ref[...]
    h = jnp.maximum(h, 0.0)

    # fc2 + relu (bf16 weights, f32 accumulation on the MXU)
    h = jnp.dot(h.astype(jnp.bfloat16), w2_ref[...],
                preferred_element_type=jnp.float32)
    h = jnp.maximum(h + b2_ref[...], 0.0)

    # fc3 + relu
    h = jnp.dot(h.astype(jnp.bfloat16), w3_ref[...],
                preferred_element_type=jnp.float32)
    h = jnp.maximum(h + b3_ref[...], 0.0)

    # final linear (no activation), output kept 128 lanes wide
    o = jnp.dot(h.astype(jnp.bfloat16), w4_ref[...],
                preferred_element_type=jnp.float32)
    o_ref[...] = o + b4_ref[...]


def prepare_params(params):
    """One-time parameter preparation (padding + bf16 cast), hoisted out of the
    per-call path. Weights stored as (in, out) so the kernel computes x @ W + b."""
    (w1, b1), (w2, b2), (w3, b3), (w4, b4) = params
    w1_f = w1.astype(jnp.float32)                                   # (2, H) tiny, keep f32
    w2_b = w2.astype(jnp.bfloat16)                                  # (H, H)
    w3_b = w3.astype(jnp.bfloat16)                                  # (H, H)
    w4_p = jnp.zeros((HIDDEN, OUT_PAD), jnp.bfloat16).at[:, :OUT_FEATS].set(
        w4.astype(jnp.bfloat16))
    b4_p = jnp.zeros((1, OUT_PAD), jnp.float32).at[:, :OUT_FEATS].set(
        b4.reshape(1, OUT_FEATS))
    return (w1_f, b1.reshape(1, HIDDEN),
            w2_b, b2.reshape(1, HIDDEN),
            w3_b, b3.reshape(1, HIDDEN),
            w4_p, b4_p)


@functools.partial(jax.jit, static_argnames=())
def mlp_forward(x, prepared):
    """x: (B, 2) float32 -> (B, 2) float32."""
    w1, b1, w2, b2, w3, b3, w4_p, b4_p = prepared
    B = x.shape[0]

    TB = min(TB_MAX, _round_up(B, 8))
    B_pad = _round_up(B, TB)
    grid = (pl.cdiv(B_pad, TB),)

    # Pad only the (tiny) input: rows to a multiple of TB, lanes 2 -> 8.
    x_p = jnp.zeros((B_pad, X_PAD), jnp.float32).at[:B, :IN_FEATS].set(x)

    flops = B_pad * (4 * HIDDEN + 4 * HIDDEN * HIDDEN + 2 * HIDDEN * OUT_PAD)
    bytes_accessed = (
        x_p.size * 4 + B_pad * OUT_PAD * 4          # activations in / out
        + IN_FEATS * HIDDEN * 4 + 3 * HIDDEN * 4    # w1 + b1/b2/b3 (f32)
        + 2 * HIDDEN * HIDDEN * 2                   # w2, w3 (bf16)
        + HIDDEN * OUT_PAD * 2 + OUT_PAD * 4)       # w4 (bf16) + b4

    const = lambda i: (0, 0)  # weights / biases stay resident across batch tiles

    out_p = pl.pallas_call(
        mlp_kernel,
        out_shape=jax.ShapeDtypeStruct((B_pad, OUT_PAD), jnp.float32),
        grid=grid,
        in_specs=[
            pl.BlockSpec((TB, X_PAD), lambda i: (i, 0)),      # x tile
            pl.BlockSpec((IN_FEATS, HIDDEN), const),          # w1
            pl.BlockSpec((1, HIDDEN), const),                 # b1
            pl.BlockSpec((HIDDEN, HIDDEN), const),            # w2 (bf16)
            pl.BlockSpec((1, HIDDEN), const),                 # b2
            pl.BlockSpec((HIDDEN, HIDDEN), const),            # w3 (bf16)
            pl.BlockSpec((1, HIDDEN), const),                 # b3
            pl.BlockSpec((HIDDEN, OUT_PAD), const),           # w4 padded (bf16)
            pl.BlockSpec((1, OUT_PAD), const),                # b4 padded
        ],
        out_specs=pl.BlockSpec((TB, OUT_PAD), lambda i: (i, 0)),
        compiler_params=pltpu.CompilerParams(
            dimension_semantics=("parallel",),
            vmem_limit_bytes=32 * 1024 * 1024,
        ),
        cost_estimate=pl.CostEstimate(
            flops=flops, transcendentals=0, bytes_accessed=bytes_accessed),
    )(x_p, w1, b1, w2, b2, w3, b3, w4_p, b4_p)

    return out_p[:B, :OUT_FEATS]


def init_params(key):
    """Deterministic synthetic init matching nn.Linear shapes (stored as (in, out))."""
    ks = jax.random.split(key, 8)

    def lin(kw, kb, fan_in, fan_out):
        bound = 1.0 / jnp.sqrt(fan_in)
        w = jax.random.uniform(kw, (fan_in, fan_out), jnp.float32, -bound, bound)
        b = jax.random.uniform(kb, (fan_out,), jnp.float32, -bound, bound)
        return w, b

    p1 = lin(ks[0], ks[1], IN_FEATS, HIDDEN)
    p2 = lin(ks[2], ks[3], HIDDEN, HIDDEN)
    p3 = lin(ks[4], ks[5], HIDDEN, HIDDEN)
    p4 = lin(ks[6], ks[7], HIDDEN, OUT_FEATS)
    return (p1, p2, p3, p4)


def reference_forward(x, prepared):
    """Pure-JAX reference using the same prepared (bf16) weights as the kernel."""
    w1, b1, w2, b2, w3, b3, w4_p, b4_p = prepared
    h = jnp.maximum(x @ w1 + b1, 0.0)
    h = jnp.maximum(
        jnp.dot(h.astype(jnp.bfloat16), w2, preferred_element_type=jnp.float32) + b2, 0.0)
    h = jnp.maximum(
        jnp.dot(h.astype(jnp.bfloat16), w3, preferred_element_type=jnp.float32) + b3, 0.0)
    o = jnp.dot(h.astype(jnp.bfloat16), w4_p, preferred_element_type=jnp.float32) + b4_p
    return o[:, :OUT_FEATS]


if __name__ == "__main__":
    key = jax.random.PRNGKey(0)
    kx, kp = jax.random.split(key)
    B = 8
    x = jax.random.normal(kx, (B, IN_FEATS), jnp.float32)

    params = init_params(kp)
    prepared = prepare_params(params)

    out = mlp_forward(x, prepared)
    out = jax.block_until_ready(out)

    ref = reference_forward(x, prepared)
    assert out.shape == (B, OUT_FEATS)
    assert jnp.allclose(out, ref, atol=1e-3, rtol=1e-3), (out, ref)

    print("KERNEL_OK")
</pallas_src>

<mosaic_0001>
module attributes {stable_mosaic.version = 11 : i64} {
  func.func @mlp_kernel(%arg0: i32, %arg1: memref<8x8xf32, #tpu.memory_space<vmem>>, %arg2: memref<2x1024xf32, #tpu.memory_space<vmem>>, %arg3: memref<1x1024xf32, #tpu.memory_space<vmem>>, %arg4: memref<1024x1024xbf16, #tpu.memory_space<vmem>>, %arg5: memref<1x1024xf32, #tpu.memory_space<vmem>>, %arg6: memref<1024x1024xbf16, #tpu.memory_space<vmem>>, %arg7: memref<1x1024xf32, #tpu.memory_space<vmem>>, %arg8: memref<1024x128xbf16, #tpu.memory_space<vmem>>, %arg9: memref<1x128xf32, #tpu.memory_space<vmem>>, %arg10: memref<8x128xf32, #tpu.memory_space<vmem>>) attributes {dimension_semantics = [#tpu.dimension_semantics<parallel>], iteration_bounds = array<i64: 1>, scalar_prefetch = 0 : i64, scratch_operands = 0 : i64, tpu.core_type = #tpu.core_type<tc>, window_params = [{transform_indices = @transform_0, window_bounds = array<i64: 8, 8>}, {pipeline_mode = #tpu.pipeline_mode<synchronous>, transform_indices = @transform_1, window_bounds = array<i64: 2, 1024>}, {pipeline_mode = #tpu.pipeline_mode<synchronous>, transform_indices = @transform_2, window_bounds = array<i64: 1, 1024>}, {pipeline_mode = #tpu.pipeline_mode<synchronous>, transform_indices = @transform_3, window_bounds = array<i64: 1024, 1024>}, {pipeline_mode = #tpu.pipeline_mode<synchronous>, transform_indices = @transform_4, window_bounds = array<i64: 1, 1024>}, {pipeline_mode = #tpu.pipeline_mode<synchronous>, transform_indices = @transform_5, window_bounds = array<i64: 1024, 1024>}, {pipeline_mode = #tpu.pipeline_mode<synchronous>, transform_indices = @transform_6, window_bounds = array<i64: 1, 1024>}, {pipeline_mode = #tpu.pipeline_mode<synchronous>, transform_indices = @transform_7, window_bounds = array<i64: 1024, 128>}, {pipeline_mode = #tpu.pipeline_mode<synchronous>, transform_indices = @transform_8, window_bounds = array<i64: 1, 128>}, {transform_indices = @transform_9, window_bounds = array<i64: 8, 128>}]} {
    %c0 = arith.constant 0 : index
    %c0_0 = arith.constant 0 : index
    %0 = vector.load %arg1[%c0, %c0_0] : memref<8x8xf32, #tpu.memory_space<vmem>>, vector<8x8xf32>
    %c0_1 = arith.constant 0 : index
    %c0_2 = arith.constant 0 : index
    %1 = vector.load %arg2[%c0_1, %c0_2] : memref<2x1024xf32, #tpu.memory_space<vmem>>, vector<2x1024xf32>
    %2 = vector.extract_strided_slice %0 {offsets = [0, 0], sizes = [8, 1], strides = [1, 1]} : vector<8x8xf32> to vector<8x1xf32>
    %3 = vector.extract_strided_slice %1 {offsets = [0, 0], sizes = [1, 1024], strides = [1, 1]} : vector<2x1024xf32> to vector<1x1024xf32>
    %4 = vector.broadcast %2 : vector<8x1xf32> to vector<8x1024xf32>
    %5 = vector.broadcast %3 : vector<1x1024xf32> to vector<8x1024xf32>
    %6 = arith.mulf %4, %5 : vector<8x1024xf32>
    %7 = vector.extract_strided_slice %0 {offsets = [0, 1], sizes = [8, 1], strides = [1, 1]} : vector<8x8xf32> to vector<8x1xf32>
    %8 = vector.extract_strided_slice %1 {offsets = [1, 0], sizes = [1, 1024], strides = [1, 1]} : vector<2x1024xf32> to vector<1x1024xf32>
    %9 = vector.broadcast %7 : vector<8x1xf32> to vector<8x1024xf32>
    %10 = vector.broadcast %8 : vector<1x1024xf32> to vector<8x1024xf32>
    %11 = arith.mulf %9, %10 : vector<8x1024xf32>
    %12 = arith.addf %6, %11 : vector<8x1024xf32>
    %c0_3 = arith.constant 0 : index
    %c0_4 = arith.constant 0 : index
    %13 = vector.load %arg3[%c0_3, %c0_4] : memref<1x1024xf32, #tpu.memory_space<vmem>>, vector<1x1024xf32>
    %14 = vector.broadcast %13 : vector<1x1024xf32> to vector<8x1024xf32>
    %15 = arith.addf %12, %14 : vector<8x1024xf32>
    %cst = arith.constant 0.000000e+00 : f32
    %16 = vector.broadcast %cst : f32 to vector<8x1024xf32>
    %17 = arith.maximumf %15, %16 : vector<8x1024xf32>
    %18 = arith.truncf %17 : vector<8x1024xf32> to vector<8x1024xbf16>
    %c0_5 = arith.constant 0 : index
    %c0_6 = arith.constant 0 : index
    %19 = vector.load %arg4[%c0_5, %c0_6] : memref<1024x1024xbf16, #tpu.memory_space<vmem>>, vector<1024x1024xbf16>
    %cst_7 = arith.constant dense<0.000000e+00> : vector<8x1024xf32>
    %20 = tpu.matmul %18, %19, %cst_7 {dimension_numbers = #tpu.dot_dimension_numbers<[1], [0], [0], [1], [0, 0, 1, 1], [], []>} : vector<8x1024xbf16>, vector<1024x1024xbf16>, vector<8x1024xf32> -> vector<8x1024xf32>
    %c0_8 = arith.constant 0 : index
    %c0_9 = arith.constant 0 : index
    %21 = vector.load %arg5[%c0_8, %c0_9] : memref<1x1024xf32, #tpu.memory_space<vmem>>, vector<1x1024xf32>
    %22 = vector.broadcast %21 : vector<1x1024xf32> to vector<8x1024xf32>
    %23 = arith.addf %20, %22 : vector<8x1024xf32>
    %cst_10 = arith.constant 0.000000e+00 : f32
    %24 = vector.broadcast %cst_10 : f32 to vector<8x1024xf32>
    %25 = arith.maximumf %23, %24 : vector<8x1024xf32>
    %26 = arith.truncf %25 : vector<8x1024xf32> to vector<8x1024xbf16>
    %c0_11 = arith.constant 0 : index
    %c0_12 = arith.constant 0 : index
    %27 = vector.load %arg6[%c0_11, %c0_12] : memref<1024x1024xbf16, #tpu.memory_space<vmem>>, vector<1024x1024xbf16>
    %cst_13 = arith.constant dense<0.000000e+00> : vector<8x1024xf32>
    %28 = tpu.matmul %26, %27, %cst_13 {dimension_numbers = #tpu.dot_dimension_numbers<[1], [0], [0], [1], [0, 0, 1, 1], [], []>} : vector<8x1024xbf16>, vector<1024x1024xbf16>, vector<8x1024xf32> -> vector<8x1024xf32>
    %c0_14 = arith.constant 0 : index
    %c0_15 = arith.constant 0 : index
    %29 = vector.load %arg7[%c0_14, %c0_15] : memref<1x1024xf32, #tpu.memory_space<vmem>>, vector<1x1024xf32>
    %30 = vector.broadcast %29 : vector<1x1024xf32> to vector<8x1024xf32>
    %31 = arith.addf %28, %30 : vector<8x1024xf32>
    %cst_16 = arith.constant 0.000000e+00 : f32
    %32 = vector.broadcast %cst_16 : f32 to vector<8x1024xf32>
    %33 = arith.maximumf %31, %32 : vector<8x1024xf32>
    %34 = arith.truncf %33 : vector<8x1024xf32> to vector<8x1024xbf16>
    %c0_17 = arith.constant 0 : index
    %c0_18 = arith.constant 0 : index
    %35 = vector.load %arg8[%c0_17, %c0_18] : memref<1024x128xbf16, #tpu.memory_space<vmem>>, vector<1024x128xbf16>
    %cst_19 = arith.constant dense<0.000000e+00> : vector<8x128xf32>
    %36 = tpu.matmul %34, %35, %cst_19 {dimension_numbers = #tpu.dot_dimension_numbers<[1], [0], [0], [1], [0, 0, 1, 1], [], []>} : vector<8x1024xbf16>, vector<1024x128xbf16>, vector<8x128xf32> -> vector<8x128xf32>
    %c0_20 = arith.constant 0 : index
    %c0_21 = arith.constant 0 : index
    %37 = vector.load %arg9[%c0_20, %c0_21] : memref<1x128xf32, #tpu.memory_space<vmem>>, vector<1x128xf32>
    %38 = vector.broadcast %37 : vector<1x128xf32> to vector<8x128xf32>
    %39 = arith.addf %36, %38 : vector<8x128xf32>
    %c0_22 = arith.constant 0 : index
    %c0_23 = arith.constant 0 : index
    %40 = vector.load %arg10[%c0_22, %c0_23] : memref<8x128xf32, #tpu.memory_space<vmem>>, vector<8x128xf32>
    tpu.vector_store %arg10[%c0_22, %c0_23], %39 {strides = array<i32>} : memref<8x128xf32, #tpu.memory_space<vmem>>, vector<8x128xf32>,
    return
  }
  func.func @transform_0(%arg0: i32) -> (i32, i32) {
    %c0_i32 = arith.constant 0 : i32
    %c0_i32_0 = arith.constant 0 : i32
    return %arg0, %c0_i32 : i32, i32
  }
  func.func @transform_1(%arg0: i32) -> (i32, i32) {
    %c0_i32 = arith.constant 0 : i32
    %c0_i32_0 = arith.constant 0 : i32
    %c0_i32_1 = arith.constant 0 : i32
    return %c0_i32, %c0_i32_0 : i32, i32
  }
  func.func @transform_2(%arg0: i32) -> (i32, i32) {
    %c0_i32 = arith.constant 0 : i32
    %c0_i32_0 = arith.constant 0 : i32
    %c0_i32_1 = arith.constant 0 : i32
    return %c0_i32, %c0_i32_0 : i32, i32
  }
  func.func @transform_3(%arg0: i32) -> (i32, i32) {
    %c0_i32 = arith.constant 0 : i32
    %c0_i32_0 = arith.constant 0 : i32
    %c0_i32_1 = arith.constant 0 : i32
    return %c0_i32, %c0_i32_0 : i32, i32
  }
  func.func @transform_4(%arg0: i32) -> (i32, i32) {
    %c0_i32 = arith.constant 0 : i32
    %c0_i32_0 = arith.constant 0 : i32
    %c0_i32_1 = arith.constant 0 : i32
    return %c0_i32, %c0_i32_0 : i32, i32
  }
  func.func @transform_5(%arg0: i32) -> (i32, i32) {
    %c0_i32 = arith.constant 0 : i32
    %c0_i32_0 = arith.constant 0 : i32
    %c0_i32_1 = arith.constant 0 : i32
    return %c0_i32, %c0_i32_0 : i32, i32
  }
  func.func @transform_6(%arg0: i32) -> (i32, i32) {
    %c0_i32 = arith.constant 0 : i32
    %c0_i32_0 = arith.constant 0 : i32
    %c0_i32_1 = arith.constant 0 : i32
    return %c0_i32, %c0_i32_0 : i32, i32
  }
  func.func @transform_7(%arg0: i32) -> (i32, i32) {
    %c0_i32 = arith.constant 0 : i32
    %c0_i32_0 = arith.constant 0 : i32
    %c0_i32_1 = arith.constant 0 : i32
    return %c0_i32, %c0_i32_0 : i32, i32
  }
  func.func @transform_8(%arg0: i32) -> (i32, i32) {
    %c0_i32 = arith.constant 0 : i32
    %c0_i32_0 = arith.constant 0 : i32
    %c0_i32_1 = arith.constant 0 : i32
    return %c0_i32, %c0_i32_0 : i32, i32
  }
  func.func @transform_9(%arg0: i32) -> (i32, i32) {
    %c0_i32 = arith.constant 0 : i32
    %c0_i32_0 = arith.constant 0 : i32
    return %arg0, %c0_i32 : i32, i32
  }
}

</mosaic_0001>

<llo_original>
// kernel: mlp_forward.1
$region0: #{mlp_forward.1}
  #allocation0 [shape = 'u32[]', space=smem, size = 0x4, offset = 0x4, fixed_abs, tag = 'smem constant byte address 0x4 - core index']
  #allocation1 [shape = 'u32[144,128]{1,0:T(1,128)}', space=vmem, size = 0x12000, scoped, tag = 'internal scratch']
  %s0 = inlined_call_operand.vmem [shape: f32[8,8], index: 0, kind: input, shape index: {}]
  %s1 = inlined_call_operand.hbm [shape: f32[2,1024], index: 1, kind: input, shape index: {}]
  %s2 = inlined_call_operand.hbm [shape: f32[1,1024], index: 2, kind: input, shape index: {}]
  %s3 = inlined_call_operand.hbm [shape: bf16[1024,1024], index: 3, kind: input, shape index: {}]
  %s4 = inlined_call_operand.hbm [shape: f32[1,1024], index: 4, kind: input, shape index: {}]
  %s5 = inlined_call_operand.hbm [shape: bf16[1024,1024], index: 5, kind: input, shape index: {}]
  %s6 = inlined_call_operand.hbm [shape: f32[1,1024], index: 6, kind: input, shape index: {}]
  %s7 = inlined_call_operand.hbm [shape: bf16[1024,128], index: 7, kind: input, shape index: {}]
  %s8 = inlined_call_operand.hbm [shape: f32[1,128], index: 8, kind: input, shape index: {}]
  %s9 = inlined_call_operand.vmem [shape: f32[8,128], index: 9, kind: output, shape index: {}]
  %s10 = sld [smem:[#allocation0]]
  $region78: #{mlp_forward.1} parent=0
    _
  %s12 = ssub.s32 1, %s10
  %s13 = scalar_select 0, %s12, %s10
  $region1: #{mlp_forward.1} parent=0
    #allocation2 [shape = 'u8[8192]{0}', space=vmem, size = 0x2000, scoped, tag = 'input window, operand 1, single buffered']
    #allocation3 [shape = 's32[1]{0}', space=sflag, size = 0x4, scoped, tag = 'scoped memory for mlp_forward.1']
    #allocation4 [shape = 'u8[4096]{0}', space=vmem, size = 0x1000, scoped, tag = 'input window, operand 2, single buffered']
    #allocation5 [shape = 's32[1]{0}', space=sflag, size = 0x4, scoped, tag = 'scoped memory for mlp_forward.1']
    #allocation6 [shape = 'u8[2097152]{0}', space=vmem, size = 0x200000, scoped, tag = 'input window, operand 3, single buffered']
    #allocation7 [shape = 'u8[4096]{0}', space=vmem, size = 0x1000, scoped, tag = 'input window, operand 4, single buffered']
    #allocation8 [shape = 's32[1]{0}', space=sflag, size = 0x4, scoped, tag = 'scoped memory for mlp_forward.1']
    #allocation9 [shape = 'u8[2097152]{0}', space=vmem, size = 0x200000, scoped, tag = 'input window, operand 5, single buffered']
    #allocation10 [shape = 'u8[4096]{0}', space=vmem, size = 0x1000, scoped, tag = 'input window, operand 6, single buffered']
    #allocation11 [shape = 's32[1]{0}', space=sflag, size = 0x4, scoped, tag = 'scoped memory for mlp_forward.1']
    #allocation12 [shape = 'u8[262144]{0}', space=vmem, size = 0x40000, scoped, tag = 'input window, operand 7, single buffered']
    #allocation13 [shape = 'u8[512]{0}', space=vmem, size = 0x400, scoped, tag = 'input window, operand 8, single buffered']
    #allocation14 [shape = 's32[1]{0}', space=sflag, size = 0x4, scoped, tag = 'scoped memory for mlp_forward.1']
    %14 = vsyncpa [#allocation3], 0
    %15 = vsyncpa [#allocation5], 0
    %16 = vsyncpa [#allocation8], 0
    %17 = vsyncpa [#allocation11], 0
    %18 = vsyncpa [#allocation14], 0
    // Predicated region
    $region2: #{mlp_forward.1} parent=1 // pred_check
      _
    $region3: #{mlp_forward.1} parent=1 // pred_check_branch
      %20 = sbr.rel (0) target = $region5
    $region4: #{mlp_forward.1} parent=1 // pred_region
      _
    $region5: #{mlp_forward.1} parent=1 // pred_fallthru
      _
    // Predicated region
    $region6: #{mlp_forward.1} parent=1 // pred_check
      _
    $region7: #{mlp_forward.1} parent=1 // pred_check_branch
      %22 = sbr.rel (0) target = $region9
    $region8: #{mlp_forward.1} parent=1 // pred_region
      %s24 = ssub.s32 256, 256
      %25 = vsyncadd [#allocation3], %s24
      %s27 = sshll.u32 [#allocation2], 4
      %s28 = int_to_ptr.vmem [resolvable:$true] %s27
      %30 = dma.hbm_to_vmem [thread:$0]  %s1, 256, %s28, [#allocation3]
    $region9: #{mlp_forward.1} parent=1 // pred_fallthru
      _
    // Predicated region
    $region10: #{mlp_forward.1} parent=1 // pred_check
      _
    $region11: #{mlp_forward.1} parent=1 // pred_check_branch
      %32 = sbr.rel (0) target = $region13
    $region12: #{mlp_forward.1} parent=1 // pred_region
      %s34 = ssub.s32 128, 128
      %35 = vsyncadd [#allocation5], %s34
      %s37 = sshll.u32 [#allocation4], 4
      %s38 = int_to_ptr.vmem [resolvable:$true] %s37
      %40 = dma.hbm_to_vmem [thread:$0]  %s2, 128, %s38, [#allocation5]
    $region13: #{mlp_forward.1} parent=1 // pred_fallthru
      _
    // Predicated region
    $region14: #{mlp_forward.1} parent=1 // pred_check
      _
    $region15: #{mlp_forward.1} parent=1 // pred_check_branch
      %42 = sbr.rel (0) target = $region17
    $region16: #{mlp_forward.1} parent=1 // pred_region
      %s44 = ssub.s32 65536, 65536
      %45 = vsyncadd [#allocation5], %s44
      %s46 = sshll.u32 [#allocation6], 4
      %s47 = int_to_ptr.vmem [resolvable:$true] %s46
      %52 = dma.hbm_to_vmem [thread:$0]  %s3, 65536, %s47, [#allocation5], 512, 512, 32
    $region17: #{mlp_forward.1} parent=1 // pred_fallthru
      _
    // Predicated region
    $region18: #{mlp_forward.1} parent=1 // pred_check
      _
    $region19: #{mlp_forward.1} parent=1 // pred_check_branch
      %54 = sbr.rel (0) target = $region21
    $region20: #{mlp_forward.1} parent=1 // pred_region
      %s56 = ssub.s32 128, 128
      %57 = vsyncadd [#allocation8], %s56
      %s59 = sshll.u32 [#allocation7], 4
      %s60 = int_to_ptr.vmem [resolvable:$true] %s59
      %62 = dma.hbm_to_vmem [thread:$0]  %s4, 128, %s60, [#allocation8]
    $region21: #{mlp_forward.1} parent=1 // pred_fallthru
      _
    // Predicated region
    $region22: #{mlp_forward.1} parent=1 // pred_check
      _
    $region23: #{mlp_forward.1} parent=1 // pred_check_branch
      %64 = sbr.rel (0) target = $region25
    $region24: #{mlp_forward.1} parent=1 // pred_region
      %s66 = ssub.s32 65536, 65536
      %67 = vsyncadd [#allocation8], %s66
      %s68 = sshll.u32 [#allocation9], 4
      %s69 = int_to_ptr.vmem [resolvable:$true] %s68
      %74 = dma.hbm_to_vmem [thread:$0]  %s5, 65536, %s69, [#allocation8], 512, 512, 32
    $region25: #{mlp_forward.1} parent=1 // pred_fallthru
      _
    // Predicated region
    $region26: #{mlp_forward.1} parent=1 // pred_check
      _
    $region27: #{mlp_forward.1} parent=1 // pred_check_branch
      %76 = sbr.rel (0) target = $region29
    $region28: #{mlp_forward.1} parent=1 // pred_region
      %s78 = ssub.s32 128, 128
      %79 = vsyncadd [#allocation11], %s78
      %s81 = sshll.u32 [#allocation10], 4
      %s82 = int_to_ptr.vmem [resolvable:$true] %s81
      %84 = dma.hbm_to_vmem [thread:$0]  %s6, 128, %s82, [#allocation11]
    $region29: #{mlp_forward.1} parent=1 // pred_fallthru
      _
    // Predicated region
    $region30: #{mlp_forward.1} parent=1 // pred_check
      _
    $region31: #{mlp_forward.1} parent=1 // pred_check_branch
      %86 = sbr.rel (0) target = $region33
    $region32: #{mlp_forward.1} parent=1 // pred_region
      %s88 = ssub.s32 8192, 8192
      %89 = vsyncadd [#allocation11], %s88
      %s90 = sshll.u32 [#allocation12], 4
      %s91 = int_to_ptr.vmem [resolvable:$true] %s90
      %96 = dma.hbm_to_vmem [thread:$0]  %s7, 8192, %s91, [#allocation11], 64, 64, 4
    $region33: #{mlp_forward.1} parent=1 // pred_fallthru
      _
    // Predicated region
    $region34: #{mlp_forward.1} parent=1 // pred_check
      _
    $region35: #{mlp_forward.1} parent=1 // pred_check_branch
      %98 = sbr.rel (0) target = $region37
    $region36: #{mlp_forward.1} parent=1 // pred_region
      %s100 = ssub.s32 16, 16
      %101 = vsyncadd [#allocation14], %s100
      %s103 = sshll.u32 [#allocation13], 4
      %s104 = int_to_ptr.vmem [resolvable:$true] %s103
      %106 = dma.hbm_to_vmem [thread:$0]  %s8, 16, %s104, [#allocation14]
    $region37: #{mlp_forward.1} parent=1 // pred_fallthru
      _
    // Predicated region
    $region38: #{mlp_forward.1} parent=1 // pred_check
      _
    $region39: #{mlp_forward.1} parent=1 // pred_check_branch
      %108 = sbr.rel (0) target = $region41
    $region40: #{mlp_forward.1} parent=1 // pred_region
      %109 = dma.done [#allocation3], 256
    $region41: #{mlp_forward.1} parent=1 // pred_fallthru
      _
    // Predicated region
    $region42: #{mlp_forward.1} parent=1 // pred_check
      _
    $region43: #{mlp_forward.1} parent=1 // pred_check_branch
      %111 = sbr.rel (0) target = $region45
    $region44: #{mlp_forward.1} parent=1 // pred_region
      %112 = dma.done [#allocation5], 128
    $region45: #{mlp_forward.1} parent=1 // pred_fallthru
      _
    // Predicated region
    $region46: #{mlp_forward.1} parent=1 // pred_check
      _
    $region47: #{mlp_forward.1} parent=1 // pred_check_branch
      %114 = sbr.rel (0) target = $region49
    $region48: #{mlp_forward.1} parent=1 // pred_region
      %115 = dma.done [#allocation5], 65536
    $region49: #{mlp_forward.1} parent=1 // pred_fallthru
      _
    // Predicated region
    $region50: #{mlp_forward.1} parent=1 // pred_check
      _
    $region51: #{mlp_forward.1} parent=1 // pred_check_branch
      %117 = sbr.rel (0) target = $region53
    $region52: #{mlp_forward.1} parent=1 // pred_region
      %118 = dma.done [#allocation8], 128
    $region53: #{mlp_forward.1} parent=1 // pred_fallthru
      _
    // Predicated region
    $region54: #{mlp_forward.1} parent=1 // pred_check
      _
    $region55: #{mlp_forward.1} parent=1 // pred_check_branch
      %120 = sbr.rel (0) target = $region57
    $region56: #{mlp_forward.1} parent=1 // pred_region
      %121 = dma.done [#allocation8], 65536
    $region57: #{mlp_forward.1} parent=1 // pred_fallthru
      _
    // Predicated region
    $region58: #{mlp_forward.1} parent=1 // pred_check
      _
    $region59: #{mlp_forward.1} parent=1 // pred_check_branch
      %123 = sbr.rel (0) target = $region61
    $region60: #{mlp_forward.1} parent=1 // pred_region
      %124 = dma.done [#allocation11], 128
    $region61: #{mlp_forward.1} parent=1 // pred_fallthru
      _
    // Predicated region
    $region62: #{mlp_forward.1} parent=1 // pred_check
      _
    $region63: #{mlp_forward.1} parent=1 // pred_check_branch
      %126 = sbr.rel (0) target = $region65
    $region64: #{mlp_forward.1} parent=1 // pred_region
      %127 = dma.done [#allocation11], 8192
    $region65: #{mlp_forward.1} parent=1 // pred_fallthru
      _
    // Predicated region
    $region66: #{mlp_forward.1} parent=1 // pred_check
      _
    $region67: #{mlp_forward.1} parent=1 // pred_check_branch
      %129 = sbr.rel (0) target = $region69
    $region68: #{mlp_forward.1} parent=1 // pred_region
      %130 = dma.done [#allocation14], 16
    $region69: #{mlp_forward.1} parent=1 // pred_fallthru
      _
    %v132 = vld [vmem:[%s0] sm:$0xff]
    %v133 = vld [vmem:[#allocation2] sm:$0xff]
    %v134 = vld [vmem:[#allocation2 + $0x8] sm:$0xff]
    %136 = vset.pattern.permute.xlu0 0
    %137 = vperm.xlu0 %136, %v132
    %v138 = vpop.permute.xlu0 %137
    %v142 = vlaneseq
    %v143 = vshrl.u32 %v142, 7
    %v144 = vsub.s32 0, %v143
    %v145 = vrot.slane %v133, %v144
    %v146 = vlaneseq
    %v147 = vshrl.u32 %v146, 7
    %v148 = vsub.s32 2, %v147
    %v149 = vrot.slane %v133, %v148
    %v150 = vlaneseq
    %v151 = vshrl.u32 %v150, 7
    %v152 = vsub.s32 4, %v151
    %v153 = vrot.slane %v133, %v152
    %v154 = vlaneseq
    %v155 = vshrl.u32 %v154, 7
    %v156 = vsub.s32 6, %v155
    %v157 = vrot.slane %v133, %v156
    %v158 = vlaneseq
    %v159 = vshrl.u32 %v158, 7
    %v160 = vsub.s32 0, %v159
    %v161 = vrot.slane %v134, %v160
    %v162 = vlaneseq
    %v163 = vshrl.u32 %v162, 7
    %v164 = vsub.s32 2, %v163
    %v165 = vrot.slane %v134, %v164
    %v166 = vlaneseq
    %v167 = vshrl.u32 %v166, 7
    %v168 = vsub.s32 4, %v167
    %v169 = vrot.slane %v134, %v168
    %v170 = vlaneseq
    %v171 = vshrl.u32 %v170, 7
    %v172 = vsub.s32 6, %v171
    %v173 = vrot.slane %v134, %v172
    %v182 = vlaneseq
    %v183 = vshrl.u32 %v182, 7
    %v184 = vsub.s32 0, %v183
    %v185 = vrot.slane %v145, %v184
    %v186 = vlaneseq
    %v187 = vshrl.u32 %v186, 7
    %v188 = vsub.s32 0, %v187
    %v189 = vrot.slane %v149, %v188
    %v190 = vlaneseq
    %v191 = vshrl.u32 %v190, 7
    %v192 = vsub.s32 0, %v191
    %v193 = vrot.slane %v153, %v192
    %v194 = vlaneseq
    %v195 = vshrl.u32 %v194, 7
    %v196 = vsub.s32 0, %v195
    %v197 = vrot.slane %v157, %v196
    %v198 = vlaneseq
    %v199 = vshrl.u32 %v198, 7
    %v200 = vsub.s32 0, %v199
    %v201 = vrot.slane %v161, %v200
    %v202 = vlaneseq
    %v203 = vshrl.u32 %v202, 7
    %v204 = vsub.s32 0, %v203
    %v205 = vrot.slane %v165, %v204
    %v206 = vlaneseq
    %v207 = vshrl.u32 %v206, 7
    %v208 = vsub.s32 0, %v207
    %v209 = vrot.slane %v169, %v208
    %v210 = vlaneseq
    %v211 = vshrl.u32 %v210, 7
    %v212 = vsub.s32 0, %v211
    %v213 = vrot.slane %v173, %v212
    %v214 = vmul.f32 %v138, %v185
    %v215 = vmul.f32 %v138, %v189
    %v216 = vmul.f32 %v138, %v193
    %v217 = vmul.f32 %v138, %v197
    %v218 = vmul.f32 %v138, %v201
    %v219 = vmul.f32 %v138, %v205
    %v220 = vmul.f32 %v138, %v209
    %v221 = vmul.f32 %v138, %v213
    %222 = vset.pattern.permute.xlu0 1
    %223 = vperm.xlu0 %222, %v132
    %v224 = vpop.permute.xlu0 %223
    %v226 = vlaneseq
    %v227 = vshrl.u32 %v226, 7
    %v228 = vsub.s32 1, %v227
    %v229 = vrot.slane %v133, %v228
    %v230 = vlaneseq
    %v231 = vshrl.u32 %v230, 7
    %v232 = vsub.s32 3, %v231
    %v233 = vrot.slane %v133, %v232
    %v234 = vlaneseq
    %v235 = vshrl.u32 %v234, 7
    %v236 = vsub.s32 5, %v235
    %v237 = vrot.slane %v133, %v236
    %v238 = vlaneseq
    %v239 = vshrl.u32 %v238, 7
    %v240 = vsub.s32 7, %v239
    %v241 = vrot.slane %v133, %v240
    %v242 = vlaneseq
    %v243 = vshrl.u32 %v242, 7
    %v244 = vsub.s32 1, %v243
    %v245 = vrot.slane %v134, %v244
    %v246 = vlaneseq
    %v247 = vshrl.u32 %v246, 7
    %v248 = vsub.s32 3, %v247
    %v249 = vrot.slane %v134, %v248
    %v250 = vlaneseq
    %v251 = vshrl.u32 %v250, 7
    %v252 = vsub.s32 5, %v251
    %v253 = vrot.slane %v134, %v252
    %v254 = vlaneseq
    %v255 = vshrl.u32 %v254, 7
    %v256 = vsub.s32 7, %v255
    %v257 = vrot.slane %v134, %v256
    %v266 = vlaneseq
    %v267 = vshrl.u32 %v266, 7
    %v268 = vsub.s32 1, %v267
    %v269 = vrot.slane %v229, %v268
    %v270 = vlaneseq
    %v271 = vshrl.u32 %v270, 7
    %v272 = vsub.s32 1, %v271
    %v273 = vrot.slane %v233, %v272
    %v274 = vlaneseq
    %v275 = vshrl.u32 %v274, 7
    %v276 = vsub.s32 1, %v275
    %v277 = vrot.slane %v237, %v276
    %v278 = vlaneseq
    %v279 = vshrl.u32 %v278, 7
    %v280 = vsub.s32 1, %v279
    %v281 = vrot.slane %v241, %v280
    %v282 = vlaneseq
    %v283 = vshrl.u32 %v282, 7
    %v284 = vsub.s32 1, %v283
    %v285 = vrot.slane %v245, %v284
    %v286 = vlaneseq
    %v287 = vshrl.u32 %v286, 7
    %v288 = vsub.s32 1, %v287
    %v289 = vrot.slane %v249, %v288
    %v290 = vlaneseq
    %v291 = vshrl.u32 %v290, 7
    %v292 = vsub.s32 1, %v291
    %v293 = vrot.slane %v253, %v292
    %v294 = vlaneseq
    %v295 = vshrl.u32 %v294, 7
    %v296 = vsub.s32 1, %v295
    %v297 = vrot.slane %v257, %v296
    %v298 = vmul.f32 %v224, %v269
    %v299 = vmul.f32 %v224, %v273
    %v300 = vmul.f32 %v224, %v277
    %v301 = vmul.f32 %v224, %v281
    %v302 = vmul.f32 %v224, %v285
    %v303 = vmul.f32 %v224, %v289
    %v304 = vmul.f32 %v224, %v293
    %v305 = vmul.f32 %v224, %v297
    %v306 = vadd.f32 %v214, %v298
    %v307 = vadd.f32 %v215, %v299
    %v308 = vadd.f32 %v216, %v300
    %v309 = vadd.f32 %v217, %v301
    %v310 = vadd.f32 %v218, %v302
    %v311 = vadd.f32 %v219, %v303
    %v312 = vadd.f32 %v220, %v304
    %v313 = vadd.f32 %v221, %v305
    %v314 = vld [vmem:[#allocation4] sm:$0xff]
    %v316 = vlaneseq
    %v317 = vshrl.u32 %v316, 7
    %v318 = vsub.s32 0, %v317
    %v319 = vrot.slane %v314, %v318
    %v320 = vlaneseq
    %v321 = vshrl.u32 %v320, 7
    %v322 = vsub.s32 1, %v321
    %v323 = vrot.slane %v314, %v322
    %v324 = vlaneseq
    %v325 = vshrl.u32 %v324, 7
    %v326 = vsub.s32 2, %v325
    %v327 = vrot.slane %v314, %v326
    %v328 = vlaneseq
    %v329 = vshrl.u32 %v328, 7
    %v330 = vsub.s32 3, %v329
    %v331 = vrot.slane %v314, %v330
    %v332 = vlaneseq
    %v333 = vshrl.u32 %v332, 7
    %v334 = vsub.s32 4, %v333
    %v335 = vrot.slane %v314, %v334
    %v336 = vlaneseq
    %v337 = vshrl.u32 %v336, 7
    %v338 = vsub.s32 5, %v337
    %v339 = vrot.slane %v314, %v338
    %v340 = vlaneseq
    %v341 = vshrl.u32 %v340, 7
    %v342 = vsub.s32 6, %v341
    %v343 = vrot.slane %v314, %v342
    %v344 = vlaneseq
    %v345 = vshrl.u32 %v344, 7
    %v346 = vsub.s32 7, %v345
    %v347 = vrot.slane %v314, %v346
    %v356 = vadd.f32 %v306, %v319
    %v357 = vadd.f32 %v307, %v323
    %v358 = vadd.f32 %v308, %v327
    %v359 = vadd.f32 %v309, %v331
    %v360 = vadd.f32 %v310, %v335
    %v361 = vadd.f32 %v311, %v339
    %v362 = vadd.f32 %v312, %v343
    %v363 = vadd.f32 %v313, %v347
    %v364 = vmax.f32 %v356, 0.0
    %v365 = vmax.f32 %v357, 0.0
    %v366 = vmax.f32 %v358, 0.0
    %v367 = vmax.f32 %v359, 0.0
    %v368 = vmax.f32 %v360, 0.0
    %v369 = vmax.f32 %v361, 0.0
    %v370 = vmax.f32 %v362, 0.0
    %v371 = vmax.f32 %v363, 0.0
    %v372 = vpack.c.bf16 %v364, %v364
    %v373 = vpack.c.bf16 %v365, %v365
    %v374 = vpack.c.bf16 %v366, %v366
    %v375 = vpack.c.bf16 %v367, %v367
    %v376 = vpack.c.bf16 %v368, %v368
    %v377 = vpack.c.bf16 %v369, %v369
    %v378 = vpack.c.bf16 %v370, %v370
    %v379 = vpack.c.bf16 %v371, %v371
    %v380 = vld [vmem:[#allocation6] sm:$0xff]
    %v381 = vld [vmem:[#allocation6 + $0x8] sm:$0xff]
    %v382 = vld [vmem:[#allocation6 + $0x10] sm:$0xff]
    %v383 = vld [vmem:[#allocation6 + $0x18] sm:$0xff]
    %v384 = vld [vmem:[#allocation6 + $0x20] sm:$0xff]
    %v385 = vld [vmem:[#allocation6 + $0x28] sm:$0xff]
    %v386 = vld [vmem:[#allocation6 + $0x30] sm:$0xff]
    %v387 = vld [vmem:[#allocation6 + $0x38] sm:$0xff]
    %v388 = vld [vmem:[#allocation6 + $0x40] sm:$0xff]
    %v389 = vld [vmem:[#allocation6 + $0x48] sm:$0xff]
    %v390 = vld [vmem:[#allocation6 + $0x50] sm:$0xff]
    %v391 = vld [vmem:[#allocation6 + $0x58] sm:$0xff]
    %v392 = vld [vmem:[#allocation6 + $0x60] sm:$0xff]
    %v393 = vld [vmem:[#allocation6 + $0x68] sm:$0xff]
    %v394 = vld [vmem:[#allocation6 + $0x70] sm:$0xff]
    %v395 = vld [vmem:[#allocation6 + $0x78] sm:$0xff]
    %v396 = vld [vmem:[#allocation6 + $0x80] sm:$0xff]
    %v397 = vld [vmem:[#allocation6 + $0x88] sm:$0xff]
    %v398 = vld [vmem:[#allocation6 + $0x90] sm:$0xff]
    %v399 = vld [vmem:[#allocation6 + $0x98] sm:$0xff]
    %v400 = vld [vmem:[#allocation6 + $0xa0] sm:$0xff]
    %v401 = vld [vmem:[#allocation6 + $0xa8] sm:$0xff]
    %v402 = vld [vmem:[#allocation6 + $0xb0] sm:$0xff]
    %v403 = vld [vmem:[#allocation6 + $0xb8] sm:$0xff]
    %v404 = vld [vmem:[#allocation6 + $0xc0] sm:$0xff]
    %v405 = vld [vmem:[#allocation6 + $0xc8] sm:$0xff]
    %v406 = vld [vmem:[#allocation6 + $0xd0] sm:$0xff]
    %v407 = vld [vmem:[#allocation6 + $0xd8] sm:$0xff]
    %v408 = vld [vmem:[#allocation6 + $0xe0] sm:$0xff]
    %v409 = vld [vmem:[#allocation6 + $0xe8] sm:$0xff]
    %v410 = vld [vmem:[#allocation6 + $0xf0] sm:$0xff]
    %v411 = vld [vmem:[#allocation6 + $0xf8] sm:$0xff]
    %v412 = vld [vmem:[#allocation6 + $0x100] sm:$0xff]
    %v413 = vld [vmem:[#allocation6 + $0x108] sm:$0xff]
    %v414 = vld [vmem:[#allocation6 + $0x110] sm:$0xff]
    %v415 = vld [vmem:[#allocation6 + $0x118] sm:$0xff]
    %v416 = vld [vmem:[#allocation6 + $0x120] sm:$0xff]
    %v417 = vld [vmem:[#allocation6 + $0x128] sm:$0xff]
    %v418 = vld [vmem:[#allocation6 + $0x130] sm:$0xff]
    %v419 = vld [vmem:[#allocation6 + $0x138] sm:$0xff]
    %v420 = vld [vmem:[#allocation6 + $0x140] sm:$0xff]
    %v421 = vld [vmem:[#allocation6 + $0x148] sm:$0xff]
    %v422 = vld [vmem:[#allocation6 + $0x150] sm:$0xff]
    %v423 = vld [vmem:[#allocation6 + $0x158] sm:$0xff]
    %v424 = vld [vmem:[#allocation6 + $0x160] sm:$0xff]
    %v425 = vld [vmem:[#allocation6 + $0x168] sm:$0xff]
    %v426 = vld [vmem:[#allocation6 + $0x170] sm:$0xff]
    %v427 = vld [vmem:[#allocation6 + $0x178] sm:$0xff]
    %v428 = vld [vmem:[#allocation6 + $0x180] sm:$0xff]
    %v429 = vld [vmem:[#allocation6 + $0x188] sm:$0xff]
    %v430 = vld [vmem:[#allocation6 + $0x190] sm:$0xff]
    %v431 = vld [vmem:[#allocation6 + $0x198] sm:$0xff]
    %v432 = vld [vmem:[#allocation6 + $0x1a0] sm:$0xff]
    %v433 = vld [vmem:[#allocation6 + $0x1a8] sm:$0xff]
    %v434 = vld [vmem:[#allocation6 + $0x1b0] sm:$0xff]
    %v435 = vld [vmem:[#allocation6 + $0x1b8] sm:$0xff]
    %v436 = vld [vmem:[#allocation6 + $0x1c0] sm:$0xff]
    %v437 = vld [vmem:[#allocation6 + $0x1c8] sm:$0xff]
    %v438 = vld [vmem:[#allocation6 + $0x1d0] sm:$0xff]
    %v439 = vld [vmem:[#allocation6 + $0x1d8] sm:$0xff]
    %v440 = vld [vmem:[#allocation6 + $0x1e0] sm:$0xff]
    %v441 = vld [vmem:[#allocation6 + $0x1e8] sm:$0xff]
    %v442 = vld [vmem:[#allocation6 + $0x1f0] sm:$0xff]
    %v443 = vld [vmem:[#allocation6 + $0x1f8] sm:$0xff]
    %v444 = vld [vmem:[#allocation6 + $0x200] sm:$0xff]
    %v445 = vld [vmem:[#allocation6 + $0x208] sm:$0xff]
    %v446 = vld [vmem:[#allocation6 + $0x210] sm:$0xff]
    %v447 = vld [vmem:[#allocation6 + $0x218] sm:$0xff]
    %v448 = vld [vmem:[#allocation6 + $0x220] sm:$0xff]
    %v449 = vld [vmem:[#allocation6 + $0x228] sm:$0xff]
    %v450 = vld [vmem:[#allocation6 + $0x230] sm:$0xff]
    %v451 = vld [vmem:[#allocation6 + $0x238] sm:$0xff]
    %v452 = vld [vmem:[#allocation6 + $0x240] sm:$0xff]
    %v453 = vld [vmem:[#allocation6 + $0x248] sm:$0xff]
    %v454 = vld [vmem:[#allocation6 + $0x250] sm:$0xff]
    %v455 = vld [vmem:[#allocation6 + $0x258] sm:$0xff]
    %v456 = vld [vmem:[#allocation6 + $0x260] sm:$0xff]
    %v457 = vld [vmem:[#allocation6 + $0x268] sm:$0xff]
    %v458 = vld [vmem:[#allocation6 + $0x270] sm:$0xff]
    %v459 = vld [vmem:[#allocation6 + $0x278] sm:$0xff]
    %v460 = vld [vmem:[#allocation6 + $0x280] sm:$0xff]
    %v461 = vld [vmem:[#allocation6 + $0x288] sm:$0xff]
    %v462 = vld [vmem:[#allocation6 + $0x290] sm:$0xff]
    %v463 = vld [vmem:[#allocation6 + $0x298] sm:$0xff]
    %v464 = vld [vmem:[#allocation6 + $0x2a0] sm:$0xff]
    %v465 = vld [vmem:[#allocation6 + $0x2a8] sm:$0xff]
    %v466 = vld [vmem:[#allocation6 + $0x2b0] sm:$0xff]
    %v467 = vld [vmem:[#allocation6 + $0x2b8] sm:$0xff]
    %v468 = vld [vmem:[#allocation6 + $0x2c0] sm:$0xff]
    %v469 = vld [vmem:[#allocation6 + $0x2c8] sm:$0xff]
    %v470 = vld [vmem:[#allocation6 + $0x2d0] sm:$0xff]
    %v471 = vld [vmem:[#allocation6 + $0x2d8] sm:$0xff]
    %v472 = vld [vmem:[#allocation6 + $0x2e0] sm:$0xff]
    %v473 = vld [vmem:[#allocation6 + $0x2e8] sm:$0xff]
    %v474 = vld [vmem:[#allocation6 + $0x2f0] sm:$0xff]
    %v475 = vld [vmem:[#allocation6 + $0x2f8] sm:$0xff]
    %v476 = vld [vmem:[#allocation6 + $0x300] sm:$0xff]
    %v477 = vld [vmem:[#allocation6 + $0x308] sm:$0xff]
    %v478 = vld [vmem:[#allocation6 + $0x310] sm:$0xff]
    %v479 = vld [vmem:[#allocation6 + $0x318] sm:$0xff]
    %v480 = vld [vmem:[#allocation6 + $0x320] sm:$0xff]
    %v481 = vld [vmem:[#allocation6 + $0x328] sm:$0xff]
    %v482 = vld [vmem:[#allocation6 + $0x330] sm:$0xff]
    %v483 = vld [vmem:[#allocation6 + $0x338] sm:$0xff]
    %v484 = vld [vmem:[#allocation6 + $0x340] sm:$0xff]
    %v485 = vld [vmem:[#allocation6 + $0x348] sm:$0xff]
    %v486 = vld [vmem:[#allocation6 + $0x350] sm:$0xff]
    %v487 = vld [vmem:[#allocation6 + $0x358] sm:$0xff]
    %v488 = vld [vmem:[#allocation6 + $0x360] sm:$0xff]
    %v489 = vld [vmem:[#allocation6 + $0x368] sm:$0xff]
    %v490 = vld [vmem:[#allocation6 + $0x370] sm:$0xff]
    %v491 = vld [vmem:[#allocation6 + $0x378] sm:$0xff]
    %v492 = vld [vmem:[#allocation6 + $0x380] sm:$0xff]
    %v493 = vld [vmem:[#allocation6 + $0x388] sm:$0xff]
    %v494 = vld [vmem:[#allocation6 + $0x390] sm:$0xff]
    %v495 = vld [vmem:[#allocation6 + $0x398] sm:$0xff]
    %v496 = vld [vmem:[#allocation6 + $0x3a0] sm:$0xff]
    %v497 = vld [vmem:[#allocation6 + $0x3a8] sm:$0xff]
    %v498 = vld [vmem:[#allocation6 + $0x3b0] sm:$0xff]
    %v499 = vld [vmem:[#allocation6 + $0x3b8] sm:$0xff]
    %v500 = vld [vmem:[#allocation6 + $0x3c0] sm:$0xff]
    %v501 = vld [vmem:[#allocation6 + $0x3c8] sm:$0xff]
    %v502 = vld [vmem:[#allocation6 + $0x3d0] sm:$0xff]
    %v503 = vld [vmem:[#allocation6 + $0x3d8] sm:$0xff]
    %v504 = vld [vmem:[#allocation6 + $0x3e0] sm:$0xff]
    %v505 = vld [vmem:[#allocation6 + $0x3e8] sm:$0xff]
    %v506 = vld [vmem:[#allocation6 + $0x3f0] sm:$0xff]
    %v507 = vld [vmem:[#allocation6 + $0x3f8] sm:$0xff]
    %v508 = vld [vmem:[#allocation6 + $0x400] sm:$0xff]
    %v509 = vld [vmem:[#allocation6 + $0x408] sm:$0xff]
    %v510 = vld [vmem:[#allocation6 + $0x410] sm:$0xff]
    %v511 = vld [vmem:[#allocation6 + $0x418] sm:$0xff]
    %v512 = vld [vmem:[#allocation6 + $0x420] sm:$0xff]
    %v513 = vld [vmem:[#allocation6 + $0x428] sm:$0xff]
    %v514 = vld [vmem:[#allocation6 + $0x430] sm:$0xff]
    %v515 = vld [vmem:[#allocation6 + $0x438] sm:$0xff]
    %v516 = vld [vmem:[#allocation6 + $0x440] sm:$0xff]
    %v517 = vld [vmem:[#allocation6 + $0x448] sm:$0xff]
    %v518 = vld [vmem:[#allocation6 + $0x450] sm:$0xff]
    %v519 = vld [vmem:[#allocation6 + $0x458] sm:$0xff]
    %v520 = vld [vmem:[#allocation6 + $0x460] sm:$0xff]
    %v521 = vld [vmem:[#allocation6 + $0x468] sm:$0xff]
    %v522 = vld [vmem:[#allocation6 + $0x470] sm:$0xff]
    %v523 = vld [vmem:[#allocation6 + $0x478] sm:$0xff]
    %v524 = vld [vmem:[#allocation6 + $0x480] sm:$0xff]
    %v525 = vld [vmem:[#allocation6 + $0x488] sm:$0xff]
    %v526 = vld [vmem:[#allocation6 + $0x490] sm:$0xff]
    %v527 = vld [vmem:[#allocation6 + $0x498] sm:$0xff]
    %v528 = vld [vmem:[#allocation6 + $0x4a0] sm:$0xff]
    %v529 = vld [vmem:[#allocation6 + $0x4a8] sm:$0xff]
    %v530 = vld [vmem:[#allocation6 + $0x4b0] sm:$0xff]
    %v531 = vld [vmem:[#allocation6 + $0x4b8] sm:$0xff]
    %v532 = vld [vmem:[#allocation6 + $0x4c0] sm:$0xff]
    %v533 = vld [vmem:[#allocation6 + $0x4c8] sm:$0xff]
    %v534 = vld [vmem:[#allocation6 + $0x4d0] sm:$0xff]
    %v535 = vld [vmem:[#allocation6 + $0x4d8] sm:$0xff]
    %v536 = vld [vmem:[#allocation6 + $0x4e0] sm:$0xff]
    %v537 = vld [vmem:[#allocation6 + $0x4e8] sm:$0xff]
    %v538 = vld [vmem:[#allocation6 + $0x4f0] sm:$0xff]
    %v539 = vld [vmem:[#allocation6 + $0x4f8] sm:$0xff]
    %v540 = vld [vmem:[#allocation6 + $0x500] sm:$0xff]
    %v541 = vld [vmem:[#allocation6 + $0x508] sm:$0xff]
    %v542 = vld [vmem:[#allocation6 + $0x510] sm:$0xff]
    %v543 = vld [vmem:[#allocation6 + $0x518] sm:$0xff]
    %v544 = vld [vmem:[#allocation6 + $0x520] sm:$0xff]
    %v545 = vld [vmem:[#allocation6 + $0x528] sm:$0xff]
    %v546 = vld [vmem:[#allocation6 + $0x530] sm:$0xff]
    %v547 = vld [vmem:[#allocation6 + $0x538] sm:$0xff]
    %v548 = vld [vmem:[#allocation6 + $0x540] sm:$0xff]
    %v549 = vld [vmem:[#allocation6 + $0x548] sm:$0xff]
    %v550 = vld [vmem:[#allocation6 + $0x550] sm:$0xff]
    %v551 = vld [vmem:[#allocation6 + $0x558] sm:$0xff]
    %v552 = vld [vmem:[#allocation6 + $0x560] sm:$0xff]
    %v553 = vld [vmem:[#allocation6 + $0x568] sm:$0xff]
    %v554 = vld [vmem:[#allocation6 + $0x570] sm:$0xff]
    %v555 = vld [vmem:[#allocation6 + $0x578] sm:$0xff]
    %v556 = vld [vmem:[#allocation6 + $0x580] sm:$0xff]
    %v557 = vld [vmem:[#allocation6 + $0x588] sm:$0xff]
    %v558 = vld [vmem:[#allocation6 + $0x590] sm:$0xff]
    %v559 = vld [vmem:[#allocation6 + $0x598] sm:$0xff]
    %v560 = vld [vmem:[#allocation6 + $0x5a0] sm:$0xff]
    %v561 = vld [vmem:[#allocation6 + $0x5a8] sm:$0xff]
    %v562 = vld [vmem:[#allocation6 + $0x5b0] sm:$0xff]
    %v563 = vld [vmem:[#allocation6 + $0x5b8] sm:$0xff]
    %v564 = vld [vmem:[#allocation6 + $0x5c0] sm:$0xff]
    %v565 = vld [vmem:[#allocation6 + $0x5c8] sm:$0xff]
    %v566 = vld [vmem:[#allocation6 + $0x5d0] sm:$0xff]
    %v567 = vld [vmem:[#allocation6 + $0x5d8] sm:$0xff]
    %v568 = vld [vmem:[#allocation6 + $0x5e0] sm:$0xff]
    %v569 = vld [vmem:[#allocation6 + $0x5e8] sm:$0xff]
    %v570 = vld [vmem:[#allocation6 + $0x5f0] sm:$0xff]
    %v571 = vld [vmem:[#allocation6 + $0x5f8] sm:$0xff]
    %v572 = vld [vmem:[#allocation6 + $0x600] sm:$0xff]
    %v573 = vld [vmem:[#allocation6 + $0x608] sm:$0xff]
    %v574 = vld [vmem:[#allocation6 + $0x610] sm:$0xff]
    %v575 = vld [vmem:[#allocation6 + $0x618] sm:$0xff]
    %v576 = vld [vmem:[#allocation6 + $0x620] sm:$0xff]
    %v577 = vld [vmem:[#allocation6 + $0x628] sm:$0xff]
    %v578 = vld [vmem:[#allocation6 + $0x630] sm:$0xff]
    %v579 = vld [vmem:[#allocation6 + $0x638] sm:$0xff]
    %v580 = vld [vmem:[#allocation6 + $0x640] sm:$0xff]
    %v581 = vld [vmem:[#allocation6 + $0x648] sm:$0xff]
    %v582 = vld [vmem:[#allocation6 + $0x650] sm:$0xff]
    %v583 = vld [vmem:[#allocation6 + $0x658] sm:$0xff]
    %v584 = vld [vmem:[#allocation6 + $0x660] sm:$0xff]
    %v585 = vld [vmem:[#allocation6 + $0x668] sm:$0xff]
    %v586 = vld [vmem:[#allocation6 + $0x670] sm:$0xff]
    %v587 = vld [vmem:[#allocation6 + $0x678] sm:$0xff]
    %v588 = vld [vmem:[#allocation6 + $0x680] sm:$0xff]
    %v589 = vld [vmem:[#allocation6 + $0x688] sm:$0xff]
    %v590 = vld [vmem:[#allocation6 + $0x690] sm:$0xff]
    %v591 = vld [vmem:[#allocation6 + $0x698] sm:$0xff]
    %v592 = vld [vmem:[#allocation6 + $0x6a0] sm:$0xff]
    %v593 = vld [vmem:[#allocation6 + $0x6a8] sm:$0xff]
    %v594 = vld [vmem:[#allocation6 + $0x6b0] sm:$0xff]
    %v595 = vld [vmem:[#allocation6 + $0x6b8] sm:$0xff]
    %v596 = vld [vmem:[#allocation6 + $0x6c0] sm:$0xff]
    %v597 = vld [vmem:[#allocation6 + $0x6c8] sm:$0xff]
    %v598 = vld [vmem:[#allocation6 + $0x6d0] sm:$0xff]
    %v599 = vld [vmem:[#allocation6 + $0x6d8] sm:$0xff]
    %v600 = vld [vmem:[#allocation6 + $0x6e0] sm:$0xff]
    %v601 = vld [vmem:[#allocation6 + $0x6e8] sm:$0xff]
    %v602 = vld [vmem:[#allocation6 + $0x6f0] sm:$0xff]
    %v603 = vld [vmem:[#allocation6 + $0x6f8] sm:$0xff]
    %v604 = vld [vmem:[#allocation6 + $0x700] sm:$0xff]
    %v605 = vld [vmem:[#allocation6 + $0x708] sm:$0xff]
    %v606 = vld [vmem:[#allocation6 + $0x710] sm:$0xff]
    %v607 = vld [vmem:[#allocation6 + $0x718] sm:$0xff]
    %v608 = vld [vmem:[#allocation6 + $0x720] sm:$0xff]
    %v609 = vld [vmem:[#allocation6 + $0x728] sm:$0xff]
    %v610 = vld [vmem:[#allocation6 + $0x730] sm:$0xff]
    %v611 = vld [vmem:[#allocation6 + $0x738] sm:$0xff]
    %v612 = vld [vmem:[#allocation6 + $0x740] sm:$0xff]
    %v613 = vld [vmem:[#allocation6 + $0x748] sm:$0xff]
    %v614 = vld [vmem:[#allocation6 + $0x750] sm:$0xff]
    %v615 = vld [vmem:[#allocation6 + $0x758] sm:$0xff]
    %v616 = vld [vmem:[#allocation6 + $0x760] sm:$0xff]
    %v617 = vld [vmem:[#allocation6 + $0x768] sm:$0xff]
    %v618 = vld [vmem:[#allocation6 + $0x770] sm:$0xff]
    %v619 = vld [vmem:[#allocation6 + $0x778] sm:$0xff]
    %v620 = vld [vmem:[#allocation6 + $0x780] sm:$0xff]
    %v621 = vld [vmem:[#allocation6 + $0x788] sm:$0xff]
    %v622 = vld [vmem:[#allocation6 + $0x790] sm:$0xff]
    %v623 = vld [vmem:[#allocation6 + $0x798] sm:$0xff]
    %v624 = vld [vmem:[#allocation6 + $0x7a0] sm:$0xff]
    %v625 = vld [vmem:[#allocation6 + $0x7a8] sm:$0xff]
    %v626 = vld [vmem:[#allocation6 + $0x7b0] sm:$0xff]
    %v627 = vld [vmem:[#allocation6 + $0x7b8] sm:$0xff]
    %v628 = vld [vmem:[#allocation6 + $0x7c0] sm:$0xff]
    %v629 = vld [vmem:[#allocation6 + $0x7c8] sm:$0xff]
    %v630 = vld [vmem:[#allocation6 + $0x7d0] sm:$0xff]
    %v631 = vld [vmem:[#allocation6 + $0x7d8] sm:$0xff]
    %v632 = vld [vmem:[#allocation6 + $0x7e0] sm:$0xff]
    %v633 = vld [vmem:[#allocation6 + $0x7e8] sm:$0xff]
    %v634 = vld [vmem:[#allocation6 + $0x7f0] sm:$0xff]
    %v635 = vld [vmem:[#allocation6 + $0x7f8] sm:$0xff]
    %v636 = vld [vmem:[#allocation6 + $0x800] sm:$0xff]
    %v637 = vld [vmem:[#allocation6 + $0x808] sm:$0xff]
    %v638 = vld [vmem:[#allocation6 + $0x810] sm:$0xff]
    %v639 = vld [vmem:[#allocation6 + $0x818] sm:$0xff]
    %v640 = vld [vmem:[#allocation6 + $0x820] sm:$0xff]
    %v641 = vld [vmem:[#allocation6 + $0x828] sm:$0xff]
    %v642 = vld [vmem:[#allocation6 + $0x830] sm:$0xff]
    %v643 = vld [vmem:[#allocation6 + $0x838] sm:$0xff]
    %v644 = vld [vmem:[#allocation6 + $0x840] sm:$0xff]
    %v645 = vld [vmem:[#allocation6 + $0x848] sm:$0xff]
    %v646 = vld [vmem:[#allocation6 + $0x850] sm:$0xff]
    %v647 = vld [vmem:[#allocation6 + $0x858] sm:$0xff]
    %v648 = vld [vmem:[#allocation6 + $0x860] sm:$0xff]
    %v649 = vld [vmem:[#allocation6 + $0x868] sm:$0xff]
    %v650 = vld [vmem:[#allocation6 + $0x870] sm:$0xff]
    %v651 = vld [vmem:[#allocation6 + $0x878] sm:$0xff]
    %v652 = vld [vmem:[#allocation6 + $0x880] sm:$0xff]
    %v653 = vld [vmem:[#allocation6 + $0x888] sm:$0xff]
    %v654 = vld [vmem:[#allocation6 + $0x890] sm:$0xff]
    %v655 = vld [vmem:[#allocation6 + $0x898] sm:$0xff]
    %v656 = vld [vmem:[#allocation6 + $0x8a0] sm:$0xff]
    %v657 = vld [vmem:[#allocation6 + $0x8a8] sm:$0xff]
    %v658 = vld [vmem:[#allocation6 + $0x8b0] sm:$0xff]
    %v659 = vld [vmem:[#allocation6 + $0x8b8] sm:$0xff]
    %v660 = vld [vmem:[#allocation6 + $0x8c0] sm:$0xff]
    %v661 = vld [vmem:[#allocation6 + $0x8c8] sm:$0xff]
    %v662 = vld [vmem:[#allocation6 + $0x8d0] sm:$0xff]
    %v663 = vld [vmem:[#allocation6 + $0x8d8] sm:$0xff]
    %v664 = vld [vmem:[#allocation6 + $0x8e0] sm:$0xff]
    %v665 = vld [vmem:[#allocation6 + $0x8e8] sm:$0xff]
    %v666 = vld [vmem:[#allocation6 + $0x8f0] sm:$0xff]
    %v667 = vld [vmem:[#allocation6 + $0x8f8] sm:$0xff]
    %v668 = vld [vmem:[#allocation6 + $0x900] sm:$0xff]
    %v669 = vld [vmem:[#allocation6 + $0x908] sm:$0xff]
    %v670 = vld [vmem:[#allocation6 + $0x910] sm:$0xff]
    %v671 = vld [vmem:[#allocation6 + $0x918] sm:$0xff]
    %v672 = vld [vmem:[#allocation6 + $0x920] sm:$0xff]
    %v673 = vld [vmem:[#allocation6 + $0x928] sm:$0xff]
    %v674 = vld [vmem:[#allocation6 + $0x930] sm:$0xff]
    %v675 = vld [vmem:[#allocation6 + $0x938] sm:$0xff]
    %v676 = vld [vmem:[#allocation6 + $0x940] sm:$0xff]
    %v677 = vld [vmem:[#allocation6 + $0x948] sm:$0xff]
    %v678 = vld [vmem:[#allocation6 + $0x950] sm:$0xff]
    %v679 = vld [vmem:[#allocation6 + $0x958] sm:$0xff]
    %v680 = vld [vmem:[#allocation6 + $0x960] sm:$0xff]
    %v681 = vld [vmem:[#allocation6 + $0x968] sm:$0xff]
    %v682 = vld [vmem:[#allocation6 + $0x970] sm:$0xff]
    %v683 = vld [vmem:[#allocation6 + $0x978] sm:$0xff]
    %v684 = vld [vmem:[#allocation6 + $0x980] sm:$0xff]
    %v685 = vld [vmem:[#allocation6 + $0x988] sm:$0xff]
    %v686 = vld [vmem:[#allocation6 + $0x990] sm:$0xff]
    %v687 = vld [vmem:[#allocation6 + $0x998] sm:$0xff]
    %v688 = vld [vmem:[#allocation6 + $0x9a0] sm:$0xff]
    %v689 = vld [vmem:[#allocation6 + $0x9a8] sm:$0xff]
    %v690 = vld [vmem:[#allocation6 + $0x9b0] sm:$0xff]
    %v691 = vld [vmem:[#allocation6 + $0x9b8] sm:$0xff]
    %v692 = vld [vmem:[#allocation6 + $0x9c0] sm:$0xff]
    %v693 = vld [vmem:[#allocation6 + $0x9c8] sm:$0xff]
    %v694 = vld [vmem:[#allocation6 + $0x9d0] sm:$0xff]
    %v695 = vld [vmem:[#allocation6 + $0x9d8] sm:$0xff]
    %v696 = vld [vmem:[#allocation6 + $0x9e0] sm:$0xff]
    %v697 = vld [vmem:[#allocation6 + $0x9e8] sm:$0xff]
    %v698 = vld [vmem:[#allocation6 + $0x9f0] sm:$0xff]
    %v699 = vld [vmem:[#allocation6 + $0x9f8] sm:$0xff]
    %v700 = vld [vmem:[#allocation6 + $0xa00] sm:$0xff]
    %v701 = vld [vmem:[#allocation6 + $0xa08] sm:$0xff]
    %v702 = vld [vmem:[#allocation6 + $0xa10] sm:$0xff]
    %v703 = vld [vmem:[#allocation6 + $0xa18] sm:$0xff]
    %v704 = vld [vmem:[#allocation6 + $0xa20] sm:$0xff]
    %v705 = vld [vmem:[#allocation6 + $0xa28] sm:$0xff]
    %v706 = vld [vmem:[#allocation6 + $0xa30] sm:$0xff]
    %v707 = vld [vmem:[#allocation6 + $0xa38] sm:$0xff]
    %v708 = vld [vmem:[#allocation6 + $0xa40] sm:$0xff]
    %v709 = vld [vmem:[#allocation6 + $0xa48] sm:$0xff]
    %v710 = vld [vmem:[#allocation6 + $0xa50] sm:$0xff]
    %v711 = vld [vmem:[#allocation6 + $0xa58] sm:$0xff]
    %v712 = vld [vmem:[#allocation6 + $0xa60] sm:$0xff]
    %v713 = vld [vmem:[#allocation6 + $0xa68] sm:$0xff]
    %v714 = vld [vmem:[#allocation6 + $0xa70] sm:$0xff]
    %v715 = vld [vmem:[#allocation6 + $0xa78] sm:$0xff]
    %v716 = vld [vmem:[#allocation6 + $0xa80] sm:$0xff]
    %v717 = vld [vmem:[#allocation6 + $0xa88] sm:$0xff]
    %v718 = vld [vmem:[#allocation6 + $0xa90] sm:$0xff]
    %v719 = vld [vmem:[#allocation6 + $0xa98] sm:$0xff]
    %v720 = vld [vmem:[#allocation6 + $0xaa0] sm:$0xff]
    %v721 = vld [vmem:[#allocation6 + $0xaa8] sm:$0xff]
    %v722 = vld [vmem:[#allocation6 + $0xab0] sm:$0xff]
    %v723 = vld [vmem:[#allocation6 + $0xab8] sm:$0xff]
    %v724 = vld [vmem:[#allocation6 + $0xac0] sm:$0xff]
    %v725 = vld [vmem:[#allocation6 + $0xac8] sm:$0xff]
    %v726 = vld [vmem:[#allocation6 + $0xad0] sm:$0xff]
    %v727 = vld [vmem:[#allocation6 + $0xad8] sm:$0xff]
    %v728 = vld [vmem:[#allocation6 + $0xae0] sm:$0xff]
    %v729 = vld [vmem:[#allocation6 + $0xae8] sm:$0xff]
    %v730 = vld [vmem:[#allocation6 + $0xaf0] sm:$0xff]
    %v731 = vld [vmem:[#allocation6 + $0xaf8] sm:$0xff]
    %v732 = vld [vmem:[#allocation6 + $0xb00] sm:$0xff]
    %v733 = vld [vmem:[#allocation6 + $0xb08] sm:$0xff]
    %v734 = vld [vmem:[#allocation6 + $0xb10] sm:$0xff]
    %v735 = vld [vmem:[#allocation6 + $0xb18] sm:$0xff]
    %v736 = vld [vmem:[#allocation6 + $0xb20] sm:$0xff]
    %v737 = vld [vmem:[#allocation6 + $0xb28] sm:$0xff]
    %v738 = vld [vmem:[#allocation6 + $0xb30] sm:$0xff]
    %v739 = vld [vmem:[#allocation6 + $0xb38] sm:$0xff]
    %v740 = vld [vmem:[#allocation6 + $0xb40] sm:$0xff]
    %v741 = vld [vmem:[#allocation6 + $0xb48] sm:$0xff]
    %v742 = vld [vmem:[#allocation6 + $0xb50] sm:$0xff]
    %v743 = vld [vmem:[#allocation6 + $0xb58] sm:$0xff]
    %v744 = vld [vmem:[#allocation6 + $0xb60] sm:$0xff]
    %v745 = vld [vmem:[#allocation6 + $0xb68] sm:$0xff]
    %v746 = vld [vmem:[#allocation6 + $0xb70] sm:$0xff]
    %v747 = vld [vmem:[#allocation6 + $0xb78] sm:$0xff]
    %v748 = vld [vmem:[#allocation6 + $0xb80] sm:$0xff]
    %v749 = vld [vmem:[#allocation6 + $0xb88] sm:$0xff]
    %v750 = vld [vmem:[#allocation6 + $0xb90] sm:$0xff]
    %v751 = vld [vmem:[#allocation6 + $0xb98] sm:$0xff]
    %v752 = vld [vmem:[#allocation6 + $0xba0] sm:$0xff]
    %v753 = vld [vmem:[#allocation6 + $0xba8] sm:$0xff]
    %v754 = vld [vmem:[#allocation6 + $0xbb0] sm:$0xff]
    %v755 = vld [vmem:[#allocation6 + $0xbb8] sm:$0xff]
    %v756 = vld [vmem:[#allocation6 + $0xbc0] sm:$0xff]
    %v757 = vld [vmem:[#allocation6 + $0xbc8] sm:$0xff]
    %v758 = vld [vmem:[#allocation6 + $0xbd0] sm:$0xff]
    %v759 = vld [vmem:[#allocation6 + $0xbd8] sm:$0xff]
    %v760 = vld [vmem:[#allocation6 + $0xbe0] sm:$0xff]
    %v761 = vld [vmem:[#allocation6 + $0xbe8] sm:$0xff]
    %v762 = vld [vmem:[#allocation6 + $0xbf0] sm:$0xff]
    %v763 = vld [vmem:[#allocation6 + $0xbf8] sm:$0xff]
    %v764 = vld [vmem:[#allocation6 + $0xc00] sm:$0xff]
    %v765 = vld [vmem:[#allocation6 + $0xc08] sm:$0xff]
    %v766 = vld [vmem:[#allocation6 + $0xc10] sm:$0xff]
    %v767 = vld [vmem:[#allocation6 + $0xc18] sm:$0xff]
    %v768 = vld [vmem:[#allocation6 + $0xc20] sm:$0xff]
    %v769 = vld [vmem:[#allocation6 + $0xc28] sm:$0xff]
    %v770 = vld [vmem:[#allocation6 + $0xc30] sm:$0xff]
    %v771 = vld [vmem:[#allocation6 + $0xc38] sm:$0xff]
    %v772 = vld [vmem:[#allocation6 + $0xc40] sm:$0xff]
    %v773 = vld [vmem:[#allocation6 + $0xc48] sm:$0xff]
    %v774 = vld [vmem:[#allocation6 + $0xc50] sm:$0xff]
    %v775 = vld [vmem:[#allocation6 + $0xc58] sm:$0xff]
    %v776 = vld [vmem:[#allocation6 + $0xc60] sm:$0xff]
    %v777 = vld [vmem:[#allocation6 + $0xc68] sm:$0xff]
    %v778 = vld [vmem:[#allocation6 + $0xc70] sm:$0xff]
    %v779 = vld [vmem:[#allocation6 + $0xc78] sm:$0xff]
    %v780 = vld [vmem:[#allocation6 + $0xc80] sm:$0xff]
    %v781 = vld [vmem:[#allocation6 + $0xc88] sm:$0xff]
    %v782 = vld [vmem:[#allocation6 + $0xc90] sm:$0xff]
    %v783 = vld [vmem:[#allocation6 + $0xc98] sm:$0xff]
    %v784 = vld [vmem:[#allocation6 + $0xca0] sm:$0xff]
    %v785 = vld [vmem:[#allocation6 + $0xca8] sm:$0xff]
    %v786 = vld [vmem:[#allocation6 + $0xcb0] sm:$0xff]
    %v787 = vld [vmem:[#allocation6 + $0xcb8] sm:$0xff]
    %v788 = vld [vmem:[#allocation6 + $0xcc0] sm:$0xff]
    %v789 = vld [vmem:[#allocation6 + $0xcc8] sm:$0xff]
    %v790 = vld [vmem:[#allocation6 + $0xcd0] sm:$0xff]
    %v791 = vld [vmem:[#allocation6 + $0xcd8] sm:$0xff]
    %v792 = vld [vmem:[#allocation6 + $0xce0] sm:$0xff]
    %v793 = vld [vmem:[#allocation6 + $0xce8] sm:$0xff]
    %v794 = vld [vmem:[#allocation6 + $0xcf0] sm:$0xff]
    %v795 = vld [vmem:[#allocation6 + $0xcf8] sm:$0xff]
    %v796 = vld [vmem:[#allocation6 + $0xd00] sm:$0xff]
    %v797 = vld [vmem:[#allocation6 + $0xd08] sm:$0xff]
    %v798 = vld [vmem:[#allocation6 + $0xd10] sm:$0xff]
    %v799 = vld [vmem:[#allocation6 + $0xd18] sm:$0xff]
    %v800 = vld [vmem:[#allocation6 + $0xd20] sm:$0xff]
    %v801 = vld [vmem:[#allocation6 + $0xd28] sm:$0xff]
    %v802 = vld [vmem:[#allocation6 + $0xd30] sm:$0xff]
    %v803 = vld [vmem:[#allocation6 + $0xd38] sm:$0xff]
    %v804 = vld [vmem:[#allocation6 + $0xd40] sm:$0xff]
    %v805 = vld [vmem:[#allocation6 + $0xd48] sm:$0xff]
    %v806 = vld [vmem:[#allocation6 + $0xd50] sm:$0xff]
    %v807 = vld [vmem:[#allocation6 + $0xd58] sm:$0xff]
    %v808 = vld [vmem:[#allocation6 + $0xd60] sm:$0xff]
    %v809 = vld [vmem:[#allocation6 + $0xd68] sm:$0xff]
    %v810 = vld [vmem:[#allocation6 + $0xd70] sm:$0xff]
    %v811 = vld [vmem:[#allocation6 + $0xd78] sm:$0xff]
    %v812 = vld [vmem:[#allocation6 + $0xd80] sm:$0xff]
    %v813 = vld [vmem:[#allocation6 + $0xd88] sm:$0xff]
    %v814 = vld [vmem:[#allocation6 + $0xd90] sm:$0xff]
    %v815 = vld [vmem:[#allocation6 + $0xd98] sm:$0xff]
    %v816 = vld [vmem:[#allocation6 + $0xda0] sm:$0xff]
    %v817 = vld [vmem:[#allocation6 + $0xda8] sm:$0xff]
    %v818 = vld [vmem:[#allocation6 + $0xdb0] sm:$0xff]
    %v819 = vld [vmem:[#allocation6 + $0xdb8] sm:$0xff]
    %v820 = vld [vmem:[#allocation6 + $0xdc0] sm:$0xff]
    %v821 = vld [vmem:[#allocation6 + $0xdc8] sm:$0xff]
    %v822 = vld [vmem:[#allocation6 + $0xdd0] sm:$0xff]
    %v823 = vld [vmem:[#allocation6 + $0xdd8] sm:$0xff]
    %v824 = vld [vmem:[#allocation6 + $0xde0] sm:$0xff]
    %v825 = vld [vmem:[#allocation6 + $0xde8] sm:$0xff]
    %v826 = vld [vmem:[#allocation6 + $0xdf0] sm:$0xff]
    %v827 = vld [vmem:[#allocation6 + $0xdf8] sm:$0xff]
    %v828 = vld [vmem:[#allocation6 + $0xe00] sm:$0xff]
    %v829 = vld [vmem:[#allocation6 + $0xe08] sm:$0xff]
    %v830 = vld [vmem:[#allocation6 + $0xe10] sm:$0xff]
    %v831 = vld [vmem:[#allocation6 + $0xe18] sm:$0xff]
    %v832 = vld [vmem:[#allocation6 + $0xe20] sm:$0xff]
    %v833 = vld [vmem:[#allocation6 + $0xe28] sm:$0xff]
    %v834 = vld [vmem:[#allocation6 + $0xe30] sm:$0xff]
    %v835 = vld [vmem:[#allocation6 + $0xe38] sm:$0xff]
    %v836 = vld [vmem:[#allocation6 + $0xe40] sm:$0xff]
    %v837 = vld [vmem:[#allocation6 + $0xe48] sm:$0xff]
    %v838 = vld [vmem:[#allocation6 + $0xe50] sm:$0xff]
    %v839 = vld [vmem:[#allocation6 + $0xe58] sm:$0xff]
    %v840 = vld [vmem:[#allocation6 + $0xe60] sm:$0xff]
    %v841 = vld [vmem:[#allocation6 + $0xe68] sm:$0xff]
    %v842 = vld [vmem:[#allocation6 + $0xe70] sm:$0xff]
    %v843 = vld [vmem:[#allocation6 + $0xe78] sm:$0xff]
    %v844 = vld [vmem:[#allocation6 + $0xe80] sm:$0xff]
    %v845 = vld [vmem:[#allocation6 + $0xe88] sm:$0xff]
    %v846 = vld [vmem:[#allocation6 + $0xe90] sm:$0xff]
    %v847 = vld [vmem:[#allocation6 + $0xe98] sm:$0xff]
    %v848 = vld [vmem:[#allocation6 + $0xea0] sm:$0xff]
    %v849 = vld [vmem:[#allocation6 + $0xea8] sm:$0xff]
    %v850 = vld [vmem:[#allocation6 + $0xeb0] sm:$0xff]
    %v851 = vld [vmem:[#allocation6 + $0xeb8] sm:$0xff]
    %v852 = vld [vmem:[#allocation6 + $0xec0] sm:$0xff]
    %v853 = vld [vmem:[#allocation6 + $0xec8] sm:$0xff]
    %v854 = vld [vmem:[#allocation6 + $0xed0] sm:$0xff]
    %v855 = vld [vmem:[#allocation6 + $0xed8] sm:$0xff]
    %v856 = vld [vmem:[#allocation6 + $0xee0] sm:$0xff]
    %v857 = vld [vmem:[#allocation6 + $0xee8] sm:$0xff]
    %v858 = vld [vmem:[#allocation6 + $0xef0] sm:$0xff]
    %v859 = vld [vmem:[#allocation6 + $0xef8] sm:$0xff]
    %v860 = vld [vmem:[#allocation6 + $0xf00] sm:$0xff]
    %v861 = vld [vmem:[#allocation6 + $0xf08] sm:$0xff]
    %v862 = vld [vmem:[#allocation6 + $0xf10] sm:$0xff]
    %v863 = vld [vmem:[#allocation6 + $0xf18] sm:$0xff]
    %v864 = vld [vmem:[#allocation6 + $0xf20] sm:$0xff]
    %v865 = vld [vmem:[#allocation6 + $0xf28] sm:$0xff]
    %v866 = vld [vmem:[#allocation6 + $0xf30] sm:$0xff]
    %v867 = vld [vmem:[#allocation6 + $0xf38] sm:$0xff]
    %v868 = vld [vmem:[#allocation6 + $0xf40] sm:$0xff]
    %v869 = vld [vmem:[#allocation6 + $0xf48] sm:$0xff]
    %v870 = vld [vmem:[#allocation6 + $0xf50] sm:$0xff]
    %v871 = vld [vmem:[#allocation6 + $0xf58] sm:$0xff]
    %v872 = vld [vmem:[#allocation6 + $0xf60] sm:$0xff]
    %v873 = vld [vmem:[#allocation6 + $0xf68] sm:$0xff]
    %v874 = vld [vmem:[#allocation6 + $0xf70] sm:$0xff]
    %v875 = vld [vmem:[#allocation6 + $0xf78] sm:$0xff]
    %v876 = vld [vmem:[#allocation6 + $0xf80] sm:$0xff]
    %v877 = vld [vmem:[#allocation6 + $0xf88] sm:$0xff]
    %v878 = vld [vmem:[#allocation6 + $0xf90] sm:$0xff]
    %v879 = vld [vmem:[#allocation6 + $0xf98] sm:$0xff]
    %v880 = vld [vmem:[#allocation6 + $0xfa0] sm:$0xff]
    %v881 = vld [vmem:[#allocation6 + $0xfa8] sm:$0xff]
    %v882 = vld [vmem:[#allocation6 + $0xfb0] sm:$0xff]
    %v883 = vld [vmem:[#allocation6 + $0xfb8] sm:$0xff]
    %v884 = vld [vmem:[#allocation6 + $0xfc0] sm:$0xff]
    %v885 = vld [vmem:[#allocation6 + $0xfc8] sm:$0xff]
    %v886 = vld [vmem:[#allocation6 + $0xfd0] sm:$0xff]
    %v887 = vld [vmem:[#allocation6 + $0xfd8] sm:$0xff]
    %v888 = vld [vmem:[#allocation6 + $0xfe0] sm:$0xff]
    %v889 = vld [vmem:[#allocation6 + $0xfe8] sm:$0xff]
    %v890 = vld [vmem:[#allocation6 + $0xff0] sm:$0xff]
    %v891 = vld [vmem:[#allocation6 + $0xff8] sm:$0xff]
    %v892 = vld [vmem:[#allocation7] sm:$0xff]
    %v894 = vlaneseq
    %v895 = vshrl.u32 %v894, 7
    %v896 = vsub.s32 0, %v895
    %v897 = vrot.slane %v892, %v896
    %v898 = vlaneseq
    %v899 = vshrl.u32 %v898, 7
    %v900 = vsub.s32 1, %v899
    %v901 = vrot.slane %v892, %v900
    %v902 = vlaneseq
    %v903 = vshrl.u32 %v902, 7
    %v904 = vsub.s32 2, %v903
    %v905 = vrot.slane %v892, %v904
    %v906 = vlaneseq
    %v907 = vshrl.u32 %v906, 7
    %v908 = vsub.s32 3, %v907
    %v909 = vrot.slane %v892, %v908
    %v910 = vlaneseq
    %v911 = vshrl.u32 %v910, 7
    %v912 = vsub.s32 4, %v911
    %v913 = vrot.slane %v892, %v912
    %v914 = vlaneseq
    %v915 = vshrl.u32 %v914, 7
    %v916 = vsub.s32 5, %v915
    %v917 = vrot.slane %v892, %v916
    %v918 = vlaneseq
    %v919 = vshrl.u32 %v918, 7
    %v920 = vsub.s32 6, %v919
    %v921 = vrot.slane %v892, %v920
    %v922 = vlaneseq
    %v923 = vshrl.u32 %v922, 7
    %v924 = vsub.s32 7, %v923
    %v925 = vrot.slane %v892, %v924
    %v1446 = vunpack.c.l.b16 %v380
    %v1447 = vunpack.c.h.b16 %v380
    %v1448 = vunpack.c.l.b16 %v381
    %v1449 = vunpack.c.h.b16 %v381
    %v1450 = vunpack.c.l.b16 %v382
    %v1451 = vunpack.c.h.b16 %v382
    %v1452 = vunpack.c.l.b16 %v383
    %v1453 = vunpack.c.h.b16 %v383
    %v1454 = vunpack.c.l.b16 %v384
    %v1455 = vunpack.c.h.b16 %v384
    %v1456 = vunpack.c.l.b16 %v385
    %v1457 = vunpack.c.h.b16 %v385
    %v1458 = vunpack.c.l.b16 %v386
    %v1459 = vunpack.c.h.b16 %v386
    %v1460 = vunpack.c.l.b16 %v387
    %v1461 = vunpack.c.h.b16 %v387
    %v1462 = vunpack.c.l.b16 %v388
    %v1463 = vunpack.c.h.b16 %v388
    %v1464 = vunpack.c.l.b16 %v389
    %v1465 = vunpack.c.h.b16 %v389
    %v1466 = vunpack.c.l.b16 %v390
    %v1467 = vunpack.c.h.b16 %v390
    %v1468 = vunpack.c.l.b16 %v391
    %v1469 = vunpack.c.h.b16 %v391
    %v1470 = vunpack.c.l.b16 %v392
    %v1471 = vunpack.c.h.b16 %v392
    %v1472 = vunpack.c.l.b16 %v393
    %v1473 = vunpack.c.h.b16 %v393
    %v1474 = vunpack.c.l.b16 %v394
    %v1475 = vunpack.c.h.b16 %v394
    %v1476 = vunpack.c.l.b16 %v395
    %v1477 = vunpack.c.h.b16 %v395
    %v1478 = vunpack.c.l.b16 %v396
    %v1479 = vunpack.c.h.b16 %v396
    %v1480 = vunpack.c.l.b16 %v397
    %v1481 = vunpack.c.h.b16 %v397
    %v1482 = vunpack.c.l.b16 %v398
    %v1483 = vunpack.c.h.b16 %v398
    %v1484 = vunpack.c.l.b16 %v399
    %v1485 = vunpack.c.h.b16 %v399
    %v1486 = vunpack.c.l.b16 %v400
    %v1487 = vunpack.c.h.b16 %v400
    %v1488 = vunpack.c.l.b16 %v401
    %v1489 = vunpack.c.h.b16 %v401
    %v1490 = vunpack.c.l.b16 %v402
    %v1491 = vunpack.c.h.b16 %v402
    %v1492 = vunpack.c.l.b16 %v403
    %v1493 = vunpack.c.h.b16 %v403
    %v1494 = vunpack.c.l.b16 %v404
    %v1495 = vunpack.c.h.b16 %v404
    %v1496 = vunpack.c.l.b16 %v405
    %v1497 = vunpack.c.h.b16 %v405
    %v1498 = vunpack.c.l.b16 %v406
    %v1499 = vunpack.c.h.b16 %v406
    %v1500 = vunpack.c.l.b16 %v407
    %v1501 = vunpack.c.h.b16 %v407
    %v1502 = vunpack.c.l.b16 %v408
    %v1503 = vunpack.c.h.b16 %v408
    %v1504 = vunpack.c.l.b16 %v409
    %v1505 = vunpack.c.h.b16 %v409
    %v1506 = vunpack.c.l.b16 %v410
    %v1507 = vunpack.c.h.b16 %v410
    %v1508 = vunpack.c.l.b16 %v411
    %v1509 = vunpack.c.h.b16 %v411
    %v1510 = vunpack.c.l.b16 %v412
    %v1511 = vunpack.c.h.b16 %v412
    %v1512 = vunpack.c.l.b16 %v413
    %v1513 = vunpack.c.h.b16 %v413
    %v1514 = vunpack.c.l.b16 %v414
    %v1515 = vunpack.c.h.b16 %v414
    %v1516 = vunpack.c.l.b16 %v415
    %v1517 = vunpack.c.h.b16 %v415
    %v1518 = vunpack.c.l.b16 %v416
    %v1519 = vunpack.c.h.b16 %v416
    %v1520 = vunpack.c.l.b16 %v417
    %v1521 = vunpack.c.h.b16 %v417
    %v1522 = vunpack.c.l.b16 %v418
    %v1523 = vunpack.c.h.b16 %v418
    %v1524 = vunpack.c.l.b16 %v419
    %v1525 = vunpack.c.h.b16 %v419
    %v1526 = vunpack.c.l.b16 %v420
    %v1527 = vunpack.c.h.b16 %v420
    %v1528 = vunpack.c.l.b16 %v421
    %v1529 = vunpack.c.h.b16 %v421
    %v1530 = vunpack.c.l.b16 %v422
    %v1531 = vunpack.c.h.b16 %v422
    %v1532 = vunpack.c.l.b16 %v423
    %v1533 = vunpack.c.h.b16 %v423
    %v1534 = vunpack.c.l.b16 %v424
    %v1535 = vunpack.c.h.b16 %v424
    %v1536 = vunpack.c.l.b16 %v425
    %v1537 = vunpack.c.h.b16 %v425
    %v1538 = vunpack.c.l.b16 %v426
    %v1539 = vunpack.c.h.b16 %v426
    %v1540 = vunpack.c.l.b16 %v427
    %v1541 = vunpack.c.h.b16 %v427
    %v1542 = vunpack.c.l.b16 %v428
    %v1543 = vunpack.c.h.b16 %v428
    %v1544 = vunpack.c.l.b16 %v429
    %v1545 = vunpack.c.h.b16 %v429
    %v1546 = vunpack.c.l.b16 %v430
    %v1547 = vunpack.c.h.b16 %v430
    %v1548 = vunpack.c.l.b16 %v431
    %v1549 = vunpack.c.h.b16 %v431
    %v1550 = vunpack.c.l.b16 %v432
    %v1551 = vunpack.c.h.b16 %v432
    %v1552 = vunpack.c.l.b16 %v433
    %v1553 = vunpack.c.h.b16 %v433
    %v1554 = vunpack.c.l.b16 %v434
    %v1555 = vunpack.c.h.b16 %v434
    %v1556 = vunpack.c.l.b16 %v435
    %v1557 = vunpack.c.h.b16 %v435
    %v1558 = vunpack.c.l.b16 %v436
    %v1559 = vunpack.c.h.b16 %v436
    %v1560 = vunpack.c.l.b16 %v437
    %v1561 = vunpack.c.h.b16 %v437
    %v1562 = vunpack.c.l.b16 %v438
    %v1563 = vunpack.c.h.b16 %v438
    %v1564 = vunpack.c.l.b16 %v439
    %v1565 = vunpack.c.h.b16 %v439
    %v1566 = vunpack.c.l.b16 %v440
    %v1567 = vunpack.c.h.b16 %v440
    %v1568 = vunpack.c.l.b16 %v441
    %v1569 = vunpack.c.h.b16 %v441
    %v1570 = vunpack.c.l.b16 %v442
    %v1571 = vunpack.c.h.b16 %v442
    %v1572 = vunpack.c.l.b16 %v443
    %v1573 = vunpack.c.h.b16 %v443
    %v1574 = vunpack.c.l.b16 %v444
    %v1575 = vunpack.c.h.b16 %v444
    %v1576 = vunpack.c.l.b16 %v445
    %v1577 = vunpack.c.h.b16 %v445
    %v1578 = vunpack.c.l.b16 %v446
    %v1579 = vunpack.c.h.b16 %v446
    %v1580 = vunpack.c.l.b16 %v447
    %v1581 = vunpack.c.h.b16 %v447
    %v1582 = vunpack.c.l.b16 %v448
    %v1583 = vunpack.c.h.b16 %v448
    %v1584 = vunpack.c.l.b16 %v449
    %v1585 = vunpack.c.h.b16 %v449
    %v1586 = vunpack.c.l.b16 %v450
    %v1587 = vunpack.c.h.b16 %v450
    %v1588 = vunpack.c.l.b16 %v451
    %v1589 = vunpack.c.h.b16 %v451
    %v1590 = vunpack.c.l.b16 %v452
    %v1591 = vunpack.c.h.b16 %v452
    %v1592 = vunpack.c.l.b16 %v453
    %v1593 = vunpack.c.h.b16 %v453
    %v1594 = vunpack.c.l.b16 %v454
    %v1595 = vunpack.c.h.b16 %v454
    %v1596 = vunpack.c.l.b16 %v455
    %v1597 = vunpack.c.h.b16 %v455
    %v1598 = vunpack.c.l.b16 %v456
    %v1599 = vunpack.c.h.b16 %v456
    %v1600 = vunpack.c.l.b16 %v457
    %v1601 = vunpack.c.h.b16 %v457
    %v1602 = vunpack.c.l.b16 %v458
    %v1603 = vunpack.c.h.b16 %v458
    %v1604 = vunpack.c.l.b16 %v459
    %v1605 = vunpack.c.h.b16 %v459
    %v1606 = vunpack.c.l.b16 %v460
    %v1607 = vunpack.c.h.b16 %v460
    %v1608 = vunpack.c.l.b16 %v461
    %v1609 = vunpack.c.h.b16 %v461
    %v1610 = vunpack.c.l.b16 %v462
    %v1611 = vunpack.c.h.b16 %v462
    %v1612 = vunpack.c.l.b16 %v463
    %v1613 = vunpack.c.h.b16 %v463
    %v1614 = vunpack.c.l.b16 %v464
    %v1615 = vunpack.c.h.b16 %v464
    %v1616 = vunpack.c.l.b16 %v465
    %v1617 = vunpack.c.h.b16 %v465
    %v1618 = vunpack.c.l.b16 %v466
    %v1619 = vunpack.c.h.b16 %v466
    %v1620 = vunpack.c.l.b16 %v467
    %v1621 = vunpack.c.h.b16 %v467
    %v1622 = vunpack.c.l.b16 %v468
    %v1623 = vunpack.c.h.b16 %v468
    %v1624 = vunpack.c.l.b16 %v469
    %v1625 = vunpack.c.h.b16 %v469
    %v1626 = vunpack.c.l.b16 %v470
    %v1627 = vunpack.c.h.b16 %v470
    %v1628 = vunpack.c.l.b16 %v471
    %v1629 = vunpack.c.h.b16 %v471
    %v1630 = vunpack.c.l.b16 %v472
    %v1631 = vunpack.c.h.b16 %v472
    %v1632 = vunpack.c.l.b16 %v473
    %v1633 = vunpack.c.h.b16 %v473
    %v1634 = vunpack.c.l.b16 %v474
    %v1635 = vunpack.c.h.b16 %v474
    %v1636 = vunpack.c.l.b16 %v475
    %v1637 = vunpack.c.h.b16 %v475
    %v1638 = vunpack.c.l.b16 %v476
    %v1639 = vunpack.c.h.b16 %v476
    %v1640 = vunpack.c.l.b16 %v477
    %v1641 = vunpack.c.h.b16 %v477
    %v1642 = vunpack.c.l.b16 %v478
    %v1643 = vunpack.c.h.b16 %v478
    %v1644 = vunpack.c.l.b16 %v479
    %v1645 = vunpack.c.h.b16 %v479
    %v1646 = vunpack.c.l.b16 %v480
    %v1647 = vunpack.c.h.b16 %v480
    %v1648 = vunpack.c.l.b16 %v481
    %v1649 = vunpack.c.h.b16 %v481
    %v1650 = vunpack.c.l.b16 %v482
    %v1651 = vunpack.c.h.b16 %v482
    %v1652 = vunpack.c.l.b16 %v483
    %v1653 = vunpack.c.h.b16 %v483
    %v1654 = vunpack.c.l.b16 %v484
    %v1655 = vunpack.c.h.b16 %v484
    %v1656 = vunpack.c.l.b16 %v485
    %v1657 = vunpack.c.h.b16 %v485
    %v1658 = vunpack.c.l.b16 %v486
    %v1659 = vunpack.c.h.b16 %v486
    %v1660 = vunpack.c.l.b16 %v487
    %v1661 = vunpack.c.h.b16 %v487
    %v1662 = vunpack.c.l.b16 %v488
    %v1663 = vunpack.c.h.b16 %v488
    %v1664 = vunpack.c.l.b16 %v489
    %v1665 = vunpack.c.h.b16 %v489
    %v1666 = vunpack.c.l.b16 %v490
    %v1667 = vunpack.c.h.b16 %v490
    %v1668 = vunpack.c.l.b16 %v491
    %v1669 = vunpack.c.h.b16 %v491
    %v1670 = vunpack.c.l.b16 %v492
    %v1671 = vunpack.c.h.b16 %v492
    %v1672 = vunpack.c.l.b16 %v493
    %v1673 = vunpack.c.h.b16 %v493
    %v1674 = vunpack.c.l.b16 %v494
    %v1675 = vunpack.c.h.b16 %v494
    %v1676 = vunpack.c.l.b16 %v495
    %v1677 = vunpack.c.h.b16 %v495
    %v1678 = vunpack.c.l.b16 %v496
    %v1679 = vunpack.c.h.b16 %v496
    %v1680 = vunpack.c.l.b16 %v497
    %v1681 = vunpack.c.h.b16 %v497
    %v1682 = vunpack.c.l.b16 %v498
    %v1683 = vunpack.c.h.b16 %v498
    %v1684 = vunpack.c.l.b16 %v499
    %v1685 = vunpack.c.h.b16 %v499
    %v1686 = vunpack.c.l.b16 %v500
    %v1687 = vunpack.c.h.b16 %v500
    %v1688 = vunpack.c.l.b16 %v501
    %v1689 = vunpack.c.h.b16 %v501
    %v1690 = vunpack.c.l.b16 %v502
    %v1691 = vunpack.c.h.b16 %v502
    %v1692 = vunpack.c.l.b16 %v503
    %v1693 = vunpack.c.h.b16 %v503
    %v1694 = vunpack.c.l.b16 %v504
    %v1695 = vunpack.c.h.b16 %v504
    %v1696 = vunpack.c.l.b16 %v505
    %v1697 = vunpack.c.h.b16 %v505
    %v1698 = vunpack.c.l.b16 %v506
    %v1699 = vunpack.c.h.b16 %v506
    %v1700 = vunpack.c.l.b16 %v507
    %v1701 = vunpack.c.h.b16 %v507
    %v1702 = vunpack.c.l.b16 %v508
    %v1703 = vunpack.c.h.b16 %v508
    %v1704 = vunpack.c.l.b16 %v509
    %v1705 = vunpack.c.h.b16 %v509
    %v1706 = vunpack.c.l.b16 %v510
    %v1707 = vunpack.c.h.b16 %v510
    %v1708 = vunpack.c.l.b16 %v511
    %v1709 = vunpack.c.h.b16 %v511
    %v1710 = vunpack.c.l.b16 %v512
    %v1711 = vunpack.c.h.b16 %v512
    %v1712 = vunpack.c.l.b16 %v513
    %v1713 = vunpack.c.h.b16 %v513
    %v1714 = vunpack.c.l.b16 %v514
    %v1715 = vunpack.c.h.b16 %v514
    %v1716 = vunpack.c.l.b16 %v515
    %v1717 = vunpack.c.h.b16 %v515
    %v1718 = vunpack.c.l.b16 %v516
    %v1719 = vunpack.c.h.b16 %v516
    %v1720 = vunpack.c.l.b16 %v517
    %v1721 = vunpack.c.h.b16 %v517
    %v1722 = vunpack.c.l.b16 %v518
    %v1723 = vunpack.c.h.b16 %v518
    %v1724 = vunpack.c.l.b16 %v519
    %v1725 = vunpack.c.h.b16 %v519
    %v1726 = vunpack.c.l.b16 %v520
    %v1727 = vunpack.c.h.b16 %v520
    %v1728 = vunpack.c.l.b16 %v521
    %v1729 = vunpack.c.h.b16 %v521
    %v1730 = vunpack.c.l.b16 %v522
    %v1731 = vunpack.c.h.b16 %v522
    %v1732 = vunpack.c.l.b16 %v523
    %v1733 = vunpack.c.h.b16 %v523
    %v1734 = vunpack.c.l.b16 %v524
    %v1735 = vunpack.c.h.b16 %v524
    %v1736 = vunpack.c.l.b16 %v525
    %v1737 = vunpack.c.h.b16 %v525
    %v1738 = vunpack.c.l.b16 %v526
    %v1739 = vunpack.c.h.b16 %v526
    %v1740 = vunpack.c.l.b16 %v527
    %v1741 = vunpack.c.h.b16 %v527
    %v1742 = vunpack.c.l.b16 %v528
    %v1743 = vunpack.c.h.b16 %v528
    %v1744 = vunpack.c.l.b16 %v529
    %v1745 = vunpack.c.h.b16 %v529
    %v1746 = vunpack.c.l.b16 %v530
    %v1747 = vunpack.c.h.b16 %v530
    %v1748 = vunpack.c.l.b16 %v531
    %v1749 = vunpack.c.h.b16 %v531
    %v1750 = vunpack.c.l.b16 %v532
    %v1751 = vunpack.c.h.b16 %v532
    %v1752 = vunpack.c.l.b16 %v533
    %v1753 = vunpack.c.h.b16 %v533
    %v1754 = vunpack.c.l.b16 %v534
    %v1755 = vunpack.c.h.b16 %v534
    %v1756 = vunpack.c.l.b16 %v535
    %v1757 = vunpack.c.h.b16 %v535
    %v1758 = vunpack.c.l.b16 %v536
    %v1759 = vunpack.c.h.b16 %v536
    %v1760 = vunpack.c.l.b16 %v537
    %v1761 = vunpack.c.h.b16 %v537
    %v1762 = vunpack.c.l.b16 %v538
    %v1763 = vunpack.c.h.b16 %v538
    %v1764 = vunpack.c.l.b16 %v539
    %v1765 = vunpack.c.h.b16 %v539
    %v1766 = vunpack.c.l.b16 %v540
    %v1767 = vunpack.c.h.b16 %v540
    %v1768 = vunpack.c.l.b16 %v541
    %v1769 = vunpack.c.h.b16 %v541
    %v1770 = vunpack.c.l.b16 %v542
    %v1771 = vunpack.c.h.b16 %v542
    %v1772 = vunpack.c.l.b16 %v543
    %v1773 = vunpack.c.h.b16 %v543
    %v1774 = vunpack.c.l.b16 %v544
    %v1775 = vunpack.c.h.b16 %v544
    %v1776 = vunpack.c.l.b16 %v545
    %v1777 = vunpack.c.h.b16 %v545
    %v1778 = vunpack.c.l.b16 %v546
    %v1779 = vunpack.c.h.b16 %v546
    %v1780 = vunpack.c.l.b16 %v547
    %v1781 = vunpack.c.h.b16 %v547
    %v1782 = vunpack.c.l.b16 %v548
    %v1783 = vunpack.c.h.b16 %v548
    %v1784 = vunpack.c.l.b16 %v549
    %v1785 = vunpack.c.h.b16 %v549
    %v1786 = vunpack.c.l.b16 %v550
    %v1787 = vunpack.c.h.b16 %v550
    %v1788 = vunpack.c.l.b16 %v551
    %v1789 = vunpack.c.h.b16 %v551
    %v1790 = vunpack.c.l.b16 %v552
    %v1791 = vunpack.c.h.b16 %v552
    %v1792 = vunpack.c.l.b16 %v553
    %v1793 = vunpack.c.h.b16 %v553
    %v1794 = vunpack.c.l.b16 %v554
    %v1795 = vunpack.c.h.b16 %v554
    %v1796 = vunpack.c.l.b16 %v555
    %v1797 = vunpack.c.h.b16 %v555
    %v1798 = vunpack.c.l.b16 %v556
    %v1799 = vunpack.c.h.b16 %v556
    %v1800 = vunpack.c.l.b16 %v557
    %v1801 = vunpack.c.h.b16 %v557
    %v1802 = vunpack.c.l.b16 %v558
    %v1803 = vunpack.c.h.b16 %v558
    %v1804 = vunpack.c.l.b16 %v559
    %v1805 = vunpack.c.h.b16 %v559
    %v1806 = vunpack.c.l.b16 %v560
    %v1807 = vunpack.c.h.b16 %v560
    %v1808 = vunpack.c.l.b16 %v561
    %v1809 = vunpack.c.h.b16 %v561
    %v1810 = vunpack.c.l.b16 %v562
    %v1811 = vunpack.c.h.b16 %v562
    %v1812 = vunpack.c.l.b16 %v563
    %v1813 = vunpack.c.h.b16 %v563
    %v1814 = vunpack.c.l.b16 %v564
    %v1815 = vunpack.c.h.b16 %v564
    %v1816 = vunpack.c.l.b16 %v565
    %v1817 = vunpack.c.h.b16 %v565
    %v1818 = vunpack.c.l.b16 %v566
    %v1819 = vunpack.c.h.b16 %v566
    %v1820 = vunpack.c.l.b16 %v567
    %v1821 = vunpack.c.h.b16 %v567
    %v1822 = vunpack.c.l.b16 %v568
    %v1823 = vunpack.c.h.b16 %v568
    %v1824 = vunpack.c.l.b16 %v569
    %v1825 = vunpack.c.h.b16 %v569
    %v1826 = vunpack.c.l.b16 %v570
    %v1827 = vunpack.c.h.b16 %v570
    %v1828 = vunpack.c.l.b16 %v571
    %v1829 = vunpack.c.h.b16 %v571
    %v1830 = vunpack.c.l.b16 %v572
    %v1831 = vunpack.c.h.b16 %v572
    %v1832 = vunpack.c.l.b16 %v573
    %v1833 = vunpack.c.h.b16 %v573
    %v1834 = vunpack.c.l.b16 %v574
    %v1835 = vunpack.c.h.b16 %v574
    %v1836 = vunpack.c.l.b16 %v575
    %v1837 = vunpack.c.h.b16 %v575
    %v1838 = vunpack.c.l.b16 %v576
    %v1839 = vunpack.c.h.b16 %v576
    %v1840 = vunpack.c.l.b16 %v577
    %v1841 = vunpack.c.h.b16 %v577
    %v1842 = vunpack.c.l.b16 %v578
    %v1843 = vunpack.c.h.b16 %v578
    %v1844 = vunpack.c.l.b16 %v579
    %v1845 = vunpack.c.h.b16 %v579
    %v1846 = vunpack.c.l.b16 %v580
    %v1847 = vunpack.c.h.b16 %v580
    %v1848 = vunpack.c.l.b16 %v581
    %v1849 = vunpack.c.h.b16 %v581
    %v1850 = vunpack.c.l.b16 %v582
    %v1851 = vunpack.c.h.b16 %v582
    %v1852 = vunpack.c.l.b16 %v583
    %v1853 = vunpack.c.h.b16 %v583
    %v1854 = vunpack.c.l.b16 %v584
    %v1855 = vunpack.c.h.b16 %v584
    %v1856 = vunpack.c.l.b16 %v585
    %v1857 = vunpack.c.h.b16 %v585
    %v1858 = vunpack.c.l.b16 %v586
    %v1859 = vunpack.c.h.b16 %v586
    %v1860 = vunpack.c.l.b16 %v587
    %v1861 = vunpack.c.h.b16 %v587
    %v1862 = vunpack.c.l.b16 %v588
    %v1863 = vunpack.c.h.b16 %v588
    %v1864 = vunpack.c.l.b16 %v589
    %v1865 = vunpack.c.h.b16 %v589
    %v1866 = vunpack.c.l.b16 %v590
    %v1867 = vunpack.c.h.b16 %v590
    %v1868 = vunpack.c.l.b16 %v591
    %v1869 = vunpack.c.h.b16 %v591
    %v1870 = vunpack.c.l.b16 %v592
    %v1871 = vunpack.c.h.b16 %v592
    %v1872 = vunpack.c.l.b16 %v593
    %v1873 = vunpack.c.h.b16 %v593
    %v1874 = vunpack.c.l.b16 %v594
    %v1875 = vunpack.c.h.b16 %v594
    %v1876 = vunpack.c.l.b16 %v595
    %v1877 = vunpack.c.h.b16 %v595
    %v1878 = vunpack.c.l.b16 %v596
    %v1879 = vunpack.c.h.b16 %v596
    %v1880 = vunpack.c.l.b16 %v597
    %v1881 = vunpack.c.h.b16 %v597
    %v1882 = vunpack.c.l.b16 %v598
    %v1883 = vunpack.c.h.b16 %v598
    %v1884 = vunpack.c.l.b16 %v599
    %v1885 = vunpack.c.h.b16 %v599
    %v1886 = vunpack.c.l.b16 %v600
    %v1887 = vunpack.c.h.b16 %v600
    %v1888 = vunpack.c.l.b16 %v601
    %v1889 = vunpack.c.h.b16 %v601
    %v1890 = vunpack.c.l.b16 %v602
    %v1891 = vunpack.c.h.b16 %v602
    %v1892 = vunpack.c.l.b16 %v603
    %v1893 = vunpack.c.h.b16 %v603
    %v1894 = vunpack.c.l.b16 %v604
    %v1895 = vunpack.c.h.b16 %v604
    %v1896 = vunpack.c.l.b16 %v605
    %v1897 = vunpack.c.h.b16 %v605
    %v1898 = vunpack.c.l.b16 %v606
    %v1899 = vunpack.c.h.b16 %v606
    %v1900 = vunpack.c.l.b16 %v607
    %v1901 = vunpack.c.h.b16 %v607
    %v1902 = vunpack.c.l.b16 %v608
    %v1903 = vunpack.c.h.b16 %v608
    %v1904 = vunpack.c.l.b16 %v609
    %v1905 = vunpack.c.h.b16 %v609
    %v1906 = vunpack.c.l.b16 %v610
    %v1907 = vunpack.c.h.b16 %v610
    %v1908 = vunpack.c.l.b16 %v611
    %v1909 = vunpack.c.h.b16 %v611
    %v1910 = vunpack.c.l.b16 %v612
    %v1911 = vunpack.c.h.b16 %v612
    %v1912 = vunpack.c.l.b16 %v613
    %v1913 = vunpack.c.h.b16 %v613
    %v1914 = vunpack.c.l.b16 %v614
    %v1915 = vunpack.c.h.b16 %v614
    %v1916 = vunpack.c.l.b16 %v615
    %v1917 = vunpack.c.h.b16 %v615
    %v1918 = vunpack.c.l.b16 %v616
    %v1919 = vunpack.c.h.b16 %v616
    %v1920 = vunpack.c.l.b16 %v617
    %v1921 = vunpack.c.h.b16 %v617
    %v1922 = vunpack.c.l.b16 %v618
    %v1923 = vunpack.c.h.b16 %v618
    %v1924 = vunpack.c.l.b16 %v619
    %v1925 = vunpack.c.h.b16 %v619
    %v1926 = vunpack.c.l.b16 %v620
    %v1927 = vunpack.c.h.b16 %v620
    %v1928 = vunpack.c.l.b16 %v621
    %v1929 = vunpack.c.h.b16 %v621
    %v1930 = vunpack.c.l.b16 %v622
    %v1931 = vunpack.c.h.b16 %v622
    %v1932 = vunpack.c.l.b16 %v623
    %v1933 = vunpack.c.h.b16 %v623
    %v1934 = vunpack.c.l.b16 %v624
    %v1935 = vunpack.c.h.b16 %v624
    %v1936 = vunpack.c.l.b16 %v625
    %v1937 = vunpack.c.h.b16 %v625
    %v1938 = vunpack.c.l.b16 %v626
    %v1939 = vunpack.c.h.b16 %v626
    %v1940 = vunpack.c.l.b16 %v627
    %v1941 = vunpack.c.h.b16 %v627
    %v1942 = vunpack.c.l.b16 %v628
    %v1943 = vunpack.c.h.b16 %v628
    %v1944 = vunpack.c.l.b16 %v629
    %v1945 = vunpack.c.h.b16 %v629
    %v1946 = vunpack.c.l.b16 %v630
    %v1947 = vunpack.c.h.b16 %v630
    %v1948 = vunpack.c.l.b16 %v631
    %v1949 = vunpack.c.h.b16 %v631
    %v1950 = vunpack.c.l.b16 %v632
    %v1951 = vunpack.c.h.b16 %v632
    %v1952 = vunpack.c.l.b16 %v633
    %v1953 = vunpack.c.h.b16 %v633
    %v1954 = vunpack.c.l.b16 %v634
    %v1955 = vunpack.c.h.b16 %v634
    %v1956 = vunpack.c.l.b16 %v635
    %v1957 = vunpack.c.h.b16 %v635
    %v1958 = vunpack.c.l.b16 %v636
    %v1959 = vunpack.c.h.b16 %v636
    %v1960 = vunpack.c.l.b16 %v637
    %v1961 = vunpack.c.h.b16 %v637
    %v1962 = vunpack.c.l.b16 %v638
    %v1963 = vunpack.c.h.b16 %v638
    %v1964 = vunpack.c.l.b16 %v639
    %v1965 = vunpack.c.h.b16 %v639
    %v1966 = vunpack.c.l.b16 %v640
    %v1967 = vunpack.c.h.b16 %v640
    %v1968 = vunpack.c.l.b16 %v641
    %v1969 = vunpack.c.h.b16 %v641
    %v1970 = vunpack.c.l.b16 %v642
    %v1971 = vunpack.c.h.b16 %v642
    %v1972 = vunpack.c.l.b16 %v643
    %v1973 = vunpack.c.h.b16 %v643
    %v1974 = vunpack.c.l.b16 %v644
    %v1975 = vunpack.c.h.b16 %v644
    %v1976 = vunpack.c.l.b16 %v645
    %v1977 = vunpack.c.h.b16 %v645
    %v1978 = vunpack.c.l.b16 %v646
    %v1979 = vunpack.c.h.b16 %v646
    %v1980 = vunpack.c.l.b16 %v647
    %v1981 = vunpack.c.h.b16 %v647
    %v1982 = vunpack.c.l.b16 %v648
    %v1983 = vunpack.c.h.b16 %v648
    %v1984 = vunpack.c.l.b16 %v649
    %v1985 = vunpack.c.h.b16 %v649
    %v1986 = vunpack.c.l.b16 %v650
    %v1987 = vunpack.c.h.b16 %v650
    %v1988 = vunpack.c.l.b16 %v651
    %v1989 = vunpack.c.h.b16 %v651
    %v1990 = vunpack.c.l.b16 %v652
    %v1991 = vunpack.c.h.b16 %v652
    %v1992 = vunpack.c.l.b16 %v653
    %v1993 = vunpack.c.h.b16 %v653
    %v1994 = vunpack.c.l.b16 %v654
    %v1995 = vunpack.c.h.b16 %v654
    %v1996 = vunpack.c.l.b16 %v655
    %v1997 = vunpack.c.h.b16 %v655
    %v1998 = vunpack.c.l.b16 %v656
    %v1999 = vunpack.c.h.b16 %v656
    %v2000 = vunpack.c.l.b16 %v657
    %v2001 = vunpack.c.h.b16 %v657
    %v2002 = vunpack.c.l.b16 %v658
    %v2003 = vunpack.c.h.b16 %v658
    %v2004 = vunpack.c.l.b16 %v659
    %v2005 = vunpack.c.h.b16 %v659
    %v2006 = vunpack.c.l.b16 %v660
    %v2007 = vunpack.c.h.b16 %v660
    %v2008 = vunpack.c.l.b16 %v661
    %v2009 = vunpack.c.h.b16 %v661
    %v2010 = vunpack.c.l.b16 %v662
    %v2011 = vunpack.c.h.b16 %v662
    %v2012 = vunpack.c.l.b16 %v663
    %v2013 = vunpack.c.h.b16 %v663
    %v2014 = vunpack.c.l.b16 %v664
    %v2015 = vunpack.c.h.b16 %v664
    %v2016 = vunpack.c.l.b16 %v665
    %v2017 = vunpack.c.h.b16 %v665
    %v2018 = vunpack.c.l.b16 %v666
    %v2019 = vunpack.c.h.b16 %v666
    %v2020 = vunpack.c.l.b16 %v667
    %v2021 = vunpack.c.h.b16 %v667
    %v2022 = vunpack.c.l.b16 %v668
    %v2023 = vunpack.c.h.b16 %v668
    %v2024 = vunpack.c.l.b16 %v669
    %v2025 = vunpack.c.h.b16 %v669
    %v2026 = vunpack.c.l.b16 %v670
    %v2027 = vunpack.c.h.b16 %v670
    %v2028 = vunpack.c.l.b16 %v671
    %v2029 = vunpack.c.h.b16 %v671
    %v2030 = vunpack.c.l.b16 %v672
    %v2031 = vunpack.c.h.b16 %v672
    %v2032 = vunpack.c.l.b16 %v673
    %v2033 = vunpack.c.h.b16 %v673
    %v2034 = vunpack.c.l.b16 %v674
    %v2035 = vunpack.c.h.b16 %v674
    %v2036 = vunpack.c.l.b16 %v675
    %v2037 = vunpack.c.h.b16 %v675
    %v2038 = vunpack.c.l.b16 %v676
    %v2039 = vunpack.c.h.b16 %v676
    %v2040 = vunpack.c.l.b16 %v677
    %v2041 = vunpack.c.h.b16 %v677
    %v2042 = vunpack.c.l.b16 %v678
    %v2043 = vunpack.c.h.b16 %v678
    %v2044 = vunpack.c.l.b16 %v679
    %v2045 = vunpack.c.h.b16 %v679
    %v2046 = vunpack.c.l.b16 %v680
    %v2047 = vunpack.c.h.b16 %v680
    %v2048 = vunpack.c.l.b16 %v681
    %v2049 = vunpack.c.h.b16 %v681
    %v2050 = vunpack.c.l.b16 %v682
    %v2051 = vunpack.c.h.b16 %v682
    %v2052 = vunpack.c.l.b16 %v683
    %v2053 = vunpack.c.h.b16 %v683
    %v2054 = vunpack.c.l.b16 %v684
    %v2055 = vunpack.c.h.b16 %v684
    %v2056 = vunpack.c.l.b16 %v685
    %v2057 = vunpack.c.h.b16 %v685
    %v2058 = vunpack.c.l.b16 %v686
    %v2059 = vunpack.c.h.b16 %v686
    %v2060 = vunpack.c.l.b16 %v687
    %v2061 = vunpack.c.h.b16 %v687
    %v2062 = vunpack.c.l.b16 %v688
    %v2063 = vunpack.c.h.b16 %v688
    %v2064 = vunpack.c.l.b16 %v689
    %v2065 = vunpack.c.h.b16 %v689
    %v2066 = vunpack.c.l.b16 %v690
    %v2067 = vunpack.c.h.b16 %v690
    %v2068 = vunpack.c.l.b16 %v691
    %v2069 = vunpack.c.h.b16 %v691
    %v2070 = vunpack.c.l.b16 %v692
    %v2071 = vunpack.c.h.b16 %v692
    %v2072 = vunpack.c.l.b16 %v693
    %v2073 = vunpack.c.h.b16 %v693
    %v2074 = vunpack.c.l.b16 %v694
    %v2075 = vunpack.c.h.b16 %v694
    %v2076 = vunpack.c.l.b16 %v695
    %v2077 = vunpack.c.h.b16 %v695
    %v2078 = vunpack.c.l.b16 %v696
    %v2079 = vunpack.c.h.b16 %v696
    %v2080 = vunpack.c.l.b16 %v697
    %v2081 = vunpack.c.h.b16 %v697
    %v2082 = vunpack.c.l.b16 %v698
    %v2083 = vunpack.c.h.b16 %v698
    %v2084 = vunpack.c.l.b16 %v699
    %v2085 = vunpack.c.h.b16 %v699
    %v2086 = vunpack.c.l.b16 %v700
    %v2087 = vunpack.c.h.b16 %v700
    %v2088 = vunpack.c.l.b16 %v701
    %v2089 = vunpack.c.h.b16 %v701
    %v2090 = vunpack.c.l.b16 %v702
    %v2091 = vunpack.c.h.b16 %v702
    %v2092 = vunpack.c.l.b16 %v703
    %v2093 = vunpack.c.h.b16 %v703
    %v2094 = vunpack.c.l.b16 %v704
    %v2095 = vunpack.c.h.b16 %v704
    %v2096 = vunpack.c.l.b16 %v705
    %v2097 = vunpack.c.h.b16 %v705
    %v2098 = vunpack.c.l.b16 %v706
    %v2099 = vunpack.c.h.b16 %v706
    %v2100 = vunpack.c.l.b16 %v707
    %v2101 = vunpack.c.h.b16 %v707
    %v2102 = vunpack.c.l.b16 %v708
    %v2103 = vunpack.c.h.b16 %v708
    %v2104 = vunpack.c.l.b16 %v709
    %v2105 = vunpack.c.h.b16 %v709
    %v2106 = vunpack.c.l.b16 %v710
    %v2107 = vunpack.c.h.b16 %v710
    %v2108 = vunpack.c.l.b16 %v711
    %v2109 = vunpack.c.h.b16 %v711
    %v2110 = vunpack.c.l.b16 %v712
    %v2111 = vunpack.c.h.b16 %v712
    %v2112 = vunpack.c.l.b16 %v713
    %v2113 = vunpack.c.h.b16 %v713
    %v2114 = vunpack.c.l.b16 %v714
    %v2115 = vunpack.c.h.b16 %v714
    %v2116 = vunpack.c.l.b16 %v715
    %v2117 = vunpack.c.h.b16 %v715
    %v2118 = vunpack.c.l.b16 %v716
    %v2119 = vunpack.c.h.b16 %v716
    %v2120 = vunpack.c.l.b16 %v717
    %v2121 = vunpack.c.h.b16 %v717
    %v2122 = vunpack.c.l.b16 %v718
    %v2123 = vunpack.c.h.b16 %v718
    %v2124 = vunpack.c.l.b16 %v719
    %v2125 = vunpack.c.h.b16 %v719
    %v2126 = vunpack.c.l.b16 %v720
    %v2127 = vunpack.c.h.b16 %v720
    %v2128 = vunpack.c.l.b16 %v721
    %v2129 = vunpack.c.h.b16 %v721
    %v2130 = vunpack.c.l.b16 %v722
    %v2131 = vunpack.c.h.b16 %v722
    %v2132 = vunpack.c.l.b16 %v723
    %v2133 = vunpack.c.h.b16 %v723
    %v2134 = vunpack.c.l.b16 %v724
    %v2135 = vunpack.c.h.b16 %v724
    %v2136 = vunpack.c.l.b16 %v725
    %v2137 = vunpack.c.h.b16 %v725
    %v2138 = vunpack.c.l.b16 %v726
    %v2139 = vunpack.c.h.b16 %v726
    %v2140 = vunpack.c.l.b16 %v727
    %v2141 = vunpack.c.h.b16 %v727
    %v2142 = vunpack.c.l.b16 %v728
    %v2143 = vunpack.c.h.b16 %v728
    %v2144 = vunpack.c.l.b16 %v729
    %v2145 = vunpack.c.h.b16 %v729
    %v2146 = vunpack.c.l.b16 %v730
    %v2147 = vunpack.c.h.b16 %v730
    %v2148 = vunpack.c.l.b16 %v731
    %v2149 = vunpack.c.h.b16 %v731
    %v2150 = vunpack.c.l.b16 %v732
    %v2151 = vunpack.c.h.b16 %v732
    %v2152 = vunpack.c.l.b16 %v733
    %v2153 = vunpack.c.h.b16 %v733
    %v2154 = vunpack.c.l.b16 %v734
    %v2155 = vunpack.c.h.b16 %v734
    %v2156 = vunpack.c.l.b16 %v735
    %v2157 = vunpack.c.h.b16 %v735
    %v2158 = vunpack.c.l.b16 %v736
    %v2159 = vunpack.c.h.b16 %v736
    %v2160 = vunpack.c.l.b16 %v737
    %v2161 = vunpack.c.h.b16 %v737
    %v2162 = vunpack.c.l.b16 %v738
    %v2163 = vunpack.c.h.b16 %v738
    %v2164 = vunpack.c.l.b16 %v739
    %v2165 = vunpack.c.h.b16 %v739
    %v2166 = vunpack.c.l.b16 %v740
    %v2167 = vunpack.c.h.b16 %v740
    %v2168 = vunpack.c.l.b16 %v741
    %v2169 = vunpack.c.h.b16 %v741
    %v2170 = vunpack.c.l.b16 %v742
    %v2171 = vunpack.c.h.b16 %v742
    %v2172 = vunpack.c.l.b16 %v743
    %v2173 = vunpack.c.h.b16 %v743
    %v2174 = vunpack.c.l.b16 %v744
    %v2175 = vunpack.c.h.b16 %v744
    %v2176 = vunpack.c.l.b16 %v745
    %v2177 = vunpack.c.h.b16 %v745
    %v2178 = vunpack.c.l.b16 %v746
    %v2179 = vunpack.c.h.b16 %v746
    %v2180 = vunpack.c.l.b16 %v747
    %v2181 = vunpack.c.h.b16 %v747
    %v2182 = vunpack.c.l.b16 %v748
    %v2183 = vunpack.c.h.b16 %v748
    %v2184 = vunpack.c.l.b16 %v749
    %v2185 = vunpack.c.h.b16 %v749
    %v2186 = vunpack.c.l.b16 %v750
    %v2187 = vunpack.c.h.b16 %v750
    %v2188 = vunpack.c.l.b16 %v751
    %v2189 = vunpack.c.h.b16 %v751
    %v2190 = vunpack.c.l.b16 %v752
    %v2191 = vunpack.c.h.b16 %v752
    %v2192 = vunpack.c.l.b16 %v753
    %v2193 = vunpack.c.h.b16 %v753
    %v2194 = vunpack.c.l.b16 %v754
    %v2195 = vunpack.c.h.b16 %v754
    %v2196 = vunpack.c.l.b16 %v755
    %v2197 = vunpack.c.h.b16 %v755
    %v2198 = vunpack.c.l.b16 %v756
    %v2199 = vunpack.c.h.b16 %v756
    %v2200 = vunpack.c.l.b16 %v757
    %v2201 = vunpack.c.h.b16 %v757
    %v2202 = vunpack.c.l.b16 %v758
    %v2203 = vunpack.c.h.b16 %v758
    %v2204 = vunpack.c.l.b16 %v759
    %v2205 = vunpack.c.h.b16 %v759
    %v2206 = vunpack.c.l.b16 %v760
    %v2207 = vunpack.c.h.b16 %v760
    %v2208 = vunpack.c.l.b16 %v761
    %v2209 = vunpack.c.h.b16 %v761
    %v2210 = vunpack.c.l.b16 %v762
    %v2211 = vunpack.c.h.b16 %v762
    %v2212 = vunpack.c.l.b16 %v763
    %v2213 = vunpack.c.h.b16 %v763
    %v2214 = vunpack.c.l.b16 %v764
    %v2215 = vunpack.c.h.b16 %v764
    %v2216 = vunpack.c.l.b16 %v765
    %v2217 = vunpack.c.h.b16 %v765
    %v2218 = vunpack.c.l.b16 %v766
    %v2219 = vunpack.c.h.b16 %v766
    %v2220 = vunpack.c.l.b16 %v767
    %v2221 = vunpack.c.h.b16 %v767
    %v2222 = vunpack.c.l.b16 %v768
    %v2223 = vunpack.c.h.b16 %v768
    %v2224 = vunpack.c.l.b16 %v769
    %v2225 = vunpack.c.h.b16 %v769
    %v2226 = vunpack.c.l.b16 %v770
    %v2227 = vunpack.c.h.b16 %v770
    %v2228 = vunpack.c.l.b16 %v771
    %v2229 = vunpack.c.h.b16 %v771
    %v2230 = vunpack.c.l.b16 %v772
    %v2231 = vunpack.c.h.b16 %v772
    %v2232 = vunpack.c.l.b16 %v773
    %v2233 = vunpack.c.h.b16 %v773
    %v2234 = vunpack.c.l.b16 %v774
    %v2235 = vunpack.c.h.b16 %v774
    %v2236 = vunpack.c.l.b16 %v775
    %v2237 = vunpack.c.h.b16 %v775
    %v2238 = vunpack.c.l.b16 %v776
    %v2239 = vunpack.c.h.b16 %v776
    %v2240 = vunpack.c.l.b16 %v777
    %v2241 = vunpack.c.h.b16 %v777
    %v2242 = vunpack.c.l.b16 %v778
    %v2243 = vunpack.c.h.b16 %v778
    %v2244 = vunpack.c.l.b16 %v779
    %v2245 = vunpack.c.h.b16 %v779
    %v2246 = vunpack.c.l.b16 %v780
    %v2247 = vunpack.c.h.b16 %v780
    %v2248 = vunpack.c.l.b16 %v781
    %v2249 = vunpack.c.h.b16 %v781
    %v2250 = vunpack.c.l.b16 %v782
    %v2251 = vunpack.c.h.b16 %v782
    %v2252 = vunpack.c.l.b16 %v783
    %v2253 = vunpack.c.h.b16 %v783
    %v2254 = vunpack.c.l.b16 %v784
    %v2255 = vunpack.c.h.b16 %v784
    %v2256 = vunpack.c.l.b16 %v785
    %v2257 = vunpack.c.h.b16 %v785
    %v2258 = vunpack.c.l.b16 %v786
    %v2259 = vunpack.c.h.b16 %v786
    %v2260 = vunpack.c.l.b16 %v787
    %v2261 = vunpack.c.h.b16 %v787
    %v2262 = vunpack.c.l.b16 %v788
    %v2263 = vunpack.c.h.b16 %v788
    %v2264 = vunpack.c.l.b16 %v789
    %v2265 = vunpack.c.h.b16 %v789
    %v2266 = vunpack.c.l.b16 %v790
    %v2267 = vunpack.c.h.b16 %v790
    %v2268 = vunpack.c.l.b16 %v791
    %v2269 = vunpack.c.h.b16 %v791
    %v2270 = vunpack.c.l.b16 %v792
    %v2271 = vunpack.c.h.b16 %v792
    %v2272 = vunpack.c.l.b16 %v793
    %v2273 = vunpack.c.h.b16 %v793
    %v2274 = vunpack.c.l.b16 %v794
    %v2275 = vunpack.c.h.b16 %v794
    %v2276 = vunpack.c.l.b16 %v795
    %v2277 = vunpack.c.h.b16 %v795
    %v2278 = vunpack.c.l.b16 %v796
    %v2279 = vunpack.c.h.b16 %v796
    %v2280 = vunpack.c.l.b16 %v797
    %v2281 = vunpack.c.h.b16 %v797
    %v2282 = vunpack.c.l.b16 %v798
    %v2283 = vunpack.c.h.b16 %v798
    %v2284 = vunpack.c.l.b16 %v799
    %v2285 = vunpack.c.h.b16 %v799
    %v2286 = vunpack.c.l.b16 %v800
    %v2287 = vunpack.c.h.b16 %v800
    %v2288 = vunpack.c.l.b16 %v801
    %v2289 = vunpack.c.h.b16 %v801
    %v2290 = vunpack.c.l.b16 %v802
    %v2291 = vunpack.c.h.b16 %v802
    %v2292 = vunpack.c.l.b16 %v803
    %v2293 = vunpack.c.h.b16 %v803
    %v2294 = vunpack.c.l.b16 %v804
    %v2295 = vunpack.c.h.b16 %v804
    %v2296 = vunpack.c.l.b16 %v805
    %v2297 = vunpack.c.h.b16 %v805
    %v2298 = vunpack.c.l.b16 %v806
    %v2299 = vunpack.c.h.b16 %v806
    %v2300 = vunpack.c.l.b16 %v807
    %v2301 = vunpack.c.h.b16 %v807
    %v2302 = vunpack.c.l.b16 %v808
    %v2303 = vunpack.c.h.b16 %v808
    %v2304 = vunpack.c.l.b16 %v809
    %v2305 = vunpack.c.h.b16 %v809
    %v2306 = vunpack.c.l.b16 %v810
    %v2307 = vunpack.c.h.b16 %v810
    %v2308 = vunpack.c.l.b16 %v811
    %v2309 = vunpack.c.h.b16 %v811
    %v2310 = vunpack.c.l.b16 %v812
    %v2311 = vunpack.c.h.b16 %v812
    %v2312 = vunpack.c.l.b16 %v813
    %v2313 = vunpack.c.h.b16 %v813
    %v2314 = vunpack.c.l.b16 %v814
    %v2315 = vunpack.c.h.b16 %v814
    %v2316 = vunpack.c.l.b16 %v815
    %v2317 = vunpack.c.h.b16 %v815
    %v2318 = vunpack.c.l.b16 %v816
    %v2319 = vunpack.c.h.b16 %v816
    %v2320 = vunpack.c.l.b16 %v817
    %v2321 = vunpack.c.h.b16 %v817
    %v2322 = vunpack.c.l.b16 %v818
    %v2323 = vunpack.c.h.b16 %v818
    %v2324 = vunpack.c.l.b16 %v819
    %v2325 = vunpack.c.h.b16 %v819
    %v2326 = vunpack.c.l.b16 %v820
    %v2327 = vunpack.c.h.b16 %v820
    %v2328 = vunpack.c.l.b16 %v821
    %v2329 = vunpack.c.h.b16 %v821
    %v2330 = vunpack.c.l.b16 %v822
    %v2331 = vunpack.c.h.b16 %v822
    %v2332 = vunpack.c.l.b16 %v823
    %v2333 = vunpack.c.h.b16 %v823
    %v2334 = vunpack.c.l.b16 %v824
    %v2335 = vunpack.c.h.b16 %v824
    %v2336 = vunpack.c.l.b16 %v825
    %v2337 = vunpack.c.h.b16 %v825
    %v2338 = vunpack.c.l.b16 %v826
    %v2339 = vunpack.c.h.b16 %v826
    %v2340 = vunpack.c.l.b16 %v827
    %v2341 = vunpack.c.h.b16 %v827
    %v2342 = vunpack.c.l.b16 %v828
    %v2343 = vunpack.c.h.b16 %v828
    %v2344 = vunpack.c.l.b16 %v829
    %v2345 = vunpack.c.h.b16 %v829
    %v2346 = vunpack.c.l.b16 %v830
    %v2347 = vunpack.c.h.b16 %v830
    %v2348 = vunpack.c.l.b16 %v831
    %v2349 = vunpack.c.h.b16 %v831
    %v2350 = vunpack.c.l.b16 %v832
    %v2351 = vunpack.c.h.b16 %v832
    %v2352 = vunpack.c.l.b16 %v833
    %v2353 = vunpack.c.h.b16 %v833
    %v2354 = vunpack.c.l.b16 %v834
    %v2355 = vunpack.c.h.b16 %v834
    %v2356 = vunpack.c.l.b16 %v835
    %v2357 = vunpack.c.h.b16 %v835
    %v2358 = vunpack.c.l.b16 %v836
    %v2359 = vunpack.c.h.b16 %v836
    %v2360 = vunpack.c.l.b16 %v837
    %v2361 = vunpack.c.h.b16 %v837
    %v2362 = vunpack.c.l.b16 %v838
    %v2363 = vunpack.c.h.b16 %v838
    %v2364 = vunpack.c.l.b16 %v839
    %v2365 = vunpack.c.h.b16 %v839
    %v2366 = vunpack.c.l.b16 %v840
    %v2367 = vunpack.c.h.b16 %v840
    %v2368 = vunpack.c.l.b16 %v841
    %v2369 = vunpack.c.h.b16 %v841
    %v2370 = vunpack.c.l.b16 %v842
    %v2371 = vunpack.c.h.b16 %v842
    %v2372 = vunpack.c.l.b16 %v843
    %v2373 = vunpack.c.h.b16 %v843
    %v2374 = vunpack.c.l.b16 %v844
    %v2375 = vunpack.c.h.b16 %v844
    %v2376 = vunpack.c.l.b16 %v845
    %v2377 = vunpack.c.h.b16 %v845
    %v2378 = vunpack.c.l.b16 %v846
    %v2379 = vunpack.c.h.b16 %v846
    %v2380 = vunpack.c.l.b16 %v847
    %v2381 = vunpack.c.h.b16 %v847
    %v2382 = vunpack.c.l.b16 %v848
    %v2383 = vunpack.c.h.b16 %v848
    %v2384 = vunpack.c.l.b16 %v849
    %v2385 = vunpack.c.h.b16 %v849
    %v2386 = vunpack.c.l.b16 %v850
    %v2387 = vunpack.c.h.b16 %v850
    %v2388 = vunpack.c.l.b16 %v851
    %v2389 = vunpack.c.h.b16 %v851
    %v2390 = vunpack.c.l.b16 %v852
    %v2391 = vunpack.c.h.b16 %v852
    %v2392 = vunpack.c.l.b16 %v853
    %v2393 = vunpack.c.h.b16 %v853
    %v2394 = vunpack.c.l.b16 %v854
    %v2395 = vunpack.c.h.b16 %v854
    %v2396 = vunpack.c.l.b16 %v855
    %v2397 = vunpack.c.h.b16 %v855
    %v2398 = vunpack.c.l.b16 %v856
    %v2399 = vunpack.c.h.b16 %v856
    %v2400 = vunpack.c.l.b16 %v857
    %v2401 = vunpack.c.h.b16 %v857
    %v2402 = vunpack.c.l.b16 %v858
    %v2403 = vunpack.c.h.b16 %v858
    %v2404 = vunpack.c.l.b16 %v859
    %v2405 = vunpack.c.h.b16 %v859
    %v2406 = vunpack.c.l.b16 %v860
    %v2407 = vunpack.c.h.b16 %v860
    %v2408 = vunpack.c.l.b16 %v861
    %v2409 = vunpack.c.h.b16 %v861
    %v2410 = vunpack.c.l.b16 %v862
    %v2411 = vunpack.c.h.b16 %v862
    %v2412 = vunpack.c.l.b16 %v863
    %v2413 = vunpack.c.h.b16 %v863
    %v2414 = vunpack.c.l.b16 %v864
    %v2415 = vunpack.c.h.b16 %v864
    %v2416 = vunpack.c.l.b16 %v865
    %v2417 = vunpack.c.h.b16 %v865
    %v2418 = vunpack.c.l.b16 %v866
    %v2419 = vunpack.c.h.b16 %v866
    %v2420 = vunpack.c.l.b16 %v867
    %v2421 = vunpack.c.h.b16 %v867
    %v2422 = vunpack.c.l.b16 %v868
    %v2423 = vunpack.c.h.b16 %v868
    %v2424 = vunpack.c.l.b16 %v869
    %v2425 = vunpack.c.h.b16 %v869
    %v2426 = vunpack.c.l.b16 %v870
    %v2427 = vunpack.c.h.b16 %v870
    %v2428 = vunpack.c.l.b16 %v871
    %v2429 = vunpack.c.h.b16 %v871
    %v2430 = vunpack.c.l.b16 %v872
    %v2431 = vunpack.c.h.b16 %v872
    %v2432 = vunpack.c.l.b16 %v873
    %v2433 = vunpack.c.h.b16 %v873
    %v2434 = vunpack.c.l.b16 %v874
    %v2435 = vunpack.c.h.b16 %v874
    %v2436 = vunpack.c.l.b16 %v875
    %v2437 = vunpack.c.h.b16 %v875
    %v2438 = vunpack.c.l.b16 %v876
    %v2439 = vunpack.c.h.b16 %v876
    %v2440 = vunpack.c.l.b16 %v877
    %v2441 = vunpack.c.h.b16 %v877
    %v2442 = vunpack.c.l.b16 %v878
    %v2443 = vunpack.c.h.b16 %v878
    %v2444 = vunpack.c.l.b16 %v879
    %v2445 = vunpack.c.h.b16 %v879
    %v2446 = vunpack.c.l.b16 %v880
    %v2447 = vunpack.c.h.b16 %v880
    %v2448 = vunpack.c.l.b16 %v881
    %v2449 = vunpack.c.h.b16 %v881
    %v2450 = vunpack.c.l.b16 %v882
    %v2451 = vunpack.c.h.b16 %v882
    %v2452 = vunpack.c.l.b16 %v883
    %v2453 = vunpack.c.h.b16 %v883
    %v2454 = vunpack.c.l.b16 %v884
    %v2455 = vunpack.c.h.b16 %v884
    %v2456 = vunpack.c.l.b16 %v885
    %v2457 = vunpack.c.h.b16 %v885
    %v2458 = vunpack.c.l.b16 %v886
    %v2459 = vunpack.c.h.b16 %v886
    %v2460 = vunpack.c.l.b16 %v887
    %v2461 = vunpack.c.h.b16 %v887
    %v2462 = vunpack.c.l.b16 %v888
    %v2463 = vunpack.c.h.b16 %v888
    %v2464 = vunpack.c.l.b16 %v889
    %v2465 = vunpack.c.h.b16 %v889
    %v2466 = vunpack.c.l.b16 %v890
    %v2467 = vunpack.c.h.b16 %v890
    %v2468 = vunpack.c.l.b16 %v891
    %v2469 = vunpack.c.h.b16 %v891
    %v2470 = vpack.c.b16 %v1454, %v1446
    %v2471 = vpack.c.b16 %v1455, %v1447
    %v2472 = vpack.c.b16 %v1456, %v1448
    %v2473 = vpack.c.b16 %v1457, %v1449
    %v2474 = vpack.c.b16 %v1458, %v1450
    %v2475 = vpack.c.b16 %v1459, %v1451
    %v2476 = vpack.c.b16 %v1460, %v1452
    %v2477 = vpack.c.b16 %v1461, %v1453
    %v2478 = vpack.c.b16 %v1470, %v1462
    %v2479 = vpack.c.b16 %v1471, %v1463
    %v2480 = vpack.c.b16 %v1472, %v1464
    %v2481 = vpack.c.b16 %v1473, %v1465
    %v2482 = vpack.c.b16 %v1474, %v1466
    %v2483 = vpack.c.b16 %v1475, %v1467
    %v2484 = vpack.c.b16 %v1476, %v1468
    %v2485 = vpack.c.b16 %v1477, %v1469
    %v2486 = vpack.c.b16 %v1486, %v1478
    %v2487 = vpack.c.b16 %v1487, %v1479
    %v2488 = vpack.c.b16 %v1488, %v1480
    %v2489 = vpack.c.b16 %v1489, %v1481
    %v2490 = vpack.c.b16 %v1490, %v1482
    %v2491 = vpack.c.b16 %v1491, %v1483
    %v2492 = vpack.c.b16 %v1492, %v1484
    %v2493 = vpack.c.b16 %v1493, %v1485
    %v2494 = vpack.c.b16 %v1502, %v1494
    %v2495 = vpack.c.b16 %v1503, %v1495
    %v2496 = vpack.c.b16 %v1504, %v1496
    %v2497 = vpack.c.b16 %v1505, %v1497
    %v2498 = vpack.c.b16 %v1506, %v1498
    %v2499 = vpack.c.b16 %v1507, %v1499
    %v2500 = vpack.c.b16 %v1508, %v1500
    %v2501 = vpack.c.b16 %v1509, %v1501
    %v2502 = vpack.c.b16 %v1518, %v1510
    %v2503 = vpack.c.b16 %v1519, %v1511
    %v2504 = vpack.c.b16 %v1520, %v1512
    %v2505 = vpack.c.b16 %v1521, %v1513
    %v2506 = vpack.c.b16 %v1522, %v1514
    %v2507 = vpack.c.b16 %v1523, %v1515
    %v2508 = vpack.c.b16 %v1524, %v1516
    %v2509 = vpack.c.b16 %v1525, %v1517
    %v2510 = vpack.c.b16 %v1534, %v1526
    %v2511 = vpack.c.b16 %v1535, %v1527
    %v2512 = vpack.c.b16 %v1536, %v1528
    %v2513 = vpack.c.b16 %v1537, %v1529
    %v2514 = vpack.c.b16 %v1538, %v1530
    %v2515 = vpack.c.b16 %v1539, %v1531
    %v2516 = vpack.c.b16 %v1540, %v1532
    %v2517 = vpack.c.b16 %v1541, %v1533
    %v2518 = vpack.c.b16 %v1550, %v1542
    %v2519 = vpack.c.b16 %v1551, %v1543
    %v2520 = vpack.c.b16 %v1552, %v1544
    %v2521 = vpack.c.b16 %v1553, %v1545
    %v2522 = vpack.c.b16 %v1554, %v1546
    %v2523 = vpack.c.b16 %v1555, %v1547
    %v2524 = vpack.c.b16 %v1556, %v1548
    %v2525 = vpack.c.b16 %v1557, %v1549
    %v2526 = vpack.c.b16 %v1566, %v1558
    %v2527 = vpack.c.b16 %v1567, %v1559
    %v2528 = vpack.c.b16 %v1568, %v1560
    %v2529 = vpack.c.b16 %v1569, %v1561
    %v2530 = vpack.c.b16 %v1570, %v1562
    %v2531 = vpack.c.b16 %v1571, %v1563
    %v2532 = vpack.c.b16 %v1572, %v1564
    %v2533 = vpack.c.b16 %v1573, %v1565
    %v2534 = vpack.c.b16 %v1582, %v1574
    %v2535 = vpack.c.b16 %v1583, %v1575
    %v2536 = vpack.c.b16 %v1584, %v1576
    %v2537 = vpack.c.b16 %v1585, %v1577
    %v2538 = vpack.c.b16 %v1586, %v1578
    %v2539 = vpack.c.b16 %v1587, %v1579
    %v2540 = vpack.c.b16 %v1588, %v1580
    %v2541 = vpack.c.b16 %v1589, %v1581
    %v2542 = vpack.c.b16 %v1598, %v1590
    %v2543 = vpack.c.b16 %v1599, %v1591
    %v2544 = vpack.c.b16 %v1600, %v1592
    %v2545 = vpack.c.b16 %v1601, %v1593
    %v2546 = vpack.c.b16 %v1602, %v1594
    %v2547 = vpack.c.b16 %v1603, %v1595
    %v2548 = vpack.c.b16 %v1604, %v1596
    %v2549 = vpack.c.b16 %v1605, %v1597
    %v2550 = vpack.c.b16 %v1614, %v1606
    %v2551 = vpack.c.b16 %v1615, %v1607
    %v2552 = vpack.c.b16 %v1616, %v1608
    %v2553 = vpack.c.b16 %v1617, %v1609
    %v2554 = vpack.c.b16 %v1618, %v1610
    %v2555 = vpack.c.b16 %v1619, %v1611
    %v2556 = vpack.c.b16 %v1620, %v1612
    %v2557 = vpack.c.b16 %v1621, %v1613
    %v2558 = vpack.c.b16 %v1630, %v1622
    %v2559 = vpack.c.b16 %v1631, %v1623
    %v2560 = vpack.c.b16 %v1632, %v1624
    %v2561 = vpack.c.b16 %v1633, %v1625
    %v2562 = vpack.c.b16 %v1634, %v1626
    %v2563 = vpack.c.b16 %v1635, %v1627
    %v2564 = vpack.c.b16 %v1636, %v1628
    %v2565 = vpack.c.b16 %v1637, %v1629
    %v2566 = vpack.c.b16 %v1646, %v1638
    %v2567 = vpack.c.b16 %v1647, %v1639
    %v2568 = vpack.c.b16 %v1648, %v1640
    %v2569 = vpack.c.b16 %v1649, %v1641
    %v2570 = vpack.c.b16 %v1650, %v1642
    %v2571 = vpack.c.b16 %v1651, %v1643
    %v2572 = vpack.c.b16 %v1652, %v1644
    %v2573 = vpack.c.b16 %v1653, %v1645
    %v2574 = vpack.c.b16 %v1662, %v1654
    %v2575 = vpack.c.b16 %v1663, %v1655
    %v2576 = vpack.c.b16 %v1664, %v1656
    %v2577 = vpack.c.b16 %v1665, %v1657
    %v2578 = vpack.c.b16 %v1666, %v1658
    %v2579 = vpack.c.b16 %v1667, %v1659
    %v2580 = vpack.c.b16 %v1668, %v1660
    %v2581 = vpack.c.b16 %v1669, %v1661
    %v2582 = vpack.c.b16 %v1678, %v1670
    %v2583 = vpack.c.b16 %v1679, %v1671
    %v2584 = vpack.c.b16 %v1680, %v1672
    %v2585 = vpack.c.b16 %v1681, %v1673
    %v2586 = vpack.c.b16 %v1682, %v1674
    %v2587 = vpack.c.b16 %v1683, %v1675
    %v2588 = vpack.c.b16 %v1684, %v1676
    %v2589 = vpack.c.b16 %v1685, %v1677
    %v2590 = vpack.c.b16 %v1694, %v1686
    %v2591 = vpack.c.b16 %v1695, %v1687
    %v2592 = vpack.c.b16 %v1696, %v1688
    %v2593 = vpack.c.b16 %v1697, %v1689
    %v2594 = vpack.c.b16 %v1698, %v1690
    %v2595 = vpack.c.b16 %v1699, %v1691
    %v2596 = vpack.c.b16 %v1700, %v1692
    %v2597 = vpack.c.b16 %v1701, %v1693
    %v2598 = vpack.c.b16 %v1710, %v1702
    %v2599 = vpack.c.b16 %v1711, %v1703
    %v2600 = vpack.c.b16 %v1712, %v1704
    %v2601 = vpack.c.b16 %v1713, %v1705
    %v2602 = vpack.c.b16 %v1714, %v1706
    %v2603 = vpack.c.b16 %v1715, %v1707
    %v2604 = vpack.c.b16 %v1716, %v1708
    %v2605 = vpack.c.b16 %v1717, %v1709
    %v2606 = vpack.c.b16 %v1726, %v1718
    %v2607 = vpack.c.b16 %v1727, %v1719
    %v2608 = vpack.c.b16 %v1728, %v1720
    %v2609 = vpack.c.b16 %v1729, %v1721
    %v2610 = vpack.c.b16 %v1730, %v1722
    %v2611 = vpack.c.b16 %v1731, %v1723
    %v2612 = vpack.c.b16 %v1732, %v1724
    %v2613 = vpack.c.b16 %v1733, %v1725
    %v2614 = vpack.c.b16 %v1742, %v1734
    %v2615 = vpack.c.b16 %v1743, %v1735
    %v2616 = vpack.c.b16 %v1744, %v1736
    %v2617 = vpack.c.b16 %v1745, %v1737
    %v2618 = vpack.c.b16 %v1746, %v1738
    %v2619 = vpack.c.b16 %v1747, %v1739
    %v2620 = vpack.c.b16 %v1748, %v1740
    %v2621 = vpack.c.b16 %v1749, %v1741
    %v2622 = vpack.c.b16 %v1758, %v1750
    %v2623 = vpack.c.b16 %v1759, %v1751
    %v2624 = vpack.c.b16 %v1760, %v1752
    %v2625 = vpack.c.b16 %v1761, %v1753
    %v2626 = vpack.c.b16 %v1762, %v1754
    %v2627 = vpack.c.b16 %v1763, %v1755
    %v2628 = vpack.c.b16 %v1764, %v1756
    %v2629 = vpack.c.b16 %v1765, %v1757
    %v2630 = vpack.c.b16 %v1774, %v1766
    %v2631 = vpack.c.b16 %v1775, %v1767
    %v2632 = vpack.c.b16 %v1776, %v1768
    %v2633 = vpack.c.b16 %v1777, %v1769
    %v2634 = vpack.c.b16 %v1778, %v1770
    %v2635 = vpack.c.b16 %v1779, %v1771
    %v2636 = vpack.c.b16 %v1780, %v1772
    %v2637 = vpack.c.b16 %v1781, %v1773
    %v2638 = vpack.c.b16 %v1790, %v1782
    %v2639 = vpack.c.b16 %v1791, %v1783
    %v2640 = vpack.c.b16 %v1792, %v1784
    %v2641 = vpack.c.b16 %v1793, %v1785
    %v2642 = vpack.c.b16 %v1794, %v1786
    %v2643 = vpack.c.b16 %v1795, %v1787
    %v2644 = vpack.c.b16 %v1796, %v1788
    %v2645 = vpack.c.b16 %v1797, %v1789
    %v2646 = vpack.c.b16 %v1806, %v1798
    %v2647 = vpack.c.b16 %v1807, %v1799
    %v2648 = vpack.c.b16 %v1808, %v1800
    %v2649 = vpack.c.b16 %v1809, %v1801
    %v2650 = vpack.c.b16 %v1810, %v1802
    %v2651 = vpack.c.b16 %v1811, %v1803
    %v2652 = vpack.c.b16 %v1812, %v1804
    %v2653 = vpack.c.b16 %v1813, %v1805
    %v2654 = vpack.c.b16 %v1822, %v1814
    %v2655 = vpack.c.b16 %v1823, %v1815
    %v2656 = vpack.c.b16 %v1824, %v1816
    %v2657 = vpack.c.b16 %v1825, %v1817
    %v2658 = vpack.c.b16 %v1826, %v1818
    %v2659 = vpack.c.b16 %v1827, %v1819
    %v2660 = vpack.c.b16 %v1828, %v1820
    %v2661 = vpack.c.b16 %v1829, %v1821
    %v2662 = vpack.c.b16 %v1838, %v1830
    %v2663 = vpack.c.b16 %v1839, %v1831
    %v2664 = vpack.c.b16 %v1840, %v1832
    %v2665 = vpack.c.b16 %v1841, %v1833
    %v2666 = vpack.c.b16 %v1842, %v1834
    %v2667 = vpack.c.b16 %v1843, %v1835
    %v2668 = vpack.c.b16 %v1844, %v1836
    %v2669 = vpack.c.b16 %v1845, %v1837
    %v2670 = vpack.c.b16 %v1854, %v1846
    %v2671 = vpack.c.b16 %v1855, %v1847
    %v2672 = vpack.c.b16 %v1856, %v1848
    %v2673 = vpack.c.b16 %v1857, %v1849
    %v2674 = vpack.c.b16 %v1858, %v1850
    %v2675 = vpack.c.b16 %v1859, %v1851
    %v2676 = vpack.c.b16 %v1860, %v1852
    %v2677 = vpack.c.b16 %v1861, %v1853
    %v2678 = vpack.c.b16 %v1870, %v1862
    %v2679 = vpack.c.b16 %v1871, %v1863
    %v2680 = vpack.c.b16 %v1872, %v1864
    %v2681 = vpack.c.b16 %v1873, %v1865
    %v2682 = vpack.c.b16 %v1874, %v1866
    %v2683 = vpack.c.b16 %v1875, %v1867
    %v2684 = vpack.c.b16 %v1876, %v1868
    %v2685 = vpack.c.b16 %v1877, %v1869
    %v2686 = vpack.c.b16 %v1886, %v1878
    %v2687 = vpack.c.b16 %v1887, %v1879
    %v2688 = vpack.c.b16 %v1888, %v1880
    %v2689 = vpack.c.b16 %v1889, %v1881
    %v2690 = vpack.c.b16 %v1890, %v1882
    %v2691 = vpack.c.b16 %v1891, %v1883
    %v2692 = vpack.c.b16 %v1892, %v1884
    %v2693 = vpack.c.b16 %v1893, %v1885
    %v2694 = vpack.c.b16 %v1902, %v1894
    %v2695 = vpack.c.b16 %v1903, %v1895
    %v2696 = vpack.c.b16 %v1904, %v1896
    %v2697 = vpack.c.b16 %v1905, %v1897
    %v2698 = vpack.c.b16 %v1906, %v1898
    %v2699 = vpack.c.b16 %v1907, %v1899
    %v2700 = vpack.c.b16 %v1908, %v1900
    %v2701 = vpack.c.b16 %v1909, %v1901
    %v2702 = vpack.c.b16 %v1918, %v1910
    %v2703 = vpack.c.b16 %v1919, %v1911
    %v2704 = vpack.c.b16 %v1920, %v1912
    %v2705 = vpack.c.b16 %v1921, %v1913
    %v2706 = vpack.c.b16 %v1922, %v1914
    %v2707 = vpack.c.b16 %v1923, %v1915
    %v2708 = vpack.c.b16 %v1924, %v1916
    %v2709 = vpack.c.b16 %v1925, %v1917
    %v2710 = vpack.c.b16 %v1934, %v1926
    %v2711 = vpack.c.b16 %v1935, %v1927
    %v2712 = vpack.c.b16 %v1936, %v1928
    %v2713 = vpack.c.b16 %v1937, %v1929
    %v2714 = vpack.c.b16 %v1938, %v1930
    %v2715 = vpack.c.b16 %v1939, %v1931
    %v2716 = vpack.c.b16 %v1940, %v1932
    %v2717 = vpack.c.b16 %v1941, %v1933
    %v2718 = vpack.c.b16 %v1950, %v1942
    %v2719 = vpack.c.b16 %v1951, %v1943
    %v2720 = vpack.c.b16 %v1952, %v1944
    %v2721 = vpack.c.b16 %v1953, %v1945
    %v2722 = vpack.c.b16 %v1954, %v1946
    %v2723 = vpack.c.b16 %v1955, %v1947
    %v2724 = vpack.c.b16 %v1956, %v1948
    %v2725 = vpack.c.b16 %v1957, %v1949
    %v2726 = vpack.c.b16 %v1966, %v1958
    %v2727 = vpack.c.b16 %v1967, %v1959
    %v2728 = vpack.c.b16 %v1968, %v1960
    %v2729 = vpack.c.b16 %v1969, %v1961
    %v2730 = vpack.c.b16 %v1970, %v1962
    %v2731 = vpack.c.b16 %v1971, %v1963
    %v2732 = vpack.c.b16 %v1972, %v1964
    %v2733 = vpack.c.b16 %v1973, %v1965
    %v2734 = vpack.c.b16 %v1982, %v1974
    %v2735 = vpack.c.b16 %v1983, %v1975
    %v2736 = vpack.c.b16 %v1984, %v1976
    %v2737 = vpack.c.b16 %v1985, %v1977
    %v2738 = vpack.c.b16 %v1986, %v1978
    %v2739 = vpack.c.b16 %v1987, %v1979
    %v2740 = vpack.c.b16 %v1988, %v1980
    %v2741 = vpack.c.b16 %v1989, %v1981
    %v2742 = vpack.c.b16 %v1998, %v1990
    %v2743 = vpack.c.b16 %v1999, %v1991
    %v2744 = vpack.c.b16 %v2000, %v1992
    %v2745 = vpack.c.b16 %v2001, %v1993
    %v2746 = vpack.c.b16 %v2002, %v1994
    %v2747 = vpack.c.b16 %v2003, %v1995
    %v2748 = vpack.c.b16 %v2004, %v1996
    %v2749 = vpack.c.b16 %v2005, %v1997
    %v2750 = vpack.c.b16 %v2014, %v2006
    %v2751 = vpack.c.b16 %v2015, %v2007
    %v2752 = vpack.c.b16 %v2016, %v2008
    %v2753 = vpack.c.b16 %v2017, %v2009
    %v2754 = vpack.c.b16 %v2018, %v2010
    %v2755 = vpack.c.b16 %v2019, %v2011
    %v2756 = vpack.c.b16 %v2020, %v2012
    %v2757 = vpack.c.b16 %v2021, %v2013
    %v2758 = vpack.c.b16 %v2030, %v2022
    %v2759 = vpack.c.b16 %v2031, %v2023
    %v2760 = vpack.c.b16 %v2032, %v2024
    %v2761 = vpack.c.b16 %v2033, %v2025
    %v2762 = vpack.c.b16 %v2034, %v2026
    %v2763 = vpack.c.b16 %v2035, %v2027
    %v2764 = vpack.c.b16 %v2036, %v2028
    %v2765 = vpack.c.b16 %v2037, %v2029
    %v2766 = vpack.c.b16 %v2046, %v2038
    %v2767 = vpack.c.b16 %v2047, %v2039
    %v2768 = vpack.c.b16 %v2048, %v2040
    %v2769 = vpack.c.b16 %v2049, %v2041
    %v2770 = vpack.c.b16 %v2050, %v2042
    %v2771 = vpack.c.b16 %v2051, %v2043
    %v2772 = vpack.c.b16 %v2052, %v2044
    %v2773 = vpack.c.b16 %v2053, %v2045
    %v2774 = vpack.c.b16 %v2062, %v2054
    %v2775 = vpack.c.b16 %v2063, %v2055
    %v2776 = vpack.c.b16 %v2064, %v2056
    %v2777 = vpack.c.b16 %v2065, %v2057
    %v2778 = vpack.c.b16 %v2066, %v2058
    %v2779 = vpack.c.b16 %v2067, %v2059
    %v2780 = vpack.c.b16 %v2068, %v2060
    %v2781 = vpack.c.b16 %v2069, %v2061
    %v2782 = vpack.c.b16 %v2078, %v2070
    %v2783 = vpack.c.b16 %v2079, %v2071
    %v2784 = vpack.c.b16 %v2080, %v2072
    %v2785 = vpack.c.b16 %v2081, %v2073
    %v2786 = vpack.c.b16 %v2082, %v2074
    %v2787 = vpack.c.b16 %v2083, %v2075
    %v2788 = vpack.c.b16 %v2084, %v2076
    %v2789 = vpack.c.b16 %v2085, %v2077
    %v2790 = vpack.c.b16 %v2094, %v2086
    %v2791 = vpack.c.b16 %v2095, %v2087
    %v2792 = vpack.c.b16 %v2096, %v2088
    %v2793 = vpack.c.b16 %v2097, %v2089
    %v2794 = vpack.c.b16 %v2098, %v2090
    %v2795 = vpack.c.b16 %v2099, %v2091
    %v2796 = vpack.c.b16 %v2100, %v2092
    %v2797 = vpack.c.b16 %v2101, %v2093
    %v2798 = vpack.c.b16 %v2110, %v2102
    %v2799 = vpack.c.b16 %v2111, %v2103
    %v2800 = vpack.c.b16 %v2112, %v2104
    %v2801 = vpack.c.b16 %v2113, %v2105
    %v2802 = vpack.c.b16 %v2114, %v2106
    %v2803 = vpack.c.b16 %v2115, %v2107
    %v2804 = vpack.c.b16 %v2116, %v2108
    %v2805 = vpack.c.b16 %v2117, %v2109
    %v2806 = vpack.c.b16 %v2126, %v2118
    %v2807 = vpack.c.b16 %v2127, %v2119
    %v2808 = vpack.c.b16 %v2128, %v2120
    %v2809 = vpack.c.b16 %v2129, %v2121
    %v2810 = vpack.c.b16 %v2130, %v2122
    %v2811 = vpack.c.b16 %v2131, %v2123
    %v2812 = vpack.c.b16 %v2132, %v2124
    %v2813 = vpack.c.b16 %v2133, %v2125
    %v2814 = vpack.c.b16 %v2142, %v2134
    %v2815 = vpack.c.b16 %v2143, %v2135
    %v2816 = vpack.c.b16 %v2144, %v2136
    %v2817 = vpack.c.b16 %v2145, %v2137
    %v2818 = vpack.c.b16 %v2146, %v2138
    %v2819 = vpack.c.b16 %v2147, %v2139
    %v2820 = vpack.c.b16 %v2148, %v2140
    %v2821 = vpack.c.b16 %v2149, %v2141
    %v2822 = vpack.c.b16 %v2158, %v2150
    %v2823 = vpack.c.b16 %v2159, %v2151
    %v2824 = vpack.c.b16 %v2160, %v2152
    %v2825 = vpack.c.b16 %v2161, %v2153
    %v2826 = vpack.c.b16 %v2162, %v2154
    %v2827 = vpack.c.b16 %v2163, %v2155
    %v2828 = vpack.c.b16 %v2164, %v2156
    %v2829 = vpack.c.b16 %v2165, %v2157
    %v2830 = vpack.c.b16 %v2174, %v2166
    %v2831 = vpack.c.b16 %v2175, %v2167
    %v2832 = vpack.c.b16 %v2176, %v2168
    %v2833 = vpack.c.b16 %v2177, %v2169
    %v2834 = vpack.c.b16 %v2178, %v2170
    %v2835 = vpack.c.b16 %v2179, %v2171
    %v2836 = vpack.c.b16 %v2180, %v2172
    %v2837 = vpack.c.b16 %v2181, %v2173
    %v2838 = vpack.c.b16 %v2190, %v2182
    %v2839 = vpack.c.b16 %v2191, %v2183
    %v2840 = vpack.c.b16 %v2192, %v2184
    %v2841 = vpack.c.b16 %v2193, %v2185
    %v2842 = vpack.c.b16 %v2194, %v2186
    %v2843 = vpack.c.b16 %v2195, %v2187
    %v2844 = vpack.c.b16 %v2196, %v2188
    %v2845 = vpack.c.b16 %v2197, %v2189
    %v2846 = vpack.c.b16 %v2206, %v2198
    %v2847 = vpack.c.b16 %v2207, %v2199
    %v2848 = vpack.c.b16 %v2208, %v2200
    %v2849 = vpack.c.b16 %v2209, %v2201
    %v2850 = vpack.c.b16 %v2210, %v2202
    %v2851 = vpack.c.b16 %v2211, %v2203
    %v2852 = vpack.c.b16 %v2212, %v2204
    %v2853 = vpack.c.b16 %v2213, %v2205
    %v2854 = vpack.c.b16 %v2222, %v2214
    %v2855 = vpack.c.b16 %v2223, %v2215
    %v2856 = vpack.c.b16 %v2224, %v2216
    %v2857 = vpack.c.b16 %v2225, %v2217
    %v2858 = vpack.c.b16 %v2226, %v2218
    %v2859 = vpack.c.b16 %v2227, %v2219
    %v2860 = vpack.c.b16 %v2228, %v2220
    %v2861 = vpack.c.b16 %v2229, %v2221
    %v2862 = vpack.c.b16 %v2238, %v2230
    %v2863 = vpack.c.b16 %v2239, %v2231
    %v2864 = vpack.c.b16 %v2240, %v2232
    %v2865 = vpack.c.b16 %v2241, %v2233
    %v2866 = vpack.c.b16 %v2242, %v2234
    %v2867 = vpack.c.b16 %v2243, %v2235
    %v2868 = vpack.c.b16 %v2244, %v2236
    %v2869 = vpack.c.b16 %v2245, %v2237
    %v2870 = vpack.c.b16 %v2254, %v2246
    %v2871 = vpack.c.b16 %v2255, %v2247
    %v2872 = vpack.c.b16 %v2256, %v2248
    %v2873 = vpack.c.b16 %v2257, %v2249
    %v2874 = vpack.c.b16 %v2258, %v2250
    %v2875 = vpack.c.b16 %v2259, %v2251
    %v2876 = vpack.c.b16 %v2260, %v2252
    %v2877 = vpack.c.b16 %v2261, %v2253
    %v2878 = vpack.c.b16 %v2270, %v2262
    %v2879 = vpack.c.b16 %v2271, %v2263
    %v2880 = vpack.c.b16 %v2272, %v2264
    %v2881 = vpack.c.b16 %v2273, %v2265
    %v2882 = vpack.c.b16 %v2274, %v2266
    %v2883 = vpack.c.b16 %v2275, %v2267
    %v2884 = vpack.c.b16 %v2276, %v2268
    %v2885 = vpack.c.b16 %v2277, %v2269
    %v2886 = vpack.c.b16 %v2286, %v2278
    %v2887 = vpack.c.b16 %v2287, %v2279
    %v2888 = vpack.c.b16 %v2288, %v2280
    %v2889 = vpack.c.b16 %v2289, %v2281
    %v2890 = vpack.c.b16 %v2290, %v2282
    %v2891 = vpack.c.b16 %v2291, %v2283
    %v2892 = vpack.c.b16 %v2292, %v2284
    %v2893 = vpack.c.b16 %v2293, %v2285
    %v2894 = vpack.c.b16 %v2302, %v2294
    %v2895 = vpack.c.b16 %v2303, %v2295
    %v2896 = vpack.c.b16 %v2304, %v2296
    %v2897 = vpack.c.b16 %v2305, %v2297
    %v2898 = vpack.c.b16 %v2306, %v2298
    %v2899 = vpack.c.b16 %v2307, %v2299
    %v2900 = vpack.c.b16 %v2308, %v2300
    %v2901 = vpack.c.b16 %v2309, %v2301
    %v2902 = vpack.c.b16 %v2318, %v2310
    %v2903 = vpack.c.b16 %v2319, %v2311
    %v2904 = vpack.c.b16 %v2320, %v2312
    %v2905 = vpack.c.b16 %v2321, %v2313
    %v2906 = vpack.c.b16 %v2322, %v2314
    %v2907 = vpack.c.b16 %v2323, %v2315
    %v2908 = vpack.c.b16 %v2324, %v2316
    %v2909 = vpack.c.b16 %v2325, %v2317
    %v2910 = vpack.c.b16 %v2334, %v2326
    %v2911 = vpack.c.b16 %v2335, %v2327
    %v2912 = vpack.c.b16 %v2336, %v2328
    %v2913 = vpack.c.b16 %v2337, %v2329
    %v2914 = vpack.c.b16 %v2338, %v2330
    %v2915 = vpack.c.b16 %v2339, %v2331
    %v2916 = vpack.c.b16 %v2340, %v2332
    %v2917 = vpack.c.b16 %v2341, %v2333
    %v2918 = vpack.c.b16 %v2350, %v2342
    %v2919 = vpack.c.b16 %v2351, %v2343
    %v2920 = vpack.c.b16 %v2352, %v2344
    %v2921 = vpack.c.b16 %v2353, %v2345
    %v2922 = vpack.c.b16 %v2354, %v2346
    %v2923 = vpack.c.b16 %v2355, %v2347
    %v2924 = vpack.c.b16 %v2356, %v2348
    %v2925 = vpack.c.b16 %v2357, %v2349
    %v2926 = vpack.c.b16 %v2366, %v2358
    %v2927 = vpack.c.b16 %v2367, %v2359
    %v2928 = vpack.c.b16 %v2368, %v2360
    %v2929 = vpack.c.b16 %v2369, %v2361
    %v2930 = vpack.c.b16 %v2370, %v2362
    %v2931 = vpack.c.b16 %v2371, %v2363
    %v2932 = vpack.c.b16 %v2372, %v2364
    %v2933 = vpack.c.b16 %v2373, %v2365
    %v2934 = vpack.c.b16 %v2382, %v2374
    %v2935 = vpack.c.b16 %v2383, %v2375
    %v2936 = vpack.c.b16 %v2384, %v2376
    %v2937 = vpack.c.b16 %v2385, %v2377
    %v2938 = vpack.c.b16 %v2386, %v2378
    %v2939 = vpack.c.b16 %v2387, %v2379
    %v2940 = vpack.c.b16 %v2388, %v2380
    %v2941 = vpack.c.b16 %v2389, %v2381
    %v2942 = vpack.c.b16 %v2398, %v2390
    %v2943 = vpack.c.b16 %v2399, %v2391
    %v2944 = vpack.c.b16 %v2400, %v2392
    %v2945 = vpack.c.b16 %v2401, %v2393
    %v2946 = vpack.c.b16 %v2402, %v2394
    %v2947 = vpack.c.b16 %v2403, %v2395
    %v2948 = vpack.c.b16 %v2404, %v2396
    %v2949 = vpack.c.b16 %v2405, %v2397
    %v2950 = vpack.c.b16 %v2414, %v2406
    %v2951 = vpack.c.b16 %v2415, %v2407
    %v2952 = vpack.c.b16 %v2416, %v2408
    %v2953 = vpack.c.b16 %v2417, %v2409
    %v2954 = vpack.c.b16 %v2418, %v2410
    %v2955 = vpack.c.b16 %v2419, %v2411
    %v2956 = vpack.c.b16 %v2420, %v2412
    %v2957 = vpack.c.b16 %v2421, %v2413
    %v2958 = vpack.c.b16 %v2430, %v2422
    %v2959 = vpack.c.b16 %v2431, %v2423
    %v2960 = vpack.c.b16 %v2432, %v2424
    %v2961 = vpack.c.b16 %v2433, %v2425
    %v2962 = vpack.c.b16 %v2434, %v2426
    %v2963 = vpack.c.b16 %v2435, %v2427
    %v2964 = vpack.c.b16 %v2436, %v2428
    %v2965 = vpack.c.b16 %v2437, %v2429
    %v2966 = vpack.c.b16 %v2446, %v2438
    %v2967 = vpack.c.b16 %v2447, %v2439
    %v2968 = vpack.c.b16 %v2448, %v2440
    %v2969 = vpack.c.b16 %v2449, %v2441
    %v2970 = vpack.c.b16 %v2450, %v2442
    %v2971 = vpack.c.b16 %v2451, %v2443
    %v2972 = vpack.c.b16 %v2452, %v2444
    %v2973 = vpack.c.b16 %v2453, %v2445
    %v2974 = vpack.c.b16 %v2462, %v2454
    %v2975 = vpack.c.b16 %v2463, %v2455
    %v2976 = vpack.c.b16 %v2464, %v2456
    %v2977 = vpack.c.b16 %v2465, %v2457
    %v2978 = vpack.c.b16 %v2466, %v2458
    %v2979 = vpack.c.b16 %v2467, %v2459
    %v2980 = vpack.c.b16 %v2468, %v2460
    %v2981 = vpack.c.b16 %v2469, %v2461
    %3494 = vmatprep.subr.bf16.mxu0 %v2471
    %3495 = vmatpush1.bf16.msra.mxu0 %v2470
    %3496 = vmatprep.subr.bf16.mxu0 %v2479
    %3497 = vmatpush1.bf16.msra.mxu0 %v2478
    %3498 = vmatprep.subr.bf16.mxu0 %v2487
    %3499 = vmatpush1.bf16.msra.mxu0 %v2486
    %3500 = vmatprep.subr.bf16.mxu0 %v2495
    %3501 = vmatpush1.bf16.msra.mxu0 %v2494
    %3502 = vmatprep.subr.bf16.mxu0 %v2503
    %3503 = vmatpush1.bf16.msra.mxu0 %v2502
    %3504 = vmatprep.subr.bf16.mxu0 %v2511
    %3505 = vmatpush1.bf16.msra.mxu0 %v2510
    %3506 = vmatprep.subr.bf16.mxu0 %v2519
    %3507 = vmatpush1.bf16.msra.mxu0 %v2518
    %3508 = vmatprep.subr.bf16.mxu0 %v2527
    %3509 = vmatpush1.bf16.msra.mxu0 %v2526
    %3510 = vmatprep.subr.bf16.mxu0 %v2535
    %3511 = vmatpush1.bf16.msra.mxu0 %v2534
    %3512 = vmatprep.subr.bf16.mxu0 %v2543
    %3513 = vmatpush1.bf16.msra.mxu0 %v2542
    %3514 = vmatprep.subr.bf16.mxu0 %v2551
    %3515 = vmatpush1.bf16.msra.mxu0 %v2550
    %3516 = vmatprep.subr.bf16.mxu0 %v2559
    %3517 = vmatpush1.bf16.msra.mxu0 %v2558
    %3518 = vmatprep.subr.bf16.mxu0 %v2567
    %3519 = vmatpush1.bf16.msra.mxu0 %v2566
    %3520 = vmatprep.subr.bf16.mxu0 %v2575
    %3521 = vmatpush1.bf16.msra.mxu0 %v2574
    %3522 = vmatprep.subr.bf16.mxu0 %v2583
    %3523 = vmatpush1.bf16.msra.mxu0 %v2582
    %3524 = vmatprep.subr.bf16.mxu0 %v2591
    %3525 = vmatpush1.bf16.msra.mxu0 %v2590
    %3526 = vmatprep.mubr.bf16.mxu0 %v373
    %3527 = vmatmul.mubr.bf16.gmra.mrb[0].mxu0 %v372
    %v3528 = vpop.f32.mrb[0].mxu0
    %v3529 = vadd.f32 %v897, %v3528
    %v3530 = vpop.f32.mrb[0].mxu0
    %v3531 = vadd.f32 %v901, %v3530
    %v3532 = vpop.f32.mrb[0].mxu0
    %v3533 = vpop.f32.mrb[0].mxu0
    %3534 = vdwg.mxu0
    %3535 = vmatprep.subr.bf16.mxu0 %v2599
    %3536 = vmatpush1.bf16.msra.mxu0 %v2598
    %3537 = vmatprep.subr.bf16.mxu0 %v2607
    %3538 = vmatpush1.bf16.msra.mxu0 %v2606
    %3539 = vmatprep.subr.bf16.mxu0 %v2615
    %3540 = vmatpush1.bf16.msra.mxu0 %v2614
    %3541 = vmatprep.subr.bf16.mxu0 %v2623
    %3542 = vmatpush1.bf16.msra.mxu0 %v2622
    %3543 = vmatprep.subr.bf16.mxu0 %v2631
    %3544 = vmatpush1.bf16.msra.mxu0 %v2630
    %3545 = vmatprep.subr.bf16.mxu0 %v2639
    %3546 = vmatpush1.bf16.msra.mxu0 %v2638
    %3547 = vmatprep.subr.bf16.mxu0 %v2647
    %3548 = vmatpush1.bf16.msra.mxu0 %v2646
    %3549 = vmatprep.subr.bf16.mxu0 %v2655
    %3550 = vmatpush1.bf16.msra.mxu0 %v2654
    %3551 = vmatprep.subr.bf16.mxu0 %v2663
    %3552 = vmatpush1.bf16.msra.mxu0 %v2662
    %3553 = vmatprep.subr.bf16.mxu0 %v2671
    %3554 = vmatpush1.bf16.msra.mxu0 %v2670
    %3555 = vmatprep.subr.bf16.mxu0 %v2679
    %3556 = vmatpush1.bf16.msra.mxu0 %v2678
    %3557 = vmatprep.subr.bf16.mxu0 %v2687
    %3558 = vmatpush1.bf16.msra.mxu0 %v2686
    %3559 = vmatprep.subr.bf16.mxu0 %v2695
    %3560 = vmatpush1.bf16.msra.mxu0 %v2694
    %3561 = vmatprep.subr.bf16.mxu0 %v2703
    %3562 = vmatpush1.bf16.msra.mxu0 %v2702
    %3563 = vmatprep.subr.bf16.mxu0 %v2711
    %3564 = vmatpush1.bf16.msra.mxu0 %v2710
    %3565 = vmatprep.subr.bf16.mxu0 %v2719
    %3566 = vmatpush1.bf16.msra.mxu0 %v2718
    %3567 = vmatprep.mubr.bf16.mxu0 %v375
    %3568 = vmatmul.mubr.bf16.gmra.mrb[0].mxu0 %v374
    %v3569 = vpop.f32.mrb[0].mxu0
    %v3570 = vadd.f32 %v3529, %v3569
    %v3571 = vpop.f32.mrb[0].mxu0
    %v3572 = vadd.f32 %v3531, %v3571
    %v3573 = vpop.f32.mrb[0].mxu0
    %v3574 = vpop.f32.mrb[0].mxu0
    %3575 = vdwg.mxu0
    %3576 = vmatprep.subr.bf16.mxu0 %v2727
    %3577 = vmatpush1.bf16.msra.mxu0 %v2726
    %3578 = vmatprep.subr.bf16.mxu0 %v2735
    %3579 = vmatpush1.bf16.msra.mxu0 %v2734
    %3580 = vmatprep.subr.bf16.mxu0 %v2743
    %3581 = vmatpush1.bf16.msra.mxu0 %v2742
    %3582 = vmatprep.subr.bf16.mxu0 %v2751
    %3583 = vmatpush1.bf16.msra.mxu0 %v2750
    %3584 = vmatprep.subr.bf16.mxu0 %v2759
    %3585 = vmatpush1.bf16.msra.mxu0 %v2758
    %3586 = vmatprep.subr.bf16.mxu0 %v2767
    %3587 = vmatpush1.bf16.msra.mxu0 %v2766
    %3588 = vmatprep.subr.bf16.mxu0 %v2775
    %3589 = vmatpush1.bf16.msra.mxu0 %v2774
    %3590 = vmatprep.subr.bf16.mxu0 %v2783
    %3591 = vmatpush1.bf16.msra.mxu0 %v2782
    %3592 = vmatprep.subr.bf16.mxu0 %v2791
    %3593 = vmatpush1.bf16.msra.mxu0 %v2790
    %3594 = vmatprep.subr.bf16.mxu0 %v2799
    %3595 = vmatpush1.bf16.msra.mxu0 %v2798
    %3596 = vmatprep.subr.bf16.mxu0 %v2807
    %3597 = vmatpush1.bf16.msra.mxu0 %v2806
    %3598 = vmatprep.subr.bf16.mxu0 %v2815
    %3599 = vmatpush1.bf16.msra.mxu0 %v2814
    %3600 = vmatprep.subr.bf16.mxu0 %v2823
    %3601 = vmatpush1.bf16.msra.mxu0 %v2822
    %3602 = vmatprep.subr.bf16.mxu0 %v2831
    %3603 = vmatpush1.bf16.msra.mxu0 %v2830
    %3604 = vmatprep.subr.bf16.mxu0 %v2839
    %3605 = vmatpush1.bf16.msra.mxu0 %v2838
    %3606 = vmatprep.subr.bf16.mxu0 %v2847
    %3607 = vmatpush1.bf16.msra.mxu0 %v2846
    %3608 = vmatprep.mubr.bf16.mxu0 %v377
    %3609 = vmatmul.mubr.bf16.gmra.mrb[0].mxu0 %v376
    %v3610 = vpop.f32.mrb[0].mxu0
    %v3611 = vadd.f32 %v3570, %v3610
    %v3612 = vpop.f32.mrb[0].mxu0
    %v3613 = vadd.f32 %v3572, %v3612
    %v3614 = vpop.f32.mrb[0].mxu0
    %v3615 = vpop.f32.mrb[0].mxu0
    %3616 = vdwg.mxu0
    %3617 = vmatprep.subr.bf16.mxu0 %v2855
    %3618 = vmatpush1.bf16.msra.mxu0 %v2854
    %3619 = vmatprep.subr.bf16.mxu0 %v2863
    %3620 = vmatpush1.bf16.msra.mxu0 %v2862
    %3621 = vmatprep.subr.bf16.mxu0 %v2871
    %3622 = vmatpush1.bf16.msra.mxu0 %v2870
    %3623 = vmatprep.subr.bf16.mxu0 %v2879
    %3624 = vmatpush1.bf16.msra.mxu0 %v2878
    %3625 = vmatprep.subr.bf16.mxu0 %v2887
    %3626 = vmatpush1.bf16.msra.mxu0 %v2886
    %3627 = vmatprep.subr.bf16.mxu0 %v2895
    %3628 = vmatpush1.bf16.msra.mxu0 %v2894
    %3629 = vmatprep.subr.bf16.mxu0 %v2903
    %3630 = vmatpush1.bf16.msra.mxu0 %v2902
    %3631 = vmatprep.subr.bf16.mxu0 %v2911
    %3632 = vmatpush1.bf16.msra.mxu0 %v2910
    %3633 = vmatprep.subr.bf16.mxu0 %v2919
    %3634 = vmatpush1.bf16.msra.mxu0 %v2918
    %3635 = vmatprep.subr.bf16.mxu0 %v2927
    %3636 = vmatpush1.bf16.msra.mxu0 %v2926
    %3637 = vmatprep.subr.bf16.mxu0 %v2935
    %3638 = vmatpush1.bf16.msra.mxu0 %v2934
    %3639 = vmatprep.subr.bf16.mxu0 %v2943
    %3640 = vmatpush1.bf16.msra.mxu0 %v2942
    %3641 = vmatprep.subr.bf16.mxu0 %v2951
    %3642 = vmatpush1.bf16.msra.mxu0 %v2950
    %3643 = vmatprep.subr.bf16.mxu0 %v2959
    %3644 = vmatpush1.bf16.msra.mxu0 %v2958
    %3645 = vmatprep.subr.bf16.mxu0 %v2967
    %3646 = vmatpush1.bf16.msra.mxu0 %v2966
    %3647 = vmatprep.subr.bf16.mxu0 %v2975
    %3648 = vmatpush1.bf16.msra.mxu0 %v2974
    %3649 = vmatprep.mubr.bf16.mxu0 %v379
    %3650 = vmatmul.mubr.bf16.gmra.mrb[0].mxu0 %v378
    %v3651 = vpop.f32.mrb[0].mxu0
    %v3652 = vadd.f32 %v3611, %v3651
    %v3653 = vpop.f32.mrb[0].mxu0
    %v3654 = vadd.f32 %v3613, %v3653
    %v3655 = vpop.f32.mrb[0].mxu0
    %v3656 = vpop.f32.mrb[0].mxu0
    %3657 = vdwg.mxu0
    %3658 = vmatprep.subr.bf16.mxu0 %v2473
    %3659 = vmatpush1.bf16.msra.mxu0 %v2472
    %3660 = vmatprep.subr.bf16.mxu0 %v2481
    %3661 = vmatpush1.bf16.msra.mxu0 %v2480
    %3662 = vmatprep.subr.bf16.mxu0 %v2489
    %3663 = vmatpush1.bf16.msra.mxu0 %v2488
    %3664 = vmatprep.subr.bf16.mxu0 %v2497
    %3665 = vmatpush1.bf16.msra.mxu0 %v2496
    %3666 = vmatprep.subr.bf16.mxu0 %v2505
    %3667 = vmatpush1.bf16.msra.mxu0 %v2504
    %3668 = vmatprep.subr.bf16.mxu0 %v2513
    %3669 = vmatpush1.bf16.msra.mxu0 %v2512
    %3670 = vmatprep.subr.bf16.mxu0 %v2521
    %3671 = vmatpush1.bf16.msra.mxu0 %v2520
    %3672 = vmatprep.subr.bf16.mxu0 %v2529
    %3673 = vmatpush1.bf16.msra.mxu0 %v2528
    %3674 = vmatprep.subr.bf16.mxu0 %v2537
    %3675 = vmatpush1.bf16.msra.mxu0 %v2536
    %3676 = vmatprep.subr.bf16.mxu0 %v2545
    %3677 = vmatpush1.bf16.msra.mxu0 %v2544
    %3678 = vmatprep.subr.bf16.mxu0 %v2553
    %3679 = vmatpush1.bf16.msra.mxu0 %v2552
    %3680 = vmatprep.subr.bf16.mxu0 %v2561
    %3681 = vmatpush1.bf16.msra.mxu0 %v2560
    %3682 = vmatprep.subr.bf16.mxu0 %v2569
    %3683 = vmatpush1.bf16.msra.mxu0 %v2568
    %3684 = vmatprep.subr.bf16.mxu0 %v2577
    %3685 = vmatpush1.bf16.msra.mxu0 %v2576
    %3686 = vmatprep.subr.bf16.mxu0 %v2585
    %3687 = vmatpush1.bf16.msra.mxu0 %v2584
    %3688 = vmatprep.subr.bf16.mxu0 %v2593
    %3689 = vmatpush1.bf16.msra.mxu0 %v2592
    %3690 = vmatprep.mubr.bf16.mxu0 %v373
    %3691 = vmatmul.mubr.bf16.gmra.mrb[0].mxu0 %v372
    %v3692 = vpop.f32.mrb[0].mxu0
    %v3693 = vadd.f32 %v905, %v3692
    %v3694 = vpop.f32.mrb[0].mxu0
    %v3695 = vadd.f32 %v909, %v3694
    %v3696 = vpop.f32.mrb[0].mxu0
    %v3697 = vpop.f32.mrb[0].mxu0
    %3698 = vdwg.mxu0
    %3699 = vmatprep.subr.bf16.mxu0 %v2601
    %3700 = vmatpush1.bf16.msra.mxu0 %v2600
    %3701 = vmatprep.subr.bf16.mxu0 %v2609
    %3702 = vmatpush1.bf16.msra.mxu0 %v2608
    %3703 = vmatprep.subr.bf16.mxu0 %v2617
    %3704 = vmatpush1.bf16.msra.mxu0 %v2616
    %3705 = vmatprep.subr.bf16.mxu0 %v2625
    %3706 = vmatpush1.bf16.msra.mxu0 %v2624
    %3707 = vmatprep.subr.bf16.mxu0 %v2633
    %3708 = vmatpush1.bf16.msra.mxu0 %v2632
    %3709 = vmatprep.subr.bf16.mxu0 %v2641
    %3710 = vmatpush1.bf16.msra.mxu0 %v2640
    %3711 = vmatprep.subr.bf16.mxu0 %v2649
    %3712 = vmatpush1.bf16.msra.mxu0 %v2648
    %3713 = vmatprep.subr.bf16.mxu0 %v2657
    %3714 = vmatpush1.bf16.msra.mxu0 %v2656
    %3715 = vmatprep.subr.bf16.mxu0 %v2665
    %3716 = vmatpush1.bf16.msra.mxu0 %v2664
    %3717 = vmatprep.subr.bf16.mxu0 %v2673
    %3718 = vmatpush1.bf16.msra.mxu0 %v2672
    %3719 = vmatprep.subr.bf16.mxu0 %v2681
    %3720 = vmatpush1.bf16.msra.mxu0 %v2680
    %3721 = vmatprep.subr.bf16.mxu0 %v2689
    %3722 = vmatpush1.bf16.msra.mxu0 %v2688
    %3723 = vmatprep.subr.bf16.mxu0 %v2697
    %3724 = vmatpush1.bf16.msra.mxu0 %v2696
    %3725 = vmatprep.subr.bf16.mxu0 %v2705
    %3726 = vmatpush1.bf16.msra.mxu0 %v2704
    %3727 = vmatprep.subr.bf16.mxu0 %v2713
    %3728 = vmatpush1.bf16.msra.mxu0 %v2712
    %3729 = vmatprep.subr.bf16.mxu0 %v2721
    %3730 = vmatpush1.bf16.msra.mxu0 %v2720
    %3731 = vmatprep.mubr.bf16.mxu0 %v375
    %3732 = vmatmul.mubr.bf16.gmra.mrb[0].mxu0 %v374
    %v3733 = vpop.f32.mrb[0].mxu0
    %v3734 = vadd.f32 %v3693, %v3733
    %v3735 = vpop.f32.mrb[0].mxu0
    %v3736 = vadd.f32 %v3695, %v3735
    %v3737 = vpop.f32.mrb[0].mxu0
    %v3738 = vpop.f32.mrb[0].mxu0
    %3739 = vdwg.mxu0
    %3740 = vmatprep.subr.bf16.mxu0 %v2729
    %3741 = vmatpush1.bf16.msra.mxu0 %v2728
    %3742 = vmatprep.subr.bf16.mxu0 %v2737
    %3743 = vmatpush1.bf16.msra.mxu0 %v2736
    %3744 = vmatprep.subr.bf16.mxu0 %v2745
    %3745 = vmatpush1.bf16.msra.mxu0 %v2744
    %3746 = vmatprep.subr.bf16.mxu0 %v2753
    %3747 = vmatpush1.bf16.msra.mxu0 %v2752
    %3748 = vmatprep.subr.bf16.mxu0 %v2761
    %3749 = vmatpush1.bf16.msra.mxu0 %v2760
    %3750 = vmatprep.subr.bf16.mxu0 %v2769
    %3751 = vmatpush1.bf16.msra.mxu0 %v2768
    %3752 = vmatprep.subr.bf16.mxu0 %v2777
    %3753 = vmatpush1.bf16.msra.mxu0 %v2776
    %3754 = vmatprep.subr.bf16.mxu0 %v2785
    %3755 = vmatpush1.bf16.msra.mxu0 %v2784
    %3756 = vmatprep.subr.bf16.mxu0 %v2793
    %3757 = vmatpush1.bf16.msra.mxu0 %v2792
    %3758 = vmatprep.subr.bf16.mxu0 %v2801
    %3759 = vmatpush1.bf16.msra.mxu0 %v2800
    %3760 = vmatprep.subr.bf16.mxu0 %v2809
    %3761 = vmatpush1.bf16.msra.mxu0 %v2808
    %3762 = vmatprep.subr.bf16.mxu0 %v2817
    %3763 = vmatpush1.bf16.msra.mxu0 %v2816
    %3764 = vmatprep.subr.bf16.mxu0 %v2825
    %3765 = vmatpush1.bf16.msra.mxu0 %v2824
    %3766 = vmatprep.subr.bf16.mxu0 %v2833
    %3767 = vmatpush1.bf16.msra.mxu0 %v2832
    %3768 = vmatprep.subr.bf16.mxu0 %v2841
    %3769 = vmatpush1.bf16.msra.mxu0 %v2840
    %3770 = vmatprep.subr.bf16.mxu0 %v2849
    %3771 = vmatpush1.bf16.msra.mxu0 %v2848
    %3772 = vmatprep.mubr.bf16.mxu0 %v377
    %3773 = vmatmul.mubr.bf16.gmra.mrb[0].mxu0 %v376
    %v3774 = vpop.f32.mrb[0].mxu0
    %v3775 = vadd.f32 %v3734, %v3774
    %v3776 = vpop.f32.mrb[0].mxu0
    %v3777 = vadd.f32 %v3736, %v3776
    %v3778 = vpop.f32.mrb[0].mxu0
    %v3779 = vpop.f32.mrb[0].mxu0
    %3780 = vdwg.mxu0
    %3781 = vmatprep.subr.bf16.mxu0 %v2857
    %3782 = vmatpush1.bf16.msra.mxu0 %v2856
    %3783 = vmatprep.subr.bf16.mxu0 %v2865
    %3784 = vmatpush1.bf16.msra.mxu0 %v2864
    %3785 = vmatprep.subr.bf16.mxu0 %v2873
    %3786 = vmatpush1.bf16.msra.mxu0 %v2872
    %3787 = vmatprep.subr.bf16.mxu0 %v2881
    %3788 = vmatpush1.bf16.msra.mxu0 %v2880
    %3789 = vmatprep.subr.bf16.mxu0 %v2889
    %3790 = vmatpush1.bf16.msra.mxu0 %v2888
    %3791 = vmatprep.subr.bf16.mxu0 %v2897
    %3792 = vmatpush1.bf16.msra.mxu0 %v2896
    %3793 = vmatprep.subr.bf16.mxu0 %v2905
    %3794 = vmatpush1.bf16.msra.mxu0 %v2904
    %3795 = vmatprep.subr.bf16.mxu0 %v2913
    %3796 = vmatpush1.bf16.msra.mxu0 %v2912
    %3797 = vmatprep.subr.bf16.mxu0 %v2921
    %3798 = vmatpush1.bf16.msra.mxu0 %v2920
    %3799 = vmatprep.subr.bf16.mxu0 %v2929
    %3800 = vmatpush1.bf16.msra.mxu0 %v2928
    %3801 = vmatprep.subr.bf16.mxu0 %v2937
    %3802 = vmatpush1.bf16.msra.mxu0 %v2936
    %3803 = vmatprep.subr.bf16.mxu0 %v2945
    %3804 = vmatpush1.bf16.msra.mxu0 %v2944
    %3805 = vmatprep.subr.bf16.mxu0 %v2953
    %3806 = vmatpush1.bf16.msra.mxu0 %v2952
    %3807 = vmatprep.subr.bf16.mxu0 %v2961
    %3808 = vmatpush1.bf16.msra.mxu0 %v2960
    %3809 = vmatprep.subr.bf16.mxu0 %v2969
    %3810 = vmatpush1.bf16.msra.mxu0 %v2968
    %3811 = vmatprep.subr.bf16.mxu0 %v2977
    %3812 = vmatpush1.bf16.msra.mxu0 %v2976
    %3813 = vmatprep.mubr.bf16.mxu0 %v379
    %3814 = vmatmul.mubr.bf16.gmra.mrb[0].mxu0 %v378
    %v3815 = vpop.f32.mrb[0].mxu0
    %v3816 = vadd.f32 %v3775, %v3815
    %v3817 = vpop.f32.mrb[0].mxu0
    %v3818 = vadd.f32 %v3777, %v3817
    %v3819 = vpop.f32.mrb[0].mxu0
    %v3820 = vpop.f32.mrb[0].mxu0
    %3821 = vdwg.mxu0
    %3822 = vmatprep.subr.bf16.mxu0 %v2475
    %3823 = vmatpush1.bf16.msra.mxu0 %v2474
    %3824 = vmatprep.subr.bf16.mxu0 %v2483
    %3825 = vmatpush1.bf16.msra.mxu0 %v2482
    %3826 = vmatprep.subr.bf16.mxu0 %v2491
    %3827 = vmatpush1.bf16.msra.mxu0 %v2490
    %3828 = vmatprep.subr.bf16.mxu0 %v2499
    %3829 = vmatpush1.bf16.msra.mxu0 %v2498
    %3830 = vmatprep.subr.bf16.mxu0 %v2507
    %3831 = vmatpush1.bf16.msra.mxu0 %v2506
    %3832 = vmatprep.subr.bf16.mxu0 %v2515
    %3833 = vmatpush1.bf16.msra.mxu0 %v2514
    %3834 = vmatprep.subr.bf16.mxu0 %v2523
    %3835 = vmatpush1.bf16.msra.mxu0 %v2522
    %3836 = vmatprep.subr.bf16.mxu0 %v2531
    %3837 = vmatpush1.bf16.msra.mxu0 %v2530
    %3838 = vmatprep.subr.bf16.mxu0 %v2539
    %3839 = vmatpush1.bf16.msra.mxu0 %v2538
    %3840 = vmatprep.subr.bf16.mxu0 %v2547
    %3841 = vmatpush1.bf16.msra.mxu0 %v2546
    %3842 = vmatprep.subr.bf16.mxu0 %v2555
    %3843 = vmatpush1.bf16.msra.mxu0 %v2554
    %3844 = vmatprep.subr.bf16.mxu0 %v2563
    %3845 = vmatpush1.bf16.msra.mxu0 %v2562
    %3846 = vmatprep.subr.bf16.mxu0 %v2571
    %3847 = vmatpush1.bf16.msra.mxu0 %v2570
    %3848 = vmatprep.subr.bf16.mxu0 %v2579
    %3849 = vmatpush1.bf16.msra.mxu0 %v2578
    %3850 = vmatprep.subr.bf16.mxu0 %v2587
    %3851 = vmatpush1.bf16.msra.mxu0 %v2586
    %3852 = vmatprep.subr.bf16.mxu0 %v2595
    %3853 = vmatpush1.bf16.msra.mxu0 %v2594
    %3854 = vmatprep.mubr.bf16.mxu0 %v373
    %3855 = vmatmul.mubr.bf16.gmra.mrb[0].mxu0 %v372
    %v3856 = vpop.f32.mrb[0].mxu0
    %v3857 = vadd.f32 %v913, %v3856
    %v3858 = vpop.f32.mrb[0].mxu0
    %v3859 = vadd.f32 %v917, %v3858
    %v3860 = vpop.f32.mrb[0].mxu0
    %v3861 = vpop.f32.mrb[0].mxu0
    %3862 = vdwg.mxu0
    %3863 = vmatprep.subr.bf16.mxu0 %v2603
    %3864 = vmatpush1.bf16.msra.mxu0 %v2602
    %3865 = vmatprep.subr.bf16.mxu0 %v2611
    %3866 = vmatpush1.bf16.msra.mxu0 %v2610
    %3867 = vmatprep.subr.bf16.mxu0 %v2619
    %3868 = vmatpush1.bf16.msra.mxu0 %v2618
    %3869 = vmatprep.subr.bf16.mxu0 %v2627
    %3870 = vmatpush1.bf16.msra.mxu0 %v2626
    %3871 = vmatprep.subr.bf16.mxu0 %v2635
    %3872 = vmatpush1.bf16.msra.mxu0 %v2634
    %3873 = vmatprep.subr.bf16.mxu0 %v2643
    %3874 = vmatpush1.bf16.msra.mxu0 %v2642
    %3875 = vmatprep.subr.bf16.mxu0 %v2651
    %3876 = vmatpush1.bf16.msra.mxu0 %v2650
    %3877 = vmatprep.subr.bf16.mxu0 %v2659
    %3878 = vmatpush1.bf16.msra.mxu0 %v2658
    %3879 = vmatprep.subr.bf16.mxu0 %v2667
    %3880 = vmatpush1.bf16.msra.mxu0 %v2666
    %3881 = vmatprep.subr.bf16.mxu0 %v2675
    %3882 = vmatpush1.bf16.msra.mxu0 %v2674
    %3883 = vmatprep.subr.bf16.mxu0 %v2683
    %3884 = vmatpush1.bf16.msra.mxu0 %v2682
    %3885 = vmatprep.subr.bf16.mxu0 %v2691
    %3886 = vmatpush1.bf16.msra.mxu0 %v2690
    %3887 = vmatprep.subr.bf16.mxu0 %v2699
    %3888 = vmatpush1.bf16.msra.mxu0 %v2698
    %3889 = vmatprep.subr.bf16.mxu0 %v2707
    %3890 = vmatpush1.bf16.msra.mxu0 %v2706
    %3891 = vmatprep.subr.bf16.mxu0 %v2715
    %3892 = vmatpush1.bf16.msra.mxu0 %v2714
    %3893 = vmatprep.subr.bf16.mxu0 %v2723
    %3894 = vmatpush1.bf16.msra.mxu0 %v2722
    %3895 = vmatprep.mubr.bf16.mxu0 %v375
    %3896 = vmatmul.mubr.bf16.gmra.mrb[0].mxu0 %v374
    %v3897 = vpop.f32.mrb[0].mxu0
    %v3898 = vadd.f32 %v3857, %v3897
    %v3899 = vpop.f32.mrb[0].mxu0
    %v3900 = vadd.f32 %v3859, %v3899
    %v3901 = vpop.f32.mrb[0].mxu0
    %v3902 = vpop.f32.mrb[0].mxu0
    %3903 = vdwg.mxu0
    %3904 = vmatprep.subr.bf16.mxu0 %v2731
    %3905 = vmatpush1.bf16.msra.mxu0 %v2730
    %3906 = vmatprep.subr.bf16.mxu0 %v2739
    %3907 = vmatpush1.bf16.msra.mxu0 %v2738
    %3908 = vmatprep.subr.bf16.mxu0 %v2747
    %3909 = vmatpush1.bf16.msra.mxu0 %v2746
    %3910 = vmatprep.subr.bf16.mxu0 %v2755
    %3911 = vmatpush1.bf16.msra.mxu0 %v2754
    %3912 = vmatprep.subr.bf16.mxu0 %v2763
    %3913 = vmatpush1.bf16.msra.mxu0 %v2762
    %3914 = vmatprep.subr.bf16.mxu0 %v2771
    %3915 = vmatpush1.bf16.msra.mxu0 %v2770
    %3916 = vmatprep.subr.bf16.mxu0 %v2779
    %3917 = vmatpush1.bf16.msra.mxu0 %v2778
    %3918 = vmatprep.subr.bf16.mxu0 %v2787
    %3919 = vmatpush1.bf16.msra.mxu0 %v2786
    %3920 = vmatprep.subr.bf16.mxu0 %v2795
    %3921 = vmatpush1.bf16.msra.mxu0 %v2794
    %3922 = vmatprep.subr.bf16.mxu0 %v2803
    %3923 = vmatpush1.bf16.msra.mxu0 %v2802
    %3924 = vmatprep.subr.bf16.mxu0 %v2811
    %3925 = vmatpush1.bf16.msra.mxu0 %v2810
    %3926 = vmatprep.subr.bf16.mxu0 %v2819
    %3927 = vmatpush1.bf16.msra.mxu0 %v2818
    %3928 = vmatprep.subr.bf16.mxu0 %v2827
    %3929 = vmatpush1.bf16.msra.mxu0 %v2826
    %3930 = vmatprep.subr.bf16.mxu0 %v2835
    %3931 = vmatpush1.bf16.msra.mxu0 %v2834
    %3932 = vmatprep.subr.bf16.mxu0 %v2843
    %3933 = vmatpush1.bf16.msra.mxu0 %v2842
    %3934 = vmatprep.subr.bf16.mxu0 %v2851
    %3935 = vmatpush1.bf16.msra.mxu0 %v2850
    %3936 = vmatprep.mubr.bf16.mxu0 %v377
    %3937 = vmatmul.mubr.bf16.gmra.mrb[0].mxu0 %v376
    %v3938 = vpop.f32.mrb[0].mxu0
    %v3939 = vadd.f32 %v3898, %v3938
    %v3940 = vpop.f32.mrb[0].mxu0
    %v3941 = vadd.f32 %v3900, %v3940
    %v3942 = vpop.f32.mrb[0].mxu0
    %v3943 = vpop.f32.mrb[0].mxu0
    %3944 = vdwg.mxu0
    %3945 = vmatprep.subr.bf16.mxu0 %v2859
    %3946 = vmatpush1.bf16.msra.mxu0 %v2858
    %3947 = vmatprep.subr.bf16.mxu0 %v2867
    %3948 = vmatpush1.bf16.msra.mxu0 %v2866
    %3949 = vmatprep.subr.bf16.mxu0 %v2875
    %3950 = vmatpush1.bf16.msra.mxu0 %v2874
    %3951 = vmatprep.subr.bf16.mxu0 %v2883
    %3952 = vmatpush1.bf16.msra.mxu0 %v2882
    %3953 = vmatprep.subr.bf16.mxu0 %v2891
    %3954 = vmatpush1.bf16.msra.mxu0 %v2890
    %3955 = vmatprep.subr.bf16.mxu0 %v2899
    %3956 = vmatpush1.bf16.msra.mxu0 %v2898
    %3957 = vmatprep.subr.bf16.mxu0 %v2907
    %3958 = vmatpush1.bf16.msra.mxu0 %v2906
    %3959 = vmatprep.subr.bf16.mxu0 %v2915
    %3960 = vmatpush1.bf16.msra.mxu0 %v2914
    %3961 = vmatprep.subr.bf16.mxu0 %v2923
    %3962 = vmatpush1.bf16.msra.mxu0 %v2922
    %3963 = vmatprep.subr.bf16.mxu0 %v2931
    %3964 = vmatpush1.bf16.msra.mxu0 %v2930
    %3965 = vmatprep.subr.bf16.mxu0 %v2939
    %3966 = vmatpush1.bf16.msra.mxu0 %v2938
    %3967 = vmatprep.subr.bf16.mxu0 %v2947
    %3968 = vmatpush1.bf16.msra.mxu0 %v2946
    %3969 = vmatprep.subr.bf16.mxu0 %v2955
    %3970 = vmatpush1.bf16.msra.mxu0 %v2954
    %3971 = vmatprep.subr.bf16.mxu0 %v2963
    %3972 = vmatpush1.bf16.msra.mxu0 %v2962
    %3973 = vmatprep.subr.bf16.mxu0 %v2971
    %3974 = vmatpush1.bf16.msra.mxu0 %v2970
    %3975 = vmatprep.subr.bf16.mxu0 %v2979
    %3976 = vmatpush1.bf16.msra.mxu0 %v2978
    %3977 = vmatprep.mubr.bf16.mxu0 %v379
    %3978 = vmatmul.mubr.bf16.gmra.mrb[0].mxu0 %v378
    %v3979 = vpop.f32.mrb[0].mxu0
    %v3980 = vadd.f32 %v3939, %v3979
    %v3981 = vpop.f32.mrb[0].mxu0
    %v3982 = vadd.f32 %v3941, %v3981
    %v3983 = vpop.f32.mrb[0].mxu0
    %v3984 = vpop.f32.mrb[0].mxu0
    %3985 = vdwg.mxu0
    %3986 = vmatprep.subr.bf16.mxu0 %v2477
    %3987 = vmatpush1.bf16.msra.mxu0 %v2476
    %3988 = vmatprep.subr.bf16.mxu0 %v2485
    %3989 = vmatpush1.bf16.msra.mxu0 %v2484
    %3990 = vmatprep.subr.bf16.mxu0 %v2493
    %3991 = vmatpush1.bf16.msra.mxu0 %v2492
    %3992 = vmatprep.subr.bf16.mxu0 %v2501
    %3993 = vmatpush1.bf16.msra.mxu0 %v2500
    %3994 = vmatprep.subr.bf16.mxu0 %v2509
    %3995 = vmatpush1.bf16.msra.mxu0 %v2508
    %3996 = vmatprep.subr.bf16.mxu0 %v2517
    %3997 = vmatpush1.bf16.msra.mxu0 %v2516
    %3998 = vmatprep.subr.bf16.mxu0 %v2525
    %3999 = vmatpush1.bf16.msra.mxu0 %v2524
    %4000 = vmatprep.subr.bf16.mxu0 %v2533
    %4001 = vmatpush1.bf16.msra.mxu0 %v2532
    %4002 = vmatprep.subr.bf16.mxu0 %v2541
    %4003 = vmatpush1.bf16.msra.mxu0 %v2540
    %4004 = vmatprep.subr.bf16.mxu0 %v2549
    %4005 = vmatpush1.bf16.msra.mxu0 %v2548
    %4006 = vmatprep.subr.bf16.mxu0 %v2557
    %4007 = vmatpush1.bf16.msra.mxu0 %v2556
    %4008 = vmatprep.subr.bf16.mxu0 %v2565
    %4009 = vmatpush1.bf16.msra.mxu0 %v2564
    %4010 = vmatprep.subr.bf16.mxu0 %v2573
    %4011 = vmatpush1.bf16.msra.mxu0 %v2572
    %4012 = vmatprep.subr.bf16.mxu0 %v2581
    %4013 = vmatpush1.bf16.msra.mxu0 %v2580
    %4014 = vmatprep.subr.bf16.mxu0 %v2589
    %4015 = vmatpush1.bf16.msra.mxu0 %v2588
    %4016 = vmatprep.subr.bf16.mxu0 %v2597
    %4017 = vmatpush1.bf16.msra.mxu0 %v2596
    %4018 = vmatprep.mubr.bf16.mxu0 %v373
    %4019 = vmatmul.mubr.bf16.gmra.mrb[0].mxu0 %v372
    %v4020 = vpop.f32.mrb[0].mxu0
    %v4021 = vadd.f32 %v921, %v4020
    %v4022 = vpop.f32.mrb[0].mxu0
    %v4023 = vadd.f32 %v925, %v4022
    %v4024 = vpop.f32.mrb[0].mxu0
    %v4025 = vpop.f32.mrb[0].mxu0
    %4026 = vdwg.mxu0
    %4027 = vmatprep.subr.bf16.mxu0 %v2605
    %4028 = vmatpush1.bf16.msra.mxu0 %v2604
    %4029 = vmatprep.subr.bf16.mxu0 %v2613
    %4030 = vmatpush1.bf16.msra.mxu0 %v2612
    %4031 = vmatprep.subr.bf16.mxu0 %v2621
    %4032 = vmatpush1.bf16.msra.mxu0 %v2620
    %4033 = vmatprep.subr.bf16.mxu0 %v2629
    %4034 = vmatpush1.bf16.msra.mxu0 %v2628
    %4035 = vmatprep.subr.bf16.mxu0 %v2637
    %4036 = vmatpush1.bf16.msra.mxu0 %v2636
    %4037 = vmatprep.subr.bf16.mxu0 %v2645
    %4038 = vmatpush1.bf16.msra.mxu0 %v2644
    %4039 = vmatprep.subr.bf16.mxu0 %v2653
    %4040 = vmatpush1.bf16.msra.mxu0 %v2652
    %4041 = vmatprep.subr.bf16.mxu0 %v2661
    %4042 = vmatpush1.bf16.msra.mxu0 %v2660
    %4043 = vmatprep.subr.bf16.mxu0 %v2669
    %4044 = vmatpush1.bf16.msra.mxu0 %v2668
    %4045 = vmatprep.subr.bf16.mxu0 %v2677
    %4046 = vmatpush1.bf16.msra.mxu0 %v2676
    %4047 = vmatprep.subr.bf16.mxu0 %v2685
    %4048 = vmatpush1.bf16.msra.mxu0 %v2684
    %4049 = vmatprep.subr.bf16.mxu0 %v2693
    %4050 = vmatpush1.bf16.msra.mxu0 %v2692
    %4051 = vmatprep.subr.bf16.mxu0 %v2701
    %4052 = vmatpush1.bf16.msra.mxu0 %v2700
    %4053 = vmatprep.subr.bf16.mxu0 %v2709
    %4054 = vmatpush1.bf16.msra.mxu0 %v2708
    %4055 = vmatprep.subr.bf16.mxu0 %v2717
    %4056 = vmatpush1.bf16.msra.mxu0 %v2716
    %4057 = vmatprep.subr.bf16.mxu0 %v2725
    %4058 = vmatpush1.bf16.msra.mxu0 %v2724
    %4059 = vmatprep.mubr.bf16.mxu0 %v375
    %4060 = vmatmul.mubr.bf16.gmra.mrb[0].mxu0 %v374
    %v4061 = vpop.f32.mrb[0].mxu0
    %v4062 = vadd.f32 %v4021, %v4061
    %v4063 = vpop.f32.mrb[0].mxu0
    %v4064 = vadd.f32 %v4023, %v4063
    %v4065 = vpop.f32.mrb[0].mxu0
    %v4066 = vpop.f32.mrb[0].mxu0
    %4067 = vdwg.mxu0
    %4068 = vmatprep.subr.bf16.mxu0 %v2733
    %4069 = vmatpush1.bf16.msra.mxu0 %v2732
    %4070 = vmatprep.subr.bf16.mxu0 %v2741
    %4071 = vmatpush1.bf16.msra.mxu0 %v2740
    %4072 = vmatprep.subr.bf16.mxu0 %v2749
    %4073 = vmatpush1.bf16.msra.mxu0 %v2748
    %4074 = vmatprep.subr.bf16.mxu0 %v2757
    %4075 = vmatpush1.bf16.msra.mxu0 %v2756
    %4076 = vmatprep.subr.bf16.mxu0 %v2765
    %4077 = vmatpush1.bf16.msra.mxu0 %v2764
    %4078 = vmatprep.subr.bf16.mxu0 %v2773
    %4079 = vmatpush1.bf16.msra.mxu0 %v2772
    %4080 = vmatprep.subr.bf16.mxu0 %v2781
    %4081 = vmatpush1.bf16.msra.mxu0 %v2780
    %4082 = vmatprep.subr.bf16.mxu0 %v2789
    %4083 = vmatpush1.bf16.msra.mxu0 %v2788
    %4084 = vmatprep.subr.bf16.mxu0 %v2797
    %4085 = vmatpush1.bf16.msra.mxu0 %v2796
    %4086 = vmatprep.subr.bf16.mxu0 %v2805
    %4087 = vmatpush1.bf16.msra.mxu0 %v2804
    %4088 = vmatprep.subr.bf16.mxu0 %v2813
    %4089 = vmatpush1.bf16.msra.mxu0 %v2812
    %4090 = vmatprep.subr.bf16.mxu0 %v2821
    %4091 = vmatpush1.bf16.msra.mxu0 %v2820
    %4092 = vmatprep.subr.bf16.mxu0 %v2829
    %4093 = vmatpush1.bf16.msra.mxu0 %v2828
    %4094 = vmatprep.subr.bf16.mxu0 %v2837
    %4095 = vmatpush1.bf16.msra.mxu0 %v2836
    %4096 = vmatprep.subr.bf16.mxu0 %v2845
    %4097 = vmatpush1.bf16.msra.mxu0 %v2844
    %4098 = vmatprep.subr.bf16.mxu0 %v2853
    %4099 = vmatpush1.bf16.msra.mxu0 %v2852
    %4100 = vmatprep.mubr.bf16.mxu0 %v377
    %4101 = vmatmul.mubr.bf16.gmra.mrb[0].mxu0 %v376
    %v4102 = vpop.f32.mrb[0].mxu0
    %v4103 = vadd.f32 %v4062, %v4102
    %v4104 = vpop.f32.mrb[0].mxu0
    %v4105 = vadd.f32 %v4064, %v4104
    %v4106 = vpop.f32.mrb[0].mxu0
    %v4107 = vpop.f32.mrb[0].mxu0
    %4108 = vdwg.mxu0
    %4109 = vmatprep.subr.bf16.mxu0 %v2861
    %4110 = vmatpush1.bf16.msra.mxu0 %v2860
    %4111 = vmatprep.subr.bf16.mxu0 %v2869
    %4112 = vmatpush1.bf16.msra.mxu0 %v2868
    %4113 = vmatprep.subr.bf16.mxu0 %v2877
    %4114 = vmatpush1.bf16.msra.mxu0 %v2876
    %4115 = vmatprep.subr.bf16.mxu0 %v2885
    %4116 = vmatpush1.bf16.msra.mxu0 %v2884
    %4117 = vmatprep.subr.bf16.mxu0 %v2893
    %4118 = vmatpush1.bf16.msra.mxu0 %v2892
    %4119 = vmatprep.subr.bf16.mxu0 %v2901
    %4120 = vmatpush1.bf16.msra.mxu0 %v2900
    %4121 = vmatprep.subr.bf16.mxu0 %v2909
    %4122 = vmatpush1.bf16.msra.mxu0 %v2908
    %4123 = vmatprep.subr.bf16.mxu0 %v2917
    %4124 = vmatpush1.bf16.msra.mxu0 %v2916
    %4125 = vmatprep.subr.bf16.mxu0 %v2925
    %4126 = vmatpush1.bf16.msra.mxu0 %v2924
    %4127 = vmatprep.subr.bf16.mxu0 %v2933
    %4128 = vmatpush1.bf16.msra.mxu0 %v2932
    %4129 = vmatprep.subr.bf16.mxu0 %v2941
    %4130 = vmatpush1.bf16.msra.mxu0 %v2940
    %4131 = vmatprep.subr.bf16.mxu0 %v2949
    %4132 = vmatpush1.bf16.msra.mxu0 %v2948
    %4133 = vmatprep.subr.bf16.mxu0 %v2957
    %4134 = vmatpush1.bf16.msra.mxu0 %v2956
    %4135 = vmatprep.subr.bf16.mxu0 %v2965
    %4136 = vmatpush1.bf16.msra.mxu0 %v2964
    %4137 = vmatprep.subr.bf16.mxu0 %v2973
    %4138 = vmatpush1.bf16.msra.mxu0 %v2972
    %4139 = vmatprep.subr.bf16.mxu0 %v2981
    %4140 = vmatpush1.bf16.msra.mxu0 %v2980
    %4141 = vmatprep.mubr.bf16.mxu0 %v379
    %4142 = vmatmul.mubr.bf16.gmra.mrb[0].mxu0 %v378
    %v4143 = vpop.f32.mrb[0].mxu0
    %v4144 = vadd.f32 %v4103, %v4143
    %v4145 = vpop.f32.mrb[0].mxu0
    %v4146 = vadd.f32 %v4105, %v4145
    %v4147 = vpop.f32.mrb[0].mxu0
    %v4148 = vpop.f32.mrb[0].mxu0
    %4149 = vdwg.mxu0
    %v4150 = vmax.f32 %v3652, 0.0
    %v4151 = vmax.f32 %v3654, 0.0
    %v4152 = vmax.f32 %v3816, 0.0
    %v4153 = vmax.f32 %v3818, 0.0
    %v4154 = vmax.f32 %v3980, 0.0
    %v4155 = vmax.f32 %v3982, 0.0
    %v4156 = vmax.f32 %v4144, 0.0
    %v4157 = vmax.f32 %v4146, 0.0
    %v4158 = vpack.c.bf16 %v4150, %v4150
    %v4159 = vpack.c.bf16 %v4151, %v4151
    %v4160 = vpack.c.bf16 %v4152, %v4152
    %v4161 = vpack.c.bf16 %v4153, %v4153
    %v4162 = vpack.c.bf16 %v4154, %v4154
    %v4163 = vpack.c.bf16 %v4155, %v4155
    %v4164 = vpack.c.bf16 %v4156, %v4156
    %v4165 = vpack.c.bf16 %v4157, %v4157
    %v4166 = vld [vmem:[#allocation9] sm:$0xff]
    %v4167 = vld [vmem:[#allocation9 + $0x8] sm:$0xff]
    %v4168 = vld [vmem:[#allocation9 + $0x10] sm:$0xff]
    %v4169 = vld [vmem:[#allocation9 + $0x18] sm:$0xff]
    %v4170 = vld [vmem:[#allocation9 + $0x20] sm:$0xff]
    %v4171 = vld [vmem:[#allocation9 + $0x28] sm:$0xff]
    %v4172 = vld [vmem:[#allocation9 + $0x30] sm:$0xff]
    %v4173 = vld [vmem:[#allocation9 + $0x38] sm:$0xff]
    %v4174 = vld [vmem:[#allocation9 + $0x40] sm:$0xff]
    %v4175 = vld [vmem:[#allocation9 + $0x48] sm:$0xff]
    %v4176 = vld [vmem:[#allocation9 + $0x50] sm:$0xff]
    %v4177 = vld [vmem:[#allocation9 + $0x58] sm:$0xff]
    %v4178 = vld [vmem:[#allocation9 + $0x60] sm:$0xff]
    %v4179 = vld [vmem:[#allocation9 + $0x68] sm:$0xff]
    %v4180 = vld [vmem:[#allocation9 + $0x70] sm:$0xff]
    %v4181 = vld [vmem:[#allocation9 + $0x78] sm:$0xff]
    %v4182 = vld [vmem:[#allocation9 + $0x80] sm:$0xff]
    %v4183 = vld [vmem:[#allocation9 + $0x88] sm:$0xff]
    %v4184 = vld [vmem:[#allocation9 + $0x90] sm:$0xff]
    %v4185 = vld [vmem:[#allocation9 + $0x98] sm:$0xff]
    %v4186 = vld [vmem:[#allocation9 + $0xa0] sm:$0xff]
    %v4187 = vld [vmem:[#allocation9 + $0xa8] sm:$0xff]
    %v4188 = vld [vmem:[#allocation9 + $0xb0] sm:$0xff]
    %v4189 = vld [vmem:[#allocation9 + $0xb8] sm:$0xff]
    %v4190 = vld [vmem:[#allocation9 + $0xc0] sm:$0xff]
    %v4191 = vld [vmem:[#allocation9 + $0xc8] sm:$0xff]
    %v4192 = vld [vmem:[#allocation9 + $0xd0] sm:$0xff]
    %v4193 = vld [vmem:[#allocation9 + $0xd8] sm:$0xff]
    %v4194 = vld [vmem:[#allocation9 + $0xe0] sm:$0xff]
    %v4195 = vld [vmem:[#allocation9 + $0xe8] sm:$0xff]
    %v4196 = vld [vmem:[#allocation9 + $0xf0] sm:$0xff]
    %v4197 = vld [vmem:[#allocation9 + $0xf8] sm:$0xff]
    %v4198 = vld [vmem:[#allocation9 + $0x100] sm:$0xff]
    %v4199 = vld [vmem:[#allocation9 + $0x108] sm:$0xff]
    %v4200 = vld [vmem:[#allocation9 + $0x110] sm:$0xff]
    %v4201 = vld [vmem:[#allocation9 + $0x118] sm:$0xff]
    %v4202 = vld [vmem:[#allocation9 + $0x120] sm:$0xff]
    %v4203 = vld [vmem:[#allocation9 + $0x128] sm:$0xff]
    %v4204 = vld [vmem:[#allocation9 + $0x130] sm:$0xff]
    %v4205 = vld [vmem:[#allocation9 + $0x138] sm:$0xff]
    %v4206 = vld [vmem:[#allocation9 + $0x140] sm:$0xff]
    %v4207 = vld [vmem:[#allocation9 + $0x148] sm:$0xff]
    %v4208 = vld [vmem:[#allocation9 + $0x150] sm:$0xff]
    %v4209 = vld [vmem:[#allocation9 + $0x158] sm:$0xff]
    %v4210 = vld [vmem:[#allocation9 + $0x160] sm:$0xff]
    %v4211 = vld [vmem:[#allocation9 + $0x168] sm:$0xff]
    %v4212 = vld [vmem:[#allocation9 + $0x170] sm:$0xff]
    %v4213 = vld [vmem:[#allocation9 + $0x178] sm:$0xff]
    %v4214 = vld [vmem:[#allocation9 + $0x180] sm:$0xff]
    %v4215 = vld [vmem:[#allocation9 + $0x188] sm:$0xff]
    %v4216 = vld [vmem:[#allocation9 + $0x190] sm:$0xff]
    %v4217 = vld [vmem:[#allocation9 + $0x198] sm:$0xff]
    %v4218 = vld [vmem:[#allocation9 + $0x1a0] sm:$0xff]
    %v4219 = vld [vmem:[#allocation9 + $0x1a8] sm:$0xff]
    %v4220 = vld [vmem:[#allocation9 + $0x1b0] sm:$0xff]
    %v4221 = vld [vmem:[#allocation9 + $0x1b8] sm:$0xff]
    %v4222 = vld [vmem:[#allocation9 + $0x1c0] sm:$0xff]
    %v4223 = vld [vmem:[#allocation9 + $0x1c8] sm:$0xff]
    %v4224 = vld [vmem:[#allocation9 + $0x1d0] sm:$0xff]
    %v4225 = vld [vmem:[#allocation9 + $0x1d8] sm:$0xff]
    %v4226 = vld [vmem:[#allocation9 + $0x1e0] sm:$0xff]
    %v4227 = vld [vmem:[#allocation9 + $0x1e8] sm:$0xff]
    %v4228 = vld [vmem:[#allocation9 + $0x1f0] sm:$0xff]
    %v4229 = vld [vmem:[#allocation9 + $0x1f8] sm:$0xff]
    %v4230 = vld [vmem:[#allocation9 + $0x200] sm:$0xff]
    %v4231 = vld [vmem:[#allocation9 + $0x208] sm:$0xff]
    %v4232 = vld [vmem:[#allocation9 + $0x210] sm:$0xff]
    %v4233 = vld [vmem:[#allocation9 + $0x218] sm:$0xff]
    %v4234 = vld [vmem:[#allocation9 + $0x220] sm:$0xff]
    %v4235 = vld [vmem:[#allocation9 + $0x228] sm:$0xff]
    %v4236 = vld [vmem:[#allocation9 + $0x230] sm:$0xff]
    %v4237 = vld [vmem:[#allocation9 + $0x238] sm:$0xff]
    %v4238 = vld [vmem:[#allocation9 + $0x240] sm:$0xff]
    %v4239 = vld [vmem:[#allocation9 + $0x248] sm:$0xff]
    %v4240 = vld [vmem:[#allocation9 + $0x250] sm:$0xff]
    %v4241 = vld [vmem:[#allocation9 + $0x258] sm:$0xff]
    %v4242 = vld [vmem:[#allocation9 + $0x260] sm:$0xff]
    %v4243 = vld [vmem:[#allocation9 + $0x268] sm:$0xff]
    %v4244 = vld [vmem:[#allocation9 + $0x270] sm:$0xff]
    %v4245 = vld [vmem:[#allocation9 + $0x278] sm:$0xff]
    %v4246 = vld [vmem:[#allocation9 + $0x280] sm:$0xff]
    %v4247 = vld [vmem:[#allocation9 + $0x288] sm:$0xff]
    %v4248 = vld [vmem:[#allocation9 + $0x290] sm:$0xff]
    %v4249 = vld [vmem:[#allocation9 + $0x298] sm:$0xff]
    %v4250 = vld [vmem:[#allocation9 + $0x2a0] sm:$0xff]
    %v4251 = vld [vmem:[#allocation9 + $0x2a8] sm:$0xff]
    %v4252 = vld [vmem:[#allocation9 + $0x2b0] sm:$0xff]
    %v4253 = vld [vmem:[#allocation9 + $0x2b8] sm:$0xff]
    %v4254 = vld [vmem:[#allocation9 + $0x2c0] sm:$0xff]
    %v4255 = vld [vmem:[#allocation9 + $0x2c8] sm:$0xff]
    %v4256 = vld [vmem:[#allocation9 + $0x2d0] sm:$0xff]
    %v4257 = vld [vmem:[#allocation9 + $0x2d8] sm:$0xff]
    %v4258 = vld [vmem:[#allocation9 + $0x2e0] sm:$0xff]
    %v4259 = vld [vmem:[#allocation9 + $0x2e8] sm:$0xff]
    %v4260 = vld [vmem:[#allocation9 + $0x2f0] sm:$0xff]
    %v4261 = vld [vmem:[#allocation9 + $0x2f8] sm:$0xff]
    %v4262 = vld [vmem:[#allocation9 + $0x300] sm:$0xff]
    %v4263 = vld [vmem:[#allocation9 + $0x308] sm:$0xff]
    %v4264 = vld [vmem:[#allocation9 + $0x310] sm:$0xff]
    %v4265 = vld [vmem:[#allocation9 + $0x318] sm:$0xff]
    %v4266 = vld [vmem:[#allocation9 + $0x320] sm:$0xff]
    %v4267 = vld [vmem:[#allocation9 + $0x328] sm:$0xff]
    %v4268 = vld [vmem:[#allocation9 + $0x330] sm:$0xff]
    %v4269 = vld [vmem:[#allocation9 + $0x338] sm:$0xff]
    %v4270 = vld [vmem:[#allocation9 + $0x340] sm:$0xff]
    %v4271 = vld [vmem:[#allocation9 + $0x348] sm:$0xff]
    %v4272 = vld [vmem:[#allocation9 + $0x350] sm:$0xff]
    %v4273 = vld [vmem:[#allocation9 + $0x358] sm:$0xff]
    %v4274 = vld [vmem:[#allocation9 + $0x360] sm:$0xff]
    %v4275 = vld [vmem:[#allocation9 + $0x368] sm:$0xff]
    %v4276 = vld [vmem:[#allocation9 + $0x370] sm:$0xff]
    %v4277 = vld [vmem:[#allocation9 + $0x378] sm:$0xff]
    %v4278 = vld [vmem:[#allocation9 + $0x380] sm:$0xff]
    %v4279 = vld [vmem:[#allocation9 + $0x388] sm:$0xff]
    %v4280 = vld [vmem:[#allocation9 + $0x390] sm:$0xff]
    %v4281 = vld [vmem:[#allocation9 + $0x398] sm:$0xff]
    %v4282 = vld [vmem:[#allocation9 + $0x3a0] sm:$0xff]
    %v4283 = vld [vmem:[#allocation9 + $0x3a8] sm:$0xff]
    %v4284 = vld [vmem:[#allocation9 + $0x3b0] sm:$0xff]
    %v4285 = vld [vmem:[#allocation9 + $0x3b8] sm:$0xff]
    %v4286 = vld [vmem:[#allocation9 + $0x3c0] sm:$0xff]
    %v4287 = vld [vmem:[#allocation9 + $0x3c8] sm:$0xff]
    %v4288 = vld [vmem:[#allocation9 + $0x3d0] sm:$0xff]
    %v4289 = vld [vmem:[#allocation9 + $0x3d8] sm:$0xff]
    %v4290 = vld [vmem:[#allocation9 + $0x3e0] sm:$0xff]
    %v4291 = vld [vmem:[#allocation9 + $0x3e8] sm:$0xff]
    %v4292 = vld [vmem:[#allocation9 + $0x3f0] sm:$0xff]
    %v4293 = vld [vmem:[#allocation9 + $0x3f8] sm:$0xff]
    %v4294 = vld [vmem:[#allocation9 + $0x400] sm:$0xff]
    %v4295 = vld [vmem:[#allocation9 + $0x408] sm:$0xff]
    %v4296 = vld [vmem:[#allocation9 + $0x410] sm:$0xff]
    %v4297 = vld [vmem:[#allocation9 + $0x418] sm:$0xff]
    %v4298 = vld [vmem:[#allocation9 + $0x420] sm:$0xff]
    %v4299 = vld [vmem:[#allocation9 + $0x428] sm:$0xff]
    %v4300 = vld [vmem:[#allocation9 + $0x430] sm:$0xff]
    %v4301 = vld [vmem:[#allocation9 + $0x438] sm:$0xff]
    %v4302 = vld [vmem:[#allocation9 + $0x440] sm:$0xff]
    %v4303 = vld [vmem:[#allocation9 + $0x448] sm:$0xff]
    %v4304 = vld [vmem:[#allocation9 + $0x450] sm:$0xff]
    %v4305 = vld [vmem:[#allocation9 + $0x458] sm:$0xff]
    %v4306 = vld [vmem:[#allocation9 + $0x460] sm:$0xff]
    %v4307 = vld [vmem:[#allocation9 + $0x468] sm:$0xff]
    %v4308 = vld [vmem:[#allocation9 + $0x470] sm:$0xff]
    %v4309 = vld [vmem:[#allocation9 + $0x478] sm:$0xff]
    %v4310 = vld [vmem:[#allocation9 + $0x480] sm:$0xff]
    %v4311 = vld [vmem:[#allocation9 + $0x488] sm:$0xff]
    %v4312 = vld [vmem:[#allocation9 + $0x490] sm:$0xff]
    %v4313 = vld [vmem:[#allocation9 + $0x498] sm:$0xff]
    %v4314 = vld [vmem:[#allocation9 + $0x4a0] sm:$0xff]
    %v4315 = vld [vmem:[#allocation9 + $0x4a8] sm:$0xff]
    %v4316 = vld [vmem:[#allocation9 + $0x4b0] sm:$0xff]
    %v4317 = vld [vmem:[#allocation9 + $0x4b8] sm:$0xff]
    %v4318 = vld [vmem:[#allocation9 + $0x4c0] sm:$0xff]
    %v4319 = vld [vmem:[#allocation9 + $0x4c8] sm:$0xff]
    %v4320 = vld [vmem:[#allocation9 + $0x4d0] sm:$0xff]
    %v4321 = vld [vmem:[#allocation9 + $0x4d8] sm:$0xff]
    %v4322 = vld [vmem:[#allocation9 + $0x4e0] sm:$0xff]
    %v4323 = vld [vmem:[#allocation9 + $0x4e8] sm:$0xff]
    %v4324 = vld [vmem:[#allocation9 + $0x4f0] sm:$0xff]
    %v4325 = vld [vmem:[#allocation9 + $0x4f8] sm:$0xff]
    %v4326 = vld [vmem:[#allocation9 + $0x500] sm:$0xff]
    %v4327 = vld [vmem:[#allocation9 + $0x508] sm:$0xff]
    %v4328 = vld [vmem:[#allocation9 + $0x510] sm:$0xff]
    %v4329 = vld [vmem:[#allocation9 + $0x518] sm:$0xff]
    %v4330 = vld [vmem:[#allocation9 + $0x520] sm:$0xff]
    %v4331 = vld [vmem:[#allocation9 + $0x528] sm:$0xff]
    %v4332 = vld [vmem:[#allocation9 + $0x530] sm:$0xff]
    %v4333 = vld [vmem:[#allocation9 + $0x538] sm:$0xff]
    %v4334 = vld [vmem:[#allocation9 + $0x540] sm:$0xff]
    %v4335 = vld [vmem:[#allocation9 + $0x548] sm:$0xff]
    %v4336 = vld [vmem:[#allocation9 + $0x550] sm:$0xff]
    %v4337 = vld [vmem:[#allocation9 + $0x558] sm:$0xff]
    %v4338 = vld [vmem:[#allocation9 + $0x560] sm:$0xff]
    %v4339 = vld [vmem:[#allocation9 + $0x568] sm:$0xff]
    %v4340 = vld [vmem:[#allocation9 + $0x570] sm:$0xff]
    %v4341 = vld [vmem:[#allocation9 + $0x578] sm:$0xff]
    %v4342 = vld [vmem:[#allocation9 + $0x580] sm:$0xff]
    %v4343 = vld [vmem:[#allocation9 + $0x588] sm:$0xff]
    %v4344 = vld [vmem:[#allocation9 + $0x590] sm:$0xff]
    %v4345 = vld [vmem:[#allocation9 + $0x598] sm:$0xff]
    %v4346 = vld [vmem:[#allocation9 + $0x5a0] sm:$0xff]
    %v4347 = vld [vmem:[#allocation9 + $0x5a8] sm:$0xff]
    %v4348 = vld [vmem:[#allocation9 + $0x5b0] sm:$0xff]
    %v4349 = vld [vmem:[#allocation9 + $0x5b8] sm:$0xff]
    %v4350 = vld [vmem:[#allocation9 + $0x5c0] sm:$0xff]
    %v4351 = vld [vmem:[#allocation9 + $0x5c8] sm:$0xff]
    %v4352 = vld [vmem:[#allocation9 + $0x5d0] sm:$0xff]
    %v4353 = vld [vmem:[#allocation9 + $0x5d8] sm:$0xff]
    %v4354 = vld [vmem:[#allocation9 + $0x5e0] sm:$0xff]
    %v4355 = vld [vmem:[#allocation9 + $0x5e8] sm:$0xff]
    %v4356 = vld [vmem:[#allocation9 + $0x5f0] sm:$0xff]
    %v4357 = vld [vmem:[#allocation9 + $0x5f8] sm:$0xff]
    %v4358 = vld [vmem:[#allocation9 + $0x600] sm:$0xff]
    %v4359 = vld [vmem:[#allocation9 + $0x608] sm:$0xff]
    %v4360 = vld [vmem:[#allocation9 + $0x610] sm:$0xff]
    %v4361 = vld [vmem:[#allocation9 + $0x618] sm:$0xff]
    %v4362 = vld [vmem:[#allocation9 + $0x620] sm:$0xff]
    %v4363 = vld [vmem:[#allocation9 + $0x628] sm:$0xff]
    %v4364 = vld [vmem:[#allocation9 + $0x630] sm:$0xff]
    %v4365 = vld [vmem:[#allocation9 + $0x638] sm:$0xff]
    %v4366 = vld [vmem:[#allocation9 + $0x640] sm:$0xff]
    %v4367 = vld [vmem:[#allocation9 + $0x648] sm:$0xff]
    %v4368 = vld [vmem:[#allocation9 + $0x650] sm:$0xff]
    %v4369 = vld [vmem:[#allocation9 + $0x658] sm:$0xff]
    %v4370 = vld [vmem:[#allocation9 + $0x660] sm:$0xff]
    %v4371 = vld [vmem:[#allocation9 + $0x668] sm:$0xff]
    %v4372 = vld [vmem:[#allocation9 + $0x670] sm:$0xff]
    %v4373 = vld [vmem:[#allocation9 + $0x678] sm:$0xff]
    %v4374 = vld [vmem:[#allocation9 + $0x680] sm:$0xff]
    %v4375 = vld [vmem:[#allocation9 + $0x688] sm:$0xff]
    %v4376 = vld [vmem:[#allocation9 + $0x690] sm:$0xff]
    %v4377 = vld [vmem:[#allocation9 + $0x698] sm:$0xff]
    %v4378 = vld [vmem:[#allocation9 + $0x6a0] sm:$0xff]
    %v4379 = vld [vmem:[#allocation9 + $0x6a8] sm:$0xff]
    %v4380 = vld [vmem:[#allocation9 + $0x6b0] sm:$0xff]
    %v4381 = vld [vmem:[#allocation9 + $0x6b8] sm:$0xff]
    %v4382 = vld [vmem:[#allocation9 + $0x6c0] sm:$0xff]
    %v4383 = vld [vmem:[#allocation9 + $0x6c8] sm:$0xff]
    %v4384 = vld [vmem:[#allocation9 + $0x6d0] sm:$0xff]
    %v4385 = vld [vmem:[#allocation9 + $0x6d8] sm:$0xff]
    %v4386 = vld [vmem:[#allocation9 + $0x6e0] sm:$0xff]
    %v4387 = vld [vmem:[#allocation9 + $0x6e8] sm:$0xff]
    %v4388 = vld [vmem:[#allocation9 + $0x6f0] sm:$0xff]
    %v4389 = vld [vmem:[#allocation9 + $0x6f8] sm:$0xff]
    %v4390 = vld [vmem:[#allocation9 + $0x700] sm:$0xff]
    %v4391 = vld [vmem:[#allocation9 + $0x708] sm:$0xff]
    %v4392 = vld [vmem:[#allocation9 + $0x710] sm:$0xff]
    %v4393 = vld [vmem:[#allocation9 + $0x718] sm:$0xff]
    %v4394 = vld [vmem:[#allocation9 + $0x720] sm:$0xff]
    %v4395 = vld [vmem:[#allocation9 + $0x728] sm:$0xff]
    %v4396 = vld [vmem:[#allocation9 + $0x730] sm:$0xff]
    %v4397 = vld [vmem:[#allocation9 + $0x738] sm:$0xff]
    %v4398 = vld [vmem:[#allocation9 + $0x740] sm:$0xff]
    %v4399 = vld [vmem:[#allocation9 + $0x748] sm:$0xff]
    %v4400 = vld [vmem:[#allocation9 + $0x750] sm:$0xff]
    %v4401 = vld [vmem:[#allocation9 + $0x758] sm:$0xff]
    %v4402 = vld [vmem:[#allocation9 + $0x760] sm:$0xff]
    %v4403 = vld [vmem:[#allocation9 + $0x768] sm:$0xff]
    %v4404 = vld [vmem:[#allocation9 + $0x770] sm:$0xff]
    %v4405 = vld [vmem:[#allocation9 + $0x778] sm:$0xff]
    %v4406 = vld [vmem:[#allocation9 + $0x780] sm:$0xff]
    %v4407 = vld [vmem:[#allocation9 + $0x788] sm:$0xff]
    %v4408 = vld [vmem:[#allocation9 + $0x790] sm:$0xff]
    %v4409 = vld [vmem:[#allocation9 + $0x798] sm:$0xff]
    %v4410 = vld [vmem:[#allocation9 + $0x7a0] sm:$0xff]
    %v4411 = vld [vmem:[#allocation9 + $0x7a8] sm:$0xff]
    %v4412 = vld [vmem:[#allocation9 + $0x7b0] sm:$0xff]
    %v4413 = vld [vmem:[#allocation9 + $0x7b8] sm:$0xff]
    %v4414 = vld [vmem:[#allocation9 + $0x7c0] sm:$0xff]
    %v4415 = vld [vmem:[#allocation9 + $0x7c8] sm:$0xff]
    %v4416 = vld [vmem:[#allocation9 + $0x7d0] sm:$0xff]
    %v4417 = vld [vmem:[#allocation9 + $0x7d8] sm:$0xff]
    %v4418 = vld [vmem:[#allocation9 + $0x7e0] sm:$0xff]
    %v4419 = vld [vmem:[#allocation9 + $0x7e8] sm:$0xff]
    %v4420 = vld [vmem:[#allocation9 + $0x7f0] sm:$0xff]
    %v4421 = vld [vmem:[#allocation9 + $0x7f8] sm:$0xff]
    %v4422 = vld [vmem:[#allocation9 + $0x800] sm:$0xff]
    %v4423 = vld [vmem:[#allocation9 + $0x808] sm:$0xff]
    %v4424 = vld [vmem:[#allocation9 + $0x810] sm:$0xff]
    %v4425 = vld [vmem:[#allocation9 + $0x818] sm:$0xff]
    %v4426 = vld [vmem:[#allocation9 + $0x820] sm:$0xff]
    %v4427 = vld [vmem:[#allocation9 + $0x828] sm:$0xff]
    %v4428 = vld [vmem:[#allocation9 + $0x830] sm:$0xff]
    %v4429 = vld [vmem:[#allocation9 + $0x838] sm:$0xff]
    %v4430 = vld [vmem:[#allocation9 + $0x840] sm:$0xff]
    %v4431 = vld [vmem:[#allocation9 + $0x848] sm:$0xff]
    %v4432 = vld [vmem:[#allocation9 + $0x850] sm:$0xff]
    %v4433 = vld [vmem:[#allocation9 + $0x858] sm:$0xff]
    %v4434 = vld [vmem:[#allocation9 + $0x860] sm:$0xff]
    %v4435 = vld [vmem:[#allocation9 + $0x868] sm:$0xff]
    %v4436 = vld [vmem:[#allocation9 + $0x870] sm:$0xff]
    %v4437 = vld [vmem:[#allocation9 + $0x878] sm:$0xff]
    %v4438 = vld [vmem:[#allocation9 + $0x880] sm:$0xff]
    %v4439 = vld [vmem:[#allocation9 + $0x888] sm:$0xff]
    %v4440 = vld [vmem:[#allocation9 + $0x890] sm:$0xff]
    %v4441 = vld [vmem:[#allocation9 + $0x898] sm:$0xff]
    %v4442 = vld [vmem:[#allocation9 + $0x8a0] sm:$0xff]
    %v4443 = vld [vmem:[#allocation9 + $0x8a8] sm:$0xff]
    %v4444 = vld [vmem:[#allocation9 + $0x8b0] sm:$0xff]
    %v4445 = vld [vmem:[#allocation9 + $0x8b8] sm:$0xff]
    %v4446 = vld [vmem:[#allocation9 + $0x8c0] sm:$0xff]
    %v4447 = vld [vmem:[#allocation9 + $0x8c8] sm:$0xff]
    %v4448 = vld [vmem:[#allocation9 + $0x8d0] sm:$0xff]
    %v4449 = vld [vmem:[#allocation9 + $0x8d8] sm:$0xff]
    %v4450 = vld [vmem:[#allocation9 + $0x8e0] sm:$0xff]
    %v4451 = vld [vmem:[#allocation9 + $0x8e8] sm:$0xff]
    %v4452 = vld [vmem:[#allocation9 + $0x8f0] sm:$0xff]
    %v4453 = vld [vmem:[#allocation9 + $0x8f8] sm:$0xff]
    %v4454 = vld [vmem:[#allocation9 + $0x900] sm:$0xff]
    %v4455 = vld [vmem:[#allocation9 + $0x908] sm:$0xff]
    %v4456 = vld [vmem:[#allocation9 + $0x910] sm:$0xff]
    %v4457 = vld [vmem:[#allocation9 + $0x918] sm:$0xff]
    %v4458 = vld [vmem:[#allocation9 + $0x920] sm:$0xff]
    %v4459 = vld [vmem:[#allocation9 + $0x928] sm:$0xff]
    %v4460 = vld [vmem:[#allocation9 + $0x930] sm:$0xff]
    %v4461 = vld [vmem:[#allocation9 + $0x938] sm:$0xff]
    %v4462 = vld [vmem:[#allocation9 + $0x940] sm:$0xff]
    %v4463 = vld [vmem:[#allocation9 + $0x948] sm:$0xff]
    %v4464 = vld [vmem:[#allocation9 + $0x950] sm:$0xff]
    %v4465 = vld [vmem:[#allocation9 + $0x958] sm:$0xff]
    %v4466 = vld [vmem:[#allocation9 + $0x960] sm:$0xff]
    %v4467 = vld [vmem:[#allocation9 + $0x968] sm:$0xff]
    %v4468 = vld [vmem:[#allocation9 + $0x970] sm:$0xff]
    %v4469 = vld [vmem:[#allocation9 + $0x978] sm:$0xff]
    %v4470 = vld [vmem:[#allocation9 + $0x980] sm:$0xff]
    %v4471 = vld [vmem:[#allocation9 + $0x988] sm:$0xff]
    %v4472 = vld [vmem:[#allocation9 + $0x990] sm:$0xff]
    %v4473 = vld [vmem:[#allocation9 + $0x998] sm:$0xff]
    %v4474 = vld [vmem:[#allocation9 + $0x9a0] sm:$0xff]
    %v4475 = vld [vmem:[#allocation9 + $0x9a8] sm:$0xff]
    %v4476 = vld [vmem:[#allocation9 + $0x9b0] sm:$0xff]
    %v4477 = vld [vmem:[#allocation9 + $0x9b8] sm:$0xff]
    %v4478 = vld [vmem:[#allocation9 + $0x9c0] sm:$0xff]
    %v4479 = vld [vmem:[#allocation9 + $0x9c8] sm:$0xff]
    %v4480 = vld [vmem:[#allocation9 + $0x9d0] sm:$0xff]
    %v4481 = vld [vmem:[#allocation9 + $0x9d8] sm:$0xff]
    %v4482 = vld [vmem:[#allocation9 + $0x9e0] sm:$0xff]
    %v4483 = vld [vmem:[#allocation9 + $0x9e8] sm:$0xff]
    %v4484 = vld [vmem:[#allocation9 + $0x9f0] sm:$0xff]
    %v4485 = vld [vmem:[#allocation9 + $0x9f8] sm:$0xff]
    %v4486 = vld [vmem:[#allocation9 + $0xa00] sm:$0xff]
    %v4487 = vld [vmem:[#allocation9 + $0xa08] sm:$0xff]
    %v4488 = vld [vmem:[#allocation9 + $0xa10] sm:$0xff]
    %v4489 = vld [vmem:[#allocation9 + $0xa18] sm:$0xff]
    %v4490 = vld [vmem:[#allocation9 + $0xa20] sm:$0xff]
    %v4491 = vld [vmem:[#allocation9 + $0xa28] sm:$0xff]
    %v4492 = vld [vmem:[#allocation9 + $0xa30] sm:$0xff]
    %v4493 = vld [vmem:[#allocation9 + $0xa38] sm:$0xff]
    %v4494 = vld [vmem:[#allocation9 + $0xa40] sm:$0xff]
    %v4495 = vld [vmem:[#allocation9 + $0xa48] sm:$0xff]
    %v4496 = vld [vmem:[#allocation9 + $0xa50] sm:$0xff]
    %v4497 = vld [vmem:[#allocation9 + $0xa58] sm:$0xff]
    %v4498 = vld [vmem:[#allocation9 + $0xa60] sm:$0xff]
    %v4499 = vld [vmem:[#allocation9 + $0xa68] sm:$0xff]
    %v4500 = vld [vmem:[#allocation9 + $0xa70] sm:$0xff]
    %v4501 = vld [vmem:[#allocation9 + $0xa78] sm:$0xff]
    %v4502 = vld [vmem:[#allocation9 + $0xa80] sm:$0xff]
    %v4503 = vld [vmem:[#allocation9 + $0xa88] sm:$0xff]
    %v4504 = vld [vmem:[#allocation9 + $0xa90] sm:$0xff]
    %v4505 = vld [vmem:[#allocation9 + $0xa98] sm:$0xff]
    %v4506 = vld [vmem:[#allocation9 + $0xaa0] sm:$0xff]
    %v4507 = vld [vmem:[#allocation9 + $0xaa8] sm:$0xff]
    %v4508 = vld [vmem:[#allocation9 + $0xab0] sm:$0xff]
    %v4509 = vld [vmem:[#allocation9 + $0xab8] sm:$0xff]
    %v4510 = vld [vmem:[#allocation9 + $0xac0] sm:$0xff]
    %v4511 = vld [vmem:[#allocation9 + $0xac8] sm:$0xff]
    %v4512 = vld [vmem:[#allocation9 + $0xad0] sm:$0xff]
    %v4513 = vld [vmem:[#allocation9 + $0xad8] sm:$0xff]
    %v4514 = vld [vmem:[#allocation9 + $0xae0] sm:$0xff]
    %v4515 = vld [vmem:[#allocation9 + $0xae8] sm:$0xff]
    %v4516 = vld [vmem:[#allocation9 + $0xaf0] sm:$0xff]
    %v4517 = vld [vmem:[#allocation9 + $0xaf8] sm:$0xff]
    %v4518 = vld [vmem:[#allocation9 + $0xb00] sm:$0xff]
    %v4519 = vld [vmem:[#allocation9 + $0xb08] sm:$0xff]
    %v4520 = vld [vmem:[#allocation9 + $0xb10] sm:$0xff]
    %v4521 = vld [vmem:[#allocation9 + $0xb18] sm:$0xff]
    %v4522 = vld [vmem:[#allocation9 + $0xb20] sm:$0xff]
    %v4523 = vld [vmem:[#allocation9 + $0xb28] sm:$0xff]
    %v4524 = vld [vmem:[#allocation9 + $0xb30] sm:$0xff]
    %v4525 = vld [vmem:[#allocation9 + $0xb38] sm:$0xff]
    %v4526 = vld [vmem:[#allocation9 + $0xb40] sm:$0xff]
    %v4527 = vld [vmem:[#allocation9 + $0xb48] sm:$0xff]
    %v4528 = vld [vmem:[#allocation9 + $0xb50] sm:$0xff]
    %v4529 = vld [vmem:[#allocation9 + $0xb58] sm:$0xff]
    %v4530 = vld [vmem:[#allocation9 + $0xb60] sm:$0xff]
    %v4531 = vld [vmem:[#allocation9 + $0xb68] sm:$0xff]
    %v4532 = vld [vmem:[#allocation9 + $0xb70] sm:$0xff]
    %v4533 = vld [vmem:[#allocation9 + $0xb78] sm:$0xff]
    %v4534 = vld [vmem:[#allocation9 + $0xb80] sm:$0xff]
    %v4535 = vld [vmem:[#allocation9 + $0xb88] sm:$0xff]
    %v4536 = vld [vmem:[#allocation9 + $0xb90] sm:$0xff]
    %v4537 = vld [vmem:[#allocation9 + $0xb98] sm:$0xff]
    %v4538 = vld [vmem:[#allocation9 + $0xba0] sm:$0xff]
    %v4539 = vld [vmem:[#allocation9 + $0xba8] sm:$0xff]
    %v4540 = vld [vmem:[#allocation9 + $0xbb0] sm:$0xff]
    %v4541 = vld [vmem:[#allocation9 + $0xbb8] sm:$0xff]
    %v4542 = vld [vmem:[#allocation9 + $0xbc0] sm:$0xff]
    %v4543 = vld [vmem:[#allocation9 + $0xbc8] sm:$0xff]
    %v4544 = vld [vmem:[#allocation9 + $0xbd0] sm:$0xff]
    %v4545 = vld [vmem:[#allocation9 + $0xbd8] sm:$0xff]
    %v4546 = vld [vmem:[#allocation9 + $0xbe0] sm:$0xff]
    %v4547 = vld [vmem:[#allocation9 + $0xbe8] sm:$0xff]
    %v4548 = vld [vmem:[#allocation9 + $0xbf0] sm:$0xff]
    %v4549 = vld [vmem:[#allocation9 + $0xbf8] sm:$0xff]
    %v4550 = vld [vmem:[#allocation9 + $0xc00] sm:$0xff]
    %v4551 = vld [vmem:[#allocation9 + $0xc08] sm:$0xff]
    %v4552 = vld [vmem:[#allocation9 + $0xc10] sm:$0xff]
    %v4553 = vld [vmem:[#allocation9 + $0xc18] sm:$0xff]
    %v4554 = vld [vmem:[#allocation9 + $0xc20] sm:$0xff]
    %v4555 = vld [vmem:[#allocation9 + $0xc28] sm:$0xff]
    %v4556 = vld [vmem:[#allocation9 + $0xc30] sm:$0xff]
    %v4557 = vld [vmem:[#allocation9 + $0xc38] sm:$0xff]
    %v4558 = vld [vmem:[#allocation9 + $0xc40] sm:$0xff]
    %v4559 = vld [vmem:[#allocation9 + $0xc48] sm:$0xff]
    %v4560 = vld [vmem:[#allocation9 + $0xc50] sm:$0xff]
    %v4561 = vld [vmem:[#allocation9 + $0xc58] sm:$0xff]
    %v4562 = vld [vmem:[#allocation9 + $0xc60] sm:$0xff]
    %v4563 = vld [vmem:[#allocation9 + $0xc68] sm:$0xff]
    %v4564 = vld [vmem:[#allocation9 + $0xc70] sm:$0xff]
    %v4565 = vld [vmem:[#allocation9 + $0xc78] sm:$0xff]
    %v4566 = vld [vmem:[#allocation9 + $0xc80] sm:$0xff]
    %v4567 = vld [vmem:[#allocation9 + $0xc88] sm:$0xff]
    %v4568 = vld [vmem:[#allocation9 + $0xc90] sm:$0xff]
    %v4569 = vld [vmem:[#allocation9 + $0xc98] sm:$0xff]
    %v4570 = vld [vmem:[#allocation9 + $0xca0] sm:$0xff]
    %v4571 = vld [vmem:[#allocation9 + $0xca8] sm:$0xff]
    %v4572 = vld [vmem:[#allocation9 + $0xcb0] sm:$0xff]
    %v4573 = vld [vmem:[#allocation9 + $0xcb8] sm:$0xff]
    %v4574 = vld [vmem:[#allocation9 + $0xcc0] sm:$0xff]
    %v4575 = vld [vmem:[#allocation9 + $0xcc8] sm:$0xff]
    %v4576 = vld [vmem:[#allocation9 + $0xcd0] sm:$0xff]
    %v4577 = vld [vmem:[#allocation9 + $0xcd8] sm:$0xff]
    %v4578 = vld [vmem:[#allocation9 + $0xce0] sm:$0xff]
    %v4579 = vld [vmem:[#allocation9 + $0xce8] sm:$0xff]
    %v4580 = vld [vmem:[#allocation9 + $0xcf0] sm:$0xff]
    %v4581 = vld [vmem:[#allocation9 + $0xcf8] sm:$0xff]
    %v4582 = vld [vmem:[#allocation9 + $0xd00] sm:$0xff]
    %v4583 = vld [vmem:[#allocation9 + $0xd08] sm:$0xff]
    %v4584 = vld [vmem:[#allocation9 + $0xd10] sm:$0xff]
    %v4585 = vld [vmem:[#allocation9 + $0xd18] sm:$0xff]
    %v4586 = vld [vmem:[#allocation9 + $0xd20] sm:$0xff]
    %v4587 = vld [vmem:[#allocation9 + $0xd28] sm:$0xff]
    %v4588 = vld [vmem:[#allocation9 + $0xd30] sm:$0xff]
    %v4589 = vld [vmem:[#allocation9 + $0xd38] sm:$0xff]
    %v4590 = vld [vmem:[#allocation9 + $0xd40] sm:$0xff]
    %v4591 = vld [vmem:[#allocation9 + $0xd48] sm:$0xff]
    %v4592 = vld [vmem:[#allocation9 + $0xd50] sm:$0xff]
    %v4593 = vld [vmem:[#allocation9 + $0xd58] sm:$0xff]
    %v4594 = vld [vmem:[#allocation9 + $0xd60] sm:$0xff]
    %v4595 = vld [vmem:[#allocation9 + $0xd68] sm:$0xff]
    %v4596 = vld [vmem:[#allocation9 + $0xd70] sm:$0xff]
    %v4597 = vld [vmem:[#allocation9 + $0xd78] sm:$0xff]
    %v4598 = vld [vmem:[#allocation9 + $0xd80] sm:$0xff]
    %v4599 = vld [vmem:[#allocation9 + $0xd88] sm:$0xff]
    %v4600 = vld [vmem:[#allocation9 + $0xd90] sm:$0xff]
    %v4601 = vld [vmem:[#allocation9 + $0xd98] sm:$0xff]
    %v4602 = vld [vmem:[#allocation9 + $0xda0] sm:$0xff]
    %v4603 = vld [vmem:[#allocation9 + $0xda8] sm:$0xff]
    %v4604 = vld [vmem:[#allocation9 + $0xdb0] sm:$0xff]
    %v4605 = vld [vmem:[#allocation9 + $0xdb8] sm:$0xff]
    %v4606 = vld [vmem:[#allocation9 + $0xdc0] sm:$0xff]
    %v4607 = vld [vmem:[#allocation9 + $0xdc8] sm:$0xff]
    %v4608 = vld [vmem:[#allocation9 + $0xdd0] sm:$0xff]
    %v4609 = vld [vmem:[#allocation9 + $0xdd8] sm:$0xff]
    %v4610 = vld [vmem:[#allocation9 + $0xde0] sm:$0xff]
    %v4611 = vld [vmem:[#allocation9 + $0xde8] sm:$0xff]
    %v4612 = vld [vmem:[#allocation9 + $0xdf0] sm:$0xff]
    %v4613 = vld [vmem:[#allocation9 + $0xdf8] sm:$0xff]
    %v4614 = vld [vmem:[#allocation9 + $0xe00] sm:$0xff]
    %v4615 = vld [vmem:[#allocation9 + $0xe08] sm:$0xff]
    %v4616 = vld [vmem:[#allocation9 + $0xe10] sm:$0xff]
    %v4617 = vld [vmem:[#allocation9 + $0xe18] sm:$0xff]
    %v4618 = vld [vmem:[#allocation9 + $0xe20] sm:$0xff]
    %v4619 = vld [vmem:[#allocation9 + $0xe28] sm:$0xff]
    %v4620 = vld [vmem:[#allocation9 + $0xe30] sm:$0xff]
    %v4621 = vld [vmem:[#allocation9 + $0xe38] sm:$0xff]
    %v4622 = vld [vmem:[#allocation9 + $0xe40] sm:$0xff]
    %v4623 = vld [vmem:[#allocation9 + $0xe48] sm:$0xff]
    %v4624 = vld [vmem:[#allocation9 + $0xe50] sm:$0xff]
    %v4625 = vld [vmem:[#allocation9 + $0xe58] sm:$0xff]
    %v4626 = vld [vmem:[#allocation9 + $0xe60] sm:$0xff]
    %v4627 = vld [vmem:[#allocation9 + $0xe68] sm:$0xff]
    %v4628 = vld [vmem:[#allocation9 + $0xe70] sm:$0xff]
    %v4629 = vld [vmem:[#allocation9 + $0xe78] sm:$0xff]
    %v4630 = vld [vmem:[#allocation9 + $0xe80] sm:$0xff]
    %v4631 = vld [vmem:[#allocation9 + $0xe88] sm:$0xff]
    %v4632 = vld [vmem:[#allocation9 + $0xe90] sm:$0xff]
    %v4633 = vld [vmem:[#allocation9 + $0xe98] sm:$0xff]
    %v4634 = vld [vmem:[#allocation9 + $0xea0] sm:$0xff]
    %v4635 = vld [vmem:[#allocation9 + $0xea8] sm:$0xff]
    %v4636 = vld [vmem:[#allocation9 + $0xeb0] sm:$0xff]
    %v4637 = vld [vmem:[#allocation9 + $0xeb8] sm:$0xff]
    %v4638 = vld [vmem:[#allocation9 + $0xec0] sm:$0xff]
    %v4639 = vld [vmem:[#allocation9 + $0xec8] sm:$0xff]
    %v4640 = vld [vmem:[#allocation9 + $0xed0] sm:$0xff]
    %v4641 = vld [vmem:[#allocation9 + $0xed8] sm:$0xff]
    %v4642 = vld [vmem:[#allocation9 + $0xee0] sm:$0xff]
    %v4643 = vld [vmem:[#allocation9 + $0xee8] sm:$0xff]
    %v4644 = vld [vmem:[#allocation9 + $0xef0] sm:$0xff]
    %v4645 = vld [vmem:[#allocation9 + $0xef8] sm:$0xff]
    %v4646 = vld [vmem:[#allocation9 + $0xf00] sm:$0xff]
    %v4647 = vld [vmem:[#allocation9 + $0xf08] sm:$0xff]
    %v4648 = vld [vmem:[#allocation9 + $0xf10] sm:$0xff]
    %v4649 = vld [vmem:[#allocation9 + $0xf18] sm:$0xff]
    %v4650 = vld [vmem:[#allocation9 + $0xf20] sm:$0xff]
    %v4651 = vld [vmem:[#allocation9 + $0xf28] sm:$0xff]
    %v4652 = vld [vmem:[#allocation9 + $0xf30] sm:$0xff]
    %v4653 = vld [vmem:[#allocation9 + $0xf38] sm:$0xff]
    %v4654 = vld [vmem:[#allocation9 + $0xf40] sm:$0xff]
    %v4655 = vld [vmem:[#allocation9 + $0xf48] sm:$0xff]
    %v4656 = vld [vmem:[#allocation9 + $0xf50] sm:$0xff]
    %v4657 = vld [vmem:[#allocation9 + $0xf58] sm:$0xff]
    %v4658 = vld [vmem:[#allocation9 + $0xf60] sm:$0xff]
    %v4659 = vld [vmem:[#allocation9 + $0xf68] sm:$0xff]
    %v4660 = vld [vmem:[#allocation9 + $0xf70] sm:$0xff]
    %v4661 = vld [vmem:[#allocation9 + $0xf78] sm:$0xff]
    %v4662 = vld [vmem:[#allocation9 + $0xf80] sm:$0xff]
    %v4663 = vld [vmem:[#allocation9 + $0xf88] sm:$0xff]
    %v4664 = vld [vmem:[#allocation9 + $0xf90] sm:$0xff]
    %v4665 = vld [vmem:[#allocation9 + $0xf98] sm:$0xff]
    %v4666 = vld [vmem:[#allocation9 + $0xfa0] sm:$0xff]
    %v4667 = vld [vmem:[#allocation9 + $0xfa8] sm:$0xff]
    %v4668 = vld [vmem:[#allocation9 + $0xfb0] sm:$0xff]
    %v4669 = vld [vmem:[#allocation9 + $0xfb8] sm:$0xff]
    %v4670 = vld [vmem:[#allocation9 + $0xfc0] sm:$0xff]
    %v4671 = vld [vmem:[#allocation9 + $0xfc8] sm:$0xff]
    %v4672 = vld [vmem:[#allocation9 + $0xfd0] sm:$0xff]
    %v4673 = vld [vmem:[#allocation9 + $0xfd8] sm:$0xff]
    %v4674 = vld [vmem:[#allocation9 + $0xfe0] sm:$0xff]
    %v4675 = vld [vmem:[#allocation9 + $0xfe8] sm:$0xff]
    %v4676 = vld [vmem:[#allocation9 + $0xff0] sm:$0xff]
    %v4677 = vld [vmem:[#allocation9 + $0xff8] sm:$0xff]
    %v4678 = vld [vmem:[#allocation10] sm:$0xff]
    %v4680 = vlaneseq
    %v4681 = vshrl.u32 %v4680, 7
    %v4682 = vsub.s32 0, %v4681
    %v4683 = vrot.slane %v4678, %v4682
    %v4684 = vlaneseq
    %v4685 = vshrl.u32 %v4684, 7
    %v4686 = vsub.s32 1, %v4685
    %v4687 = vrot.slane %v4678, %v4686
    %v4688 = vlaneseq
    %v4689 = vshrl.u32 %v4688, 7
    %v4690 = vsub.s32 2, %v4689
    %v4691 = vrot.slane %v4678, %v4690
    %v4692 = vlaneseq
    %v4693 = vshrl.u32 %v4692, 7
    %v4694 = vsub.s32 3, %v4693
    %v4695 = vrot.slane %v4678, %v4694
    %v4696 = vlaneseq
    %v4697 = vshrl.u32 %v4696, 7
    %v4698 = vsub.s32 4, %v4697
    %v4699 = vrot.slane %v4678, %v4698
    %v4700 = vlaneseq
    %v4701 = vshrl.u32 %v4700, 7
    %v4702 = vsub.s32 5, %v4701
    %v4703 = vrot.slane %v4678, %v4702
    %v4704 = vlaneseq
    %v4705 = vshrl.u32 %v4704, 7
    %v4706 = vsub.s32 6, %v4705
    %v4707 = vrot.slane %v4678, %v4706
    %v4708 = vlaneseq
    %v4709 = vshrl.u32 %v4708, 7
    %v4710 = vsub.s32 7, %v4709
    %v4711 = vrot.slane %v4678, %v4710
    %v5232 = vunpack.c.l.b16 %v4166
    %v5233 = vunpack.c.h.b16 %v4166
    %v5234 = vunpack.c.l.b16 %v4167
    %v5235 = vunpack.c.h.b16 %v4167
    %v5236 = vunpack.c.l.b16 %v4168
    %v5237 = vunpack.c.h.b16 %v4168
    %v5238 = vunpack.c.l.b16 %v4169
    %v5239 = vunpack.c.h.b16 %v4169
    %v5240 = vunpack.c.l.b16 %v4170
    %v5241 = vunpack.c.h.b16 %v4170
    %v5242 = vunpack.c.l.b16 %v4171
    %v5243 = vunpack.c.h.b16 %v4171
    %v5244 = vunpack.c.l.b16 %v4172
    %v5245 = vunpack.c.h.b16 %v4172
    %v5246 = vunpack.c.l.b16 %v4173
    %v5247 = vunpack.c.h.b16 %v4173
    %v5248 = vunpack.c.l.b16 %v4174
    %v5249 = vunpack.c.h.b16 %v4174
    %v5250 = vunpack.c.l.b16 %v4175
    %v5251 = vunpack.c.h.b16 %v4175
    %v5252 = vunpack.c.l.b16 %v4176
    %v5253 = vunpack.c.h.b16 %v4176
    %v5254 = vunpack.c.l.b16 %v4177
    %v5255 = vunpack.c.h.b16 %v4177
    %v5256 = vunpack.c.l.b16 %v4178
    %v5257 = vunpack.c.h.b16 %v4178
    %v5258 = vunpack.c.l.b16 %v4179
    %v5259 = vunpack.c.h.b16 %v4179
    %v5260 = vunpack.c.l.b16 %v4180
    %v5261 = vunpack.c.h.b16 %v4180
    %v5262 = vunpack.c.l.b16 %v4181
    %v5263 = vunpack.c.h.b16 %v4181
    %v5264 = vunpack.c.l.b16 %v4182
    %v5265 = vunpack.c.h.b16 %v4182
    %v5266 = vunpack.c.l.b16 %v4183
    %v5267 = vunpack.c.h.b16 %v4183
    %v5268 = vunpack.c.l.b16 %v4184
    %v5269 = vunpack.c.h.b16 %v4184
    %v5270 = vunpack.c.l.b16 %v4185
    %v5271 = vunpack.c.h.b16 %v4185
    %v5272 = vunpack.c.l.b16 %v4186
    %v5273 = vunpack.c.h.b16 %v4186
    %v5274 = vunpack.c.l.b16 %v4187
    %v5275 = vunpack.c.h.b16 %v4187
    %v5276 = vunpack.c.l.b16 %v4188
    %v5277 = vunpack.c.h.b16 %v4188
    %v5278 = vunpack.c.l.b16 %v4189
    %v5279 = vunpack.c.h.b16 %v4189
    %v5280 = vunpack.c.l.b16 %v4190
    %v5281 = vunpack.c.h.b16 %v4190
    %v5282 = vunpack.c.l.b16 %v4191
    %v5283 = vunpack.c.h.b16 %v4191
    %v5284 = vunpack.c.l.b16 %v4192
    %v5285 = vunpack.c.h.b16 %v4192
    %v5286 = vunpack.c.l.b16 %v4193
    %v5287 = vunpack.c.h.b16 %v4193
    %v5288 = vunpack.c.l.b16 %v4194
    %v5289 = vunpack.c.h.b16 %v4194
    %v5290 = vunpack.c.l.b16 %v4195
    %v5291 = vunpack.c.h.b16 %v4195
    %v5292 = vunpack.c.l.b16 %v4196
    %v5293 = vunpack.c.h.b16 %v4196
    %v5294 = vunpack.c.l.b16 %v4197
    %v5295 = vunpack.c.h.b16 %v4197
    %v5296 = vunpack.c.l.b16 %v4198
    %v5297 = vunpack.c.h.b16 %v4198
    %v5298 = vunpack.c.l.b16 %v4199
    %v5299 = vunpack.c.h.b16 %v4199
    %v5300 = vunpack.c.l.b16 %v4200
    %v5301 = vunpack.c.h.b16 %v4200
    %v5302 = vunpack.c.l.b16 %v4201
    %v5303 = vunpack.c.h.b16 %v4201
    %v5304 = vunpack.c.l.b16 %v4202
    %v5305 = vunpack.c.h.b16 %v4202
    %v5306 = vunpack.c.l.b16 %v4203
    %v5307 = vunpack.c.h.b16 %v4203
    %v5308 = vunpack.c.l.b16 %v4204
    %v5309 = vunpack.c.h.b16 %v4204
    %v5310 = vunpack.c.l.b16 %v4205
    %v5311 = vunpack.c.h.b16 %v4205
    %v5312 = vunpack.c.l.b16 %v4206
    %v5313 = vunpack.c.h.b16 %v4206
    %v5314 = vunpack.c.l.b16 %v4207
    %v5315 = vunpack.c.h.b16 %v4207
    %v5316 = vunpack.c.l.b16 %v4208
    %v5317 = vunpack.c.h.b16 %v4208
    %v5318 = vunpack.c.l.b16 %v4209
    %v5319 = vunpack.c.h.b16 %v4209
    %v5320 = vunpack.c.l.b16 %v4210
    %v5321 = vunpack.c.h.b16 %v4210
    %v5322 = vunpack.c.l.b16 %v4211
    %v5323 = vunpack.c.h.b16 %v4211
    %v5324 = vunpack.c.l.b16 %v4212
    %v5325 = vunpack.c.h.b16 %v4212
    %v5326 = vunpack.c.l.b16 %v4213
    %v5327 = vunpack.c.h.b16 %v4213
    %v5328 = vunpack.c.l.b16 %v4214
    %v5329 = vunpack.c.h.b16 %v4214
    %v5330 = vunpack.c.l.b16 %v4215
    %v5331 = vunpack.c.h.b16 %v4215
    %v5332 = vunpack.c.l.b16 %v4216
    %v5333 = vunpack.c.h.b16 %v4216
    %v5334 = vunpack.c.l.b16 %v4217
    %v5335 = vunpack.c.h.b16 %v4217
    %v5336 = vunpack.c.l.b16 %v4218
    %v5337 = vunpack.c.h.b16 %v4218
    %v5338 = vunpack.c.l.b16 %v4219
    %v5339 = vunpack.c.h.b16 %v4219
    %v5340 = vunpack.c.l.b16 %v4220
    %v5341 = vunpack.c.h.b16 %v4220
    %v5342 = vunpack.c.l.b16 %v4221
    %v5343 = vunpack.c.h.b16 %v4221
    %v5344 = vunpack.c.l.b16 %v4222
    %v5345 = vunpack.c.h.b16 %v4222
    %v5346 = vunpack.c.l.b16 %v4223
    %v5347 = vunpack.c.h.b16 %v4223
    %v5348 = vunpack.c.l.b16 %v4224
    %v5349 = vunpack.c.h.b16 %v4224
    %v5350 = vunpack.c.l.b16 %v4225
    %v5351 = vunpack.c.h.b16 %v4225
    %v5352 = vunpack.c.l.b16 %v4226
    %v5353 = vunpack.c.h.b16 %v4226
    %v5354 = vunpack.c.l.b16 %v4227
    %v5355 = vunpack.c.h.b16 %v4227
    %v5356 = vunpack.c.l.b16 %v4228
    %v5357 = vunpack.c.h.b16 %v4228
    %v5358 = vunpack.c.l.b16 %v4229
    %v5359 = vunpack.c.h.b16 %v4229
    %v5360 = vunpack.c.l.b16 %v4230
    %v5361 = vunpack.c.h.b16 %v4230
    %v5362 = vunpack.c.l.b16 %v4231
    %v5363 = vunpack.c.h.b16 %v4231
    %v5364 = vunpack.c.l.b16 %v4232
    %v5365 = vunpack.c.h.b16 %v4232
    %v5366 = vunpack.c.l.b16 %v4233
    %v5367 = vunpack.c.h.b16 %v4233
    %v5368 = vunpack.c.l.b16 %v4234
    %v5369 = vunpack.c.h.b16 %v4234
    %v5370 = vunpack.c.l.b16 %v4235
    %v5371 = vunpack.c.h.b16 %v4235
    %v5372 = vunpack.c.l.b16 %v4236
    %v5373 = vunpack.c.h.b16 %v4236
    %v5374 = vunpack.c.l.b16 %v4237
    %v5375 = vunpack.c.h.b16 %v4237
    %v5376 = vunpack.c.l.b16 %v4238
    %v5377 = vunpack.c.h.b16 %v4238
    %v5378 = vunpack.c.l.b16 %v4239
    %v5379 = vunpack.c.h.b16 %v4239
    %v5380 = vunpack.c.l.b16 %v4240
    %v5381 = vunpack.c.h.b16 %v4240
    %v5382 = vunpack.c.l.b16 %v4241
    %v5383 = vunpack.c.h.b16 %v4241
    %v5384 = vunpack.c.l.b16 %v4242
    %v5385 = vunpack.c.h.b16 %v4242
    %v5386 = vunpack.c.l.b16 %v4243
    %v5387 = vunpack.c.h.b16 %v4243
    %v5388 = vunpack.c.l.b16 %v4244
    %v5389 = vunpack.c.h.b16 %v4244
    %v5390 = vunpack.c.l.b16 %v4245
    %v5391 = vunpack.c.h.b16 %v4245
    %v5392 = vunpack.c.l.b16 %v4246
    %v5393 = vunpack.c.h.b16 %v4246
    %v5394 = vunpack.c.l.b16 %v4247
    %v5395 = vunpack.c.h.b16 %v4247
    %v5396 = vunpack.c.l.b16 %v4248
    %v5397 = vunpack.c.h.b16 %v4248
    %v5398 = vunpack.c.l.b16 %v4249
    %v5399 = vunpack.c.h.b16 %v4249
    %v5400 = vunpack.c.l.b16 %v4250
    %v5401 = vunpack.c.h.b16 %v4250
    %v5402 = vunpack.c.l.b16 %v4251
    %v5403 = vunpack.c.h.b16 %v4251
    %v5404 = vunpack.c.l.b16 %v4252
    %v5405 = vunpack.c.h.b16 %v4252
    %v5406 = vunpack.c.l.b16 %v4253
    %v5407 = vunpack.c.h.b16 %v4253
    %v5408 = vunpack.c.l.b16 %v4254
    %v5409 = vunpack.c.h.b16 %v4254
    %v5410 = vunpack.c.l.b16 %v4255
    %v5411 = vunpack.c.h.b16 %v4255
    %v5412 = vunpack.c.l.b16 %v4256
    %v5413 = vunpack.c.h.b16 %v4256
    %v5414 = vunpack.c.l.b16 %v4257
    %v5415 = vunpack.c.h.b16 %v4257
    %v5416 = vunpack.c.l.b16 %v4258
    %v5417 = vunpack.c.h.b16 %v4258
    %v5418 = vunpack.c.l.b16 %v4259
    %v5419 = vunpack.c.h.b16 %v4259
    %v5420 = vunpack.c.l.b16 %v4260
    %v5421 = vunpack.c.h.b16 %v4260
    %v5422 = vunpack.c.l.b16 %v4261
    %v5423 = vunpack.c.h.b16 %v4261
    %v5424 = vunpack.c.l.b16 %v4262
    %v5425 = vunpack.c.h.b16 %v4262
    %v5426 = vunpack.c.l.b16 %v4263
    %v5427 = vunpack.c.h.b16 %v4263
    %v5428 = vunpack.c.l.b16 %v4264
    %v5429 = vunpack.c.h.b16 %v4264
    %v5430 = vunpack.c.l.b16 %v4265
    %v5431 = vunpack.c.h.b16 %v4265
    %v5432 = vunpack.c.l.b16 %v4266
    %v5433 = vunpack.c.h.b16 %v4266
    %v5434 = vunpack.c.l.b16 %v4267
    %v5435 = vunpack.c.h.b16 %v4267
    %v5436 = vunpack.c.l.b16 %v4268
    %v5437 = vunpack.c.h.b16 %v4268
    %v5438 = vunpack.c.l.b16 %v4269
    %v5439 = vunpack.c.h.b16 %v4269
    %v5440 = vunpack.c.l.b16 %v4270
    %v5441 = vunpack.c.h.b16 %v4270
    %v5442 = vunpack.c.l.b16 %v4271
    %v5443 = vunpack.c.h.b16 %v4271
    %v5444 = vunpack.c.l.b16 %v4272
    %v5445 = vunpack.c.h.b16 %v4272
    %v5446 = vunpack.c.l.b16 %v4273
    %v5447 = vunpack.c.h.b16 %v4273
    %v5448 = vunpack.c.l.b16 %v4274
    %v5449 = vunpack.c.h.b16 %v4274
    %v5450 = vunpack.c.l.b16 %v4275
    %v5451 = vunpack.c.h.b16 %v4275
    %v5452 = vunpack.c.l.b16 %v4276
    %v5453 = vunpack.c.h.b16 %v4276
    %v5454 = vunpack.c.l.b16 %v4277
    %v5455 = vunpack.c.h.b16 %v4277
    %v5456 = vunpack.c.l.b16 %v4278
    %v5457 = vunpack.c.h.b16 %v4278
    %v5458 = vunpack.c.l.b16 %v4279
    %v5459 = vunpack.c.h.b16 %v4279
    %v5460 = vunpack.c.l.b16 %v4280
    %v5461 = vunpack.c.h.b16 %v4280
    %v5462 = vunpack.c.l.b16 %v4281
    %v5463 = vunpack.c.h.b16 %v4281
    %v5464 = vunpack.c.l.b16 %v4282
    %v5465 = vunpack.c.h.b16 %v4282
    %v5466 = vunpack.c.l.b16 %v4283
    %v5467 = vunpack.c.h.b16 %v4283
    %v5468 = vunpack.c.l.b16 %v4284
    %v5469 = vunpack.c.h.b16 %v4284
    %v5470 = vunpack.c.l.b16 %v4285
    %v5471 = vunpack.c.h.b16 %v4285
    %v5472 = vunpack.c.l.b16 %v4286
    %v5473 = vunpack.c.h.b16 %v4286
    %v5474 = vunpack.c.l.b16 %v4287
    %v5475 = vunpack.c.h.b16 %v4287
    %v5476 = vunpack.c.l.b16 %v4288
    %v5477 = vunpack.c.h.b16 %v4288
    %v5478 = vunpack.c.l.b16 %v4289
    %v5479 = vunpack.c.h.b16 %v4289
    %v5480 = vunpack.c.l.b16 %v4290
    %v5481 = vunpack.c.h.b16 %v4290
    %v5482 = vunpack.c.l.b16 %v4291
    %v5483 = vunpack.c.h.b16 %v4291
    %v5484 = vunpack.c.l.b16 %v4292
    %v5485 = vunpack.c.h.b16 %v4292
    %v5486 = vunpack.c.l.b16 %v4293
    %v5487 = vunpack.c.h.b16 %v4293
    %v5488 = vunpack.c.l.b16 %v4294
    %v5489 = vunpack.c.h.b16 %v4294
    %v5490 = vunpack.c.l.b16 %v4295
    %v5491 = vunpack.c.h.b16 %v4295
    %v5492 = vunpack.c.l.b16 %v4296
    %v5493 = vunpack.c.h.b16 %v4296
    %v5494 = vunpack.c.l.b16 %v4297
    %v5495 = vunpack.c.h.b16 %v4297
    %v5496 = vunpack.c.l.b16 %v4298
    %v5497 = vunpack.c.h.b16 %v4298
    %v5498 = vunpack.c.l.b16 %v4299
    %v5499 = vunpack.c.h.b16 %v4299
    %v5500 = vunpack.c.l.b16 %v4300
    %v5501 = vunpack.c.h.b16 %v4300
    %v5502 = vunpack.c.l.b16 %v4301
    %v5503 = vunpack.c.h.b16 %v4301
    %v5504 = vunpack.c.l.b16 %v4302
    %v5505 = vunpack.c.h.b16 %v4302
    %v5506 = vunpack.c.l.b16 %v4303
    %v5507 = vunpack.c.h.b16 %v4303
    %v5508 = vunpack.c.l.b16 %v4304
    %v5509 = vunpack.c.h.b16 %v4304
    %v5510 = vunpack.c.l.b16 %v4305
    %v5511 = vunpack.c.h.b16 %v4305
    %v5512 = vunpack.c.l.b16 %v4306
    %v5513 = vunpack.c.h.b16 %v4306
    %v5514 = vunpack.c.l.b16 %v4307
    %v5515 = vunpack.c.h.b16 %v4307
    %v5516 = vunpack.c.l.b16 %v4308
    %v5517 = vunpack.c.h.b16 %v4308
    %v5518 = vunpack.c.l.b16 %v4309
    %v5519 = vunpack.c.h.b16 %v4309
    %v5520 = vunpack.c.l.b16 %v4310
    %v5521 = vunpack.c.h.b16 %v4310
    %v5522 = vunpack.c.l.b16 %v4311
    %v5523 = vunpack.c.h.b16 %v4311
    %v5524 = vunpack.c.l.b16 %v4312
    %v5525 = vunpack.c.h.b16 %v4312
    %v5526 = vunpack.c.l.b16 %v4313
    %v5527 = vunpack.c.h.b16 %v4313
    %v5528 = vunpack.c.l.b16 %v4314
    %v5529 = vunpack.c.h.b16 %v4314
    %v5530 = vunpack.c.l.b16 %v4315
    %v5531 = vunpack.c.h.b16 %v4315
    %v5532 = vunpack.c.l.b16 %v4316
    %v5533 = vunpack.c.h.b16 %v4316
    %v5534 = vunpack.c.l.b16 %v4317
    %v5535 = vunpack.c.h.b16 %v4317
    %v5536 = vunpack.c.l.b16 %v4318
    %v5537 = vunpack.c.h.b16 %v4318
    %v5538 = vunpack.c.l.b16 %v4319
    %v5539 = vunpack.c.h.b16 %v4319
    %v5540 = vunpack.c.l.b16 %v4320
    %v5541 = vunpack.c.h.b16 %v4320
    %v5542 = vunpack.c.l.b16 %v4321
    %v5543 = vunpack.c.h.b16 %v4321
    %v5544 = vunpack.c.l.b16 %v4322
    %v5545 = vunpack.c.h.b16 %v4322
    %v5546 = vunpack.c.l.b16 %v4323
    %v5547 = vunpack.c.h.b16 %v4323
    %v5548 = vunpack.c.l.b16 %v4324
    %v5549 = vunpack.c.h.b16 %v4324
    %v5550 = vunpack.c.l.b16 %v4325
    %v5551 = vunpack.c.h.b16 %v4325
    %v5552 = vunpack.c.l.b16 %v4326
    %v5553 = vunpack.c.h.b16 %v4326
    %v5554 = vunpack.c.l.b16 %v4327
    %v5555 = vunpack.c.h.b16 %v4327
    %v5556 = vunpack.c.l.b16 %v4328
    %v5557 = vunpack.c.h.b16 %v4328
    %v5558 = vunpack.c.l.b16 %v4329
    %v5559 = vunpack.c.h.b16 %v4329
    %v5560 = vunpack.c.l.b16 %v4330
    %v5561 = vunpack.c.h.b16 %v4330
    %v5562 = vunpack.c.l.b16 %v4331
    %v5563 = vunpack.c.h.b16 %v4331
    %v5564 = vunpack.c.l.b16 %v4332
    %v5565 = vunpack.c.h.b16 %v4332
    %v5566 = vunpack.c.l.b16 %v4333
    %v5567 = vunpack.c.h.b16 %v4333
    %v5568 = vunpack.c.l.b16 %v4334
    %v5569 = vunpack.c.h.b16 %v4334
    %v5570 = vunpack.c.l.b16 %v4335
    %v5571 = vunpack.c.h.b16 %v4335
    %v5572 = vunpack.c.l.b16 %v4336
    %v5573 = vunpack.c.h.b16 %v4336
    %v5574 = vunpack.c.l.b16 %v4337
    %v5575 = vunpack.c.h.b16 %v4337
    %v5576 = vunpack.c.l.b16 %v4338
    %v5577 = vunpack.c.h.b16 %v4338
    %v5578 = vunpack.c.l.b16 %v4339
    %v5579 = vunpack.c.h.b16 %v4339
    %v5580 = vunpack.c.l.b16 %v4340
    %v5581 = vunpack.c.h.b16 %v4340
    %v5582 = vunpack.c.l.b16 %v4341
    %v5583 = vunpack.c.h.b16 %v4341
    %v5584 = vunpack.c.l.b16 %v4342
    %v5585 = vunpack.c.h.b16 %v4342
    %v5586 = vunpack.c.l.b16 %v4343
    %v5587 = vunpack.c.h.b16 %v4343
    %v5588 = vunpack.c.l.b16 %v4344
    %v5589 = vunpack.c.h.b16 %v4344
    %v5590 = vunpack.c.l.b16 %v4345
    %v5591 = vunpack.c.h.b16 %v4345
    %v5592 = vunpack.c.l.b16 %v4346
    %v5593 = vunpack.c.h.b16 %v4346
    %v5594 = vunpack.c.l.b16 %v4347
    %v5595 = vunpack.c.h.b16 %v4347
    %v5596 = vunpack.c.l.b16 %v4348
    %v5597 = vunpack.c.h.b16 %v4348
    %v5598 = vunpack.c.l.b16 %v4349
    %v5599 = vunpack.c.h.b16 %v4349
    %v5600 = vunpack.c.l.b16 %v4350
    %v5601 = vunpack.c.h.b16 %v4350
    %v5602 = vunpack.c.l.b16 %v4351
    %v5603 = vunpack.c.h.b16 %v4351
    %v5604 = vunpack.c.l.b16 %v4352
    %v5605 = vunpack.c.h.b16 %v4352
    %v5606 = vunpack.c.l.b16 %v4353
    %v5607 = vunpack.c.h.b16 %v4353
    %v5608 = vunpack.c.l.b16 %v4354
    %v5609 = vunpack.c.h.b16 %v4354
    %v5610 = vunpack.c.l.b16 %v4355
    %v5611 = vunpack.c.h.b16 %v4355
    %v5612 = vunpack.c.l.b16 %v4356
    %v5613 = vunpack.c.h.b16 %v4356
    %v5614 = vunpack.c.l.b16 %v4357
    %v5615 = vunpack.c.h.b16 %v4357
    %v5616 = vunpack.c.l.b16 %v4358
    %v5617 = vunpack.c.h.b16 %v4358
    %v5618 = vunpack.c.l.b16 %v4359
    %v5619 = vunpack.c.h.b16 %v4359
    %v5620 = vunpack.c.l.b16 %v4360
    %v5621 = vunpack.c.h.b16 %v4360
    %v5622 = vunpack.c.l.b16 %v4361
    %v5623 = vunpack.c.h.b16 %v4361
    %v5624 = vunpack.c.l.b16 %v4362
    %v5625 = vunpack.c.h.b16 %v4362
    %v5626 = vunpack.c.l.b16 %v4363
    %v5627 = vunpack.c.h.b16 %v4363
    %v5628 = vunpack.c.l.b16 %v4364
    %v5629 = vunpack.c.h.b16 %v4364
    %v5630 = vunpack.c.l.b16 %v4365
    %v5631 = vunpack.c.h.b16 %v4365
    %v5632 = vunpack.c.l.b16 %v4366
    %v5633 = vunpack.c.h.b16 %v4366
    %v5634 = vunpack.c.l.b16 %v4367
    %v5635 = vunpack.c.h.b16 %v4367
    %v5636 = vunpack.c.l.b16 %v4368
    %v5637 = vunpack.c.h.b16 %v4368
    %v5638 = vunpack.c.l.b16 %v4369
    %v5639 = vunpack.c.h.b16 %v4369
    %v5640 = vunpack.c.l.b16 %v4370
    %v5641 = vunpack.c.h.b16 %v4370
    %v5642 = vunpack.c.l.b16 %v4371
    %v5643 = vunpack.c.h.b16 %v4371
    %v5644 = vunpack.c.l.b16 %v4372
    %v5645 = vunpack.c.h.b16 %v4372
    %v5646 = vunpack.c.l.b16 %v4373
    %v5647 = vunpack.c.h.b16 %v4373
    %v5648 = vunpack.c.l.b16 %v4374
    %v5649 = vunpack.c.h.b16 %v4374
    %v5650 = vunpack.c.l.b16 %v4375
    %v5651 = vunpack.c.h.b16 %v4375
    %v5652 = vunpack.c.l.b16 %v4376
    %v5653 = vunpack.c.h.b16 %v4376
    %v5654 = vunpack.c.l.b16 %v4377
    %v5655 = vunpack.c.h.b16 %v4377
    %v5656 = vunpack.c.l.b16 %v4378
    %v5657 = vunpack.c.h.b16 %v4378
    %v5658 = vunpack.c.l.b16 %v4379
    %v5659 = vunpack.c.h.b16 %v4379
    %v5660 = vunpack.c.l.b16 %v4380
    %v5661 = vunpack.c.h.b16 %v4380
    %v5662 = vunpack.c.l.b16 %v4381
    %v5663 = vunpack.c.h.b16 %v4381
    %v5664 = vunpack.c.l.b16 %v4382
    %v5665 = vunpack.c.h.b16 %v4382
    %v5666 = vunpack.c.l.b16 %v4383
    %v5667 = vunpack.c.h.b16 %v4383
    %v5668 = vunpack.c.l.b16 %v4384
    %v5669 = vunpack.c.h.b16 %v4384
    %v5670 = vunpack.c.l.b16 %v4385
    %v5671 = vunpack.c.h.b16 %v4385
    %v5672 = vunpack.c.l.b16 %v4386
    %v5673 = vunpack.c.h.b16 %v4386
    %v5674 = vunpack.c.l.b16 %v4387
    %v5675 = vunpack.c.h.b16 %v4387
    %v5676 = vunpack.c.l.b16 %v4388
    %v5677 = vunpack.c.h.b16 %v4388
    %v5678 = vunpack.c.l.b16 %v4389
    %v5679 = vunpack.c.h.b16 %v4389
    %v5680 = vunpack.c.l.b16 %v4390
    %v5681 = vunpack.c.h.b16 %v4390
    %v5682 = vunpack.c.l.b16 %v4391
    %v5683 = vunpack.c.h.b16 %v4391
    %v5684 = vunpack.c.l.b16 %v4392
    %v5685 = vunpack.c.h.b16 %v4392
    %v5686 = vunpack.c.l.b16 %v4393
    %v5687 = vunpack.c.h.b16 %v4393
    %v5688 = vunpack.c.l.b16 %v4394
    %v5689 = vunpack.c.h.b16 %v4394
    %v5690 = vunpack.c.l.b16 %v4395
    %v5691 = vunpack.c.h.b16 %v4395
    %v5692 = vunpack.c.l.b16 %v4396
    %v5693 = vunpack.c.h.b16 %v4396
    %v5694 = vunpack.c.l.b16 %v4397
    %v5695 = vunpack.c.h.b16 %v4397
    %v5696 = vunpack.c.l.b16 %v4398
    %v5697 = vunpack.c.h.b16 %v4398
    %v5698 = vunpack.c.l.b16 %v4399
    %v5699 = vunpack.c.h.b16 %v4399
    %v5700 = vunpack.c.l.b16 %v4400
    %v5701 = vunpack.c.h.b16 %v4400
    %v5702 = vunpack.c.l.b16 %v4401
    %v5703 = vunpack.c.h.b16 %v4401
    %v5704 = vunpack.c.l.b16 %v4402
    %v5705 = vunpack.c.h.b16 %v4402
    %v5706 = vunpack.c.l.b16 %v4403
    %v5707 = vunpack.c.h.b16 %v4403
    %v5708 = vunpack.c.l.b16 %v4404
    %v5709 = vunpack.c.h.b16 %v4404
    %v5710 = vunpack.c.l.b16 %v4405
    %v5711 = vunpack.c.h.b16 %v4405
    %v5712 = vunpack.c.l.b16 %v4406
    %v5713 = vunpack.c.h.b16 %v4406
    %v5714 = vunpack.c.l.b16 %v4407
    %v5715 = vunpack.c.h.b16 %v4407
    %v5716 = vunpack.c.l.b16 %v4408
    %v5717 = vunpack.c.h.b16 %v4408
    %v5718 = vunpack.c.l.b16 %v4409
    %v5719 = vunpack.c.h.b16 %v4409
    %v5720 = vunpack.c.l.b16 %v4410
    %v5721 = vunpack.c.h.b16 %v4410
    %v5722 = vunpack.c.l.b16 %v4411
    %v5723 = vunpack.c.h.b16 %v4411
    %v5724 = vunpack.c.l.b16 %v4412
    %v5725 = vunpack.c.h.b16 %v4412
    %v5726 = vunpack.c.l.b16 %v4413
    %v5727 = vunpack.c.h.b16 %v4413
    %v5728 = vunpack.c.l.b16 %v4414
    %v5729 = vunpack.c.h.b16 %v4414
    %v5730 = vunpack.c.l.b16 %v4415
    %v5731 = vunpack.c.h.b16 %v4415
    %v5732 = vunpack.c.l.b16 %v4416
    %v5733 = vunpack.c.h.b16 %v4416
    %v5734 = vunpack.c.l.b16 %v4417
    %v5735 = vunpack.c.h.b16 %v4417
    %v5736 = vunpack.c.l.b16 %v4418
    %v5737 = vunpack.c.h.b16 %v4418
    %v5738 = vunpack.c.l.b16 %v4419
    %v5739 = vunpack.c.h.b16 %v4419
    %v5740 = vunpack.c.l.b16 %v4420
    %v5741 = vunpack.c.h.b16 %v4420
    %v5742 = vunpack.c.l.b16 %v4421
    %v5743 = vunpack.c.h.b16 %v4421
    %v5744 = vunpack.c.l.b16 %v4422
    %v5745 = vunpack.c.h.b16 %v4422
    %v5746 = vunpack.c.l.b16 %v4423
    %v5747 = vunpack.c.h.b16 %v4423
    %v5748 = vunpack.c.l.b16 %v4424
    %v5749 = vunpack.c.h.b16 %v4424
    %v5750 = vunpack.c.l.b16 %v4425
    %v5751 = vunpack.c.h.b16 %v4425
    %v5752 = vunpack.c.l.b16 %v4426
    %v5753 = vunpack.c.h.b16 %v4426
    %v5754 = vunpack.c.l.b16 %v4427
    %v5755 = vunpack.c.h.b16 %v4427
    %v5756 = vunpack.c.l.b16 %v4428
    %v5757 = vunpack.c.h.b16 %v4428
    %v5758 = vunpack.c.l.b16 %v4429
    %v5759 = vunpack.c.h.b16 %v4429
    %v5760 = vunpack.c.l.b16 %v4430
    %v5761 = vunpack.c.h.b16 %v4430
    %v5762 = vunpack.c.l.b16 %v4431
    %v5763 = vunpack.c.h.b16 %v4431
    %v5764 = vunpack.c.l.b16 %v4432
    %v5765 = vunpack.c.h.b16 %v4432
    %v5766 = vunpack.c.l.b16 %v4433
    %v5767 = vunpack.c.h.b16 %v4433
    %v5768 = vunpack.c.l.b16 %v4434
    %v5769 = vunpack.c.h.b16 %v4434
    %v5770 = vunpack.c.l.b16 %v4435
    %v5771 = vunpack.c.h.b16 %v4435
    %v5772 = vunpack.c.l.b16 %v4436
    %v5773 = vunpack.c.h.b16 %v4436
    %v5774 = vunpack.c.l.b16 %v4437
    %v5775 = vunpack.c.h.b16 %v4437
    %v5776 = vunpack.c.l.b16 %v4438
    %v5777 = vunpack.c.h.b16 %v4438
    %v5778 = vunpack.c.l.b16 %v4439
    %v5779 = vunpack.c.h.b16 %v4439
    %v5780 = vunpack.c.l.b16 %v4440
    %v5781 = vunpack.c.h.b16 %v4440
    %v5782 = vunpack.c.l.b16 %v4441
    %v5783 = vunpack.c.h.b16 %v4441
    %v5784 = vunpack.c.l.b16 %v4442
    %v5785 = vunpack.c.h.b16 %v4442
    %v5786 = vunpack.c.l.b16 %v4443
    %v5787 = vunpack.c.h.b16 %v4443
    %v5788 = vunpack.c.l.b16 %v4444
    %v5789 = vunpack.c.h.b16 %v4444
    %v5790 = vunpack.c.l.b16 %v4445
    %v5791 = vunpack.c.h.b16 %v4445
    %v5792 = vunpack.c.l.b16 %v4446
    %v5793 = vunpack.c.h.b16 %v4446
    %v5794 = vunpack.c.l.b16 %v4447
    %v5795 = vunpack.c.h.b16 %v4447
    %v5796 = vunpack.c.l.b16 %v4448
    %v5797 = vunpack.c.h.b16 %v4448
    %v5798 = vunpack.c.l.b16 %v4449
    %v5799 = vunpack.c.h.b16 %v4449
    %v5800 = vunpack.c.l.b16 %v4450
    %v5801 = vunpack.c.h.b16 %v4450
    %v5802 = vunpack.c.l.b16 %v4451
    %v5803 = vunpack.c.h.b16 %v4451
    %v5804 = vunpack.c.l.b16 %v4452
    %v5805 = vunpack.c.h.b16 %v4452
    %v5806 = vunpack.c.l.b16 %v4453
    %v5807 = vunpack.c.h.b16 %v4453
    %v5808 = vunpack.c.l.b16 %v4454
    %v5809 = vunpack.c.h.b16 %v4454
    %v5810 = vunpack.c.l.b16 %v4455
    %v5811 = vunpack.c.h.b16 %v4455
    %v5812 = vunpack.c.l.b16 %v4456
    %v5813 = vunpack.c.h.b16 %v4456
    %v5814 = vunpack.c.l.b16 %v4457
    %v5815 = vunpack.c.h.b16 %v4457
    %v5816 = vunpack.c.l.b16 %v4458
    %v5817 = vunpack.c.h.b16 %v4458
    %v5818 = vunpack.c.l.b16 %v4459
    %v5819 = vunpack.c.h.b16 %v4459
    %v5820 = vunpack.c.l.b16 %v4460
    %v5821 = vunpack.c.h.b16 %v4460
    %v5822 = vunpack.c.l.b16 %v4461
    %v5823 = vunpack.c.h.b16 %v4461
    %v5824 = vunpack.c.l.b16 %v4462
    %v5825 = vunpack.c.h.b16 %v4462
    %v5826 = vunpack.c.l.b16 %v4463
    %v5827 = vunpack.c.h.b16 %v4463
    %v5828 = vunpack.c.l.b16 %v4464
    %v5829 = vunpack.c.h.b16 %v4464
    %v5830 = vunpack.c.l.b16 %v4465
    %v5831 = vunpack.c.h.b16 %v4465
    %v5832 = vunpack.c.l.b16 %v4466
    %v5833 = vunpack.c.h.b16 %v4466
    %v5834 = vunpack.c.l.b16 %v4467
    %v5835 = vunpack.c.h.b16 %v4467
    %v5836 = vunpack.c.l.b16 %v4468
    %v5837 = vunpack.c.h.b16 %v4468
    %v5838 = vunpack.c.l.b16 %v4469
    %v5839 = vunpack.c.h.b16 %v4469
    %v5840 = vunpack.c.l.b16 %v4470
    %v5841 = vunpack.c.h.b16 %v4470
    %v5842 = vunpack.c.l.b16 %v4471
    %v5843 = vunpack.c.h.b16 %v4471
    %v5844 = vunpack.c.l.b16 %v4472
    %v5845 = vunpack.c.h.b16 %v4472
    %v5846 = vunpack.c.l.b16 %v4473
    %v5847 = vunpack.c.h.b16 %v4473
    %v5848 = vunpack.c.l.b16 %v4474
    %v5849 = vunpack.c.h.b16 %v4474
    %v5850 = vunpack.c.l.b16 %v4475
    %v5851 = vunpack.c.h.b16 %v4475
    %v5852 = vunpack.c.l.b16 %v4476
    %v5853 = vunpack.c.h.b16 %v4476
    %v5854 = vunpack.c.l.b16 %v4477
    %v5855 = vunpack.c.h.b16 %v4477
    %v5856 = vunpack.c.l.b16 %v4478
    %v5857 = vunpack.c.h.b16 %v4478
    %v5858 = vunpack.c.l.b16 %v4479
    %v5859 = vunpack.c.h.b16 %v4479
    %v5860 = vunpack.c.l.b16 %v4480
    %v5861 = vunpack.c.h.b16 %v4480
    %v5862 = vunpack.c.l.b16 %v4481
    %v5863 = vunpack.c.h.b16 %v4481
    %v5864 = vunpack.c.l.b16 %v4482
    %v5865 = vunpack.c.h.b16 %v4482
    %v5866 = vunpack.c.l.b16 %v4483
    %v5867 = vunpack.c.h.b16 %v4483
    %v5868 = vunpack.c.l.b16 %v4484
    %v5869 = vunpack.c.h.b16 %v4484
    %v5870 = vunpack.c.l.b16 %v4485
    %v5871 = vunpack.c.h.b16 %v4485
    %v5872 = vunpack.c.l.b16 %v4486
    %v5873 = vunpack.c.h.b16 %v4486
    %v5874 = vunpack.c.l.b16 %v4487
    %v5875 = vunpack.c.h.b16 %v4487
    %v5876 = vunpack.c.l.b16 %v4488
    %v5877 = vunpack.c.h.b16 %v4488
    %v5878 = vunpack.c.l.b16 %v4489
    %v5879 = vunpack.c.h.b16 %v4489
    %v5880 = vunpack.c.l.b16 %v4490
    %v5881 = vunpack.c.h.b16 %v4490
    %v5882 = vunpack.c.l.b16 %v4491
    %v5883 = vunpack.c.h.b16 %v4491
    %v5884 = vunpack.c.l.b16 %v4492
    %v5885 = vunpack.c.h.b16 %v4492
    %v5886 = vunpack.c.l.b16 %v4493
    %v5887 = vunpack.c.h.b16 %v4493
    %v5888 = vunpack.c.l.b16 %v4494
    %v5889 = vunpack.c.h.b16 %v4494
    %v5890 = vunpack.c.l.b16 %v4495
    %v5891 = vunpack.c.h.b16 %v4495
    %v5892 = vunpack.c.l.b16 %v4496
    %v5893 = vunpack.c.h.b16 %v4496
    %v5894 = vunpack.c.l.b16 %v4497
    %v5895 = vunpack.c.h.b16 %v4497
    %v5896 = vunpack.c.l.b16 %v4498
    %v5897 = vunpack.c.h.b16 %v4498
    %v5898 = vunpack.c.l.b16 %v4499
    %v5899 = vunpack.c.h.b16 %v4499
    %v5900 = vunpack.c.l.b16 %v4500
    %v5901 = vunpack.c.h.b16 %v4500
    %v5902 = vunpack.c.l.b16 %v4501
    %v5903 = vunpack.c.h.b16 %v4501
    %v5904 = vunpack.c.l.b16 %v4502
    %v5905 = vunpack.c.h.b16 %v4502
    %v5906 = vunpack.c.l.b16 %v4503
    %v5907 = vunpack.c.h.b16 %v4503
    %v5908 = vunpack.c.l.b16 %v4504
    %v5909 = vunpack.c.h.b16 %v4504
    %v5910 = vunpack.c.l.b16 %v4505
    %v5911 = vunpack.c.h.b16 %v4505
    %v5912 = vunpack.c.l.b16 %v4506
    %v5913 = vunpack.c.h.b16 %v4506
    %v5914 = vunpack.c.l.b16 %v4507
    %v5915 = vunpack.c.h.b16 %v4507
    %v5916 = vunpack.c.l.b16 %v4508
    %v5917 = vunpack.c.h.b16 %v4508
    %v5918 = vunpack.c.l.b16 %v4509
    %v5919 = vunpack.c.h.b16 %v4509
    %v5920 = vunpack.c.l.b16 %v4510
    %v5921 = vunpack.c.h.b16 %v4510
    %v5922 = vunpack.c.l.b16 %v4511
    %v5923 = vunpack.c.h.b16 %v4511
    %v5924 = vunpack.c.l.b16 %v4512
    %v5925 = vunpack.c.h.b16 %v4512
    %v5926 = vunpack.c.l.b16 %v4513
    %v5927 = vunpack.c.h.b16 %v4513
    %v5928 = vunpack.c.l.b16 %v4514
    %v5929 = vunpack.c.h.b16 %v4514
    %v5930 = vunpack.c.l.b16 %v4515
    %v5931 = vunpack.c.h.b16 %v4515
    %v5932 = vunpack.c.l.b16 %v4516
    %v5933 = vunpack.c.h.b16 %v4516
    %v5934 = vunpack.c.l.b16 %v4517
    %v5935 = vunpack.c.h.b16 %v4517
    %v5936 = vunpack.c.l.b16 %v4518
    %v5937 = vunpack.c.h.b16 %v4518
    %v5938 = vunpack.c.l.b16 %v4519
    %v5939 = vunpack.c.h.b16 %v4519
    %v5940 = vunpack.c.l.b16 %v4520
    %v5941 = vunpack.c.h.b16 %v4520
    %v5942 = vunpack.c.l.b16 %v4521
    %v5943 = vunpack.c.h.b16 %v4521
    %v5944 = vunpack.c.l.b16 %v4522
    %v5945 = vunpack.c.h.b16 %v4522
    %v5946 = vunpack.c.l.b16 %v4523
    %v5947 = vunpack.c.h.b16 %v4523
    %v5948 = vunpack.c.l.b16 %v4524
    %v5949 = vunpack.c.h.b16 %v4524
    %v5950 = vunpack.c.l.b16 %v4525
    %v5951 = vunpack.c.h.b16 %v4525
    %v5952 = vunpack.c.l.b16 %v4526
    %v5953 = vunpack.c.h.b16 %v4526
    %v5954 = vunpack.c.l.b16 %v4527
    %v5955 = vunpack.c.h.b16 %v4527
    %v5956 = vunpack.c.l.b16 %v4528
    %v5957 = vunpack.c.h.b16 %v4528
    %v5958 = vunpack.c.l.b16 %v4529
    %v5959 = vunpack.c.h.b16 %v4529
    %v5960 = vunpack.c.l.b16 %v4530
    %v5961 = vunpack.c.h.b16 %v4530
    %v5962 = vunpack.c.l.b16 %v4531
    %v5963 = vunpack.c.h.b16 %v4531
    %v5964 = vunpack.c.l.b16 %v4532
    %v5965 = vunpack.c.h.b16 %v4532
    %v5966 = vunpack.c.l.b16 %v4533
    %v5967 = vunpack.c.h.b16 %v4533
    %v5968 = vunpack.c.l.b16 %v4534
    %v5969 = vunpack.c.h.b16 %v4534
    %v5970 = vunpack.c.l.b16 %v4535
    %v5971 = vunpack.c.h.b16 %v4535
    %v5972 = vunpack.c.l.b16 %v4536
    %v5973 = vunpack.c.h.b16 %v4536
    %v5974 = vunpack.c.l.b16 %v4537
    %v5975 = vunpack.c.h.b16 %v4537
    %v5976 = vunpack.c.l.b16 %v4538
    %v5977 = vunpack.c.h.b16 %v4538
    %v5978 = vunpack.c.l.b16 %v4539
    %v5979 = vunpack.c.h.b16 %v4539
    %v5980 = vunpack.c.l.b16 %v4540
    %v5981 = vunpack.c.h.b16 %v4540
    %v5982 = vunpack.c.l.b16 %v4541
    %v5983 = vunpack.c.h.b16 %v4541
    %v5984 = vunpack.c.l.b16 %v4542
    %v5985 = vunpack.c.h.b16 %v4542
    %v5986 = vunpack.c.l.b16 %v4543
    %v5987 = vunpack.c.h.b16 %v4543
    %v5988 = vunpack.c.l.b16 %v4544
    %v5989 = vunpack.c.h.b16 %v4544
    %v5990 = vunpack.c.l.b16 %v4545
    %v5991 = vunpack.c.h.b16 %v4545
    %v5992 = vunpack.c.l.b16 %v4546
    %v5993 = vunpack.c.h.b16 %v4546
    %v5994 = vunpack.c.l.b16 %v4547
    %v5995 = vunpack.c.h.b16 %v4547
    %v5996 = vunpack.c.l.b16 %v4548
    %v5997 = vunpack.c.h.b16 %v4548
    %v5998 = vunpack.c.l.b16 %v4549
    %v5999 = vunpack.c.h.b16 %v4549
    %v6000 = vunpack.c.l.b16 %v4550
    %v6001 = vunpack.c.h.b16 %v4550
    %v6002 = vunpack.c.l.b16 %v4551
    %v6003 = vunpack.c.h.b16 %v4551
    %v6004 = vunpack.c.l.b16 %v4552
    %v6005 = vunpack.c.h.b16 %v4552
    %v6006 = vunpack.c.l.b16 %v4553
    %v6007 = vunpack.c.h.b16 %v4553
    %v6008 = vunpack.c.l.b16 %v4554
    %v6009 = vunpack.c.h.b16 %v4554
    %v6010 = vunpack.c.l.b16 %v4555
    %v6011 = vunpack.c.h.b16 %v4555
    %v6012 = vunpack.c.l.b16 %v4556
    %v6013 = vunpack.c.h.b16 %v4556
    %v6014 = vunpack.c.l.b16 %v4557
    %v6015 = vunpack.c.h.b16 %v4557
    %v6016 = vunpack.c.l.b16 %v4558
    %v6017 = vunpack.c.h.b16 %v4558
    %v6018 = vunpack.c.l.b16 %v4559
    %v6019 = vunpack.c.h.b16 %v4559
    %v6020 = vunpack.c.l.b16 %v4560
    %v6021 = vunpack.c.h.b16 %v4560
    %v6022 = vunpack.c.l.b16 %v4561
    %v6023 = vunpack.c.h.b16 %v4561
    %v6024 = vunpack.c.l.b16 %v4562
    %v6025 = vunpack.c.h.b16 %v4562
    %v6026 = vunpack.c.l.b16 %v4563
    %v6027 = vunpack.c.h.b16 %v4563
    %v6028 = vunpack.c.l.b16 %v4564
    %v6029 = vunpack.c.h.b16 %v4564
    %v6030 = vunpack.c.l.b16 %v4565
    %v6031 = vunpack.c.h.b16 %v4565
    %v6032 = vunpack.c.l.b16 %v4566
    %v6033 = vunpack.c.h.b16 %v4566
    %v6034 = vunpack.c.l.b16 %v4567
    %v6035 = vunpack.c.h.b16 %v4567
    %v6036 = vunpack.c.l.b16 %v4568
    %v6037 = vunpack.c.h.b16 %v4568
    %v6038 = vunpack.c.l.b16 %v4569
    %v6039 = vunpack.c.h.b16 %v4569
    %v6040 = vunpack.c.l.b16 %v4570
    %v6041 = vunpack.c.h.b16 %v4570
    %v6042 = vunpack.c.l.b16 %v4571
    %v6043 = vunpack.c.h.b16 %v4571
    %v6044 = vunpack.c.l.b16 %v4572
    %v6045 = vunpack.c.h.b16 %v4572
    %v6046 = vunpack.c.l.b16 %v4573
    %v6047 = vunpack.c.h.b16 %v4573
    %v6048 = vunpack.c.l.b16 %v4574
    %v6049 = vunpack.c.h.b16 %v4574
    %v6050 = vunpack.c.l.b16 %v4575
    %v6051 = vunpack.c.h.b16 %v4575
    %v6052 = vunpack.c.l.b16 %v4576
    %v6053 = vunpack.c.h.b16 %v4576
    %v6054 = vunpack.c.l.b16 %v4577
    %v6055 = vunpack.c.h.b16 %v4577
    %v6056 = vunpack.c.l.b16 %v4578
    %v6057 = vunpack.c.h.b16 %v4578
    %v6058 = vunpack.c.l.b16 %v4579
    %v6059 = vunpack.c.h.b16 %v4579
    %v6060 = vunpack.c.l.b16 %v4580
    %v6061 = vunpack.c.h.b16 %v4580
    %v6062 = vunpack.c.l.b16 %v4581
    %v6063 = vunpack.c.h.b16 %v4581
    %v6064 = vunpack.c.l.b16 %v4582
    %v6065 = vunpack.c.h.b16 %v4582
    %v6066 = vunpack.c.l.b16 %v4583
    %v6067 = vunpack.c.h.b16 %v4583
    %v6068 = vunpack.c.l.b16 %v4584
    %v6069 = vunpack.c.h.b16 %v4584
    %v6070 = vunpack.c.l.b16 %v4585
    %v6071 = vunpack.c.h.b16 %v4585
    %v6072 = vunpack.c.l.b16 %v4586
    %v6073 = vunpack.c.h.b16 %v4586
    %v6074 = vunpack.c.l.b16 %v4587
    %v6075 = vunpack.c.h.b16 %v4587
    %v6076 = vunpack.c.l.b16 %v4588
    %v6077 = vunpack.c.h.b16 %v4588
    %v6078 = vunpack.c.l.b16 %v4589
    %v6079 = vunpack.c.h.b16 %v4589
    %v6080 = vunpack.c.l.b16 %v4590
    %v6081 = vunpack.c.h.b16 %v4590
    %v6082 = vunpack.c.l.b16 %v4591
    %v6083 = vunpack.c.h.b16 %v4591
    %v6084 = vunpack.c.l.b16 %v4592
    %v6085 = vunpack.c.h.b16 %v4592
    %v6086 = vunpack.c.l.b16 %v4593
    %v6087 = vunpack.c.h.b16 %v4593
    %v6088 = vunpack.c.l.b16 %v4594
    %v6089 = vunpack.c.h.b16 %v4594
    %v6090 = vunpack.c.l.b16 %v4595
    %v6091 = vunpack.c.h.b16 %v4595
    %v6092 = vunpack.c.l.b16 %v4596
    %v6093 = vunpack.c.h.b16 %v4596
    %v6094 = vunpack.c.l.b16 %v4597
    %v6095 = vunpack.c.h.b16 %v4597
    %v6096 = vunpack.c.l.b16 %v4598
    %v6097 = vunpack.c.h.b16 %v4598
    %v6098 = vunpack.c.l.b16 %v4599
    %v6099 = vunpack.c.h.b16 %v4599
    %v6100 = vunpack.c.l.b16 %v4600
    %v6101 = vunpack.c.h.b16 %v4600
    %v6102 = vunpack.c.l.b16 %v4601
    %v6103 = vunpack.c.h.b16 %v4601
    %v6104 = vunpack.c.l.b16 %v4602
    %v6105 = vunpack.c.h.b16 %v4602
    %v6106 = vunpack.c.l.b16 %v4603
    %v6107 = vunpack.c.h.b16 %v4603
    %v6108 = vunpack.c.l.b16 %v4604
    %v6109 = vunpack.c.h.b16 %v4604
    %v6110 = vunpack.c.l.b16 %v4605
    %v6111 = vunpack.c.h.b16 %v4605
    %v6112 = vunpack.c.l.b16 %v4606
    %v6113 = vunpack.c.h.b16 %v4606
    %v6114 = vunpack.c.l.b16 %v4607
    %v6115 = vunpack.c.h.b16 %v4607
    %v6116 = vunpack.c.l.b16 %v4608
    %v6117 = vunpack.c.h.b16 %v4608
    %v6118 = vunpack.c.l.b16 %v4609
    %v6119 = vunpack.c.h.b16 %v4609
    %v6120 = vunpack.c.l.b16 %v4610
    %v6121 = vunpack.c.h.b16 %v4610
    %v6122 = vunpack.c.l.b16 %v4611
    %v6123 = vunpack.c.h.b16 %v4611
    %v6124 = vunpack.c.l.b16 %v4612
    %v6125 = vunpack.c.h.b16 %v4612
    %v6126 = vunpack.c.l.b16 %v4613
    %v6127 = vunpack.c.h.b16 %v4613
    %v6128 = vunpack.c.l.b16 %v4614
    %v6129 = vunpack.c.h.b16 %v4614
    %v6130 = vunpack.c.l.b16 %v4615
    %v6131 = vunpack.c.h.b16 %v4615
    %v6132 = vunpack.c.l.b16 %v4616
    %v6133 = vunpack.c.h.b16 %v4616
    %v6134 = vunpack.c.l.b16 %v4617
    %v6135 = vunpack.c.h.b16 %v4617
    %v6136 = vunpack.c.l.b16 %v4618
    %v6137 = vunpack.c.h.b16 %v4618
    %v6138 = vunpack.c.l.b16 %v4619
    %v6139 = vunpack.c.h.b16 %v4619
    %v6140 = vunpack.c.l.b16 %v4620
    %v6141 = vunpack.c.h.b16 %v4620
    %v6142 = vunpack.c.l.b16 %v4621
    %v6143 = vunpack.c.h.b16 %v4621
    %v6144 = vunpack.c.l.b16 %v4622
    %v6145 = vunpack.c.h.b16 %v4622
    %v6146 = vunpack.c.l.b16 %v4623
    %v6147 = vunpack.c.h.b16 %v4623
    %v6148 = vunpack.c.l.b16 %v4624
    %v6149 = vunpack.c.h.b16 %v4624
    %v6150 = vunpack.c.l.b16 %v4625
    %v6151 = vunpack.c.h.b16 %v4625
    %v6152 = vunpack.c.l.b16 %v4626
    %v6153 = vunpack.c.h.b16 %v4626
    %v6154 = vunpack.c.l.b16 %v4627
    %v6155 = vunpack.c.h.b16 %v4627
    %v6156 = vunpack.c.l.b16 %v4628
    %v6157 = vunpack.c.h.b16 %v4628
    %v6158 = vunpack.c.l.b16 %v4629
    %v6159 = vunpack.c.h.b16 %v4629
    %v6160 = vunpack.c.l.b16 %v4630
    %v6161 = vunpack.c.h.b16 %v4630
    %v6162 = vunpack.c.l.b16 %v4631
    %v6163 = vunpack.c.h.b16 %v4631
    %v6164 = vunpack.c.l.b16 %v4632
    %v6165 = vunpack.c.h.b16 %v4632
    %v6166 = vunpack.c.l.b16 %v4633
    %v6167 = vunpack.c.h.b16 %v4633
    %v6168 = vunpack.c.l.b16 %v4634
    %v6169 = vunpack.c.h.b16 %v4634
    %v6170 = vunpack.c.l.b16 %v4635
    %v6171 = vunpack.c.h.b16 %v4635
    %v6172 = vunpack.c.l.b16 %v4636
    %v6173 = vunpack.c.h.b16 %v4636
    %v6174 = vunpack.c.l.b16 %v4637
    %v6175 = vunpack.c.h.b16 %v4637
    %v6176 = vunpack.c.l.b16 %v4638
    %v6177 = vunpack.c.h.b16 %v4638
    %v6178 = vunpack.c.l.b16 %v4639
    %v6179 = vunpack.c.h.b16 %v4639
    %v6180 = vunpack.c.l.b16 %v4640
    %v6181 = vunpack.c.h.b16 %v4640
    %v6182 = vunpack.c.l.b16 %v4641
    %v6183 = vunpack.c.h.b16 %v4641
    %v6184 = vunpack.c.l.b16 %v4642
    %v6185 = vunpack.c.h.b16 %v4642
    %v6186 = vunpack.c.l.b16 %v4643
    %v6187 = vunpack.c.h.b16 %v4643
    %v6188 = vunpack.c.l.b16 %v4644
    %v6189 = vunpack.c.h.b16 %v4644
    %v6190 = vunpack.c.l.b16 %v4645
    %v6191 = vunpack.c.h.b16 %v4645
    %v6192 = vunpack.c.l.b16 %v4646
    %v6193 = vunpack.c.h.b16 %v4646
    %v6194 = vunpack.c.l.b16 %v4647
    %v6195 = vunpack.c.h.b16 %v4647
    %v6196 = vunpack.c.l.b16 %v4648
    %v6197 = vunpack.c.h.b16 %v4648
    %v6198 = vunpack.c.l.b16 %v4649
    %v6199 = vunpack.c.h.b16 %v4649
    %v6200 = vunpack.c.l.b16 %v4650
    %v6201 = vunpack.c.h.b16 %v4650
    %v6202 = vunpack.c.l.b16 %v4651
    %v6203 = vunpack.c.h.b16 %v4651
    %v6204 = vunpack.c.l.b16 %v4652
    %v6205 = vunpack.c.h.b16 %v4652
    %v6206 = vunpack.c.l.b16 %v4653
    %v6207 = vunpack.c.h.b16 %v4653
    %v6208 = vunpack.c.l.b16 %v4654
    %v6209 = vunpack.c.h.b16 %v4654
    %v6210 = vunpack.c.l.b16 %v4655
    %v6211 = vunpack.c.h.b16 %v4655
    %v6212 = vunpack.c.l.b16 %v4656
    %v6213 = vunpack.c.h.b16 %v4656
    %v6214 = vunpack.c.l.b16 %v4657
    %v6215 = vunpack.c.h.b16 %v4657
    %v6216 = vunpack.c.l.b16 %v4658
    %v6217 = vunpack.c.h.b16 %v4658
    %v6218 = vunpack.c.l.b16 %v4659
    %v6219 = vunpack.c.h.b16 %v4659
    %v6220 = vunpack.c.l.b16 %v4660
    %v6221 = vunpack.c.h.b16 %v4660
    %v6222 = vunpack.c.l.b16 %v4661
    %v6223 = vunpack.c.h.b16 %v4661
    %v6224 = vunpack.c.l.b16 %v4662
    %v6225 = vunpack.c.h.b16 %v4662
    %v6226 = vunpack.c.l.b16 %v4663
    %v6227 = vunpack.c.h.b16 %v4663
    %v6228 = vunpack.c.l.b16 %v4664
    %v6229 = vunpack.c.h.b16 %v4664
    %v6230 = vunpack.c.l.b16 %v4665
    %v6231 = vunpack.c.h.b16 %v4665
    %v6232 = vunpack.c.l.b16 %v4666
    %v6233 = vunpack.c.h.b16 %v4666
    %v6234 = vunpack.c.l.b16 %v4667
    %v6235 = vunpack.c.h.b16 %v4667
    %v6236 = vunpack.c.l.b16 %v4668
    %v6237 = vunpack.c.h.b16 %v4668
    %v6238 = vunpack.c.l.b16 %v4669
    %v6239 = vunpack.c.h.b16 %v4669
    %v6240 = vunpack.c.l.b16 %v4670
    %v6241 = vunpack.c.h.b16 %v4670
    %v6242 = vunpack.c.l.b16 %v4671
    %v6243 = vunpack.c.h.b16 %v4671
    %v6244 = vunpack.c.l.b16 %v4672
    %v6245 = vunpack.c.h.b16 %v4672
    %v6246 = vunpack.c.l.b16 %v4673
    %v6247 = vunpack.c.h.b16 %v4673
    %v6248 = vunpack.c.l.b16 %v4674
    %v6249 = vunpack.c.h.b16 %v4674
    %v6250 = vunpack.c.l.b16 %v4675
    %v6251 = vunpack.c.h.b16 %v4675
    %v6252 = vunpack.c.l.b16 %v4676
    %v6253 = vunpack.c.h.b16 %v4676
    %v6254 = vunpack.c.l.b16 %v4677
    %v6255 = vunpack.c.h.b16 %v4677
    %v6256 = vpack.c.b16 %v5240, %v5232
    %v6257 = vpack.c.b16 %v5241, %v5233
    %v6258 = vpack.c.b16 %v5242, %v5234
    %v6259 = vpack.c.b16 %v5243, %v5235
    %v6260 = vpack.c.b16 %v5244, %v5236
    %v6261 = vpack.c.b16 %v5245, %v5237
    %v6262 = vpack.c.b16 %v5246, %v5238
    %v6263 = vpack.c.b16 %v5247, %v5239
    %v6264 = vpack.c.b16 %v5256, %v5248
    %v6265 = vpack.c.b16 %v5257, %v5249
    %v6266 = vpack.c.b16 %v5258, %v5250
    %v6267 = vpack.c.b16 %v5259, %v5251
    %v6268 = vpack.c.b16 %v5260, %v5252
    %v6269 = vpack.c.b16 %v5261, %v5253
    %v6270 = vpack.c.b16 %v5262, %v5254
    %v6271 = vpack.c.b16 %v5263, %v5255
    %v6272 = vpack.c.b16 %v5272, %v5264
    %v6273 = vpack.c.b16 %v5273, %v5265
    %v6274 = vpack.c.b16 %v5274, %v5266
    %v6275 = vpack.c.b16 %v5275, %v5267
    %v6276 = vpack.c.b16 %v5276, %v5268
    %v6277 = vpack.c.b16 %v5277, %v5269
    %v6278 = vpack.c.b16 %v5278, %v5270
    %v6279 = vpack.c.b16 %v5279, %v5271
    %v6280 = vpack.c.b16 %v5288, %v5280
    %v6281 = vpack.c.b16 %v5289, %v5281
    %v6282 = vpack.c.b16 %v5290, %v5282
    %v6283 = vpack.c.b16 %v5291, %v5283
    %v6284 = vpack.c.b16 %v5292, %v5284
    %v6285 = vpack.c.b16 %v5293, %v5285
    %v6286 = vpack.c.b16 %v5294, %v5286
    %v6287 = vpack.c.b16 %v5295, %v5287
    %v6288 = vpack.c.b16 %v5304, %v5296
    %v6289 = vpack.c.b16 %v5305, %v5297
    %v6290 = vpack.c.b16 %v5306, %v5298
    %v6291 = vpack.c.b16 %v5307, %v5299
    %v6292 = vpack.c.b16 %v5308, %v5300
    %v6293 = vpack.c.b16 %v5309, %v5301
    %v6294 = vpack.c.b16 %v5310, %v5302
    %v6295 = vpack.c.b16 %v5311, %v5303
    %v6296 = vpack.c.b16 %v5320, %v5312
    %v6297 = vpack.c.b16 %v5321, %v5313
    %v6298 = vpack.c.b16 %v5322, %v5314
    %v6299 = vpack.c.b16 %v5323, %v5315
    %v6300 = vpack.c.b16 %v5324, %v5316
    %v6301 = vpack.c.b16 %v5325, %v5317
    %v6302 = vpack.c.b16 %v5326, %v5318
    %v6303 = vpack.c.b16 %v5327, %v5319
    %v6304 = vpack.c.b16 %v5336, %v5328
    %v6305 = vpack.c.b16 %v5337, %v5329
    %v6306 = vpack.c.b16 %v5338, %v5330
    %v6307 = vpack.c.b16 %v5339, %v5331
    %v6308 = vpack.c.b16 %v5340, %v5332
    %v6309 = vpack.c.b16 %v5341, %v5333
    %v6310 = vpack.c.b16 %v5342, %v5334
    %v6311 = vpack.c.b16 %v5343, %v5335
    %v6312 = vpack.c.b16 %v5352, %v5344
    %v6313 = vpack.c.b16 %v5353, %v5345
    %v6314 = vpack.c.b16 %v5354, %v5346
    %v6315 = vpack.c.b16 %v5355, %v5347
    %v6316 = vpack.c.b16 %v5356, %v5348
    %v6317 = vpack.c.b16 %v5357, %v5349
    %v6318 = vpack.c.b16 %v5358, %v5350
    %v6319 = vpack.c.b16 %v5359, %v5351
    %v6320 = vpack.c.b16 %v5368, %v5360
    %v6321 = vpack.c.b16 %v5369, %v5361
    %v6322 = vpack.c.b16 %v5370, %v5362
    %v6323 = vpack.c.b16 %v5371, %v5363
    %v6324 = vpack.c.b16 %v5372, %v5364
    %v6325 = vpack.c.b16 %v5373, %v5365
    %v6326 = vpack.c.b16 %v5374, %v5366
    %v6327 = vpack.c.b16 %v5375, %v5367
    %v6328 = vpack.c.b16 %v5384, %v5376
    %v6329 = vpack.c.b16 %v5385, %v5377
    %v6330 = vpack.c.b16 %v5386, %v5378
    %v6331 = vpack.c.b16 %v5387, %v5379
    %v6332 = vpack.c.b16 %v5388, %v5380
    %v6333 = vpack.c.b16 %v5389, %v5381
    %v6334 = vpack.c.b16 %v5390, %v5382
    %v6335 = vpack.c.b16 %v5391, %v5383
    %v6336 = vpack.c.b16 %v5400, %v5392
    %v6337 = vpack.c.b16 %v5401, %v5393
    %v6338 = vpack.c.b16 %v5402, %v5394
    %v6339 = vpack.c.b16 %v5403, %v5395
    %v6340 = vpack.c.b16 %v5404, %v5396
    %v6341 = vpack.c.b16 %v5405, %v5397
    %v6342 = vpack.c.b16 %v5406, %v5398
    %v6343 = vpack.c.b16 %v5407, %v5399
    %v6344 = vpack.c.b16 %v5416, %v5408
    %v6345 = vpack.c.b16 %v5417, %v5409
    %v6346 = vpack.c.b16 %v5418, %v5410
    %v6347 = vpack.c.b16 %v5419, %v5411
    %v6348 = vpack.c.b16 %v5420, %v5412
    %v6349 = vpack.c.b16 %v5421, %v5413
    %v6350 = vpack.c.b16 %v5422, %v5414
    %v6351 = vpack.c.b16 %v5423, %v5415
    %v6352 = vpack.c.b16 %v5432, %v5424
    %v6353 = vpack.c.b16 %v5433, %v5425
    %v6354 = vpack.c.b16 %v5434, %v5426
    %v6355 = vpack.c.b16 %v5435, %v5427
    %v6356 = vpack.c.b16 %v5436, %v5428
    %v6357 = vpack.c.b16 %v5437, %v5429
    %v6358 = vpack.c.b16 %v5438, %v5430
    %v6359 = vpack.c.b16 %v5439, %v5431
    %v6360 = vpack.c.b16 %v5448, %v5440
    %v6361 = vpack.c.b16 %v5449, %v5441
    %v6362 = vpack.c.b16 %v5450, %v5442
    %v6363 = vpack.c.b16 %v5451, %v5443
    %v6364 = vpack.c.b16 %v5452, %v5444
    %v6365 = vpack.c.b16 %v5453, %v5445
    %v6366 = vpack.c.b16 %v5454, %v5446
    %v6367 = vpack.c.b16 %v5455, %v5447
    %v6368 = vpack.c.b16 %v5464, %v5456
    %v6369 = vpack.c.b16 %v5465, %v5457
    %v6370 = vpack.c.b16 %v5466, %v5458
    %v6371 = vpack.c.b16 %v5467, %v5459
    %v6372 = vpack.c.b16 %v5468, %v5460
    %v6373 = vpack.c.b16 %v5469, %v5461
    %v6374 = vpack.c.b16 %v5470, %v5462
    %v6375 = vpack.c.b16 %v5471, %v5463
    %v6376 = vpack.c.b16 %v5480, %v5472
    %v6377 = vpack.c.b16 %v5481, %v5473
    %v6378 = vpack.c.b16 %v5482, %v5474
    %v6379 = vpack.c.b16 %v5483, %v5475
    %v6380 = vpack.c.b16 %v5484, %v5476
    %v6381 = vpack.c.b16 %v5485, %v5477
    %v6382 = vpack.c.b16 %v5486, %v5478
    %v6383 = vpack.c.b16 %v5487, %v5479
    %v6384 = vpack.c.b16 %v5496, %v5488
    %v6385 = vpack.c.b16 %v5497, %v5489
    %v6386 = vpack.c.b16 %v5498, %v5490
    %v6387 = vpack.c.b16 %v5499, %v5491
    %v6388 = vpack.c.b16 %v5500, %v5492
    %v6389 = vpack.c.b16 %v5501, %v5493
    %v6390 = vpack.c.b16 %v5502, %v5494
    %v6391 = vpack.c.b16 %v5503, %v5495
    %v6392 = vpack.c.b16 %v5512, %v5504
    %v6393 = vpack.c.b16 %v5513, %v5505
    %v6394 = vpack.c.b16 %v5514, %v5506
    %v6395 = vpack.c.b16 %v5515, %v5507
    %v6396 = vpack.c.b16 %v5516, %v5508
    %v6397 = vpack.c.b16 %v5517, %v5509
    %v6398 = vpack.c.b16 %v5518, %v5510
    %v6399 = vpack.c.b16 %v5519, %v5511
    %v6400 = vpack.c.b16 %v5528, %v5520
    %v6401 = vpack.c.b16 %v5529, %v5521
    %v6402 = vpack.c.b16 %v5530, %v5522
    %v6403 = vpack.c.b16 %v5531, %v5523
    %v6404 = vpack.c.b16 %v5532, %v5524
    %v6405 = vpack.c.b16 %v5533, %v5525
    %v6406 = vpack.c.b16 %v5534, %v5526
    %v6407 = vpack.c.b16 %v5535, %v5527
    %v6408 = vpack.c.b16 %v5544, %v5536
    %v6409 = vpack.c.b16 %v5545, %v5537
    %v6410 = vpack.c.b16 %v5546, %v5538
    %v6411 = vpack.c.b16 %v5547, %v5539
    %v6412 = vpack.c.b16 %v5548, %v5540
    %v6413 = vpack.c.b16 %v5549, %v5541
    %v6414 = vpack.c.b16 %v5550, %v5542
    %v6415 = vpack.c.b16 %v5551, %v5543
    %v6416 = vpack.c.b16 %v5560, %v5552
    %v6417 = vpack.c.b16 %v5561, %v5553
    %v6418 = vpack.c.b16 %v5562, %v5554
    %v6419 = vpack.c.b16 %v5563, %v5555
    %v6420 = vpack.c.b16 %v5564, %v5556
    %v6421 = vpack.c.b16 %v5565, %v5557
    %v6422 = vpack.c.b16 %v5566, %v5558
    %v6423 = vpack.c.b16 %v5567, %v5559
    %v6424 = vpack.c.b16 %v5576, %v5568
    %v6425 = vpack.c.b16 %v5577, %v5569
    %v6426 = vpack.c.b16 %v5578, %v5570
    %v6427 = vpack.c.b16 %v5579, %v5571
    %v6428 = vpack.c.b16 %v5580, %v5572
    %v6429 = vpack.c.b16 %v5581, %v5573
    %v6430 = vpack.c.b16 %v5582, %v5574
    %v6431 = vpack.c.b16 %v5583, %v5575
    %v6432 = vpack.c.b16 %v5592, %v5584
    %v6433 = vpack.c.b16 %v5593, %v5585
    %v6434 = vpack.c.b16 %v5594, %v5586
    %v6435 = vpack.c.b16 %v5595, %v5587
    %v6436 = vpack.c.b16 %v5596, %v5588
    %v6437 = vpack.c.b16 %v5597, %v5589
    %v6438 = vpack.c.b16 %v5598, %v5590
    %v6439 = vpack.c.b16 %v5599, %v5591
    %v6440 = vpack.c.b16 %v5608, %v5600
    %v6441 = vpack.c.b16 %v5609, %v5601
    %v6442 = vpack.c.b16 %v5610, %v5602
    %v6443 = vpack.c.b16 %v5611, %v5603
    %v6444 = vpack.c.b16 %v5612, %v5604
    %v6445 = vpack.c.b16 %v5613, %v5605
    %v6446 = vpack.c.b16 %v5614, %v5606
    %v6447 = vpack.c.b16 %v5615, %v5607
    %v6448 = vpack.c.b16 %v5624, %v5616
    %v6449 = vpack.c.b16 %v5625, %v5617
    %v6450 = vpack.c.b16 %v5626, %v5618
    %v6451 = vpack.c.b16 %v5627, %v5619
    %v6452 = vpack.c.b16 %v5628, %v5620
    %v6453 = vpack.c.b16 %v5629, %v5621
    %v6454 = vpack.c.b16 %v5630, %v5622
    %v6455 = vpack.c.b16 %v5631, %v5623
    %v6456 = vpack.c.b16 %v5640, %v5632
    %v6457 = vpack.c.b16 %v5641, %v5633
    %v6458 = vpack.c.b16 %v5642, %v5634
    %v6459 = vpack.c.b16 %v5643, %v5635
    %v6460 = vpack.c.b16 %v5644, %v5636
    %v6461 = vpack.c.b16 %v5645, %v5637
    %v6462 = vpack.c.b16 %v5646, %v5638
    %v6463 = vpack.c.b16 %v5647, %v5639
    %v6464 = vpack.c.b16 %v5656, %v5648
    %v6465 = vpack.c.b16 %v5657, %v5649
    %v6466 = vpack.c.b16 %v5658, %v5650
    %v6467 = vpack.c.b16 %v5659, %v5651
    %v6468 = vpack.c.b16 %v5660, %v5652
    %v6469 = vpack.c.b16 %v5661, %v5653
    %v6470 = vpack.c.b16 %v5662, %v5654
    %v6471 = vpack.c.b16 %v5663, %v5655
    %v6472 = vpack.c.b16 %v5672, %v5664
    %v6473 = vpack.c.b16 %v5673, %v5665
    %v6474 = vpack.c.b16 %v5674, %v5666
    %v6475 = vpack.c.b16 %v5675, %v5667
    %v6476 = vpack.c.b16 %v5676, %v5668
    %v6477 = vpack.c.b16 %v5677, %v5669
    %v6478 = vpack.c.b16 %v5678, %v5670
    %v6479 = vpack.c.b16 %v5679, %v5671
    %v6480 = vpack.c.b16 %v5688, %v5680
    %v6481 = vpack.c.b16 %v5689, %v5681
    %v6482 = vpack.c.b16 %v5690, %v5682
    %v6483 = vpack.c.b16 %v5691, %v5683
    %v6484 = vpack.c.b16 %v5692, %v5684
    %v6485 = vpack.c.b16 %v5693, %v5685
    %v6486 = vpack.c.b16 %v5694, %v5686
    %v6487 = vpack.c.b16 %v5695, %v5687
    %v6488 = vpack.c.b16 %v5704, %v5696
    %v6489 = vpack.c.b16 %v5705, %v5697
    %v6490 = vpack.c.b16 %v5706, %v5698
    %v6491 = vpack.c.b16 %v5707, %v5699
    %v6492 = vpack.c.b16 %v5708, %v5700
    %v6493 = vpack.c.b16 %v5709, %v5701
    %v6494 = vpack.c.b16 %v5710, %v5702
    %v6495 = vpack.c.b16 %v5711, %v5703
    %v6496 = vpack.c.b16 %v5720, %v5712
    %v6497 = vpack.c.b16 %v5721, %v5713
    %v6498 = vpack.c.b16 %v5722, %v5714
    %v6499 = vpack.c.b16 %v5723, %v5715
    %v6500 = vpack.c.b16 %v5724, %v5716
    %v6501 = vpack.c.b16 %v5725, %v5717
    %v6502 = vpack.c.b16 %v5726, %v5718
    %v6503 = vpack.c.b16 %v5727, %v5719
    %v6504 = vpack.c.b16 %v5736, %v5728
    %v6505 = vpack.c.b16 %v5737, %v5729
    %v6506 = vpack.c.b16 %v5738, %v5730
    %v6507 = vpack.c.b16 %v5739, %v5731
    %v6508 = vpack.c.b16 %v5740, %v5732
    %v6509 = vpack.c.b16 %v5741, %v5733
    %v6510 = vpack.c.b16 %v5742, %v5734
    %v6511 = vpack.c.b16 %v5743, %v5735
    %v6512 = vpack.c.b16 %v5752, %v5744
    %v6513 = vpack.c.b16 %v5753, %v5745
    %v6514 = vpack.c.b16 %v5754, %v5746
    %v6515 = vpack.c.b16 %v5755, %v5747
    %v6516 = vpack.c.b16 %v5756, %v5748
    %v6517 = vpack.c.b16 %v5757, %v5749
    %v6518 = vpack.c.b16 %v5758, %v5750
    %v6519 = vpack.c.b16 %v5759, %v5751
    %v6520 = vpack.c.b16 %v5768, %v5760
    %v6521 = vpack.c.b16 %v5769, %v5761
    %v6522 = vpack.c.b16 %v5770, %v5762
    %v6523 = vpack.c.b16 %v5771, %v5763
    %v6524 = vpack.c.b16 %v5772, %v5764
    %v6525 = vpack.c.b16 %v5773, %v5765
    %v6526 = vpack.c.b16 %v5774, %v5766
    %v6527 = vpack.c.b16 %v5775, %v5767
    %v6528 = vpack.c.b16 %v5784, %v5776
    %v6529 = vpack.c.b16 %v5785, %v5777
    %v6530 = vpack.c.b16 %v5786, %v5778
    %v6531 = vpack.c.b16 %v5787, %v5779
    %v6532 = vpack.c.b16 %v5788, %v5780
    %v6533 = vpack.c.b16 %v5789, %v5781
    %v6534 = vpack.c.b16 %v5790, %v5782
    %v6535 = vpack.c.b16 %v5791, %v5783
    %v6536 = vpack.c.b16 %v5800, %v5792
    %v6537 = vpack.c.b16 %v5801, %v5793
    %v6538 = vpack.c.b16 %v5802, %v5794
    %v6539 = vpack.c.b16 %v5803, %v5795
    %v6540 = vpack.c.b16 %v5804, %v5796
    %v6541 = vpack.c.b16 %v5805, %v5797
    %v6542 = vpack.c.b16 %v5806, %v5798
    %v6543 = vpack.c.b16 %v5807, %v5799
    %v6544 = vpack.c.b16 %v5816, %v5808
    %v6545 = vpack.c.b16 %v5817, %v5809
    %v6546 = vpack.c.b16 %v5818, %v5810
    %v6547 = vpack.c.b16 %v5819, %v5811
    %v6548 = vpack.c.b16 %v5820, %v5812
    %v6549 = vpack.c.b16 %v5821, %v5813
    %v6550 = vpack.c.b16 %v5822, %v5814
    %v6551 = vpack.c.b16 %v5823, %v5815
    %v6552 = vpack.c.b16 %v5832, %v5824
    %v6553 = vpack.c.b16 %v5833, %v5825
    %v6554 = vpack.c.b16 %v5834, %v5826
    %v6555 = vpack.c.b16 %v5835, %v5827
    %v6556 = vpack.c.b16 %v5836, %v5828
    %v6557 = vpack.c.b16 %v5837, %v5829
    %v6558 = vpack.c.b16 %v5838, %v5830
    %v6559 = vpack.c.b16 %v5839, %v5831
    %v6560 = vpack.c.b16 %v5848, %v5840
    %v6561 = vpack.c.b16 %v5849, %v5841
    %v6562 = vpack.c.b16 %v5850, %v5842
    %v6563 = vpack.c.b16 %v5851, %v5843
    %v6564 = vpack.c.b16 %v5852, %v5844
    %v6565 = vpack.c.b16 %v5853, %v5845
    %v6566 = vpack.c.b16 %v5854, %v5846
    %v6567 = vpack.c.b16 %v5855, %v5847
    %v6568 = vpack.c.b16 %v5864, %v5856
    %v6569 = vpack.c.b16 %v5865, %v5857
    %v6570 = vpack.c.b16 %v5866, %v5858
    %v6571 = vpack.c.b16 %v5867, %v5859
    %v6572 = vpack.c.b16 %v5868, %v5860
    %v6573 = vpack.c.b16 %v5869, %v5861
    %v6574 = vpack.c.b16 %v5870, %v5862
    %v6575 = vpack.c.b16 %v5871, %v5863
    %v6576 = vpack.c.b16 %v5880, %v5872
    %v6577 = vpack.c.b16 %v5881, %v5873
    %v6578 = vpack.c.b16 %v5882, %v5874
    %v6579 = vpack.c.b16 %v5883, %v5875
    %v6580 = vpack.c.b16 %v5884, %v5876
    %v6581 = vpack.c.b16 %v5885, %v5877
    %v6582 = vpack.c.b16 %v5886, %v5878
    %v6583 = vpack.c.b16 %v5887, %v5879
    %v6584 = vpack.c.b16 %v5896, %v5888
    %v6585 = vpack.c.b16 %v5897, %v5889
    %v6586 = vpack.c.b16 %v5898, %v5890
    %v6587 = vpack.c.b16 %v5899, %v5891
    %v6588 = vpack.c.b16 %v5900, %v5892
    %v6589 = vpack.c.b16 %v5901, %v5893
    %v6590 = vpack.c.b16 %v5902, %v5894
    %v6591 = vpack.c.b16 %v5903, %v5895
    %v6592 = vpack.c.b16 %v5912, %v5904
    %v6593 = vpack.c.b16 %v5913, %v5905
    %v6594 = vpack.c.b16 %v5914, %v5906
    %v6595 = vpack.c.b16 %v5915, %v5907
    %v6596 = vpack.c.b16 %v5916, %v5908
    %v6597 = vpack.c.b16 %v5917, %v5909
    %v6598 = vpack.c.b16 %v5918, %v5910
    %v6599 = vpack.c.b16 %v5919, %v5911
    %v6600 = vpack.c.b16 %v5928, %v5920
    %v6601 = vpack.c.b16 %v5929, %v5921
    %v6602 = vpack.c.b16 %v5930, %v5922
    %v6603 = vpack.c.b16 %v5931, %v5923
    %v6604 = vpack.c.b16 %v5932, %v5924
    %v6605 = vpack.c.b16 %v5933, %v5925
    %v6606 = vpack.c.b16 %v5934, %v5926
    %v6607 = vpack.c.b16 %v5935, %v5927
    %v6608 = vpack.c.b16 %v5944, %v5936
    %v6609 = vpack.c.b16 %v5945, %v5937
    %v6610 = vpack.c.b16 %v5946, %v5938
    %v6611 = vpack.c.b16 %v5947, %v5939
    %v6612 = vpack.c.b16 %v5948, %v5940
    %v6613 = vpack.c.b16 %v5949, %v5941
    %v6614 = vpack.c.b16 %v5950, %v5942
    %v6615 = vpack.c.b16 %v5951, %v5943
    %v6616 = vpack.c.b16 %v5960, %v5952
    %v6617 = vpack.c.b16 %v5961, %v5953
    %v6618 = vpack.c.b16 %v5962, %v5954
    %v6619 = vpack.c.b16 %v5963, %v5955
    %v6620 = vpack.c.b16 %v5964, %v5956
    %v6621 = vpack.c.b16 %v5965, %v5957
    %v6622 = vpack.c.b16 %v5966, %v5958
    %v6623 = vpack.c.b16 %v5967, %v5959
    %v6624 = vpack.c.b16 %v5976, %v5968
    %v6625 = vpack.c.b16 %v5977, %v5969
    %v6626 = vpack.c.b16 %v5978, %v5970
    %v6627 = vpack.c.b16 %v5979, %v5971
    %v6628 = vpack.c.b16 %v5980, %v5972
    %v6629 = vpack.c.b16 %v5981, %v5973
    %v6630 = vpack.c.b16 %v5982, %v5974
    %v6631 = vpack.c.b16 %v5983, %v5975
    %v6632 = vpack.c.b16 %v5992, %v5984
    %v6633 = vpack.c.b16 %v5993, %v5985
    %v6634 = vpack.c.b16 %v5994, %v5986
    %v6635 = vpack.c.b16 %v5995, %v5987
    %v6636 = vpack.c.b16 %v5996, %v5988
    %v6637 = vpack.c.b16 %v5997, %v5989
    %v6638 = vpack.c.b16 %v5998, %v5990
    %v6639 = vpack.c.b16 %v5999, %v5991
    %v6640 = vpack.c.b16 %v6008, %v6000
    %v6641 = vpack.c.b16 %v6009, %v6001
    %v6642 = vpack.c.b16 %v6010, %v6002
    %v6643 = vpack.c.b16 %v6011, %v6003
    %v6644 = vpack.c.b16 %v6012, %v6004
    %v6645 = vpack.c.b16 %v6013, %v6005
    %v6646 = vpack.c.b16 %v6014, %v6006
    %v6647 = vpack.c.b16 %v6015, %v6007
    %v6648 = vpack.c.b16 %v6024, %v6016
    %v6649 = vpack.c.b16 %v6025, %v6017
    %v6650 = vpack.c.b16 %v6026, %v6018
    %v6651 = vpack.c.b16 %v6027, %v6019
    %v6652 = vpack.c.b16 %v6028, %v6020
    %v6653 = vpack.c.b16 %v6029, %v6021
    %v6654 = vpack.c.b16 %v6030, %v6022
    %v6655 = vpack.c.b16 %v6031, %v6023
    %v6656 = vpack.c.b16 %v6040, %v6032
    %v6657 = vpack.c.b16 %v6041, %v6033
    %v6658 = vpack.c.b16 %v6042, %v6034
    %v6659 = vpack.c.b16 %v6043, %v6035
    %v6660 = vpack.c.b16 %v6044, %v6036
    %v6661 = vpack.c.b16 %v6045, %v6037
    %v6662 = vpack.c.b16 %v6046, %v6038
    %v6663 = vpack.c.b16 %v6047, %v6039
    %v6664 = vpack.c.b16 %v6056, %v6048
    %v6665 = vpack.c.b16 %v6057, %v6049
    %v6666 = vpack.c.b16 %v6058, %v6050
    %v6667 = vpack.c.b16 %v6059, %v6051
    %v6668 = vpack.c.b16 %v6060, %v6052
    %v6669 = vpack.c.b16 %v6061, %v6053
    %v6670 = vpack.c.b16 %v6062, %v6054
    %v6671 = vpack.c.b16 %v6063, %v6055
    %v6672 = vpack.c.b16 %v6072, %v6064
    %v6673 = vpack.c.b16 %v6073, %v6065
    %v6674 = vpack.c.b16 %v6074, %v6066
    %v6675 = vpack.c.b16 %v6075, %v6067
    %v6676 = vpack.c.b16 %v6076, %v6068
    %v6677 = vpack.c.b16 %v6077, %v6069
    %v6678 = vpack.c.b16 %v6078, %v6070
    %v6679 = vpack.c.b16 %v6079, %v6071
    %v6680 = vpack.c.b16 %v6088, %v6080
    %v6681 = vpack.c.b16 %v6089, %v6081
    %v6682 = vpack.c.b16 %v6090, %v6082
    %v6683 = vpack.c.b16 %v6091, %v6083
    %v6684 = vpack.c.b16 %v6092, %v6084
    %v6685 = vpack.c.b16 %v6093, %v6085
    %v6686 = vpack.c.b16 %v6094, %v6086
    %v6687 = vpack.c.b16 %v6095, %v6087
    %v6688 = vpack.c.b16 %v6104, %v6096
    %v6689 = vpack.c.b16 %v6105, %v6097
    %v6690 = vpack.c.b16 %v6106, %v6098
    %v6691 = vpack.c.b16 %v6107, %v6099
    %v6692 = vpack.c.b16 %v6108, %v6100
    %v6693 = vpack.c.b16 %v6109, %v6101
    %v6694 = vpack.c.b16 %v6110, %v6102
    %v6695 = vpack.c.b16 %v6111, %v6103
    %v6696 = vpack.c.b16 %v6120, %v6112
    %v6697 = vpack.c.b16 %v6121, %v6113
    %v6698 = vpack.c.b16 %v6122, %v6114
    %v6699 = vpack.c.b16 %v6123, %v6115
    %v6700 = vpack.c.b16 %v6124, %v6116
    %v6701 = vpack.c.b16 %v6125, %v6117
    %v6702 = vpack.c.b16 %v6126, %v6118
    %v6703 = vpack.c.b16 %v6127, %v6119
    %v6704 = vpack.c.b16 %v6136, %v6128
    %v6705 = vpack.c.b16 %v6137, %v6129
    %v6706 = vpack.c.b16 %v6138, %v6130
    %v6707 = vpack.c.b16 %v6139, %v6131
    %v6708 = vpack.c.b16 %v6140, %v6132
    %v6709 = vpack.c.b16 %v6141, %v6133
    %v6710 = vpack.c.b16 %v6142, %v6134
    %v6711 = vpack.c.b16 %v6143, %v6135
    %v6712 = vpack.c.b16 %v6152, %v6144
    %v6713 = vpack.c.b16 %v6153, %v6145
    %v6714 = vpack.c.b16 %v6154, %v6146
    %v6715 = vpack.c.b16 %v6155, %v6147
    %v6716 = vpack.c.b16 %v6156, %v6148
    %v6717 = vpack.c.b16 %v6157, %v6149
    %v6718 = vpack.c.b16 %v6158, %v6150
    %v6719 = vpack.c.b16 %v6159, %v6151
    %v6720 = vpack.c.b16 %v6168, %v6160
    %v6721 = vpack.c.b16 %v6169, %v6161
    %v6722 = vpack.c.b16 %v6170, %v6162
    %v6723 = vpack.c.b16 %v6171, %v6163
    %v6724 = vpack.c.b16 %v6172, %v6164
    %v6725 = vpack.c.b16 %v6173, %v6165
    %v6726 = vpack.c.b16 %v6174, %v6166
    %v6727 = vpack.c.b16 %v6175, %v6167
    %v6728 = vpack.c.b16 %v6184, %v6176
    %v6729 = vpack.c.b16 %v6185, %v6177
    %v6730 = vpack.c.b16 %v6186, %v6178
    %v6731 = vpack.c.b16 %v6187, %v6179
    %v6732 = vpack.c.b16 %v6188, %v6180
    %v6733 = vpack.c.b16 %v6189, %v6181
    %v6734 = vpack.c.b16 %v6190, %v6182
    %v6735 = vpack.c.b16 %v6191, %v6183
    %v6736 = vpack.c.b16 %v6200, %v6192
    %v6737 = vpack.c.b16 %v6201, %v6193
    %v6738 = vpack.c.b16 %v6202, %v6194
    %v6739 = vpack.c.b16 %v6203, %v6195
    %v6740 = vpack.c.b16 %v6204, %v6196
    %v6741 = vpack.c.b16 %v6205, %v6197
    %v6742 = vpack.c.b16 %v6206, %v6198
    %v6743 = vpack.c.b16 %v6207, %v6199
    %v6744 = vpack.c.b16 %v6216, %v6208
    %v6745 = vpack.c.b16 %v6217, %v6209
    %v6746 = vpack.c.b16 %v6218, %v6210
    %v6747 = vpack.c.b16 %v6219, %v6211
    %v6748 = vpack.c.b16 %v6220, %v6212
    %v6749 = vpack.c.b16 %v6221, %v6213
    %v6750 = vpack.c.b16 %v6222, %v6214
    %v6751 = vpack.c.b16 %v6223, %v6215
    %v6752 = vpack.c.b16 %v6232, %v6224
    %v6753 = vpack.c.b16 %v6233, %v6225
    %v6754 = vpack.c.b16 %v6234, %v6226
    %v6755 = vpack.c.b16 %v6235, %v6227
    %v6756 = vpack.c.b16 %v6236, %v6228
    %v6757 = vpack.c.b16 %v6237, %v6229
    %v6758 = vpack.c.b16 %v6238, %v6230
    %v6759 = vpack.c.b16 %v6239, %v6231
    %v6760 = vpack.c.b16 %v6248, %v6240
    %v6761 = vpack.c.b16 %v6249, %v6241
    %v6762 = vpack.c.b16 %v6250, %v6242
    %v6763 = vpack.c.b16 %v6251, %v6243
    %v6764 = vpack.c.b16 %v6252, %v6244
    %v6765 = vpack.c.b16 %v6253, %v6245
    %v6766 = vpack.c.b16 %v6254, %v6246
    %v6767 = vpack.c.b16 %v6255, %v6247
    %7280 = vmatprep.subr.bf16.mxu0 %v6257
    %7281 = vmatpush1.bf16.msra.mxu0 %v6256
    %7282 = vmatprep.subr.bf16.mxu0 %v6265
    %7283 = vmatpush1.bf16.msra.mxu0 %v6264
    %7284 = vmatprep.subr.bf16.mxu0 %v6273
    %7285 = vmatpush1.bf16.msra.mxu0 %v6272
    %7286 = vmatprep.subr.bf16.mxu0 %v6281
    %7287 = vmatpush1.bf16.msra.mxu0 %v6280
    %7288 = vmatprep.subr.bf16.mxu0 %v6289
    %7289 = vmatpush1.bf16.msra.mxu0 %v6288
    %7290 = vmatprep.subr.bf16.mxu0 %v6297
    %7291 = vmatpush1.bf16.msra.mxu0 %v6296
    %7292 = vmatprep.subr.bf16.mxu0 %v6305
    %7293 = vmatpush1.bf16.msra.mxu0 %v6304
    %7294 = vmatprep.subr.bf16.mxu0 %v6313
    %7295 = vmatpush1.bf16.msra.mxu0 %v6312
    %7296 = vmatprep.subr.bf16.mxu0 %v6321
    %7297 = vmatpush1.bf16.msra.mxu0 %v6320
    %7298 = vmatprep.subr.bf16.mxu0 %v6329
    %7299 = vmatpush1.bf16.msra.mxu0 %v6328
    %7300 = vmatprep.subr.bf16.mxu0 %v6337
    %7301 = vmatpush1.bf16.msra.mxu0 %v6336
    %7302 = vmatprep.subr.bf16.mxu0 %v6345
    %7303 = vmatpush1.bf16.msra.mxu0 %v6344
    %7304 = vmatprep.subr.bf16.mxu0 %v6353
    %7305 = vmatpush1.bf16.msra.mxu0 %v6352
    %7306 = vmatprep.subr.bf16.mxu0 %v6361
    %7307 = vmatpush1.bf16.msra.mxu0 %v6360
    %7308 = vmatprep.subr.bf16.mxu0 %v6369
    %7309 = vmatpush1.bf16.msra.mxu0 %v6368
    %7310 = vmatprep.subr.bf16.mxu0 %v6377
    %7311 = vmatpush1.bf16.msra.mxu0 %v6376
    %7312 = vmatprep.mubr.bf16.mxu0 %v4159
    %7313 = vmatmul.mubr.bf16.gmra.mrb[0].mxu0 %v4158
    %v7314 = vpop.f32.mrb[0].mxu0
    %v7315 = vadd.f32 %v4683, %v7314
    %v7316 = vpop.f32.mrb[0].mxu0
    %v7317 = vadd.f32 %v4687, %v7316
    %v7318 = vpop.f32.mrb[0].mxu0
    %v7319 = vpop.f32.mrb[0].mxu0
    %7320 = vdwg.mxu0
    %7321 = vmatprep.subr.bf16.mxu0 %v6385
    %7322 = vmatpush1.bf16.msra.mxu0 %v6384
    %7323 = vmatprep.subr.bf16.mxu0 %v6393
    %7324 = vmatpush1.bf16.msra.mxu0 %v6392
    %7325 = vmatprep.subr.bf16.mxu0 %v6401
    %7326 = vmatpush1.bf16.msra.mxu0 %v6400
    %7327 = vmatprep.subr.bf16.mxu0 %v6409
    %7328 = vmatpush1.bf16.msra.mxu0 %v6408
    %7329 = vmatprep.subr.bf16.mxu0 %v6417
    %7330 = vmatpush1.bf16.msra.mxu0 %v6416
    %7331 = vmatprep.subr.bf16.mxu0 %v6425
    %7332 = vmatpush1.bf16.msra.mxu0 %v6424
    %7333 = vmatprep.subr.bf16.mxu0 %v6433
    %7334 = vmatpush1.bf16.msra.mxu0 %v6432
    %7335 = vmatprep.subr.bf16.mxu0 %v6441
    %7336 = vmatpush1.bf16.msra.mxu0 %v6440
    %7337 = vmatprep.subr.bf16.mxu0 %v6449
    %7338 = vmatpush1.bf16.msra.mxu0 %v6448
    %7339 = vmatprep.subr.bf16.mxu0 %v6457
    %7340 = vmatpush1.bf16.msra.mxu0 %v6456
    %7341 = vmatprep.subr.bf16.mxu0 %v6465
    %7342 = vmatpush1.bf16.msra.mxu0 %v6464
    %7343 = vmatprep.subr.bf16.mxu0 %v6473
    %7344 = vmatpush1.bf16.msra.mxu0 %v6472
    %7345 = vmatprep.subr.bf16.mxu0 %v6481
    %7346 = vmatpush1.bf16.msra.mxu0 %v6480
    %7347 = vmatprep.subr.bf16.mxu0 %v6489
    %7348 = vmatpush1.bf16.msra.mxu0 %v6488
    %7349 = vmatprep.subr.bf16.mxu0 %v6497
    %7350 = vmatpush1.bf16.msra.mxu0 %v6496
    %7351 = vmatprep.subr.bf16.mxu0 %v6505
    %7352 = vmatpush1.bf16.msra.mxu0 %v6504
    %7353 = vmatprep.mubr.bf16.mxu0 %v4161
    %7354 = vmatmul.mubr.bf16.gmra.mrb[0].mxu0 %v4160
    %v7355 = vpop.f32.mrb[0].mxu0
    %v7356 = vadd.f32 %v7315, %v7355
    %v7357 = vpop.f32.mrb[0].mxu0
    %v7358 = vadd.f32 %v7317, %v7357
    %v7359 = vpop.f32.mrb[0].mxu0
    %v7360 = vpop.f32.mrb[0].mxu0
    %7361 = vdwg.mxu0
    %7362 = vmatprep.subr.bf16.mxu0 %v6513
    %7363 = vmatpush1.bf16.msra.mxu0 %v6512
    %7364 = vmatprep.subr.bf16.mxu0 %v6521
    %7365 = vmatpush1.bf16.msra.mxu0 %v6520
    %7366 = vmatprep.subr.bf16.mxu0 %v6529
    %7367 = vmatpush1.bf16.msra.mxu0 %v6528
    %7368 = vmatprep.subr.bf16.mxu0 %v6537
    %7369 = vmatpush1.bf16.msra.mxu0 %v6536
    %7370 = vmatprep.subr.bf16.mxu0 %v6545
    %7371 = vmatpush1.bf16.msra.mxu0 %v6544
    %7372 = vmatprep.subr.bf16.mxu0 %v6553
    %7373 = vmatpush1.bf16.msra.mxu0 %v6552
    %7374 = vmatprep.subr.bf16.mxu0 %v6561
    %7375 = vmatpush1.bf16.msra.mxu0 %v6560
    %7376 = vmatprep.subr.bf16.mxu0 %v6569
    %7377 = vmatpush1.bf16.msra.mxu0 %v6568
    %7378 = vmatprep.subr.bf16.mxu0 %v6577
    %7379 = vmatpush1.bf16.msra.mxu0 %v6576
    %7380 = vmatprep.subr.bf16.mxu0 %v6585
    %7381 = vmatpush1.bf16.msra.mxu0 %v6584
    %7382 = vmatprep.subr.bf16.mxu0 %v6593
    %7383 = vmatpush1.bf16.msra.mxu0 %v6592
    %7384 = vmatprep.subr.bf16.mxu0 %v6601
    %7385 = vmatpush1.bf16.msra.mxu0 %v6600
    %7386 = vmatprep.subr.bf16.mxu0 %v6609
    %7387 = vmatpush1.bf16.msra.mxu0 %v6608
    %7388 = vmatprep.subr.bf16.mxu0 %v6617
    %7389 = vmatpush1.bf16.msra.mxu0 %v6616
    %7390 = vmatprep.subr.bf16.mxu0 %v6625
    %7391 = vmatpush1.bf16.msra.mxu0 %v6624
    %7392 = vmatprep.subr.bf16.mxu0 %v6633
    %7393 = vmatpush1.bf16.msra.mxu0 %v6632
    %7394 = vmatprep.mubr.bf16.mxu0 %v4163
    %7395 = vmatmul.mubr.bf16.gmra.mrb[0].mxu0 %v4162
    %v7396 = vpop.f32.mrb[0].mxu0
    %v7397 = vadd.f32 %v7356, %v7396
    %v7398 = vpop.f32.mrb[0].mxu0
    %v7399 = vadd.f32 %v7358, %v7398
    %v7400 = vpop.f32.mrb[0].mxu0
    %v7401 = vpop.f32.mrb[0].mxu0
    %7402 = vdwg.mxu0
    %7403 = vmatprep.subr.bf16.mxu0 %v6641
    %7404 = vmatpush1.bf16.msra.mxu0 %v6640
    %7405 = vmatprep.subr.bf16.mxu0 %v6649
    %7406 = vmatpush1.bf16.msra.mxu0 %v6648
    %7407 = vmatprep.subr.bf16.mxu0 %v6657
    %7408 = vmatpush1.bf16.msra.mxu0 %v6656
    %7409 = vmatprep.subr.bf16.mxu0 %v6665
    %7410 = vmatpush1.bf16.msra.mxu0 %v6664
    %7411 = vmatprep.subr.bf16.mxu0 %v6673
    %7412 = vmatpush1.bf16.msra.mxu0 %v6672
    %7413 = vmatprep.subr.bf16.mxu0 %v6681
    %7414 = vmatpush1.bf16.msra.mxu0 %v6680
    %7415 = vmatprep.subr.bf16.mxu0 %v6689
    %7416 = vmatpush1.bf16.msra.mxu0 %v6688
    %7417 = vmatprep.subr.bf16.mxu0 %v6697
    %7418 = vmatpush1.bf16.msra.mxu0 %v6696
    %7419 = vmatprep.subr.bf16.mxu0 %v6705
    %7420 = vmatpush1.bf16.msra.mxu0 %v6704
    %7421 = vmatprep.subr.bf16.mxu0 %v6713
    %7422 = vmatpush1.bf16.msra.mxu0 %v6712
    %7423 = vmatprep.subr.bf16.mxu0 %v6721
    %7424 = vmatpush1.bf16.msra.mxu0 %v6720
    %7425 = vmatprep.subr.bf16.mxu0 %v6729
    %7426 = vmatpush1.bf16.msra.mxu0 %v6728
    %7427 = vmatprep.subr.bf16.mxu0 %v6737
    %7428 = vmatpush1.bf16.msra.mxu0 %v6736
    %7429 = vmatprep.subr.bf16.mxu0 %v6745
    %7430 = vmatpush1.bf16.msra.mxu0 %v6744
    %7431 = vmatprep.subr.bf16.mxu0 %v6753
    %7432 = vmatpush1.bf16.msra.mxu0 %v6752
    %7433 = vmatprep.subr.bf16.mxu0 %v6761
    %7434 = vmatpush1.bf16.msra.mxu0 %v6760
    %7435 = vmatprep.mubr.bf16.mxu0 %v4165
    %7436 = vmatmul.mubr.bf16.gmra.mrb[0].mxu0 %v4164
    %v7437 = vpop.f32.mrb[0].mxu0
    %v7438 = vadd.f32 %v7397, %v7437
    %v7439 = vpop.f32.mrb[0].mxu0
    %v7440 = vadd.f32 %v7399, %v7439
    %v7441 = vpop.f32.mrb[0].mxu0
    %v7442 = vpop.f32.mrb[0].mxu0
    %7443 = vdwg.mxu0
    %7444 = vmatprep.subr.bf16.mxu0 %v6259
    %7445 = vmatpush1.bf16.msra.mxu0 %v6258
    %7446 = vmatprep.subr.bf16.mxu0 %v6267
    %7447 = vmatpush1.bf16.msra.mxu0 %v6266
    %7448 = vmatprep.subr.bf16.mxu0 %v6275
    %7449 = vmatpush1.bf16.msra.mxu0 %v6274
    %7450 = vmatprep.subr.bf16.mxu0 %v6283
    %7451 = vmatpush1.bf16.msra.mxu0 %v6282
    %7452 = vmatprep.subr.bf16.mxu0 %v6291
    %7453 = vmatpush1.bf16.msra.mxu0 %v6290
    %7454 = vmatprep.subr.bf16.mxu0 %v6299
    %7455 = vmatpush1.bf16.msra.mxu0 %v6298
    %7456 = vmatprep.subr.bf16.mxu0 %v6307
    %7457 = vmatpush1.bf16.msra.mxu0 %v6306
    %7458 = vmatprep.subr.bf16.mxu0 %v6315
    %7459 = vmatpush1.bf16.msra.mxu0 %v6314
    %7460 = vmatprep.subr.bf16.mxu0 %v6323
    %7461 = vmatpush1.bf16.msra.mxu0 %v6322
    %7462 = vmatprep.subr.bf16.mxu0 %v6331
    %7463 = vmatpush1.bf16.msra.mxu0 %v6330
    %7464 = vmatprep.subr.bf16.mxu0 %v6339
    %7465 = vmatpush1.bf16.msra.mxu0 %v6338
    %7466 = vmatprep.subr.bf16.mxu0 %v6347
    %7467 = vmatpush1.bf16.msra.mxu0 %v6346
    %7468 = vmatprep.subr.bf16.mxu0 %v6355
    %7469 = vmatpush1.bf16.msra.mxu0 %v6354
    %7470 = vmatprep.subr.bf16.mxu0 %v6363
    %7471 = vmatpush1.bf16.msra.mxu0 %v6362
    %7472 = vmatprep.subr.bf16.mxu0 %v6371
    %7473 = vmatpush1.bf16.msra.mxu0 %v6370
    %7474 = vmatprep.subr.bf16.mxu0 %v6379
    %7475 = vmatpush1.bf16.msra.mxu0 %v6378
    %7476 = vmatprep.mubr.bf16.mxu0 %v4159
    %7477 = vmatmul.mubr.bf16.gmra.mrb[0].mxu0 %v4158
    %v7478 = vpop.f32.mrb[0].mxu0
    %v7479 = vadd.f32 %v4691, %v7478
    %v7480 = vpop.f32.mrb[0].mxu0
    %v7481 = vadd.f32 %v4695, %v7480
    %v7482 = vpop.f32.mrb[0].mxu0
    %v7483 = vpop.f32.mrb[0].mxu0
    %7484 = vdwg.mxu0
    %7485 = vmatprep.subr.bf16.mxu0 %v6387
    %7486 = vmatpush1.bf16.msra.mxu0 %v6386
    %7487 = vmatprep.subr.bf16.mxu0 %v6395
    %7488 = vmatpush1.bf16.msra.mxu0 %v6394
    %7489 = vmatprep.subr.bf16.mxu0 %v6403
    %7490 = vmatpush1.bf16.msra.mxu0 %v6402
    %7491 = vmatprep.subr.bf16.mxu0 %v6411
    %7492 = vmatpush1.bf16.msra.mxu0 %v6410
    %7493 = vmatprep.subr.bf16.mxu0 %v6419
    %7494 = vmatpush1.bf16.msra.mxu0 %v6418
    %7495 = vmatprep.subr.bf16.mxu0 %v6427
    %7496 = vmatpush1.bf16.msra.mxu0 %v6426
    %7497 = vmatprep.subr.bf16.mxu0 %v6435
    %7498 = vmatpush1.bf16.msra.mxu0 %v6434
    %7499 = vmatprep.subr.bf16.mxu0 %v6443
    %7500 = vmatpush1.bf16.msra.mxu0 %v6442
    %7501 = vmatprep.subr.bf16.mxu0 %v6451
    %7502 = vmatpush1.bf16.msra.mxu0 %v6450
    %7503 = vmatprep.subr.bf16.mxu0 %v6459
    %7504 = vmatpush1.bf16.msra.mxu0 %v6458
    %7505 = vmatprep.subr.bf16.mxu0 %v6467
    %7506 = vmatpush1.bf16.msra.mxu0 %v6466
    %7507 = vmatprep.subr.bf16.mxu0 %v6475
    %7508 = vmatpush1.bf16.msra.mxu0 %v6474
    %7509 = vmatprep.subr.bf16.mxu0 %v6483
    %7510 = vmatpush1.bf16.msra.mxu0 %v6482
    %7511 = vmatprep.subr.bf16.mxu0 %v6491
    %7512 = vmatpush1.bf16.msra.mxu0 %v6490
    %7513 = vmatprep.subr.bf16.mxu0 %v6499
    %7514 = vmatpush1.bf16.msra.mxu0 %v6498
    %7515 = vmatprep.subr.bf16.mxu0 %v6507
    %7516 = vmatpush1.bf16.msra.mxu0 %v6506
    %7517 = vmatprep.mubr.bf16.mxu0 %v4161
    %7518 = vmatmul.mubr.bf16.gmra.mrb[0].mxu0 %v4160
    %v7519 = vpop.f32.mrb[0].mxu0
    %v7520 = vadd.f32 %v7479, %v7519
    %v7521 = vpop.f32.mrb[0].mxu0
    %v7522 = vadd.f32 %v7481, %v7521
    %v7523 = vpop.f32.mrb[0].mxu0
    %v7524 = vpop.f32.mrb[0].mxu0
    %7525 = vdwg.mxu0
    %7526 = vmatprep.subr.bf16.mxu0 %v6515
    %7527 = vmatpush1.bf16.msra.mxu0 %v6514
    %7528 = vmatprep.subr.bf16.mxu0 %v6523
    %7529 = vmatpush1.bf16.msra.mxu0 %v6522
    %7530 = vmatprep.subr.bf16.mxu0 %v6531
    %7531 = vmatpush1.bf16.msra.mxu0 %v6530
    %7532 = vmatprep.subr.bf16.mxu0 %v6539
    %7533 = vmatpush1.bf16.msra.mxu0 %v6538
    %7534 = vmatprep.subr.bf16.mxu0 %v6547
    %7535 = vmatpush1.bf16.msra.mxu0 %v6546
    %7536 = vmatprep.subr.bf16.mxu0 %v6555
    %7537 = vmatpush1.bf16.msra.mxu0 %v6554
    %7538 = vmatprep.subr.bf16.mxu0 %v6563
    %7539 = vmatpush1.bf16.msra.mxu0 %v6562
    %7540 = vmatprep.subr.bf16.mxu0 %v6571
    %7541 = vmatpush1.bf16.msra.mxu0 %v6570
    %7542 = vmatprep.subr.bf16.mxu0 %v6579
    %7543 = vmatpush1.bf16.msra.mxu0 %v6578
    %7544 = vmatprep.subr.bf16.mxu0 %v6587
    %7545 = vmatpush1.bf16.msra.mxu0 %v6586
    %7546 = vmatprep.subr.bf16.mxu0 %v6595
    %7547 = vmatpush1.bf16.msra.mxu0 %v6594
    %7548 = vmatprep.subr.bf16.mxu0 %v6603
    %7549 = vmatpush1.bf16.msra.mxu0 %v6602
    %7550 = vmatprep.subr.bf16.mxu0 %v6611
    %7551 = vmatpush1.bf16.msra.mxu0 %v6610
    %7552 = vmatprep.subr.bf16.mxu0 %v6619
    %7553 = vmatpush1.bf16.msra.mxu0 %v6618
    %7554 = vmatprep.subr.bf16.mxu0 %v6627
    %7555 = vmatpush1.bf16.msra.mxu0 %v6626
    %7556 = vmatprep.subr.bf16.mxu0 %v6635
    %7557 = vmatpush1.bf16.msra.mxu0 %v6634
    %7558 = vmatprep.mubr.bf16.mxu0 %v4163
    %7559 = vmatmul.mubr.bf16.gmra.mrb[0].mxu0 %v4162
    %v7560 = vpop.f32.mrb[0].mxu0
    %v7561 = vadd.f32 %v7520, %v7560
    %v7562 = vpop.f32.mrb[0].mxu0
    %v7563 = vadd.f32 %v7522, %v7562
    %v7564 = vpop.f32.mrb[0].mxu0
    %v7565 = vpop.f32.mrb[0].mxu0
    %7566 = vdwg.mxu0
    %7567 = vmatprep.subr.bf16.mxu0 %v6643
    %7568 = vmatpush1.bf16.msra.mxu0 %v6642
    %7569 = vmatprep.subr.bf16.mxu0 %v6651
    %7570 = vmatpush1.bf16.msra.mxu0 %v6650
    %7571 = vmatprep.subr.bf16.mxu0 %v6659
    %7572 = vmatpush1.bf16.msra.mxu0 %v6658
    %7573 = vmatprep.subr.bf16.mxu0 %v6667
    %7574 = vmatpush1.bf16.msra.mxu0 %v6666
    %7575 = vmatprep.subr.bf16.mxu0 %v6675
    %7576 = vmatpush1.bf16.msra.mxu0 %v6674
    %7577 = vmatprep.subr.bf16.mxu0 %v6683
    %7578 = vmatpush1.bf16.msra.mxu0 %v6682
    %7579 = vmatprep.subr.bf16.mxu0 %v6691
    %7580 = vmatpush1.bf16.msra.mxu0 %v6690
    %7581 = vmatprep.subr.bf16.mxu0 %v6699
    %7582 = vmatpush1.bf16.msra.mxu0 %v6698
    %7583 = vmatprep.subr.bf16.mxu0 %v6707
    %7584 = vmatpush1.bf16.msra.mxu0 %v6706
    %7585 = vmatprep.subr.bf16.mxu0 %v6715
    %7586 = vmatpush1.bf16.msra.mxu0 %v6714
    %7587 = vmatprep.subr.bf16.mxu0 %v6723
    %7588 = vmatpush1.bf16.msra.mxu0 %v6722
    %7589 = vmatprep.subr.bf16.mxu0 %v6731
    %7590 = vmatpush1.bf16.msra.mxu0 %v6730
    %7591 = vmatprep.subr.bf16.mxu0 %v6739
    %7592 = vmatpush1.bf16.msra.mxu0 %v6738
    %7593 = vmatprep.subr.bf16.mxu0 %v6747
    %7594 = vmatpush1.bf16.msra.mxu0 %v6746
    %7595 = vmatprep.subr.bf16.mxu0 %v6755
    %7596 = vmatpush1.bf16.msra.mxu0 %v6754
    %7597 = vmatprep.subr.bf16.mxu0 %v6763
    %7598 = vmatpush1.bf16.msra.mxu0 %v6762
    %7599 = vmatprep.mubr.bf16.mxu0 %v4165
    %7600 = vmatmul.mubr.bf16.gmra.mrb[0].mxu0 %v4164
    %v7601 = vpop.f32.mrb[0].mxu0
    %v7602 = vadd.f32 %v7561, %v7601
    %v7603 = vpop.f32.mrb[0].mxu0
    %v7604 = vadd.f32 %v7563, %v7603
    %v7605 = vpop.f32.mrb[0].mxu0
    %v7606 = vpop.f32.mrb[0].mxu0
    %7607 = vdwg.mxu0
    %7608 = vmatprep.subr.bf16.mxu0 %v6261
    %7609 = vmatpush1.bf16.msra.mxu0 %v6260
    %7610 = vmatprep.subr.bf16.mxu0 %v6269
    %7611 = vmatpush1.bf16.msra.mxu0 %v6268
    %7612 = vmatprep.subr.bf16.mxu0 %v6277
    %7613 = vmatpush1.bf16.msra.mxu0 %v6276
    %7614 = vmatprep.subr.bf16.mxu0 %v6285
    %7615 = vmatpush1.bf16.msra.mxu0 %v6284
    %7616 = vmatprep.subr.bf16.mxu0 %v6293
    %7617 = vmatpush1.bf16.msra.mxu0 %v6292
    %7618 = vmatprep.subr.bf16.mxu0 %v6301
    %7619 = vmatpush1.bf16.msra.mxu0 %v6300
    %7620 = vmatprep.subr.bf16.mxu0 %v6309
    %7621 = vmatpush1.bf16.msra.mxu0 %v6308
    %7622 = vmatprep.subr.bf16.mxu0 %v6317
    %7623 = vmatpush1.bf16.msra.mxu0 %v6316
    %7624 = vmatprep.subr.bf16.mxu0 %v6325
    %7625 = vmatpush1.bf16.msra.mxu0 %v6324
    %7626 = vmatprep.subr.bf16.mxu0 %v6333
    %7627 = vmatpush1.bf16.msra.mxu0 %v6332
    %7628 = vmatprep.subr.bf16.mxu0 %v6341
    %7629 = vmatpush1.bf16.msra.mxu0 %v6340
    %7630 = vmatprep.subr.bf16.mxu0 %v6349
    %7631 = vmatpush1.bf16.msra.mxu0 %v6348
    %7632 = vmatprep.subr.bf16.mxu0 %v6357
    %7633 = vmatpush1.bf16.msra.mxu0 %v6356
    %7634 = vmatprep.subr.bf16.mxu0 %v6365
    %7635 = vmatpush1.bf16.msra.mxu0 %v6364
    %7636 = vmatprep.subr.bf16.mxu0 %v6373
    %7637 = vmatpush1.bf16.msra.mxu0 %v6372
    %7638 = vmatprep.subr.bf16.mxu0 %v6381
    %7639 = vmatpush1.bf16.msra.mxu0 %v6380
    %7640 = vmatprep.mubr.bf16.mxu0 %v4159
    %7641 = vmatmul.mubr.bf16.gmra.mrb[0].mxu0 %v4158
    %v7642 = vpop.f32.mrb[0].mxu0
    %v7643 = vadd.f32 %v4699, %v7642
    %v7644 = vpop.f32.mrb[0].mxu0
    %v7645 = vadd.f32 %v4703, %v7644
    %v7646 = vpop.f32.mrb[0].mxu0
    %v7647 = vpop.f32.mrb[0].mxu0
    %7648 = vdwg.mxu0
    %7649 = vmatprep.subr.bf16.mxu0 %v6389
    %7650 = vmatpush1.bf16.msra.mxu0 %v6388
    %7651 = vmatprep.subr.bf16.mxu0 %v6397
    %7652 = vmatpush1.bf16.msra.mxu0 %v6396
    %7653 = vmatprep.subr.bf16.mxu0 %v6405
    %7654 = vmatpush1.bf16.msra.mxu0 %v6404
    %7655 = vmatprep.subr.bf16.mxu0 %v6413
    %7656 = vmatpush1.bf16.msra.mxu0 %v6412
    %7657 = vmatprep.subr.bf16.mxu0 %v6421
    %7658 = vmatpush1.bf16.msra.mxu0 %v6420
    %7659 = vmatprep.subr.bf16.mxu0 %v6429
    %7660 = vmatpush1.bf16.msra.mxu0 %v6428
    %7661 = vmatprep.subr.bf16.mxu0 %v6437
    %7662 = vmatpush1.bf16.msra.mxu0 %v6436
    %7663 = vmatprep.subr.bf16.mxu0 %v6445
    %7664 = vmatpush1.bf16.msra.mxu0 %v6444
    %7665 = vmatprep.subr.bf16.mxu0 %v6453
    %7666 = vmatpush1.bf16.msra.mxu0 %v6452
    %7667 = vmatprep.subr.bf16.mxu0 %v6461
    %7668 = vmatpush1.bf16.msra.mxu0 %v6460
    %7669 = vmatprep.subr.bf16.mxu0 %v6469
    %7670 = vmatpush1.bf16.msra.mxu0 %v6468
    %7671 = vmatprep.subr.bf16.mxu0 %v6477
    %7672 = vmatpush1.bf16.msra.mxu0 %v6476
    %7673 = vmatprep.subr.bf16.mxu0 %v6485
    %7674 = vmatpush1.bf16.msra.mxu0 %v6484
    %7675 = vmatprep.subr.bf16.mxu0 %v6493
    %7676 = vmatpush1.bf16.msra.mxu0 %v6492
    %7677 = vmatprep.subr.bf16.mxu0 %v6501
    %7678 = vmatpush1.bf16.msra.mxu0 %v6500
    %7679 = vmatprep.subr.bf16.mxu0 %v6509
    %7680 = vmatpush1.bf16.msra.mxu0 %v6508
    %7681 = vmatprep.mubr.bf16.mxu0 %v4161
    %7682 = vmatmul.mubr.bf16.gmra.mrb[0].mxu0 %v4160
    %v7683 = vpop.f32.mrb[0].mxu0
    %v7684 = vadd.f32 %v7643, %v7683
    %v7685 = vpop.f32.mrb[0].mxu0
    %v7686 = vadd.f32 %v7645, %v7685
    %v7687 = vpop.f32.mrb[0].mxu0
    %v7688 = vpop.f32.mrb[0].mxu0
    %7689 = vdwg.mxu0
    %7690 = vmatprep.subr.bf16.mxu0 %v6517
    %7691 = vmatpush1.bf16.msra.mxu0 %v6516
    %7692 = vmatprep.subr.bf16.mxu0 %v6525
    %7693 = vmatpush1.bf16.msra.mxu0 %v6524
    %7694 = vmatprep.subr.bf16.mxu0 %v6533
    %7695 = vmatpush1.bf16.msra.mxu0 %v6532
    %7696 = vmatprep.subr.bf16.mxu0 %v6541
    %7697 = vmatpush1.bf16.msra.mxu0 %v6540
    %7698 = vmatprep.subr.bf16.mxu0 %v6549
    %7699 = vmatpush1.bf16.msra.mxu0 %v6548
    %7700 = vmatprep.subr.bf16.mxu0 %v6557
    %7701 = vmatpush1.bf16.msra.mxu0 %v6556
    %7702 = vmatprep.subr.bf16.mxu0 %v6565
    %7703 = vmatpush1.bf16.msra.mxu0 %v6564
    %7704 = vmatprep.subr.bf16.mxu0 %v6573
    %7705 = vmatpush1.bf16.msra.mxu0 %v6572
    %7706 = vmatprep.subr.bf16.mxu0 %v6581
    %7707 = vmatpush1.bf16.msra.mxu0 %v6580
    %7708 = vmatprep.subr.bf16.mxu0 %v6589
    %7709 = vmatpush1.bf16.msra.mxu0 %v6588
    %7710 = vmatprep.subr.bf16.mxu0 %v6597
    %7711 = vmatpush1.bf16.msra.mxu0 %v6596
    %7712 = vmatprep.subr.bf16.mxu0 %v6605
    %7713 = vmatpush1.bf16.msra.mxu0 %v6604
    %7714 = vmatprep.subr.bf16.mxu0 %v6613
    %7715 = vmatpush1.bf16.msra.mxu0 %v6612
    %7716 = vmatprep.subr.bf16.mxu0 %v6621
    %7717 = vmatpush1.bf16.msra.mxu0 %v6620
    %7718 = vmatprep.subr.bf16.mxu0 %v6629
    %7719 = vmatpush1.bf16.msra.mxu0 %v6628
    %7720 = vmatprep.subr.bf16.mxu0 %v6637
    %7721 = vmatpush1.bf16.msra.mxu0 %v6636
    %7722 = vmatprep.mubr.bf16.mxu0 %v4163
    %7723 = vmatmul.mubr.bf16.gmra.mrb[0].mxu0 %v4162
    %v7724 = vpop.f32.mrb[0].mxu0
    %v7725 = vadd.f32 %v7684, %v7724
    %v7726 = vpop.f32.mrb[0].mxu0
    %v7727 = vadd.f32 %v7686, %v7726
    %v7728 = vpop.f32.mrb[0].mxu0
    %v7729 = vpop.f32.mrb[0].mxu0
    %7730 = vdwg.mxu0
    %7731 = vmatprep.subr.bf16.mxu0 %v6645
    %7732 = vmatpush1.bf16.msra.mxu0 %v6644
    %7733 = vmatprep.subr.bf16.mxu0 %v6653
    %7734 = vmatpush1.bf16.msra.mxu0 %v6652
    %7735 = vmatprep.subr.bf16.mxu0 %v6661
    %7736 = vmatpush1.bf16.msra.mxu0 %v6660
    %7737 = vmatprep.subr.bf16.mxu0 %v6669
    %7738 = vmatpush1.bf16.msra.mxu0 %v6668
    %7739 = vmatprep.subr.bf16.mxu0 %v6677
    %7740 = vmatpush1.bf16.msra.mxu0 %v6676
    %7741 = vmatprep.subr.bf16.mxu0 %v6685
    %7742 = vmatpush1.bf16.msra.mxu0 %v6684
    %7743 = vmatprep.subr.bf16.mxu0 %v6693
    %7744 = vmatpush1.bf16.msra.mxu0 %v6692
    %7745 = vmatprep.subr.bf16.mxu0 %v6701
    %7746 = vmatpush1.bf16.msra.mxu0 %v6700
    %7747 = vmatprep.subr.bf16.mxu0 %v6709
    %7748 = vmatpush1.bf16.msra.mxu0 %v6708
    %7749 = vmatprep.subr.bf16.mxu0 %v6717
    %7750 = vmatpush1.bf16.msra.mxu0 %v6716
    %7751 = vmatprep.subr.bf16.mxu0 %v6725
    %7752 = vmatpush1.bf16.msra.mxu0 %v6724
    %7753 = vmatprep.subr.bf16.mxu0 %v6733
    %7754 = vmatpush1.bf16.msra.mxu0 %v6732
    %7755 = vmatprep.subr.bf16.mxu0 %v6741
    %7756 = vmatpush1.bf16.msra.mxu0 %v6740
    %7757 = vmatprep.subr.bf16.mxu0 %v6749
    %7758 = vmatpush1.bf16.msra.mxu0 %v6748
    %7759 = vmatprep.subr.bf16.mxu0 %v6757
    %7760 = vmatpush1.bf16.msra.mxu0 %v6756
    %7761 = vmatprep.subr.bf16.mxu0 %v6765
    %7762 = vmatpush1.bf16.msra.mxu0 %v6764
    %7763 = vmatprep.mubr.bf16.mxu0 %v4165
    %7764 = vmatmul.mubr.bf16.gmra.mrb[0].mxu0 %v4164
    %v7765 = vpop.f32.mrb[0].mxu0
    %v7766 = vadd.f32 %v7725, %v7765
    %v7767 = vpop.f32.mrb[0].mxu0
    %v7768 = vadd.f32 %v7727, %v7767
    %v7769 = vpop.f32.mrb[0].mxu0
    %v7770 = vpop.f32.mrb[0].mxu0
    %7771 = vdwg.mxu0
    %7772 = vmatprep.subr.bf16.mxu0 %v6263
    %7773 = vmatpush1.bf16.msra.mxu0 %v6262
    %7774 = vmatprep.subr.bf16.mxu0 %v6271
    %7775 = vmatpush1.bf16.msra.mxu0 %v6270
    %7776 = vmatprep.subr.bf16.mxu0 %v6279
    %7777 = vmatpush1.bf16.msra.mxu0 %v6278
    %7778 = vmatprep.subr.bf16.mxu0 %v6287
    %7779 = vmatpush1.bf16.msra.mxu0 %v6286
    %7780 = vmatprep.subr.bf16.mxu0 %v6295
    %7781 = vmatpush1.bf16.msra.mxu0 %v6294
    %7782 = vmatprep.subr.bf16.mxu0 %v6303
    %7783 = vmatpush1.bf16.msra.mxu0 %v6302
    %7784 = vmatprep.subr.bf16.mxu0 %v6311
    %7785 = vmatpush1.bf16.msra.mxu0 %v6310
    %7786 = vmatprep.subr.bf16.mxu0 %v6319
    %7787 = vmatpush1.bf16.msra.mxu0 %v6318
    %7788 = vmatprep.subr.bf16.mxu0 %v6327
    %7789 = vmatpush1.bf16.msra.mxu0 %v6326
    %7790 = vmatprep.subr.bf16.mxu0 %v6335
    %7791 = vmatpush1.bf16.msra.mxu0 %v6334
    %7792 = vmatprep.subr.bf16.mxu0 %v6343
    %7793 = vmatpush1.bf16.msra.mxu0 %v6342
    %7794 = vmatprep.subr.bf16.mxu0 %v6351
    %7795 = vmatpush1.bf16.msra.mxu0 %v6350
    %7796 = vmatprep.subr.bf16.mxu0 %v6359
    %7797 = vmatpush1.bf16.msra.mxu0 %v6358
    %7798 = vmatprep.subr.bf16.mxu0 %v6367
    %7799 = vmatpush1.bf16.msra.mxu0 %v6366
    %7800 = vmatprep.subr.bf16.mxu0 %v6375
    %7801 = vmatpush1.bf16.msra.mxu0 %v6374
    %7802 = vmatprep.subr.bf16.mxu0 %v6383
    %7803 = vmatpush1.bf16.msra.mxu0 %v6382
    %7804 = vmatprep.mubr.bf16.mxu0 %v4159
    %7805 = vmatmul.mubr.bf16.gmra.mrb[0].mxu0 %v4158
    %v7806 = vpop.f32.mrb[0].mxu0
    %v7807 = vadd.f32 %v4707, %v7806
    %v7808 = vpop.f32.mrb[0].mxu0
    %v7809 = vadd.f32 %v4711, %v7808
    %v7810 = vpop.f32.mrb[0].mxu0
    %v7811 = vpop.f32.mrb[0].mxu0
    %7812 = vdwg.mxu0
    %7813 = vmatprep.subr.bf16.mxu0 %v6391
    %7814 = vmatpush1.bf16.msra.mxu0 %v6390
    %7815 = vmatprep.subr.bf16.mxu0 %v6399
    %7816 = vmatpush1.bf16.msra.mxu0 %v6398
    %7817 = vmatprep.subr.bf16.mxu0 %v6407
    %7818 = vmatpush1.bf16.msra.mxu0 %v6406
    %7819 = vmatprep.subr.bf16.mxu0 %v6415
    %7820 = vmatpush1.bf16.msra.mxu0 %v6414
    %7821 = vmatprep.subr.bf16.mxu0 %v6423
    %7822 = vmatpush1.bf16.msra.mxu0 %v6422
    %7823 = vmatprep.subr.bf16.mxu0 %v6431
    %7824 = vmatpush1.bf16.msra.mxu0 %v6430
    %7825 = vmatprep.subr.bf16.mxu0 %v6439
    %7826 = vmatpush1.bf16.msra.mxu0 %v6438
    %7827 = vmatprep.subr.bf16.mxu0 %v6447
    %7828 = vmatpush1.bf16.msra.mxu0 %v6446
    %7829 = vmatprep.subr.bf16.mxu0 %v6455
    %7830 = vmatpush1.bf16.msra.mxu0 %v6454
    %7831 = vmatprep.subr.bf16.mxu0 %v6463
    %7832 = vmatpush1.bf16.msra.mxu0 %v6462
    %7833 = vmatprep.subr.bf16.mxu0 %v6471
    %7834 = vmatpush1.bf16.msra.mxu0 %v6470
    %7835 = vmatprep.subr.bf16.mxu0 %v6479
    %7836 = vmatpush1.bf16.msra.mxu0 %v6478
    %7837 = vmatprep.subr.bf16.mxu0 %v6487
    %7838 = vmatpush1.bf16.msra.mxu0 %v6486
    %7839 = vmatprep.subr.bf16.mxu0 %v6495
    %7840 = vmatpush1.bf16.msra.mxu0 %v6494
    %7841 = vmatprep.subr.bf16.mxu0 %v6503
    %7842 = vmatpush1.bf16.msra.mxu0 %v6502
    %7843 = vmatprep.subr.bf16.mxu0 %v6511
    %7844 = vmatpush1.bf16.msra.mxu0 %v6510
    %7845 = vmatprep.mubr.bf16.mxu0 %v4161
    %7846 = vmatmul.mubr.bf16.gmra.mrb[0].mxu0 %v4160
    %v7847 = vpop.f32.mrb[0].mxu0
    %v7848 = vadd.f32 %v7807, %v7847
    %v7849 = vpop.f32.mrb[0].mxu0
    %v7850 = vadd.f32 %v7809, %v7849
    %v7851 = vpop.f32.mrb[0].mxu0
    %v7852 = vpop.f32.mrb[0].mxu0
    %7853 = vdwg.mxu0
    %7854 = vmatprep.subr.bf16.mxu0 %v6519
    %7855 = vmatpush1.bf16.msra.mxu0 %v6518
    %7856 = vmatprep.subr.bf16.mxu0 %v6527
    %7857 = vmatpush1.bf16.msra.mxu0 %v6526
    %7858 = vmatprep.subr.bf16.mxu0 %v6535
    %7859 = vmatpush1.bf16.msra.mxu0 %v6534
    %7860 = vmatprep.subr.bf16.mxu0 %v6543
    %7861 = vmatpush1.bf16.msra.mxu0 %v6542
    %7862 = vmatprep.subr.bf16.mxu0 %v6551
    %7863 = vmatpush1.bf16.msra.mxu0 %v6550
    %7864 = vmatprep.subr.bf16.mxu0 %v6559
    %7865 = vmatpush1.bf16.msra.mxu0 %v6558
    %7866 = vmatprep.subr.bf16.mxu0 %v6567
    %7867 = vmatpush1.bf16.msra.mxu0 %v6566
    %7868 = vmatprep.subr.bf16.mxu0 %v6575
    %7869 = vmatpush1.bf16.msra.mxu0 %v6574
    %7870 = vmatprep.subr.bf16.mxu0 %v6583
    %7871 = vmatpush1.bf16.msra.mxu0 %v6582
    %7872 = vmatprep.subr.bf16.mxu0 %v6591
    %7873 = vmatpush1.bf16.msra.mxu0 %v6590
    %7874 = vmatprep.subr.bf16.mxu0 %v6599
    %7875 = vmatpush1.bf16.msra.mxu0 %v6598
    %7876 = vmatprep.subr.bf16.mxu0 %v6607
    %7877 = vmatpush1.bf16.msra.mxu0 %v6606
    %7878 = vmatprep.subr.bf16.mxu0 %v6615
    %7879 = vmatpush1.bf16.msra.mxu0 %v6614
    %7880 = vmatprep.subr.bf16.mxu0 %v6623
    %7881 = vmatpush1.bf16.msra.mxu0 %v6622
    %7882 = vmatprep.subr.bf16.mxu0 %v6631
    %7883 = vmatpush1.bf16.msra.mxu0 %v6630
    %7884 = vmatprep.subr.bf16.mxu0 %v6639
    %7885 = vmatpush1.bf16.msra.mxu0 %v6638
    %7886 = vmatprep.mubr.bf16.mxu0 %v4163
    %7887 = vmatmul.mubr.bf16.gmra.mrb[0].mxu0 %v4162
    %v7888 = vpop.f32.mrb[0].mxu0
    %v7889 = vadd.f32 %v7848, %v7888
    %v7890 = vpop.f32.mrb[0].mxu0
    %v7891 = vadd.f32 %v7850, %v7890
    %v7892 = vpop.f32.mrb[0].mxu0
    %v7893 = vpop.f32.mrb[0].mxu0
    %7894 = vdwg.mxu0
    %7895 = vmatprep.subr.bf16.mxu0 %v6647
    %7896 = vmatpush1.bf16.msra.mxu0 %v6646
    %7897 = vmatprep.subr.bf16.mxu0 %v6655
    %7898 = vmatpush1.bf16.msra.mxu0 %v6654
    %7899 = vmatprep.subr.bf16.mxu0 %v6663
    %7900 = vmatpush1.bf16.msra.mxu0 %v6662
    %7901 = vmatprep.subr.bf16.mxu0 %v6671
    %7902 = vmatpush1.bf16.msra.mxu0 %v6670
    %7903 = vmatprep.subr.bf16.mxu0 %v6679
    %7904 = vmatpush1.bf16.msra.mxu0 %v6678
    %7905 = vmatprep.subr.bf16.mxu0 %v6687
    %7906 = vmatpush1.bf16.msra.mxu0 %v6686
    %7907 = vmatprep.subr.bf16.mxu0 %v6695
    %7908 = vmatpush1.bf16.msra.mxu0 %v6694
    %7909 = vmatprep.subr.bf16.mxu0 %v6703
    %7910 = vmatpush1.bf16.msra.mxu0 %v6702
    %7911 = vmatprep.subr.bf16.mxu0 %v6711
    %7912 = vmatpush1.bf16.msra.mxu0 %v6710
    %7913 = vmatprep.subr.bf16.mxu0 %v6719
    %7914 = vmatpush1.bf16.msra.mxu0 %v6718
    %7915 = vmatprep.subr.bf16.mxu0 %v6727
    %7916 = vmatpush1.bf16.msra.mxu0 %v6726
    %7917 = vmatprep.subr.bf16.mxu0 %v6735
    %7918 = vmatpush1.bf16.msra.mxu0 %v6734
    %7919 = vmatprep.subr.bf16.mxu0 %v6743
    %7920 = vmatpush1.bf16.msra.mxu0 %v6742
    %7921 = vmatprep.subr.bf16.mxu0 %v6751
    %7922 = vmatpush1.bf16.msra.mxu0 %v6750
    %7923 = vmatprep.subr.bf16.mxu0 %v6759
    %7924 = vmatpush1.bf16.msra.mxu0 %v6758
    %7925 = vmatprep.subr.bf16.mxu0 %v6767
    %7926 = vmatpush1.bf16.msra.mxu0 %v6766
    %7927 = vmatprep.mubr.bf16.mxu0 %v4165
    %7928 = vmatmul.mubr.bf16.gmra.mrb[0].mxu0 %v4164
    %v7929 = vpop.f32.mrb[0].mxu0
    %v7930 = vadd.f32 %v7889, %v7929
    %v7931 = vpop.f32.mrb[0].mxu0
    %v7932 = vadd.f32 %v7891, %v7931
    %v7933 = vpop.f32.mrb[0].mxu0
    %v7934 = vpop.f32.mrb[0].mxu0
    %7935 = vdwg.mxu0
    %v7936 = vmax.f32 %v7438, 0.0
    %v7937 = vmax.f32 %v7440, 0.0
    %v7938 = vmax.f32 %v7602, 0.0
    %v7939 = vmax.f32 %v7604, 0.0
    %v7940 = vmax.f32 %v7766, 0.0
    %v7941 = vmax.f32 %v7768, 0.0
    %v7942 = vmax.f32 %v7930, 0.0
    %v7943 = vmax.f32 %v7932, 0.0
    %v7944 = vpack.c.bf16 %v7936, %v7936
    %v7945 = vpack.c.bf16 %v7937, %v7937
    %v7946 = vpack.c.bf16 %v7938, %v7938
    %v7947 = vpack.c.bf16 %v7939, %v7939
    %v7948 = vpack.c.bf16 %v7940, %v7940
    %v7949 = vpack.c.bf16 %v7941, %v7941
    %v7950 = vpack.c.bf16 %v7942, %v7942
    %v7951 = vpack.c.bf16 %v7943, %v7943
    %v7952 = vld [vmem:[#allocation12] sm:$0xf]
    %v7953 = vld [vmem:[#allocation12 + $0x4] sm:$0xf]
    %v7954 = vld [vmem:[#allocation12 + $0x8] sm:$0xf]
    %v7955 = vld [vmem:[#allocation12 + $0xc] sm:$0xf]
    %v7956 = vld [vmem:[#allocation12 + $0x10] sm:$0xf]
    %v7957 = vld [vmem:[#allocation12 + $0x14] sm:$0xf]
    %v7958 = vld [vmem:[#allocation12 + $0x18] sm:$0xf]
    %v7959 = vld [vmem:[#allocation12 + $0x1c] sm:$0xf]
    %v7960 = vld [vmem:[#allocation12 + $0x20] sm:$0xf]
    %v7961 = vld [vmem:[#allocation12 + $0x24] sm:$0xf]
    %v7962 = vld [vmem:[#allocation12 + $0x28] sm:$0xf]
    %v7963 = vld [vmem:[#allocation12 + $0x2c] sm:$0xf]
    %v7964 = vld [vmem:[#allocation12 + $0x30] sm:$0xf]
    %v7965 = vld [vmem:[#allocation12 + $0x34] sm:$0xf]
    %v7966 = vld [vmem:[#allocation12 + $0x38] sm:$0xf]
    %v7967 = vld [vmem:[#allocation12 + $0x3c] sm:$0xf]
    %v7968 = vld [vmem:[#allocation12 + $0x40] sm:$0xf]
    %v7969 = vld [vmem:[#allocation12 + $0x44] sm:$0xf]
    %v7970 = vld [vmem:[#allocation12 + $0x48] sm:$0xf]
    %v7971 = vld [vmem:[#allocation12 + $0x4c] sm:$0xf]
    %v7972 = vld [vmem:[#allocation12 + $0x50] sm:$0xf]
    %v7973 = vld [vmem:[#allocation12 + $0x54] sm:$0xf]
    %v7974 = vld [vmem:[#allocation12 + $0x58] sm:$0xf]
    %v7975 = vld [vmem:[#allocation12 + $0x5c] sm:$0xf]
    %v7976 = vld [vmem:[#allocation12 + $0x60] sm:$0xf]
    %v7977 = vld [vmem:[#allocation12 + $0x64] sm:$0xf]
    %v7978 = vld [vmem:[#allocation12 + $0x68] sm:$0xf]
    %v7979 = vld [vmem:[#allocation12 + $0x6c] sm:$0xf]
    %v7980 = vld [vmem:[#allocation12 + $0x70] sm:$0xf]
    %v7981 = vld [vmem:[#allocation12 + $0x74] sm:$0xf]
    %v7982 = vld [vmem:[#allocation12 + $0x78] sm:$0xf]
    %v7983 = vld [vmem:[#allocation12 + $0x7c] sm:$0xf]
    %v7984 = vld [vmem:[#allocation12 + $0x80] sm:$0xf]
    %v7985 = vld [vmem:[#allocation12 + $0x84] sm:$0xf]
    %v7986 = vld [vmem:[#allocation12 + $0x88] sm:$0xf]
    %v7987 = vld [vmem:[#allocation12 + $0x8c] sm:$0xf]
    %v7988 = vld [vmem:[#allocation12 + $0x90] sm:$0xf]
    %v7989 = vld [vmem:[#allocation12 + $0x94] sm:$0xf]
    %v7990 = vld [vmem:[#allocation12 + $0x98] sm:$0xf]
    %v7991 = vld [vmem:[#allocation12 + $0x9c] sm:$0xf]
    %v7992 = vld [vmem:[#allocation12 + $0xa0] sm:$0xf]
    %v7993 = vld [vmem:[#allocation12 + $0xa4] sm:$0xf]
    %v7994 = vld [vmem:[#allocation12 + $0xa8] sm:$0xf]
    %v7995 = vld [vmem:[#allocation12 + $0xac] sm:$0xf]
    %v7996 = vld [vmem:[#allocation12 + $0xb0] sm:$0xf]
    %v7997 = vld [vmem:[#allocation12 + $0xb4] sm:$0xf]
    %v7998 = vld [vmem:[#allocation12 + $0xb8] sm:$0xf]
    %v7999 = vld [vmem:[#allocation12 + $0xbc] sm:$0xf]
    %v8000 = vld [vmem:[#allocation12 + $0xc0] sm:$0xf]
    %v8001 = vld [vmem:[#allocation12 + $0xc4] sm:$0xf]
    %v8002 = vld [vmem:[#allocation12 + $0xc8] sm:$0xf]
    %v8003 = vld [vmem:[#allocation12 + $0xcc] sm:$0xf]
    %v8004 = vld [vmem:[#allocation12 + $0xd0] sm:$0xf]
    %v8005 = vld [vmem:[#allocation12 + $0xd4] sm:$0xf]
    %v8006 = vld [vmem:[#allocation12 + $0xd8] sm:$0xf]
    %v8007 = vld [vmem:[#allocation12 + $0xdc] sm:$0xf]
    %v8008 = vld [vmem:[#allocation12 + $0xe0] sm:$0xf]
    %v8009 = vld [vmem:[#allocation12 + $0xe4] sm:$0xf]
    %v8010 = vld [vmem:[#allocation12 + $0xe8] sm:$0xf]
    %v8011 = vld [vmem:[#allocation12 + $0xec] sm:$0xf]
    %v8012 = vld [vmem:[#allocation12 + $0xf0] sm:$0xf]
    %v8013 = vld [vmem:[#allocation12 + $0xf4] sm:$0xf]
    %v8014 = vld [vmem:[#allocation12 + $0xf8] sm:$0xf]
    %v8015 = vld [vmem:[#allocation12 + $0xfc] sm:$0xf]
    %v8016 = vld [vmem:[#allocation12 + $0x100] sm:$0xf]
    %v8017 = vld [vmem:[#allocation12 + $0x104] sm:$0xf]
    %v8018 = vld [vmem:[#allocation12 + $0x108] sm:$0xf]
    %v8019 = vld [vmem:[#allocation12 + $0x10c] sm:$0xf]
    %v8020 = vld [vmem:[#allocation12 + $0x110] sm:$0xf]
    %v8021 = vld [vmem:[#allocation12 + $0x114] sm:$0xf]
    %v8022 = vld [vmem:[#allocation12 + $0x118] sm:$0xf]
    %v8023 = vld [vmem:[#allocation12 + $0x11c] sm:$0xf]
    %v8024 = vld [vmem:[#allocation12 + $0x120] sm:$0xf]
    %v8025 = vld [vmem:[#allocation12 + $0x124] sm:$0xf]
    %v8026 = vld [vmem:[#allocation12 + $0x128] sm:$0xf]
    %v8027 = vld [vmem:[#allocation12 + $0x12c] sm:$0xf]
    %v8028 = vld [vmem:[#allocation12 + $0x130] sm:$0xf]
    %v8029 = vld [vmem:[#allocation12 + $0x134] sm:$0xf]
    %v8030 = vld [vmem:[#allocation12 + $0x138] sm:$0xf]
    %v8031 = vld [vmem:[#allocation12 + $0x13c] sm:$0xf]
    %v8032 = vld [vmem:[#allocation12 + $0x140] sm:$0xf]
    %v8033 = vld [vmem:[#allocation12 + $0x144] sm:$0xf]
    %v8034 = vld [vmem:[#allocation12 + $0x148] sm:$0xf]
    %v8035 = vld [vmem:[#allocation12 + $0x14c] sm:$0xf]
    %v8036 = vld [vmem:[#allocation12 + $0x150] sm:$0xf]
    %v8037 = vld [vmem:[#allocation12 + $0x154] sm:$0xf]
    %v8038 = vld [vmem:[#allocation12 + $0x158] sm:$0xf]
    %v8039 = vld [vmem:[#allocation12 + $0x15c] sm:$0xf]
    %v8040 = vld [vmem:[#allocation12 + $0x160] sm:$0xf]
    %v8041 = vld [vmem:[#allocation12 + $0x164] sm:$0xf]
    %v8042 = vld [vmem:[#allocation12 + $0x168] sm:$0xf]
    %v8043 = vld [vmem:[#allocation12 + $0x16c] sm:$0xf]
    %v8044 = vld [vmem:[#allocation12 + $0x170] sm:$0xf]
    %v8045 = vld [vmem:[#allocation12 + $0x174] sm:$0xf]
    %v8046 = vld [vmem:[#allocation12 + $0x178] sm:$0xf]
    %v8047 = vld [vmem:[#allocation12 + $0x17c] sm:$0xf]
    %v8048 = vld [vmem:[#allocation12 + $0x180] sm:$0xf]
    %v8049 = vld [vmem:[#allocation12 + $0x184] sm:$0xf]
    %v8050 = vld [vmem:[#allocation12 + $0x188] sm:$0xf]
    %v8051 = vld [vmem:[#allocation12 + $0x18c] sm:$0xf]
    %v8052 = vld [vmem:[#allocation12 + $0x190] sm:$0xf]
    %v8053 = vld [vmem:[#allocation12 + $0x194] sm:$0xf]
    %v8054 = vld [vmem:[#allocation12 + $0x198] sm:$0xf]
    %v8055 = vld [vmem:[#allocation12 + $0x19c] sm:$0xf]
    %v8056 = vld [vmem:[#allocation12 + $0x1a0] sm:$0xf]
    %v8057 = vld [vmem:[#allocation12 + $0x1a4] sm:$0xf]
    %v8058 = vld [vmem:[#allocation12 + $0x1a8] sm:$0xf]
    %v8059 = vld [vmem:[#allocation12 + $0x1ac] sm:$0xf]
    %v8060 = vld [vmem:[#allocation12 + $0x1b0] sm:$0xf]
    %v8061 = vld [vmem:[#allocation12 + $0x1b4] sm:$0xf]
    %v8062 = vld [vmem:[#allocation12 + $0x1b8] sm:$0xf]
    %v8063 = vld [vmem:[#allocation12 + $0x1bc] sm:$0xf]
    %v8064 = vld [vmem:[#allocation12 + $0x1c0] sm:$0xf]
    %v8065 = vld [vmem:[#allocation12 + $0x1c4] sm:$0xf]
    %v8066 = vld [vmem:[#allocation12 + $0x1c8] sm:$0xf]
    %v8067 = vld [vmem:[#allocation12 + $0x1cc] sm:$0xf]
    %v8068 = vld [vmem:[#allocation12 + $0x1d0] sm:$0xf]
    %v8069 = vld [vmem:[#allocation12 + $0x1d4] sm:$0xf]
    %v8070 = vld [vmem:[#allocation12 + $0x1d8] sm:$0xf]
    %v8071 = vld [vmem:[#allocation12 + $0x1dc] sm:$0xf]
    %v8072 = vld [vmem:[#allocation12 + $0x1e0] sm:$0xf]
    %v8073 = vld [vmem:[#allocation12 + $0x1e4] sm:$0xf]
    %v8074 = vld [vmem:[#allocation12 + $0x1e8] sm:$0xf]
    %v8075 = vld [vmem:[#allocation12 + $0x1ec] sm:$0xf]
    %v8076 = vld [vmem:[#allocation12 + $0x1f0] sm:$0xf]
    %v8077 = vld [vmem:[#allocation12 + $0x1f4] sm:$0xf]
    %v8078 = vld [vmem:[#allocation12 + $0x1f8] sm:$0xf]
    %v8079 = vld [vmem:[#allocation12 + $0x1fc] sm:$0xf]
    %v8080 = vld [vmem:[#allocation13] sm:$0x1]
    %v8082 = vlaneseq
    %v8083 = vshrl.u32 %v8082, 7
    %v8084 = vsub.s32 0, %v8083
    %v8085 = vrot.slane %v8080, %v8084
    %v8215 = vunpack.c.l.b16 %v7952
    %v8216 = vunpack.c.l.b16 %v7953
    %v8217 = vunpack.c.l.b16 %v7954
    %v8218 = vunpack.c.l.b16 %v7955
    %v8219 = vunpack.c.l.b16 %v7956
    %v8220 = vunpack.c.l.b16 %v7957
    %v8221 = vunpack.c.l.b16 %v7958
    %v8222 = vunpack.c.l.b16 %v7959
    %v8223 = vunpack.c.l.b16 %v7960
    %v8224 = vunpack.c.l.b16 %v7961
    %v8225 = vunpack.c.l.b16 %v7962
    %v8226 = vunpack.c.l.b16 %v7963
    %v8227 = vunpack.c.l.b16 %v7964
    %v8228 = vunpack.c.l.b16 %v7965
    %v8229 = vunpack.c.l.b16 %v7966
    %v8230 = vunpack.c.l.b16 %v7967
    %v8231 = vunpack.c.l.b16 %v7968
    %v8232 = vunpack.c.l.b16 %v7969
    %v8233 = vunpack.c.l.b16 %v7970
    %v8234 = vunpack.c.l.b16 %v7971
    %v8235 = vunpack.c.l.b16 %v7972
    %v8236 = vunpack.c.l.b16 %v7973
    %v8237 = vunpack.c.l.b16 %v7974
    %v8238 = vunpack.c.l.b16 %v7975
    %v8239 = vunpack.c.l.b16 %v7976
    %v8240 = vunpack.c.l.b16 %v7977
    %v8241 = vunpack.c.l.b16 %v7978
    %v8242 = vunpack.c.l.b16 %v7979
    %v8243 = vunpack.c.l.b16 %v7980
    %v8244 = vunpack.c.l.b16 %v7981
    %v8245 = vunpack.c.l.b16 %v7982
    %v8246 = vunpack.c.l.b16 %v7983
    %v8247 = vunpack.c.l.b16 %v7984
    %v8248 = vunpack.c.l.b16 %v7985
    %v8249 = vunpack.c.l.b16 %v7986
    %v8250 = vunpack.c.l.b16 %v7987
    %v8251 = vunpack.c.l.b16 %v7988
    %v8252 = vunpack.c.l.b16 %v7989
    %v8253 = vunpack.c.l.b16 %v7990
    %v8254 = vunpack.c.l.b16 %v7991
    %v8255 = vunpack.c.l.b16 %v7992
    %v8256 = vunpack.c.l.b16 %v7993
    %v8257 = vunpack.c.l.b16 %v7994
    %v8258 = vunpack.c.l.b16 %v7995
    %v8259 = vunpack.c.l.b16 %v7996
    %v8260 = vunpack.c.l.b16 %v7997
    %v8261 = vunpack.c.l.b16 %v7998
    %v8262 = vunpack.c.l.b16 %v7999
    %v8263 = vunpack.c.l.b16 %v8000
    %v8264 = vunpack.c.l.b16 %v8001
    %v8265 = vunpack.c.l.b16 %v8002
    %v8266 = vunpack.c.l.b16 %v8003
    %v8267 = vunpack.c.l.b16 %v8004
    %v8268 = vunpack.c.l.b16 %v8005
    %v8269 = vunpack.c.l.b16 %v8006
    %v8270 = vunpack.c.l.b16 %v8007
    %v8271 = vunpack.c.l.b16 %v8008
    %v8272 = vunpack.c.l.b16 %v8009
    %v8273 = vunpack.c.l.b16 %v8010
    %v8274 = vunpack.c.l.b16 %v8011
    %v8275 = vunpack.c.l.b16 %v8012
    %v8276 = vunpack.c.l.b16 %v8013
    %v8277 = vunpack.c.l.b16 %v8014
    %v8278 = vunpack.c.l.b16 %v8015
    %v8279 = vunpack.c.l.b16 %v8016
    %v8280 = vunpack.c.l.b16 %v8017
    %v8281 = vunpack.c.l.b16 %v8018
    %v8282 = vunpack.c.l.b16 %v8019
    %v8283 = vunpack.c.l.b16 %v8020
    %v8284 = vunpack.c.l.b16 %v8021
    %v8285 = vunpack.c.l.b16 %v8022
    %v8286 = vunpack.c.l.b16 %v8023
    %v8287 = vunpack.c.l.b16 %v8024
    %v8288 = vunpack.c.l.b16 %v8025
    %v8289 = vunpack.c.l.b16 %v8026
    %v8290 = vunpack.c.l.b16 %v8027
    %v8291 = vunpack.c.l.b16 %v8028
    %v8292 = vunpack.c.l.b16 %v8029
    %v8293 = vunpack.c.l.b16 %v8030
    %v8294 = vunpack.c.l.b16 %v8031
    %v8295 = vunpack.c.l.b16 %v8032
    %v8296 = vunpack.c.l.b16 %v8033
    %v8297 = vunpack.c.l.b16 %v8034
    %v8298 = vunpack.c.l.b16 %v8035
    %v8299 = vunpack.c.l.b16 %v8036
    %v8300 = vunpack.c.l.b16 %v8037
    %v8301 = vunpack.c.l.b16 %v8038
    %v8302 = vunpack.c.l.b16 %v8039
    %v8303 = vunpack.c.l.b16 %v8040
    %v8304 = vunpack.c.l.b16 %v8041
    %v8305 = vunpack.c.l.b16 %v8042
    %v8306 = vunpack.c.l.b16 %v8043
    %v8307 = vunpack.c.l.b16 %v8044
    %v8308 = vunpack.c.l.b16 %v8045
    %v8309 = vunpack.c.l.b16 %v8046
    %v8310 = vunpack.c.l.b16 %v8047
    %v8311 = vunpack.c.l.b16 %v8048
    %v8312 = vunpack.c.l.b16 %v8049
    %v8313 = vunpack.c.l.b16 %v8050
    %v8314 = vunpack.c.l.b16 %v8051
    %v8315 = vunpack.c.l.b16 %v8052
    %v8316 = vunpack.c.l.b16 %v8053
    %v8317 = vunpack.c.l.b16 %v8054
    %v8318 = vunpack.c.l.b16 %v8055
    %v8319 = vunpack.c.l.b16 %v8056
    %v8320 = vunpack.c.l.b16 %v8057
    %v8321 = vunpack.c.l.b16 %v8058
    %v8322 = vunpack.c.l.b16 %v8059
    %v8323 = vunpack.c.l.b16 %v8060
    %v8324 = vunpack.c.l.b16 %v8061
    %v8325 = vunpack.c.l.b16 %v8062
    %v8326 = vunpack.c.l.b16 %v8063
    %v8327 = vunpack.c.l.b16 %v8064
    %v8328 = vunpack.c.l.b16 %v8065
    %v8329 = vunpack.c.l.b16 %v8066
    %v8330 = vunpack.c.l.b16 %v8067
    %v8331 = vunpack.c.l.b16 %v8068
    %v8332 = vunpack.c.l.b16 %v8069
    %v8333 = vunpack.c.l.b16 %v8070
    %v8334 = vunpack.c.l.b16 %v8071
    %v8335 = vunpack.c.l.b16 %v8072
    %v8336 = vunpack.c.l.b16 %v8073
    %v8337 = vunpack.c.l.b16 %v8074
    %v8338 = vunpack.c.l.b16 %v8075
    %v8339 = vunpack.c.l.b16 %v8076
    %v8340 = vunpack.c.l.b16 %v8077
    %v8341 = vunpack.c.l.b16 %v8078
    %v8342 = vunpack.c.l.b16 %v8079
    %v8343 = vpack.c.b16 %v8216, %v8215
    %v8344 = vpack.c.b16 %v8218, %v8217
    %v8345 = vpack.c.b16 %v8220, %v8219
    %v8346 = vpack.c.b16 %v8222, %v8221
    %v8347 = vpack.c.b16 %v8224, %v8223
    %v8348 = vpack.c.b16 %v8226, %v8225
    %v8349 = vpack.c.b16 %v8228, %v8227
    %v8350 = vpack.c.b16 %v8230, %v8229
    %v8351 = vpack.c.b16 %v8232, %v8231
    %v8352 = vpack.c.b16 %v8234, %v8233
    %v8353 = vpack.c.b16 %v8236, %v8235
    %v8354 = vpack.c.b16 %v8238, %v8237
    %v8355 = vpack.c.b16 %v8240, %v8239
    %v8356 = vpack.c.b16 %v8242, %v8241
    %v8357 = vpack.c.b16 %v8244, %v8243
    %v8358 = vpack.c.b16 %v8246, %v8245
    %v8359 = vpack.c.b16 %v8248, %v8247
    %v8360 = vpack.c.b16 %v8250, %v8249
    %v8361 = vpack.c.b16 %v8252, %v8251
    %v8362 = vpack.c.b16 %v8254, %v8253
    %v8363 = vpack.c.b16 %v8256, %v8255
    %v8364 = vpack.c.b16 %v8258, %v8257
    %v8365 = vpack.c.b16 %v8260, %v8259
    %v8366 = vpack.c.b16 %v8262, %v8261
    %v8367 = vpack.c.b16 %v8264, %v8263
    %v8368 = vpack.c.b16 %v8266, %v8265
    %v8369 = vpack.c.b16 %v8268, %v8267
    %v8370 = vpack.c.b16 %v8270, %v8269
    %v8371 = vpack.c.b16 %v8272, %v8271
    %v8372 = vpack.c.b16 %v8274, %v8273
    %v8373 = vpack.c.b16 %v8276, %v8275
    %v8374 = vpack.c.b16 %v8278, %v8277
    %v8375 = vpack.c.b16 %v8280, %v8279
    %v8376 = vpack.c.b16 %v8282, %v8281
    %v8377 = vpack.c.b16 %v8284, %v8283
    %v8378 = vpack.c.b16 %v8286, %v8285
    %v8379 = vpack.c.b16 %v8288, %v8287
    %v8380 = vpack.c.b16 %v8290, %v8289
    %v8381 = vpack.c.b16 %v8292, %v8291
    %v8382 = vpack.c.b16 %v8294, %v8293
    %v8383 = vpack.c.b16 %v8296, %v8295
    %v8384 = vpack.c.b16 %v8298, %v8297
    %v8385 = vpack.c.b16 %v8300, %v8299
    %v8386 = vpack.c.b16 %v8302, %v8301
    %v8387 = vpack.c.b16 %v8304, %v8303
    %v8388 = vpack.c.b16 %v8306, %v8305
    %v8389 = vpack.c.b16 %v8308, %v8307
    %v8390 = vpack.c.b16 %v8310, %v8309
    %v8391 = vpack.c.b16 %v8312, %v8311
    %v8392 = vpack.c.b16 %v8314, %v8313
    %v8393 = vpack.c.b16 %v8316, %v8315
    %v8394 = vpack.c.b16 %v8318, %v8317
    %v8395 = vpack.c.b16 %v8320, %v8319
    %v8396 = vpack.c.b16 %v8322, %v8321
    %v8397 = vpack.c.b16 %v8324, %v8323
    %v8398 = vpack.c.b16 %v8326, %v8325
    %v8399 = vpack.c.b16 %v8328, %v8327
    %v8400 = vpack.c.b16 %v8330, %v8329
    %v8401 = vpack.c.b16 %v8332, %v8331
    %v8402 = vpack.c.b16 %v8334, %v8333
    %v8403 = vpack.c.b16 %v8336, %v8335
    %v8404 = vpack.c.b16 %v8338, %v8337
    %v8405 = vpack.c.b16 %v8340, %v8339
    %v8406 = vpack.c.b16 %v8342, %v8341
    %8471 = vmatprep.subr.bf16.mxu0 0
    %8472 = vmatpush1.bf16.msra.mxu0 %v8343
    %8473 = vmatprep.subr.bf16.mxu0 0
    %8474 = vmatpush1.bf16.msra.mxu0 %v8344
    %8475 = vmatprep.subr.bf16.mxu0 0
    %8476 = vmatpush1.bf16.msra.mxu0 %v8345
    %8477 = vmatprep.subr.bf16.mxu0 0
    %8478 = vmatpush1.bf16.msra.mxu0 %v8346
    %8479 = vmatprep.subr.bf16.mxu0 0
    %8480 = vmatpush1.bf16.msra.mxu0 %v8347
    %8481 = vmatprep.subr.bf16.mxu0 0
    %8482 = vmatpush1.bf16.msra.mxu0 %v8348
    %8483 = vmatprep.subr.bf16.mxu0 0
    %8484 = vmatpush1.bf16.msra.mxu0 %v8349
    %8485 = vmatprep.subr.bf16.mxu0 0
    %8486 = vmatpush1.bf16.msra.mxu0 %v8350
    %8487 = vmatprep.subr.bf16.mxu0 0
    %8488 = vmatpush1.bf16.msra.mxu0 %v8351
    %8489 = vmatprep.subr.bf16.mxu0 0
    %8490 = vmatpush1.bf16.msra.mxu0 %v8352
    %8491 = vmatprep.subr.bf16.mxu0 0
    %8492 = vmatpush1.bf16.msra.mxu0 %v8353
    %8493 = vmatprep.subr.bf16.mxu0 0
    %8494 = vmatpush1.bf16.msra.mxu0 %v8354
    %8495 = vmatprep.subr.bf16.mxu0 0
    %8496 = vmatpush1.bf16.msra.mxu0 %v8355
    %8497 = vmatprep.subr.bf16.mxu0 0
    %8498 = vmatpush1.bf16.msra.mxu0 %v8356
    %8499 = vmatprep.subr.bf16.mxu0 0
    %8500 = vmatpush1.bf16.msra.mxu0 %v8357
    %8501 = vmatprep.subr.bf16.mxu0 0
    %8502 = vmatpush1.bf16.msra.mxu0 %v8358
    %8503 = vmatprep.mubr.bf16.mxu0 %v7945
    %8504 = vmatmul.mubr.bf16.gmra.mrb[0].mxu0 %v7944
    %v8505 = vpop.f32.mrb[0].mxu0
    %v8506 = vadd.f32 %v8085, %v8505
    %v8507 = vpop.f32.mrb[0].mxu0
    %v8508 = vpop.f32.mrb[0].mxu0
    %v8509 = vpop.f32.mrb[0].mxu0
    %8510 = vdwg.mxu0
    %8511 = vmatprep.subr.bf16.mxu0 0
    %8512 = vmatpush1.bf16.msra.mxu0 %v8359
    %8513 = vmatprep.subr.bf16.mxu0 0
    %8514 = vmatpush1.bf16.msra.mxu0 %v8360
    %8515 = vmatprep.subr.bf16.mxu0 0
    %8516 = vmatpush1.bf16.msra.mxu0 %v8361
    %8517 = vmatprep.subr.bf16.mxu0 0
    %8518 = vmatpush1.bf16.msra.mxu0 %v8362
    %8519 = vmatprep.subr.bf16.mxu0 0
    %8520 = vmatpush1.bf16.msra.mxu0 %v8363
    %8521 = vmatprep.subr.bf16.mxu0 0
    %8522 = vmatpush1.bf16.msra.mxu0 %v8364
    %8523 = vmatprep.subr.bf16.mxu0 0
    %8524 = vmatpush1.bf16.msra.mxu0 %v8365
    %8525 = vmatprep.subr.bf16.mxu0 0
    %8526 = vmatpush1.bf16.msra.mxu0 %v8366
    %8527 = vmatprep.subr.bf16.mxu0 0
    %8528 = vmatpush1.bf16.msra.mxu0 %v8367
    %8529 = vmatprep.subr.bf16.mxu0 0
    %8530 = vmatpush1.bf16.msra.mxu0 %v8368
    %8531 = vmatprep.subr.bf16.mxu0 0
    %8532 = vmatpush1.bf16.msra.mxu0 %v8369
    %8533 = vmatprep.subr.bf16.mxu0 0
    %8534 = vmatpush1.bf16.msra.mxu0 %v8370
    %8535 = vmatprep.subr.bf16.mxu0 0
    %8536 = vmatpush1.bf16.msra.mxu0 %v8371
    %8537 = vmatprep.subr.bf16.mxu0 0
    %8538 = vmatpush1.bf16.msra.mxu0 %v8372
    %8539 = vmatprep.subr.bf16.mxu0 0
    %8540 = vmatpush1.bf16.msra.mxu0 %v8373
    %8541 = vmatprep.subr.bf16.mxu0 0
    %8542 = vmatpush1.bf16.msra.mxu0 %v8374
    %8543 = vmatprep.mubr.bf16.mxu0 %v7947
    %8544 = vmatmul.mubr.bf16.gmra.mrb[0].mxu0 %v7946
    %v8545 = vpop.f32.mrb[0].mxu0
    %v8546 = vadd.f32 %v8506, %v8545
    %v8547 = vpop.f32.mrb[0].mxu0
    %v8548 = vpop.f32.mrb[0].mxu0
    %v8549 = vpop.f32.mrb[0].mxu0
    %8550 = vdwg.mxu0
    %8551 = vmatprep.subr.bf16.mxu0 0
    %8552 = vmatpush1.bf16.msra.mxu0 %v8375
    %8553 = vmatprep.subr.bf16.mxu0 0
    %8554 = vmatpush1.bf16.msra.mxu0 %v8376
    %8555 = vmatprep.subr.bf16.mxu0 0
    %8556 = vmatpush1.bf16.msra.mxu0 %v8377
    %8557 = vmatprep.subr.bf16.mxu0 0
    %8558 = vmatpush1.bf16.msra.mxu0 %v8378
    %8559 = vmatprep.subr.bf16.mxu0 0
    %8560 = vmatpush1.bf16.msra.mxu0 %v8379
    %8561 = vmatprep.subr.bf16.mxu0 0
    %8562 = vmatpush1.bf16.msra.mxu0 %v8380
    %8563 = vmatprep.subr.bf16.mxu0 0
    %8564 = vmatpush1.bf16.msra.mxu0 %v8381
    %8565 = vmatprep.subr.bf16.mxu0 0
    %8566 = vmatpush1.bf16.msra.mxu0 %v8382
    %8567 = vmatprep.subr.bf16.mxu0 0
    %8568 = vmatpush1.bf16.msra.mxu0 %v8383
    %8569 = vmatprep.subr.bf16.mxu0 0
    %8570 = vmatpush1.bf16.msra.mxu0 %v8384
    %8571 = vmatprep.subr.bf16.mxu0 0
    %8572 = vmatpush1.bf16.msra.mxu0 %v8385
    %8573 = vmatprep.subr.bf16.mxu0 0
    %8574 = vmatpush1.bf16.msra.mxu0 %v8386
    %8575 = vmatprep.subr.bf16.mxu0 0
    %8576 = vmatpush1.bf16.msra.mxu0 %v8387
    %8577 = vmatprep.subr.bf16.mxu0 0
    %8578 = vmatpush1.bf16.msra.mxu0 %v8388
    %8579 = vmatprep.subr.bf16.mxu0 0
    %8580 = vmatpush1.bf16.msra.mxu0 %v8389
    %8581 = vmatprep.subr.bf16.mxu0 0
    %8582 = vmatpush1.bf16.msra.mxu0 %v8390
    %8583 = vmatprep.mubr.bf16.mxu0 %v7949
    %8584 = vmatmul.mubr.bf16.gmra.mrb[0].mxu0 %v7948
    %v8585 = vpop.f32.mrb[0].mxu0
    %v8586 = vadd.f32 %v8546, %v8585
    %v8587 = vpop.f32.mrb[0].mxu0
    %v8588 = vpop.f32.mrb[0].mxu0
    %v8589 = vpop.f32.mrb[0].mxu0
    %8590 = vdwg.mxu0
    %8591 = vmatprep.subr.bf16.mxu0 0
    %8592 = vmatpush1.bf16.msra.mxu0 %v8391
    %8593 = vmatprep.subr.bf16.mxu0 0
    %8594 = vmatpush1.bf16.msra.mxu0 %v8392
    %8595 = vmatprep.subr.bf16.mxu0 0
    %8596 = vmatpush1.bf16.msra.mxu0 %v8393
    %8597 = vmatprep.subr.bf16.mxu0 0
    %8598 = vmatpush1.bf16.msra.mxu0 %v8394
    %8599 = vmatprep.subr.bf16.mxu0 0
    %8600 = vmatpush1.bf16.msra.mxu0 %v8395
    %8601 = vmatprep.subr.bf16.mxu0 0
    %8602 = vmatpush1.bf16.msra.mxu0 %v8396
    %8603 = vmatprep.subr.bf16.mxu0 0
    %8604 = vmatpush1.bf16.msra.mxu0 %v8397
    %8605 = vmatprep.subr.bf16.mxu0 0
    %8606 = vmatpush1.bf16.msra.mxu0 %v8398
    %8607 = vmatprep.subr.bf16.mxu0 0
    %8608 = vmatpush1.bf16.msra.mxu0 %v8399
    %8609 = vmatprep.subr.bf16.mxu0 0
    %8610 = vmatpush1.bf16.msra.mxu0 %v8400
    %8611 = vmatprep.subr.bf16.mxu0 0
    %8612 = vmatpush1.bf16.msra.mxu0 %v8401
    %8613 = vmatprep.subr.bf16.mxu0 0
    %8614 = vmatpush1.bf16.msra.mxu0 %v8402
    %8615 = vmatprep.subr.bf16.mxu0 0
    %8616 = vmatpush1.bf16.msra.mxu0 %v8403
    %8617 = vmatprep.subr.bf16.mxu0 0
    %8618 = vmatpush1.bf16.msra.mxu0 %v8404
    %8619 = vmatprep.subr.bf16.mxu0 0
    %8620 = vmatpush1.bf16.msra.mxu0 %v8405
    %8621 = vmatprep.subr.bf16.mxu0 0
    %8622 = vmatpush1.bf16.msra.mxu0 %v8406
    %8623 = vmatprep.mubr.bf16.mxu0 %v7951
    %8624 = vmatmul.mubr.bf16.gmra.mrb[0].mxu0 %v7950
    %v8625 = vpop.f32.mrb[0].mxu0
    %v8626 = vadd.f32 %v8586, %v8625
    %v8627 = vpop.f32.mrb[0].mxu0
    %v8628 = vpop.f32.mrb[0].mxu0
    %v8629 = vpop.f32.mrb[0].mxu0
    %8630 = vdwg.mxu0
    %8631 = vst [vmem:[%s9] sm:$0xff] %v8626
    // Predicated region
    $region70: #{mlp_forward.1} parent=1 // pred_check
      _
    $region71: #{mlp_forward.1} parent=1 // pred_check_branch
      %8633 = sbr.rel (0) target = $region73
    $region72: #{mlp_forward.1} parent=1 // pred_region
      _
    $region73: #{mlp_forward.1} parent=1 // pred_fallthru
      _
    // Predicated region
    $region74: #{mlp_forward.1} parent=1 // pred_check
      _
    $region75: #{mlp_forward.1} parent=1 // pred_check_branch
      %8635 = sbr.rel (0) target = $region77
    $region76: #{mlp_forward.1} parent=1 // pred_region
      _
    $region77: #{mlp_forward.1} parent=1 // pred_fallthru
      _
    %8636 = vsyncpa [#allocation3], 1
    %8637 = vsyncpa [#allocation5], 1
    %8638 = vsyncpa [#allocation8], 1
    %8639 = vsyncpa [#allocation11], 1
    %8640 = vsyncpa [#allocation14], 1

</llo_original>
